<compile_context>
chip_gen: v7x
topology: tpu7x:2x2x1
jax: 0.10.0
libtpu: 0.0.40
codegen_flags: <defaults>
</compile_context>

<pallas_src>
import jax
import jax.numpy as jnp
from jax import lax
from jax.experimental import pallas as pl
from jax.experimental.pallas import tpu as pltpu


def eas_kernel(xpad_ref, wedge_ref, wconv_ref, bconv_ref,
               w1_ref, b1_ref, w2_ref, b2_ref, wsa_ref,
               out_ref, midpad_ref):
    N, Hp2, Wp2, C = xpad_ref.shape
    H, W = Hp2 - 2, Wp2 - 2
    M = N * H * W

    xpad = xpad_ref[...]                          # (N, H+2, W+2, C) f32
    x = xpad[:, 1:H + 1, 1:W + 1, :]              # (N, H, W, C)     f32

    def conv3x3(src_padded, w_ref):
        # im2col: build one (M, 9C) patch matrix, hit it with one bf16 matmul
        # (f32 accumulation).  w_ref is the HWIO weight flattened to (9C, Cout).
        cols = [src_padded[:, kh:kh + H, kw:kw + W, :]
                for kh in range(3) for kw in range(3)]
        patches = jnp.concatenate(cols, axis=-1)                # (N, H, W, 9C)
        patches = patches.reshape(M, 9 * C).astype(jnp.bfloat16)
        y = jnp.dot(patches, w_ref[...],
                    preferred_element_type=jnp.float32)         # (M, Cout) f32
        return y.reshape(N, H, W, -1)

    # edge = |sobel_x(x)| + |sobel_y(x)|  -- both Sobel convs in ONE matmul.
    e2 = conv3x3(xpad, wedge_ref)                               # (N, H, W, 2C)
    edge = jnp.abs(e2[..., :C]) + jnp.abs(e2[..., C:])          # (N, H, W, C)

    # channel attention: GAP -> 1x1 -> ReLU -> 1x1 -> sigmoid (tiny, keep f32)
    gap = jnp.mean(x, axis=(1, 2))                              # (N, C)
    h1 = jax.nn.relu(
        jnp.dot(gap, w1_ref[...], preferred_element_type=jnp.float32)
        + b1_ref[...])                                          # (N, Cr)
    ca = jax.nn.sigmoid(
        jnp.dot(h1, w2_ref[...], preferred_element_type=jnp.float32)
        + b2_ref[...])                                          # (N, C)

    # spatial attention on the VPU/XLU (a Cout=1 matmul would waste MXU lanes)
    sa = jax.nn.sigmoid(jnp.sum(x * wsa_ref[...].reshape(1, 1, 1, C),
                                axis=-1, keepdims=True))        # (N, H, W, 1)

    mid = x * ca.reshape(N, 1, 1, C) + x * sa + edge            # (N, H, W, C)

    # final 3x3 conv (+ bias): zero-pad mid into the scratch (zeroed exactly
    # once — single grid step), im2col, one bf16 matmul.
    midpad_ref[...] = jnp.zeros_like(midpad_ref)
    midpad_ref[:, 1:H + 1, 1:W + 1, :] = mid
    y = conv3x3(midpad_ref[...], wconv_ref) + bconv_ref[...].reshape(1, 1, 1, C)

    # lane-dense store: last dim W*C (= 512) instead of C (= 32)
    out_ref[...] = y.reshape(N * H, W * C).astype(out_ref.dtype)


def eas_pallas(x_nhwc, params):
    N, H, W, C = x_nhwc.shape
    Cr = params["w1"].shape[1]

    xpad = jnp.pad(x_nhwc, ((0, 0), (1, 1), (1, 1), (0, 0)))

    # Fuse the two Sobel weights into one (3,3,C,2C) tensor, flatten HWIO
    # -> (9C, Cout) to match the im2col column order, and pre-cast the big
    # matmul weights to bf16 (kernel accumulates in f32).
    wedge = jnp.concatenate([params["wsx"], params["wsy"]], axis=-1)
    wedge = wedge.reshape(9 * C, 2 * C).astype(jnp.bfloat16)
    wconv = params["wconv"].reshape(9 * C, C).astype(jnp.bfloat16)
    wsa = params["wsa"].reshape(1, C)

    grid_spec = pltpu.PrefetchScalarGridSpec(
        num_scalar_prefetch=0,
        grid=(1,),   # whole problem (~0.4 MB) fits easily in VMEM on v5e/v6e/v7x
        in_specs=[
            pl.BlockSpec((N, H + 2, W + 2, C), lambda i: (0, 0, 0, 0)),  # xpad
            pl.BlockSpec((9 * C, 2 * C), lambda i: (0, 0)),              # wedge
            pl.BlockSpec((9 * C, C), lambda i: (0, 0)),                  # wconv
            pl.BlockSpec((1, C), lambda i: (0, 0)),                      # bconv
            pl.BlockSpec((C, Cr), lambda i: (0, 0)),                     # w1
            pl.BlockSpec((1, Cr), lambda i: (0, 0)),                     # b1
            pl.BlockSpec((Cr, C), lambda i: (0, 0)),                     # w2
            pl.BlockSpec((1, C), lambda i: (0, 0)),                      # b2
            pl.BlockSpec((1, C), lambda i: (0, 0)),                      # wsa
        ],
        out_specs=pl.BlockSpec((N * H, W * C), lambda i: (0, 0)),
        scratch_shapes=[pltpu.VMEM((N, H + 2, W + 2, C), jnp.float32)],
    )

    out_flat = pl.pallas_call(
        eas_kernel,
        out_shape=jax.ShapeDtypeStruct((N * H, W * C), jnp.float32),
        grid_spec=grid_spec,
        compiler_params=pltpu.CompilerParams(
            dimension_semantics=("arbitrary",)),
    )(xpad, wedge, wconv, params["bconv"],
      params["w1"], params["b1"], params["w2"], params["b2"], wsa)

    return out_flat.reshape(N, H, W, C)


def eas_reference(x_nhwc, params):
    """Pure-JAX reference (matches the PyTorch forward, NHWC layout, f32)."""
    def conv3(x, w):
        return lax.conv_general_dilated(
            x, w, (1, 1), 'SAME',
            dimension_numbers=('NHWC', 'HWIO', 'NHWC'),
            precision=lax.Precision.HIGHEST)

    edge = jnp.abs(conv3(x_nhwc, params["wsx"])) + jnp.abs(conv3(x_nhwc, params["wsy"]))
    gap = jnp.mean(x_nhwc, axis=(1, 2))                               # (N, C)
    h1 = jax.nn.relu(gap @ params["w1"] + params["b1"][0])
    ca = jax.nn.sigmoid(h1 @ params["w2"] + params["b2"][0])          # (N, C)
    sa = jax.nn.sigmoid(jnp.einsum('nhwc,co->nhwo', x_nhwc, params["wsa"]))
    mid = x_nhwc * ca[:, None, None, :] + x_nhwc * sa + edge
    return conv3(mid, params["wconv"]) + params["bconv"][0]


def init_params(key, C):
    Cr = C // 16
    ks = jax.random.split(key, 8)

    def uni(k, shape, fan_in):
        b = 1.0 / jnp.sqrt(fan_in)
        return jax.random.uniform(k, shape, jnp.float32, -b, b)

    return {
        "wsx":   uni(ks[0], (3, 3, C, C), 9 * C),     # sobel_x conv (HWIO)
        "wsy":   uni(ks[1], (3, 3, C, C), 9 * C),     # sobel_y conv
        "wconv": uni(ks[2], (3, 3, C, C), 9 * C),     # final 3x3 conv
        "bconv": uni(ks[3], (1, C), 9 * C),
        "w1":    uni(ks[4], (C, Cr), C),              # ca 1x1 conv #1
        "b1":    uni(ks[5], (1, Cr), C),
        "w2":    uni(ks[6], (Cr, C), Cr),             # ca 1x1 conv #2
        "b2":    uni(ks[7], (1, C), Cr),
        "wsa":   uni(jax.random.fold_in(key, 99), (C, 1), C),  # sa 1x1 conv
    }


if __name__ == "__main__":
    N, C, H, W = 2, 32, 16, 16   # in_channels must be >= 16 (C // 16 hidden dim)
    key = jax.random.PRNGKey(0)
    kx, kp = jax.random.split(key)

    # PyTorch input is NCHW; build it that way and transpose to NHWC for the kernel.
    x_nchw = jax.random.normal(kx, (N, C, H, W), jnp.float32)
    x_nhwc = jnp.transpose(x_nchw, (0, 2, 3, 1))

    params = init_params(kp, C)

    out = eas_pallas(x_nhwc, params)
    out = jax.block_until_ready(out)

    ref = eas_reference(x_nhwc, params)
    assert out.shape == (N, H, W, C)
    # Tolerance loosened vs the f32 version: the two 3x3 convs now run with
    # bf16 MXU operands (f32 accumulation), which introduces ~1e-3..1e-2 error
    # against the f32 HIGHEST-precision reference.
    assert jnp.allclose(out, ref, rtol=2e-2, atol=2e-2), (
        float(jnp.max(jnp.abs(out - ref))))

    print("KERNEL_OK")
</pallas_src>

<mosaic_0001>
module attributes {stable_mosaic.version = 11 : i64} {
  func.func @eas_kernel(%arg0: i32, %arg1: memref<2x18x18x32xf32, #tpu.memory_space<vmem>>, %arg2: memref<288x64xbf16, #tpu.memory_space<vmem>>, %arg3: memref<288x32xbf16, #tpu.memory_space<vmem>>, %arg4: memref<1x32xf32, #tpu.memory_space<vmem>>, %arg5: memref<32x2xf32, #tpu.memory_space<vmem>>, %arg6: memref<1x2xf32, #tpu.memory_space<vmem>>, %arg7: memref<2x32xf32, #tpu.memory_space<vmem>>, %arg8: memref<1x32xf32, #tpu.memory_space<vmem>>, %arg9: memref<1x32xf32, #tpu.memory_space<vmem>>, %arg10: memref<32x512xf32, #tpu.memory_space<vmem>>, %arg11: memref<2x18x18x32xf32, #tpu.memory_space<vmem>>) attributes {dimension_semantics = [#tpu.dimension_semantics<arbitrary>], iteration_bounds = array<i64: 1>, scalar_prefetch = 0 : i64, scratch_operands = 1 : i64, tpu.core_type = #tpu.core_type<tc>, window_params = [{pipeline_mode = #tpu.pipeline_mode<synchronous>, transform_indices = @transform_0, window_bounds = array<i64: 2, 18, 18, 32>}, {pipeline_mode = #tpu.pipeline_mode<synchronous>, transform_indices = @transform_1, window_bounds = array<i64: 288, 64>}, {pipeline_mode = #tpu.pipeline_mode<synchronous>, transform_indices = @transform_2, window_bounds = array<i64: 288, 32>}, {pipeline_mode = #tpu.pipeline_mode<synchronous>, transform_indices = @transform_3, window_bounds = array<i64: 1, 32>}, {pipeline_mode = #tpu.pipeline_mode<synchronous>, transform_indices = @transform_4, window_bounds = array<i64: 32, 2>}, {pipeline_mode = #tpu.pipeline_mode<synchronous>, transform_indices = @transform_5, window_bounds = array<i64: 1, 2>}, {pipeline_mode = #tpu.pipeline_mode<synchronous>, transform_indices = @transform_6, window_bounds = array<i64: 2, 32>}, {pipeline_mode = #tpu.pipeline_mode<synchronous>, transform_indices = @transform_7, window_bounds = array<i64: 1, 32>}, {pipeline_mode = #tpu.pipeline_mode<synchronous>, transform_indices = @transform_8, window_bounds = array<i64: 1, 32>}, {pipeline_mode = #tpu.pipeline_mode<synchronous>, transform_indices = @transform_9, window_bounds = array<i64: 32, 512>}]} {
    %c0 = arith.constant 0 : index
    %c0_0 = arith.constant 0 : index
    %c0_1 = arith.constant 0 : index
    %c0_2 = arith.constant 0 : index
    %0 = vector.load %arg1[%c0, %c0_0, %c0_1, %c0_2] : memref<2x18x18x32xf32, #tpu.memory_space<vmem>>, vector<2x18x18x32xf32>
    %1 = vector.extract_strided_slice %0 {offsets = [0, 1, 1, 0], sizes = [2, 16, 16, 32], strides = [1, 1, 1, 1]} : vector<2x18x18x32xf32> to vector<2x16x16x32xf32>
    %2 = vector.extract_strided_slice %0 {offsets = [0, 0, 0, 0], sizes = [2, 16, 16, 32], strides = [1, 1, 1, 1]} : vector<2x18x18x32xf32> to vector<2x16x16x32xf32>
    %3 = vector.extract_strided_slice %0 {offsets = [0, 0, 1, 0], sizes = [2, 16, 16, 32], strides = [1, 1, 1, 1]} : vector<2x18x18x32xf32> to vector<2x16x16x32xf32>
    %4 = vector.extract_strided_slice %0 {offsets = [0, 0, 2, 0], sizes = [2, 16, 16, 32], strides = [1, 1, 1, 1]} : vector<2x18x18x32xf32> to vector<2x16x16x32xf32>
    %5 = vector.extract_strided_slice %0 {offsets = [0, 1, 0, 0], sizes = [2, 16, 16, 32], strides = [1, 1, 1, 1]} : vector<2x18x18x32xf32> to vector<2x16x16x32xf32>
    %6 = vector.extract_strided_slice %0 {offsets = [0, 1, 1, 0], sizes = [2, 16, 16, 32], strides = [1, 1, 1, 1]} : vector<2x18x18x32xf32> to vector<2x16x16x32xf32>
    %7 = vector.extract_strided_slice %0 {offsets = [0, 1, 2, 0], sizes = [2, 16, 16, 32], strides = [1, 1, 1, 1]} : vector<2x18x18x32xf32> to vector<2x16x16x32xf32>
    %8 = vector.extract_strided_slice %0 {offsets = [0, 2, 0, 0], sizes = [2, 16, 16, 32], strides = [1, 1, 1, 1]} : vector<2x18x18x32xf32> to vector<2x16x16x32xf32>
    %9 = vector.extract_strided_slice %0 {offsets = [0, 2, 1, 0], sizes = [2, 16, 16, 32], strides = [1, 1, 1, 1]} : vector<2x18x18x32xf32> to vector<2x16x16x32xf32>
    %10 = vector.extract_strided_slice %0 {offsets = [0, 2, 2, 0], sizes = [2, 16, 16, 32], strides = [1, 1, 1, 1]} : vector<2x18x18x32xf32> to vector<2x16x16x32xf32>
    %11 = tpu.concatenate %2, %3, %4, %5, %6, %7, %8, %9, %10 in 3 : vector<2x16x16x32xf32>, vector<2x16x16x32xf32>, vector<2x16x16x32xf32>, vector<2x16x16x32xf32>, vector<2x16x16x32xf32>, vector<2x16x16x32xf32>, vector<2x16x16x32xf32>, vector<2x16x16x32xf32>, vector<2x16x16x32xf32> -> vector<2x16x16x288xf32>
    %12 = vector.shape_cast %11 : vector<2x16x16x288xf32> to vector<512x288xf32>
    %13 = arith.truncf %12 : vector<512x288xf32> to vector<512x288xbf16>
    %c0_3 = arith.constant 0 : index
    %c0_4 = arith.constant 0 : index
    %14 = vector.load %arg2[%c0_3, %c0_4] : memref<288x64xbf16, #tpu.memory_space<vmem>>, vector<288x64xbf16>
    %cst = arith.constant dense<0.000000e+00> : vector<512x64xf32>
    %15 = tpu.matmul %13, %14, %cst {dimension_numbers = #tpu.dot_dimension_numbers<[1], [0], [0], [1], [0, 0, 1, 1], [], []>} : vector<512x288xbf16>, vector<288x64xbf16>, vector<512x64xf32> -> vector<512x64xf32>
    %16 = vector.shape_cast %15 : vector<512x64xf32> to vector<2x16x16x64xf32>
    %17 = vector.extract_strided_slice %16 {offsets = [0, 0, 0, 0], sizes = [2, 16, 16, 32], strides = [1, 1, 1, 1]} : vector<2x16x16x64xf32> to vector<2x16x16x32xf32>
    %18 = math.absf %17 : vector<2x16x16x32xf32>
    %19 = vector.extract_strided_slice %16 {offsets = [0, 0, 0, 32], sizes = [2, 16, 16, 32], strides = [1, 1, 1, 1]} : vector<2x16x16x64xf32> to vector<2x16x16x32xf32>
    %20 = math.absf %19 : vector<2x16x16x32xf32>
    %21 = arith.addf %18, %20 : vector<2x16x16x32xf32>
    %cst_5 = arith.constant dense<0.000000e+00> : vector<2x32xf32>
    %22 = vector.multi_reduction <add>, %1, %cst_5 [1, 2] : vector<2x16x16x32xf32> to vector<2x32xf32>
    %cst_6 = arith.constant 2.560000e+02 : f32
    %23 = vector.broadcast %cst_6 : f32 to vector<2x32xf32>
    %24 = arith.divf %22, %23 : vector<2x32xf32>
    %c0_7 = arith.constant 0 : index
    %c0_8 = arith.constant 0 : index
    %25 = vector.load %arg5[%c0_7, %c0_8] : memref<32x2xf32, #tpu.memory_space<vmem>>, vector<32x2xf32>
    %cst_9 = arith.constant dense<0.000000e+00> : vector<2x2xf32>
    %26 = tpu.matmul %24, %25, %cst_9 {dimension_numbers = #tpu.dot_dimension_numbers<[1], [0], [0], [1], [0, 0, 1, 1], [], []>} : vector<2x32xf32>, vector<32x2xf32>, vector<2x2xf32> -> vector<2x2xf32>
    %c0_10 = arith.constant 0 : index
    %c0_11 = arith.constant 0 : index
    %27 = vector.load %arg6[%c0_10, %c0_11] : memref<1x2xf32, #tpu.memory_space<vmem>>, vector<1x2xf32>
    %28 = vector.broadcast %27 : vector<1x2xf32> to vector<2x2xf32>
    %29 = arith.addf %26, %28 : vector<2x2xf32>
    %cst_12 = arith.constant 0.000000e+00 : f32
    %30 = vector.broadcast %cst_12 : f32 to vector<2x2xf32>
    %31 = arith.maximumf %29, %30 : vector<2x2xf32>
    %c0_13 = arith.constant 0 : index
    %c0_14 = arith.constant 0 : index
    %32 = vector.load %arg7[%c0_13, %c0_14] : memref<2x32xf32, #tpu.memory_space<vmem>>, vector<2x32xf32>
    %cst_15 = arith.constant dense<0.000000e+00> : vector<2x32xf32>
    %33 = tpu.matmul %31, %32, %cst_15 {dimension_numbers = #tpu.dot_dimension_numbers<[1], [0], [0], [1], [0, 0, 1, 1], [], []>} : vector<2x2xf32>, vector<2x32xf32>, vector<2x32xf32> -> vector<2x32xf32>
    %c0_16 = arith.constant 0 : index
    %c0_17 = arith.constant 0 : index
    %34 = vector.load %arg8[%c0_16, %c0_17] : memref<1x32xf32, #tpu.memory_space<vmem>>, vector<1x32xf32>
    %35 = vector.broadcast %34 : vector<1x32xf32> to vector<2x32xf32>
    %36 = arith.addf %33, %35 : vector<2x32xf32>
    %37 = arith.negf %36 : vector<2x32xf32>
    %38 = math.exp %37 : vector<2x32xf32>
    %cst_18 = arith.constant 1.000000e+00 : f32
    %39 = vector.broadcast %cst_18 : f32 to vector<2x32xf32>
    %40 = arith.addf %39, %38 : vector<2x32xf32>
    %41 = arith.divf %39, %40 : vector<2x32xf32>
    %c0_19 = arith.constant 0 : index
    %c0_20 = arith.constant 0 : index
    %42 = vector.load %arg9[%c0_19, %c0_20] : memref<1x32xf32, #tpu.memory_space<vmem>>, vector<1x32xf32>
    %43 = vector.shape_cast %42 : vector<1x32xf32> to vector<1x1x1x32xf32>
    %44 = vector.broadcast %43 : vector<1x1x1x32xf32> to vector<2x16x16x32xf32>
    %45 = arith.mulf %1, %44 : vector<2x16x16x32xf32>
    %cst_21 = arith.constant dense<0.000000e+00> : vector<2x16x16xf32>
    %46 = vector.multi_reduction <add>, %45, %cst_21 [3] : vector<2x16x16x32xf32> to vector<2x16x16xf32>
    %47 = vector.shape_cast %46 : vector<2x16x16xf32> to vector<2x16x16x1xf32>
    %48 = arith.negf %47 : vector<2x16x16x1xf32>
    %49 = math.exp %48 : vector<2x16x16x1xf32>
    %cst_22 = arith.constant 1.000000e+00 : f32
    %50 = vector.broadcast %cst_22 : f32 to vector<2x16x16x1xf32>
    %51 = arith.addf %50, %49 : vector<2x16x16x1xf32>
    %52 = arith.divf %50, %51 : vector<2x16x16x1xf32>
    %53 = vector.shape_cast %41 : vector<2x32xf32> to vector<2x1x1x32xf32>
    %54 = vector.broadcast %53 : vector<2x1x1x32xf32> to vector<2x16x16x32xf32>
    %55 = arith.mulf %1, %54 : vector<2x16x16x32xf32>
    %56 = vector.broadcast %52 : vector<2x16x16x1xf32> to vector<2x16x16x32xf32>
    %57 = arith.mulf %1, %56 : vector<2x16x16x32xf32>
    %58 = arith.addf %55, %57 : vector<2x16x16x32xf32>
    %59 = arith.addf %58, %21 : vector<2x16x16x32xf32>
    %cst_23 = arith.constant 0.000000e+00 : f32
    %60 = vector.broadcast %cst_23 : f32 to vector<2x18x18x32xf32>
    %c0_24 = arith.constant 0 : index
    %c0_25 = arith.constant 0 : index
    %c0_26 = arith.constant 0 : index
    %c0_27 = arith.constant 0 : index
    %61 = vector.load %arg11[%c0_24, %c0_25, %c0_26, %c0_27] : memref<2x18x18x32xf32, #tpu.memory_space<vmem>>, vector<2x18x18x32xf32>
    tpu.vector_store %arg11[%c0_24, %c0_25, %c0_26, %c0_27], %60 {strides = array<i32>} : memref<2x18x18x32xf32, #tpu.memory_space<vmem>>, vector<2x18x18x32xf32>,
    %c0_28 = arith.constant 0 : index
    %c1 = arith.constant 1 : index
    %c1_29 = arith.constant 1 : index
    %c0_30 = arith.constant 0 : index
    %62 = vector.load %arg11[%c0_28, %c1, %c1_29, %c0_30] : memref<2x18x18x32xf32, #tpu.memory_space<vmem>>, vector<2x16x16x32xf32>
    tpu.vector_store %arg11[%c0_28, %c1, %c1_29, %c0_30], %59 {strides = array<i32>} : memref<2x18x18x32xf32, #tpu.memory_space<vmem>>, vector<2x16x16x32xf32>,
    %c0_31 = arith.constant 0 : index
    %c0_32 = arith.constant 0 : index
    %c0_33 = arith.constant 0 : index
    %c0_34 = arith.constant 0 : index
    %63 = vector.load %arg11[%c0_31, %c0_32, %c0_33, %c0_34] : memref<2x18x18x32xf32, #tpu.memory_space<vmem>>, vector<2x18x18x32xf32>
    %64 = vector.extract_strided_slice %63 {offsets = [0, 0, 0, 0], sizes = [2, 16, 16, 32], strides = [1, 1, 1, 1]} : vector<2x18x18x32xf32> to vector<2x16x16x32xf32>
    %65 = vector.extract_strided_slice %63 {offsets = [0, 0, 1, 0], sizes = [2, 16, 16, 32], strides = [1, 1, 1, 1]} : vector<2x18x18x32xf32> to vector<2x16x16x32xf32>
    %66 = vector.extract_strided_slice %63 {offsets = [0, 0, 2, 0], sizes = [2, 16, 16, 32], strides = [1, 1, 1, 1]} : vector<2x18x18x32xf32> to vector<2x16x16x32xf32>
    %67 = vector.extract_strided_slice %63 {offsets = [0, 1, 0, 0], sizes = [2, 16, 16, 32], strides = [1, 1, 1, 1]} : vector<2x18x18x32xf32> to vector<2x16x16x32xf32>
    %68 = vector.extract_strided_slice %63 {offsets = [0, 1, 1, 0], sizes = [2, 16, 16, 32], strides = [1, 1, 1, 1]} : vector<2x18x18x32xf32> to vector<2x16x16x32xf32>
    %69 = vector.extract_strided_slice %63 {offsets = [0, 1, 2, 0], sizes = [2, 16, 16, 32], strides = [1, 1, 1, 1]} : vector<2x18x18x32xf32> to vector<2x16x16x32xf32>
    %70 = vector.extract_strided_slice %63 {offsets = [0, 2, 0, 0], sizes = [2, 16, 16, 32], strides = [1, 1, 1, 1]} : vector<2x18x18x32xf32> to vector<2x16x16x32xf32>
    %71 = vector.extract_strided_slice %63 {offsets = [0, 2, 1, 0], sizes = [2, 16, 16, 32], strides = [1, 1, 1, 1]} : vector<2x18x18x32xf32> to vector<2x16x16x32xf32>
    %72 = vector.extract_strided_slice %63 {offsets = [0, 2, 2, 0], sizes = [2, 16, 16, 32], strides = [1, 1, 1, 1]} : vector<2x18x18x32xf32> to vector<2x16x16x32xf32>
    %73 = tpu.concatenate %64, %65, %66, %67, %68, %69, %70, %71, %72 in 3 : vector<2x16x16x32xf32>, vector<2x16x16x32xf32>, vector<2x16x16x32xf32>, vector<2x16x16x32xf32>, vector<2x16x16x32xf32>, vector<2x16x16x32xf32>, vector<2x16x16x32xf32>, vector<2x16x16x32xf32>, vector<2x16x16x32xf32> -> vector<2x16x16x288xf32>
    %74 = vector.shape_cast %73 : vector<2x16x16x288xf32> to vector<512x288xf32>
    %75 = arith.truncf %74 : vector<512x288xf32> to vector<512x288xbf16>
    %c0_35 = arith.constant 0 : index
    %c0_36 = arith.constant 0 : index
    %76 = vector.load %arg3[%c0_35, %c0_36] : memref<288x32xbf16, #tpu.memory_space<vmem>>, vector<288x32xbf16>
    %cst_37 = arith.constant dense<0.000000e+00> : vector<512x32xf32>
    %77 = tpu.matmul %75, %76, %cst_37 {dimension_numbers = #tpu.dot_dimension_numbers<[1], [0], [0], [1], [0, 0, 1, 1], [], []>} : vector<512x288xbf16>, vector<288x32xbf16>, vector<512x32xf32> -> vector<512x32xf32>
    %78 = vector.shape_cast %77 : vector<512x32xf32> to vector<2x16x16x32xf32>
    %c0_38 = arith.constant 0 : index
    %c0_39 = arith.constant 0 : index
    %79 = vector.load %arg4[%c0_38, %c0_39] : memref<1x32xf32, #tpu.memory_space<vmem>>, vector<1x32xf32>
    %80 = vector.shape_cast %79 : vector<1x32xf32> to vector<1x1x1x32xf32>
    %81 = vector.broadcast %80 : vector<1x1x1x32xf32> to vector<2x16x16x32xf32>
    %82 = arith.addf %78, %81 : vector<2x16x16x32xf32>
    %83 = vector.shape_cast %82 : vector<2x16x16x32xf32> to vector<32x512xf32>
    %c0_40 = arith.constant 0 : index
    %c0_41 = arith.constant 0 : index
    %84 = vector.load %arg10[%c0_40, %c0_41] : memref<32x512xf32, #tpu.memory_space<vmem>>, vector<32x512xf32>
    tpu.vector_store %arg10[%c0_40, %c0_41], %83 {strides = array<i32>} : memref<32x512xf32, #tpu.memory_space<vmem>>, vector<32x512xf32>,
    return
  }
  func.func @transform_0(%arg0: i32) -> (i32, i32, i32, i32) {
    %c0_i32 = arith.constant 0 : i32
    %c0_i32_0 = arith.constant 0 : i32
    %c0_i32_1 = arith.constant 0 : i32
    %c0_i32_2 = arith.constant 0 : i32
    %c0_i32_3 = arith.constant 0 : i32
    return %c0_i32, %c0_i32_0, %c0_i32_1, %c0_i32_2 : i32, i32, i32, i32
  }
  func.func @transform_1(%arg0: i32) -> (i32, i32) {
    %c0_i32 = arith.constant 0 : i32
    %c0_i32_0 = arith.constant 0 : i32
    %c0_i32_1 = arith.constant 0 : i32
    return %c0_i32, %c0_i32_0 : i32, i32
  }
  func.func @transform_2(%arg0: i32) -> (i32, i32) {
    %c0_i32 = arith.constant 0 : i32
    %c0_i32_0 = arith.constant 0 : i32
    %c0_i32_1 = arith.constant 0 : i32
    return %c0_i32, %c0_i32_0 : i32, i32
  }
  func.func @transform_3(%arg0: i32) -> (i32, i32) {
    %c0_i32 = arith.constant 0 : i32
    %c0_i32_0 = arith.constant 0 : i32
    %c0_i32_1 = arith.constant 0 : i32
    return %c0_i32, %c0_i32_0 : i32, i32
  }
  func.func @transform_4(%arg0: i32) -> (i32, i32) {
    %c0_i32 = arith.constant 0 : i32
    %c0_i32_0 = arith.constant 0 : i32
    %c0_i32_1 = arith.constant 0 : i32
    return %c0_i32, %c0_i32_0 : i32, i32
  }
  func.func @transform_5(%arg0: i32) -> (i32, i32) {
    %c0_i32 = arith.constant 0 : i32
    %c0_i32_0 = arith.constant 0 : i32
    %c0_i32_1 = arith.constant 0 : i32
    return %c0_i32, %c0_i32_0 : i32, i32
  }
  func.func @transform_6(%arg0: i32) -> (i32, i32) {
    %c0_i32 = arith.constant 0 : i32
    %c0_i32_0 = arith.constant 0 : i32
    %c0_i32_1 = arith.constant 0 : i32
    return %c0_i32, %c0_i32_0 : i32, i32
  }
  func.func @transform_7(%arg0: i32) -> (i32, i32) {
    %c0_i32 = arith.constant 0 : i32
    %c0_i32_0 = arith.constant 0 : i32
    %c0_i32_1 = arith.constant 0 : i32
    return %c0_i32, %c0_i32_0 : i32, i32
  }
  func.func @transform_8(%arg0: i32) -> (i32, i32) {
    %c0_i32 = arith.constant 0 : i32
    %c0_i32_0 = arith.constant 0 : i32
    %c0_i32_1 = arith.constant 0 : i32
    return %c0_i32, %c0_i32_0 : i32, i32
  }
  func.func @transform_9(%arg0: i32) -> (i32, i32) {
    %c0_i32 = arith.constant 0 : i32
    %c0_i32_0 = arith.constant 0 : i32
    %c0_i32_1 = arith.constant 0 : i32
    return %c0_i32, %c0_i32_0 : i32, i32
  }
}

</mosaic_0001>

<llo_original>
// kernel: tpu_custom_call.1
$region0: #{tpu_custom_call.1}
  #allocation0 [shape = 'u32[]', space=smem, size = 0x4, offset = 0x4, fixed_abs, tag = 'smem constant byte address 0x4 - core index']
  #allocation1 [shape = 'u32[144,128]{1,0:T(1,128)}', space=vmem, size = 0x12000, scoped, tag = 'internal scratch']
  #allocation2 [shape = 'f32[2,18,18,32]{3,2,1,0:T(8,128)}', space=vmem, size = 0x6c000, scoped, tag = 'scratch operand']
  %s0 = inlined_call_operand.vmem [shape: f32[2,18,18,32], index: 0, kind: input, shape index: {}]
  %s1 = inlined_call_operand.vmem [shape: bf16[288,64], index: 1, kind: input, shape index: {}]
  %s2 = inlined_call_operand.vmem [shape: bf16[288,32], index: 2, kind: input, shape index: {}]
  %s3 = inlined_call_operand.vmem [shape: f32[1,32], index: 3, kind: input, shape index: {}]
  %s4 = inlined_call_operand.vmem [shape: f32[32,2], index: 4, kind: input, shape index: {}]
  %s5 = inlined_call_operand.vmem [shape: f32[1,2], index: 5, kind: input, shape index: {}]
  %s6 = inlined_call_operand.vmem [shape: f32[2,32], index: 6, kind: input, shape index: {}]
  %s7 = inlined_call_operand.vmem [shape: f32[1,32], index: 7, kind: input, shape index: {}]
  %s8 = inlined_call_operand.vmem [shape: f32[1,32], index: 8, kind: input, shape index: {}]
  %s9 = inlined_call_operand.hbm [shape: f32[32,512], index: 9, kind: output, shape index: {}]
  %s10 = sld [smem:[#allocation0]]
  $region46: #{tpu_custom_call.1} parent=0
    _
  %s12 = ssub.s32 1, %s10
  %s13 = scalar_select 0, %s12, %s10
  $region1: #{tpu_custom_call.1} parent=0
    #allocation3 [shape = 'u8[65536]{0}', space=vmem, size = 0x10000, scoped, tag = 'output window, operand 0, single buffered']
    #allocation4 [shape = 's32[1]{0}', space=sflag, size = 0x4, scoped, tag = 'scoped memory for tpu_custom_call.1']
    %14 = vsyncpa [#allocation4], 0
    // Predicated region
    $region2: #{tpu_custom_call.1} parent=1 // pred_check
      _
    $region3: #{tpu_custom_call.1} parent=1 // pred_check_branch
      %16 = sbr.rel (0) target = $region5
    $region4: #{tpu_custom_call.1} parent=1 // pred_region
      _
    $region5: #{tpu_custom_call.1} parent=1 // pred_fallthru
      _
    // Predicated region
    $region6: #{tpu_custom_call.1} parent=1 // pred_check
      _
    $region7: #{tpu_custom_call.1} parent=1 // pred_check_branch
      %18 = sbr.rel (0) target = $region9
    $region8: #{tpu_custom_call.1} parent=1 // pred_region
      _
    $region9: #{tpu_custom_call.1} parent=1 // pred_fallthru
      _
    // Predicated region
    $region10: #{tpu_custom_call.1} parent=1 // pred_check
      _
    $region11: #{tpu_custom_call.1} parent=1 // pred_check_branch
      %20 = sbr.rel (0) target = $region13
    $region12: #{tpu_custom_call.1} parent=1 // pred_region
      _
    $region13: #{tpu_custom_call.1} parent=1 // pred_fallthru
      _
    // Predicated region
    $region14: #{tpu_custom_call.1} parent=1 // pred_check
      _
    $region15: #{tpu_custom_call.1} parent=1 // pred_check_branch
      %22 = sbr.rel (0) target = $region17
    $region16: #{tpu_custom_call.1} parent=1 // pred_region
      _
    $region17: #{tpu_custom_call.1} parent=1 // pred_fallthru
      _
    // Predicated region
    $region18: #{tpu_custom_call.1} parent=1 // pred_check
      _
    $region19: #{tpu_custom_call.1} parent=1 // pred_check_branch
      %24 = sbr.rel (0) target = $region21
    $region20: #{tpu_custom_call.1} parent=1 // pred_region
      _
    $region21: #{tpu_custom_call.1} parent=1 // pred_fallthru
      _
    // Predicated region
    $region22: #{tpu_custom_call.1} parent=1 // pred_check
      _
    $region23: #{tpu_custom_call.1} parent=1 // pred_check_branch
      %26 = sbr.rel (0) target = $region25
    $region24: #{tpu_custom_call.1} parent=1 // pred_region
      _
    $region25: #{tpu_custom_call.1} parent=1 // pred_fallthru
      _
    // Predicated region
    $region26: #{tpu_custom_call.1} parent=1 // pred_check
      _
    $region27: #{tpu_custom_call.1} parent=1 // pred_check_branch
      %28 = sbr.rel (0) target = $region29
    $region28: #{tpu_custom_call.1} parent=1 // pred_region
      _
    $region29: #{tpu_custom_call.1} parent=1 // pred_fallthru
      _
    // Predicated region
    $region30: #{tpu_custom_call.1} parent=1 // pred_check
      _
    $region31: #{tpu_custom_call.1} parent=1 // pred_check_branch
      %30 = sbr.rel (0) target = $region33
    $region32: #{tpu_custom_call.1} parent=1 // pred_region
      _
    $region33: #{tpu_custom_call.1} parent=1 // pred_fallthru
      _
    // Predicated region
    $region34: #{tpu_custom_call.1} parent=1 // pred_check
      _
    $region35: #{tpu_custom_call.1} parent=1 // pred_check_branch
      %32 = sbr.rel (0) target = $region37
    $region36: #{tpu_custom_call.1} parent=1 // pred_region
      _
    $region37: #{tpu_custom_call.1} parent=1 // pred_fallthru
      _
    %v34 = vld [vmem:[%s0] sm:$0xff]
    %v35 = vld [vmem:[%s0 + $0x8] sm:$0xff]
    %v36 = vld [vmem:[%s0 + $0x10] sm:$0x3]
    %v37 = vld [vmem:[%s0 + $0x18] sm:$0xff]
    %v38 = vld [vmem:[%s0 + $0x20] sm:$0xff]
    %v39 = vld [vmem:[%s0 + $0x28] sm:$0x3]
    %v40 = vld [vmem:[%s0 + $0x30] sm:$0xff]
    %v41 = vld [vmem:[%s0 + $0x38] sm:$0xff]
    %v42 = vld [vmem:[%s0 + $0x40] sm:$0x3]
    %v43 = vld [vmem:[%s0 + $0x48] sm:$0xff]
    %v44 = vld [vmem:[%s0 + $0x50] sm:$0xff]
    %v45 = vld [vmem:[%s0 + $0x58] sm:$0x3]
    %v46 = vld [vmem:[%s0 + $0x60] sm:$0xff]
    %v47 = vld [vmem:[%s0 + $0x68] sm:$0xff]
    %v48 = vld [vmem:[%s0 + $0x70] sm:$0x3]
    %v49 = vld [vmem:[%s0 + $0x78] sm:$0xff]
    %v50 = vld [vmem:[%s0 + $0x80] sm:$0xff]
    %v51 = vld [vmem:[%s0 + $0x88] sm:$0x3]
    %v52 = vld [vmem:[%s0 + $0x90] sm:$0xff]
    %v53 = vld [vmem:[%s0 + $0x98] sm:$0xff]
    %v54 = vld [vmem:[%s0 + $0xa0] sm:$0x3]
    %v55 = vld [vmem:[%s0 + $0xa8] sm:$0xff]
    %v56 = vld [vmem:[%s0 + $0xb0] sm:$0xff]
    %v57 = vld [vmem:[%s0 + $0xb8] sm:$0x3]
    %v58 = vld [vmem:[%s0 + $0xc0] sm:$0xff]
    %v59 = vld [vmem:[%s0 + $0xc8] sm:$0xff]
    %v60 = vld [vmem:[%s0 + $0xd0] sm:$0x3]
    %v61 = vld [vmem:[%s0 + $0xd8] sm:$0xff]
    %v62 = vld [vmem:[%s0 + $0xe0] sm:$0xff]
    %v63 = vld [vmem:[%s0 + $0xe8] sm:$0x3]
    %v64 = vld [vmem:[%s0 + $0xf0] sm:$0xff]
    %v65 = vld [vmem:[%s0 + $0xf8] sm:$0xff]
    %v66 = vld [vmem:[%s0 + $0x100] sm:$0x3]
    %v67 = vld [vmem:[%s0 + $0x108] sm:$0xff]
    %v68 = vld [vmem:[%s0 + $0x110] sm:$0xff]
    %v69 = vld [vmem:[%s0 + $0x118] sm:$0x3]
    %v70 = vld [vmem:[%s0 + $0x120] sm:$0xff]
    %v71 = vld [vmem:[%s0 + $0x128] sm:$0xff]
    %v72 = vld [vmem:[%s0 + $0x130] sm:$0x3]
    %v73 = vld [vmem:[%s0 + $0x138] sm:$0xff]
    %v74 = vld [vmem:[%s0 + $0x140] sm:$0xff]
    %v75 = vld [vmem:[%s0 + $0x148] sm:$0x3]
    %v76 = vld [vmem:[%s0 + $0x150] sm:$0xff]
    %v77 = vld [vmem:[%s0 + $0x158] sm:$0xff]
    %v78 = vld [vmem:[%s0 + $0x160] sm:$0x3]
    %v79 = vld [vmem:[%s0 + $0x168] sm:$0xff]
    %v80 = vld [vmem:[%s0 + $0x170] sm:$0xff]
    %v81 = vld [vmem:[%s0 + $0x178] sm:$0x3]
    %v82 = vld [vmem:[%s0 + $0x180] sm:$0xff]
    %v83 = vld [vmem:[%s0 + $0x188] sm:$0xff]
    %v84 = vld [vmem:[%s0 + $0x190] sm:$0x3]
    %v85 = vld [vmem:[%s0 + $0x198] sm:$0xff]
    %v86 = vld [vmem:[%s0 + $0x1a0] sm:$0xff]
    %v87 = vld [vmem:[%s0 + $0x1a8] sm:$0x3]
    %v88 = vld [vmem:[%s0 + $0x1b0] sm:$0xff]
    %v89 = vld [vmem:[%s0 + $0x1b8] sm:$0xff]
    %v90 = vld [vmem:[%s0 + $0x1c0] sm:$0x3]
    %v91 = vld [vmem:[%s0 + $0x1c8] sm:$0xff]
    %v92 = vld [vmem:[%s0 + $0x1d0] sm:$0xff]
    %v93 = vld [vmem:[%s0 + $0x1d8] sm:$0x3]
    %v94 = vld [vmem:[%s0 + $0x1e0] sm:$0xff]
    %v95 = vld [vmem:[%s0 + $0x1e8] sm:$0xff]
    %v96 = vld [vmem:[%s0 + $0x1f0] sm:$0x3]
    %v97 = vld [vmem:[%s0 + $0x1f8] sm:$0xff]
    %v98 = vld [vmem:[%s0 + $0x200] sm:$0xff]
    %v99 = vld [vmem:[%s0 + $0x208] sm:$0x3]
    %v100 = vld [vmem:[%s0 + $0x210] sm:$0xff]
    %v101 = vld [vmem:[%s0 + $0x218] sm:$0xff]
    %v102 = vld [vmem:[%s0 + $0x220] sm:$0x3]
    %v103 = vld [vmem:[%s0 + $0x228] sm:$0xff]
    %v104 = vld [vmem:[%s0 + $0x230] sm:$0xff]
    %v105 = vld [vmem:[%s0 + $0x238] sm:$0x3]
    %v106 = vld [vmem:[%s0 + $0x240] sm:$0xff]
    %v107 = vld [vmem:[%s0 + $0x248] sm:$0xff]
    %v108 = vld [vmem:[%s0 + $0x250] sm:$0x3]
    %v109 = vld [vmem:[%s0 + $0x258] sm:$0xff]
    %v110 = vld [vmem:[%s0 + $0x260] sm:$0xff]
    %v111 = vld [vmem:[%s0 + $0x268] sm:$0x3]
    %v112 = vld [vmem:[%s0 + $0x270] sm:$0xff]
    %v113 = vld [vmem:[%s0 + $0x278] sm:$0xff]
    %v114 = vld [vmem:[%s0 + $0x280] sm:$0x3]
    %v115 = vld [vmem:[%s0 + $0x288] sm:$0xff]
    %v116 = vld [vmem:[%s0 + $0x290] sm:$0xff]
    %v117 = vld [vmem:[%s0 + $0x298] sm:$0x3]
    %v118 = vld [vmem:[%s0 + $0x2a0] sm:$0xff]
    %v119 = vld [vmem:[%s0 + $0x2a8] sm:$0xff]
    %v120 = vld [vmem:[%s0 + $0x2b0] sm:$0x3]
    %v121 = vld [vmem:[%s0 + $0x2b8] sm:$0xff]
    %v122 = vld [vmem:[%s0 + $0x2c0] sm:$0xff]
    %v123 = vld [vmem:[%s0 + $0x2c8] sm:$0x3]
    %v124 = vld [vmem:[%s0 + $0x2d0] sm:$0xff]
    %v125 = vld [vmem:[%s0 + $0x2d8] sm:$0xff]
    %v126 = vld [vmem:[%s0 + $0x2e0] sm:$0x3]
    %v127 = vld [vmem:[%s0 + $0x2e8] sm:$0xff]
    %v128 = vld [vmem:[%s0 + $0x2f0] sm:$0xff]
    %v129 = vld [vmem:[%s0 + $0x2f8] sm:$0x3]
    %v130 = vld [vmem:[%s0 + $0x300] sm:$0xff]
    %v131 = vld [vmem:[%s0 + $0x308] sm:$0xff]
    %v132 = vld [vmem:[%s0 + $0x310] sm:$0x3]
    %v133 = vld [vmem:[%s0 + $0x318] sm:$0xff]
    %v134 = vld [vmem:[%s0 + $0x320] sm:$0xff]
    %v135 = vld [vmem:[%s0 + $0x328] sm:$0x3]
    %v136 = vld [vmem:[%s0 + $0x330] sm:$0xff]
    %v137 = vld [vmem:[%s0 + $0x338] sm:$0xff]
    %v138 = vld [vmem:[%s0 + $0x340] sm:$0x3]
    %v139 = vld [vmem:[%s0 + $0x348] sm:$0xff]
    %v140 = vld [vmem:[%s0 + $0x350] sm:$0xff]
    %v141 = vld [vmem:[%s0 + $0x358] sm:$0x3]
    %vm238 = vcmask 1046528
    %v239 = vrot.slane %v34, 1
    %v240 = vrot.slane %v35, 1
    %v241 = vsel %vm238, %v239, %v240
    %v242 = vrot.slane %v36, 1
    %v243 = vsel %vm238, %v240, %v242
    %v244 = vrot.slane %v37, 1
    %v245 = vrot.slane %v38, 1
    %v246 = vsel %vm238, %v244, %v245
    %v247 = vrot.slane %v39, 1
    %v248 = vsel %vm238, %v245, %v247
    %v249 = vrot.slane %v40, 1
    %v250 = vrot.slane %v41, 1
    %v251 = vsel %vm238, %v249, %v250
    %v252 = vrot.slane %v42, 1
    %v253 = vsel %vm238, %v250, %v252
    %v254 = vrot.slane %v43, 1
    %v255 = vrot.slane %v44, 1
    %v256 = vsel %vm238, %v254, %v255
    %v257 = vrot.slane %v45, 1
    %v258 = vsel %vm238, %v255, %v257
    %v259 = vrot.slane %v46, 1
    %v260 = vrot.slane %v47, 1
    %v261 = vsel %vm238, %v259, %v260
    %v262 = vrot.slane %v48, 1
    %v263 = vsel %vm238, %v260, %v262
    %v264 = vrot.slane %v49, 1
    %v265 = vrot.slane %v50, 1
    %v266 = vsel %vm238, %v264, %v265
    %v267 = vrot.slane %v51, 1
    %v268 = vsel %vm238, %v265, %v267
    %v269 = vrot.slane %v52, 1
    %v270 = vrot.slane %v53, 1
    %v271 = vsel %vm238, %v269, %v270
    %v272 = vrot.slane %v54, 1
    %v273 = vsel %vm238, %v270, %v272
    %v274 = vrot.slane %v55, 1
    %v275 = vrot.slane %v56, 1
    %v276 = vsel %vm238, %v274, %v275
    %v277 = vrot.slane %v57, 1
    %v278 = vsel %vm238, %v275, %v277
    %v279 = vrot.slane %v58, 1
    %v280 = vrot.slane %v59, 1
    %v281 = vsel %vm238, %v279, %v280
    %v282 = vrot.slane %v60, 1
    %v283 = vsel %vm238, %v280, %v282
    %v284 = vrot.slane %v61, 1
    %v285 = vrot.slane %v62, 1
    %v286 = vsel %vm238, %v284, %v285
    %v287 = vrot.slane %v63, 1
    %v288 = vsel %vm238, %v285, %v287
    %v289 = vrot.slane %v64, 1
    %v290 = vrot.slane %v65, 1
    %v291 = vsel %vm238, %v289, %v290
    %v292 = vrot.slane %v66, 1
    %v293 = vsel %vm238, %v290, %v292
    %v294 = vrot.slane %v67, 1
    %v295 = vrot.slane %v68, 1
    %v296 = vsel %vm238, %v294, %v295
    %v297 = vrot.slane %v69, 1
    %v298 = vsel %vm238, %v295, %v297
    %v299 = vrot.slane %v70, 1
    %v300 = vrot.slane %v71, 1
    %v301 = vsel %vm238, %v299, %v300
    %v302 = vrot.slane %v72, 1
    %v303 = vsel %vm238, %v300, %v302
    %v304 = vrot.slane %v73, 1
    %v305 = vrot.slane %v74, 1
    %v306 = vsel %vm238, %v304, %v305
    %v307 = vrot.slane %v75, 1
    %v308 = vsel %vm238, %v305, %v307
    %v309 = vrot.slane %v76, 1
    %v310 = vrot.slane %v77, 1
    %v311 = vsel %vm238, %v309, %v310
    %v312 = vrot.slane %v78, 1
    %v313 = vsel %vm238, %v310, %v312
    %v314 = vrot.slane %v79, 1
    %v315 = vrot.slane %v80, 1
    %v316 = vsel %vm238, %v314, %v315
    %v317 = vrot.slane %v81, 1
    %v318 = vsel %vm238, %v315, %v317
    %v319 = vrot.slane %v88, 1
    %v320 = vrot.slane %v89, 1
    %v321 = vsel %vm238, %v319, %v320
    %v322 = vrot.slane %v90, 1
    %v323 = vsel %vm238, %v320, %v322
    %v324 = vrot.slane %v91, 1
    %v325 = vrot.slane %v92, 1
    %v326 = vsel %vm238, %v324, %v325
    %v327 = vrot.slane %v93, 1
    %v328 = vsel %vm238, %v325, %v327
    %v329 = vrot.slane %v94, 1
    %v330 = vrot.slane %v95, 1
    %v331 = vsel %vm238, %v329, %v330
    %v332 = vrot.slane %v96, 1
    %v333 = vsel %vm238, %v330, %v332
    %v334 = vrot.slane %v97, 1
    %v335 = vrot.slane %v98, 1
    %v336 = vsel %vm238, %v334, %v335
    %v337 = vrot.slane %v99, 1
    %v338 = vsel %vm238, %v335, %v337
    %v339 = vrot.slane %v100, 1
    %v340 = vrot.slane %v101, 1
    %v341 = vsel %vm238, %v339, %v340
    %v342 = vrot.slane %v102, 1
    %v343 = vsel %vm238, %v340, %v342
    %v344 = vrot.slane %v103, 1
    %v345 = vrot.slane %v104, 1
    %v346 = vsel %vm238, %v344, %v345
    %v347 = vrot.slane %v105, 1
    %v348 = vsel %vm238, %v345, %v347
    %v349 = vrot.slane %v106, 1
    %v350 = vrot.slane %v107, 1
    %v351 = vsel %vm238, %v349, %v350
    %v352 = vrot.slane %v108, 1
    %v353 = vsel %vm238, %v350, %v352
    %v354 = vrot.slane %v109, 1
    %v355 = vrot.slane %v110, 1
    %v356 = vsel %vm238, %v354, %v355
    %v357 = vrot.slane %v111, 1
    %v358 = vsel %vm238, %v355, %v357
    %v359 = vrot.slane %v112, 1
    %v360 = vrot.slane %v113, 1
    %v361 = vsel %vm238, %v359, %v360
    %v362 = vrot.slane %v114, 1
    %v363 = vsel %vm238, %v360, %v362
    %v364 = vrot.slane %v115, 1
    %v365 = vrot.slane %v116, 1
    %v366 = vsel %vm238, %v364, %v365
    %v367 = vrot.slane %v117, 1
    %v368 = vsel %vm238, %v365, %v367
    %v369 = vrot.slane %v118, 1
    %v370 = vrot.slane %v119, 1
    %v371 = vsel %vm238, %v369, %v370
    %v372 = vrot.slane %v120, 1
    %v373 = vsel %vm238, %v370, %v372
    %v374 = vrot.slane %v121, 1
    %v375 = vrot.slane %v122, 1
    %v376 = vsel %vm238, %v374, %v375
    %v377 = vrot.slane %v123, 1
    %v378 = vsel %vm238, %v375, %v377
    %v379 = vrot.slane %v124, 1
    %v380 = vrot.slane %v125, 1
    %v381 = vsel %vm238, %v379, %v380
    %v382 = vrot.slane %v126, 1
    %v383 = vsel %vm238, %v380, %v382
    %v384 = vrot.slane %v127, 1
    %v385 = vrot.slane %v128, 1
    %v386 = vsel %vm238, %v384, %v385
    %v387 = vrot.slane %v129, 1
    %v388 = vsel %vm238, %v385, %v387
    %v389 = vrot.slane %v130, 1
    %v390 = vrot.slane %v131, 1
    %v391 = vsel %vm238, %v389, %v390
    %v392 = vrot.slane %v132, 1
    %v393 = vsel %vm238, %v390, %v392
    %v394 = vrot.slane %v133, 1
    %v395 = vrot.slane %v134, 1
    %v396 = vsel %vm238, %v394, %v395
    %v397 = vrot.slane %v135, 1
    %v398 = vsel %vm238, %v395, %v397
    %399 = vrot.lane.b32.xlu0 %v241, 32
    %v400 = vpop.permute.xlu0 %399
    %401 = vrot.lane.b32.xlu0 %v243, 32
    %v402 = vpop.permute.xlu0 %401
    %403 = vrot.lane.b32.xlu0 %v246, 32
    %v404 = vpop.permute.xlu0 %403
    %405 = vrot.lane.b32.xlu0 %v248, 32
    %v406 = vpop.permute.xlu0 %405
    %407 = vrot.lane.b32.xlu0 %v251, 32
    %v408 = vpop.permute.xlu0 %407
    %409 = vrot.lane.b32.xlu0 %v253, 32
    %v410 = vpop.permute.xlu0 %409
    %411 = vrot.lane.b32.xlu0 %v256, 32
    %v412 = vpop.permute.xlu0 %411
    %413 = vrot.lane.b32.xlu0 %v258, 32
    %v414 = vpop.permute.xlu0 %413
    %415 = vrot.lane.b32.xlu0 %v261, 32
    %v416 = vpop.permute.xlu0 %415
    %417 = vrot.lane.b32.xlu0 %v263, 32
    %v418 = vpop.permute.xlu0 %417
    %419 = vrot.lane.b32.xlu0 %v266, 32
    %v420 = vpop.permute.xlu0 %419
    %421 = vrot.lane.b32.xlu0 %v268, 32
    %v422 = vpop.permute.xlu0 %421
    %423 = vrot.lane.b32.xlu0 %v271, 32
    %v424 = vpop.permute.xlu0 %423
    %425 = vrot.lane.b32.xlu0 %v273, 32
    %v426 = vpop.permute.xlu0 %425
    %427 = vrot.lane.b32.xlu0 %v276, 32
    %v428 = vpop.permute.xlu0 %427
    %429 = vrot.lane.b32.xlu0 %v278, 32
    %v430 = vpop.permute.xlu0 %429
    %431 = vrot.lane.b32.xlu0 %v281, 32
    %v432 = vpop.permute.xlu0 %431
    %433 = vrot.lane.b32.xlu0 %v283, 32
    %v434 = vpop.permute.xlu0 %433
    %435 = vrot.lane.b32.xlu0 %v286, 32
    %v436 = vpop.permute.xlu0 %435
    %437 = vrot.lane.b32.xlu0 %v288, 32
    %v438 = vpop.permute.xlu0 %437
    %439 = vrot.lane.b32.xlu0 %v291, 32
    %v440 = vpop.permute.xlu0 %439
    %441 = vrot.lane.b32.xlu0 %v293, 32
    %v442 = vpop.permute.xlu0 %441
    %443 = vrot.lane.b32.xlu0 %v296, 32
    %v444 = vpop.permute.xlu0 %443
    %445 = vrot.lane.b32.xlu0 %v298, 32
    %v446 = vpop.permute.xlu0 %445
    %447 = vrot.lane.b32.xlu0 %v301, 32
    %v448 = vpop.permute.xlu0 %447
    %449 = vrot.lane.b32.xlu0 %v303, 32
    %v450 = vpop.permute.xlu0 %449
    %451 = vrot.lane.b32.xlu0 %v306, 32
    %v452 = vpop.permute.xlu0 %451
    %453 = vrot.lane.b32.xlu0 %v308, 32
    %v454 = vpop.permute.xlu0 %453
    %455 = vrot.lane.b32.xlu0 %v311, 32
    %v456 = vpop.permute.xlu0 %455
    %457 = vrot.lane.b32.xlu0 %v313, 32
    %v458 = vpop.permute.xlu0 %457
    %459 = vrot.lane.b32.xlu0 %v316, 32
    %v460 = vpop.permute.xlu0 %459
    %461 = vrot.lane.b32.xlu0 %v318, 32
    %v462 = vpop.permute.xlu0 %461
    %463 = vrot.lane.b32.xlu0 %v321, 32
    %v464 = vpop.permute.xlu0 %463
    %465 = vrot.lane.b32.xlu0 %v323, 32
    %v466 = vpop.permute.xlu0 %465
    %467 = vrot.lane.b32.xlu0 %v326, 32
    %v468 = vpop.permute.xlu0 %467
    %469 = vrot.lane.b32.xlu0 %v328, 32
    %v470 = vpop.permute.xlu0 %469
    %471 = vrot.lane.b32.xlu0 %v331, 32
    %v472 = vpop.permute.xlu0 %471
    %473 = vrot.lane.b32.xlu0 %v333, 32
    %v474 = vpop.permute.xlu0 %473
    %475 = vrot.lane.b32.xlu0 %v336, 32
    %v476 = vpop.permute.xlu0 %475
    %477 = vrot.lane.b32.xlu0 %v338, 32
    %v478 = vpop.permute.xlu0 %477
    %479 = vrot.lane.b32.xlu0 %v341, 32
    %v480 = vpop.permute.xlu0 %479
    %481 = vrot.lane.b32.xlu0 %v343, 32
    %v482 = vpop.permute.xlu0 %481
    %483 = vrot.lane.b32.xlu0 %v346, 32
    %v484 = vpop.permute.xlu0 %483
    %485 = vrot.lane.b32.xlu0 %v348, 32
    %v486 = vpop.permute.xlu0 %485
    %487 = vrot.lane.b32.xlu0 %v351, 32
    %v488 = vpop.permute.xlu0 %487
    %489 = vrot.lane.b32.xlu0 %v353, 32
    %v490 = vpop.permute.xlu0 %489
    %491 = vrot.lane.b32.xlu0 %v356, 32
    %v492 = vpop.permute.xlu0 %491
    %493 = vrot.lane.b32.xlu0 %v358, 32
    %v494 = vpop.permute.xlu0 %493
    %495 = vrot.lane.b32.xlu0 %v361, 32
    %v496 = vpop.permute.xlu0 %495
    %497 = vrot.lane.b32.xlu0 %v363, 32
    %v498 = vpop.permute.xlu0 %497
    %499 = vrot.lane.b32.xlu0 %v366, 32
    %v500 = vpop.permute.xlu0 %499
    %501 = vrot.lane.b32.xlu0 %v368, 32
    %v502 = vpop.permute.xlu0 %501
    %503 = vrot.lane.b32.xlu0 %v371, 32
    %v504 = vpop.permute.xlu0 %503
    %505 = vrot.lane.b32.xlu0 %v373, 32
    %v506 = vpop.permute.xlu0 %505
    %507 = vrot.lane.b32.xlu0 %v376, 32
    %v508 = vpop.permute.xlu0 %507
    %509 = vrot.lane.b32.xlu0 %v378, 32
    %v510 = vpop.permute.xlu0 %509
    %511 = vrot.lane.b32.xlu0 %v381, 32
    %v512 = vpop.permute.xlu0 %511
    %513 = vrot.lane.b32.xlu0 %v383, 32
    %v514 = vpop.permute.xlu0 %513
    %515 = vrot.lane.b32.xlu0 %v386, 32
    %v516 = vpop.permute.xlu0 %515
    %517 = vrot.lane.b32.xlu0 %v388, 32
    %v518 = vpop.permute.xlu0 %517
    %519 = vrot.lane.b32.xlu0 %v391, 32
    %v520 = vpop.permute.xlu0 %519
    %521 = vrot.lane.b32.xlu0 %v393, 32
    %v522 = vpop.permute.xlu0 %521
    %523 = vrot.lane.b32.xlu0 %v396, 32
    %v524 = vpop.permute.xlu0 %523
    %525 = vrot.lane.b32.xlu0 %v398, 32
    %v526 = vpop.permute.xlu0 %525
    %vm591 = vcmask 1045504
    %v592 = vrot.slane %v34, 2
    %v593 = vrot.slane %v35, 2
    %v594 = vsel %vm591, %v592, %v593
    %v595 = vrot.slane %v36, 2
    %v596 = vsel %vm591, %v593, %v595
    %v597 = vrot.slane %v37, 2
    %v598 = vrot.slane %v38, 2
    %v599 = vsel %vm591, %v597, %v598
    %v600 = vrot.slane %v39, 2
    %v601 = vsel %vm591, %v598, %v600
    %v602 = vrot.slane %v40, 2
    %v603 = vrot.slane %v41, 2
    %v604 = vsel %vm591, %v602, %v603
    %v605 = vrot.slane %v42, 2
    %v606 = vsel %vm591, %v603, %v605
    %v607 = vrot.slane %v43, 2
    %v608 = vrot.slane %v44, 2
    %v609 = vsel %vm591, %v607, %v608
    %v610 = vrot.slane %v45, 2
    %v611 = vsel %vm591, %v608, %v610
    %v612 = vrot.slane %v46, 2
    %v613 = vrot.slane %v47, 2
    %v614 = vsel %vm591, %v612, %v613
    %v615 = vrot.slane %v48, 2
    %v616 = vsel %vm591, %v613, %v615
    %v617 = vrot.slane %v49, 2
    %v618 = vrot.slane %v50, 2
    %v619 = vsel %vm591, %v617, %v618
    %v620 = vrot.slane %v51, 2
    %v621 = vsel %vm591, %v618, %v620
    %v622 = vrot.slane %v52, 2
    %v623 = vrot.slane %v53, 2
    %v624 = vsel %vm591, %v622, %v623
    %v625 = vrot.slane %v54, 2
    %v626 = vsel %vm591, %v623, %v625
    %v627 = vrot.slane %v55, 2
    %v628 = vrot.slane %v56, 2
    %v629 = vsel %vm591, %v627, %v628
    %v630 = vrot.slane %v57, 2
    %v631 = vsel %vm591, %v628, %v630
    %v632 = vrot.slane %v58, 2
    %v633 = vrot.slane %v59, 2
    %v634 = vsel %vm591, %v632, %v633
    %v635 = vrot.slane %v60, 2
    %v636 = vsel %vm591, %v633, %v635
    %v637 = vrot.slane %v61, 2
    %v638 = vrot.slane %v62, 2
    %v639 = vsel %vm591, %v637, %v638
    %v640 = vrot.slane %v63, 2
    %v641 = vsel %vm591, %v638, %v640
    %v642 = vrot.slane %v64, 2
    %v643 = vrot.slane %v65, 2
    %v644 = vsel %vm591, %v642, %v643
    %v645 = vrot.slane %v66, 2
    %v646 = vsel %vm591, %v643, %v645
    %v647 = vrot.slane %v67, 2
    %v648 = vrot.slane %v68, 2
    %v649 = vsel %vm591, %v647, %v648
    %v650 = vrot.slane %v69, 2
    %v651 = vsel %vm591, %v648, %v650
    %v652 = vrot.slane %v70, 2
    %v653 = vrot.slane %v71, 2
    %v654 = vsel %vm591, %v652, %v653
    %v655 = vrot.slane %v72, 2
    %v656 = vsel %vm591, %v653, %v655
    %v657 = vrot.slane %v73, 2
    %v658 = vrot.slane %v74, 2
    %v659 = vsel %vm591, %v657, %v658
    %v660 = vrot.slane %v75, 2
    %v661 = vsel %vm591, %v658, %v660
    %v662 = vrot.slane %v76, 2
    %v663 = vrot.slane %v77, 2
    %v664 = vsel %vm591, %v662, %v663
    %v665 = vrot.slane %v78, 2
    %v666 = vsel %vm591, %v663, %v665
    %v667 = vrot.slane %v79, 2
    %v668 = vrot.slane %v80, 2
    %v669 = vsel %vm591, %v667, %v668
    %v670 = vrot.slane %v81, 2
    %v671 = vsel %vm591, %v668, %v670
    %v672 = vrot.slane %v88, 2
    %v673 = vrot.slane %v89, 2
    %v674 = vsel %vm591, %v672, %v673
    %v675 = vrot.slane %v90, 2
    %v676 = vsel %vm591, %v673, %v675
    %v677 = vrot.slane %v91, 2
    %v678 = vrot.slane %v92, 2
    %v679 = vsel %vm591, %v677, %v678
    %v680 = vrot.slane %v93, 2
    %v681 = vsel %vm591, %v678, %v680
    %v682 = vrot.slane %v94, 2
    %v683 = vrot.slane %v95, 2
    %v684 = vsel %vm591, %v682, %v683
    %v685 = vrot.slane %v96, 2
    %v686 = vsel %vm591, %v683, %v685
    %v687 = vrot.slane %v97, 2
    %v688 = vrot.slane %v98, 2
    %v689 = vsel %vm591, %v687, %v688
    %v690 = vrot.slane %v99, 2
    %v691 = vsel %vm591, %v688, %v690
    %v692 = vrot.slane %v100, 2
    %v693 = vrot.slane %v101, 2
    %v694 = vsel %vm591, %v692, %v693
    %v695 = vrot.slane %v102, 2
    %v696 = vsel %vm591, %v693, %v695
    %v697 = vrot.slane %v103, 2
    %v698 = vrot.slane %v104, 2
    %v699 = vsel %vm591, %v697, %v698
    %v700 = vrot.slane %v105, 2
    %v701 = vsel %vm591, %v698, %v700
    %v702 = vrot.slane %v106, 2
    %v703 = vrot.slane %v107, 2
    %v704 = vsel %vm591, %v702, %v703
    %v705 = vrot.slane %v108, 2
    %v706 = vsel %vm591, %v703, %v705
    %v707 = vrot.slane %v109, 2
    %v708 = vrot.slane %v110, 2
    %v709 = vsel %vm591, %v707, %v708
    %v710 = vrot.slane %v111, 2
    %v711 = vsel %vm591, %v708, %v710
    %v712 = vrot.slane %v112, 2
    %v713 = vrot.slane %v113, 2
    %v714 = vsel %vm591, %v712, %v713
    %v715 = vrot.slane %v114, 2
    %v716 = vsel %vm591, %v713, %v715
    %v717 = vrot.slane %v115, 2
    %v718 = vrot.slane %v116, 2
    %v719 = vsel %vm591, %v717, %v718
    %v720 = vrot.slane %v117, 2
    %v721 = vsel %vm591, %v718, %v720
    %v722 = vrot.slane %v118, 2
    %v723 = vrot.slane %v119, 2
    %v724 = vsel %vm591, %v722, %v723
    %v725 = vrot.slane %v120, 2
    %v726 = vsel %vm591, %v723, %v725
    %v727 = vrot.slane %v121, 2
    %v728 = vrot.slane %v122, 2
    %v729 = vsel %vm591, %v727, %v728
    %v730 = vrot.slane %v123, 2
    %v731 = vsel %vm591, %v728, %v730
    %v732 = vrot.slane %v124, 2
    %v733 = vrot.slane %v125, 2
    %v734 = vsel %vm591, %v732, %v733
    %v735 = vrot.slane %v126, 2
    %v736 = vsel %vm591, %v733, %v735
    %v737 = vrot.slane %v127, 2
    %v738 = vrot.slane %v128, 2
    %v739 = vsel %vm591, %v737, %v738
    %v740 = vrot.slane %v129, 2
    %v741 = vsel %vm591, %v738, %v740
    %v742 = vrot.slane %v130, 2
    %v743 = vrot.slane %v131, 2
    %v744 = vsel %vm591, %v742, %v743
    %v745 = vrot.slane %v132, 2
    %v746 = vsel %vm591, %v743, %v745
    %v747 = vrot.slane %v133, 2
    %v748 = vrot.slane %v134, 2
    %v749 = vsel %vm591, %v747, %v748
    %v750 = vrot.slane %v135, 2
    %v751 = vsel %vm591, %v748, %v750
    %752 = vrot.lane.b32.xlu0 %v594, 64
    %v753 = vpop.permute.xlu0 %752
    %754 = vrot.lane.b32.xlu0 %v596, 64
    %v755 = vpop.permute.xlu0 %754
    %756 = vrot.lane.b32.xlu0 %v599, 64
    %v757 = vpop.permute.xlu0 %756
    %758 = vrot.lane.b32.xlu0 %v601, 64
    %v759 = vpop.permute.xlu0 %758
    %760 = vrot.lane.b32.xlu0 %v604, 64
    %v761 = vpop.permute.xlu0 %760
    %762 = vrot.lane.b32.xlu0 %v606, 64
    %v763 = vpop.permute.xlu0 %762
    %764 = vrot.lane.b32.xlu0 %v609, 64
    %v765 = vpop.permute.xlu0 %764
    %766 = vrot.lane.b32.xlu0 %v611, 64
    %v767 = vpop.permute.xlu0 %766
    %768 = vrot.lane.b32.xlu0 %v614, 64
    %v769 = vpop.permute.xlu0 %768
    %770 = vrot.lane.b32.xlu0 %v616, 64
    %v771 = vpop.permute.xlu0 %770
    %772 = vrot.lane.b32.xlu0 %v619, 64
    %v773 = vpop.permute.xlu0 %772
    %774 = vrot.lane.b32.xlu0 %v621, 64
    %v775 = vpop.permute.xlu0 %774
    %776 = vrot.lane.b32.xlu0 %v624, 64
    %v777 = vpop.permute.xlu0 %776
    %778 = vrot.lane.b32.xlu0 %v626, 64
    %v779 = vpop.permute.xlu0 %778
    %780 = vrot.lane.b32.xlu0 %v629, 64
    %v781 = vpop.permute.xlu0 %780
    %782 = vrot.lane.b32.xlu0 %v631, 64
    %v783 = vpop.permute.xlu0 %782
    %784 = vrot.lane.b32.xlu0 %v634, 64
    %v785 = vpop.permute.xlu0 %784
    %786 = vrot.lane.b32.xlu0 %v636, 64
    %v787 = vpop.permute.xlu0 %786
    %788 = vrot.lane.b32.xlu0 %v639, 64
    %v789 = vpop.permute.xlu0 %788
    %790 = vrot.lane.b32.xlu0 %v641, 64
    %v791 = vpop.permute.xlu0 %790
    %792 = vrot.lane.b32.xlu0 %v644, 64
    %v793 = vpop.permute.xlu0 %792
    %794 = vrot.lane.b32.xlu0 %v646, 64
    %v795 = vpop.permute.xlu0 %794
    %796 = vrot.lane.b32.xlu0 %v649, 64
    %v797 = vpop.permute.xlu0 %796
    %798 = vrot.lane.b32.xlu0 %v651, 64
    %v799 = vpop.permute.xlu0 %798
    %800 = vrot.lane.b32.xlu0 %v654, 64
    %v801 = vpop.permute.xlu0 %800
    %802 = vrot.lane.b32.xlu0 %v656, 64
    %v803 = vpop.permute.xlu0 %802
    %804 = vrot.lane.b32.xlu0 %v659, 64
    %v805 = vpop.permute.xlu0 %804
    %806 = vrot.lane.b32.xlu0 %v661, 64
    %v807 = vpop.permute.xlu0 %806
    %808 = vrot.lane.b32.xlu0 %v664, 64
    %v809 = vpop.permute.xlu0 %808
    %810 = vrot.lane.b32.xlu0 %v666, 64
    %v811 = vpop.permute.xlu0 %810
    %812 = vrot.lane.b32.xlu0 %v669, 64
    %v813 = vpop.permute.xlu0 %812
    %814 = vrot.lane.b32.xlu0 %v671, 64
    %v815 = vpop.permute.xlu0 %814
    %816 = vrot.lane.b32.xlu0 %v674, 64
    %v817 = vpop.permute.xlu0 %816
    %818 = vrot.lane.b32.xlu0 %v676, 64
    %v819 = vpop.permute.xlu0 %818
    %820 = vrot.lane.b32.xlu0 %v679, 64
    %v821 = vpop.permute.xlu0 %820
    %822 = vrot.lane.b32.xlu0 %v681, 64
    %v823 = vpop.permute.xlu0 %822
    %824 = vrot.lane.b32.xlu0 %v684, 64
    %v825 = vpop.permute.xlu0 %824
    %826 = vrot.lane.b32.xlu0 %v686, 64
    %v827 = vpop.permute.xlu0 %826
    %828 = vrot.lane.b32.xlu0 %v689, 64
    %v829 = vpop.permute.xlu0 %828
    %830 = vrot.lane.b32.xlu0 %v691, 64
    %v831 = vpop.permute.xlu0 %830
    %832 = vrot.lane.b32.xlu0 %v694, 64
    %v833 = vpop.permute.xlu0 %832
    %834 = vrot.lane.b32.xlu0 %v696, 64
    %v835 = vpop.permute.xlu0 %834
    %836 = vrot.lane.b32.xlu0 %v699, 64
    %v837 = vpop.permute.xlu0 %836
    %838 = vrot.lane.b32.xlu0 %v701, 64
    %v839 = vpop.permute.xlu0 %838
    %840 = vrot.lane.b32.xlu0 %v704, 64
    %v841 = vpop.permute.xlu0 %840
    %842 = vrot.lane.b32.xlu0 %v706, 64
    %v843 = vpop.permute.xlu0 %842
    %844 = vrot.lane.b32.xlu0 %v709, 64
    %v845 = vpop.permute.xlu0 %844
    %846 = vrot.lane.b32.xlu0 %v711, 64
    %v847 = vpop.permute.xlu0 %846
    %848 = vrot.lane.b32.xlu0 %v714, 64
    %v849 = vpop.permute.xlu0 %848
    %850 = vrot.lane.b32.xlu0 %v716, 64
    %v851 = vpop.permute.xlu0 %850
    %852 = vrot.lane.b32.xlu0 %v719, 64
    %v853 = vpop.permute.xlu0 %852
    %854 = vrot.lane.b32.xlu0 %v721, 64
    %v855 = vpop.permute.xlu0 %854
    %856 = vrot.lane.b32.xlu0 %v724, 64
    %v857 = vpop.permute.xlu0 %856
    %858 = vrot.lane.b32.xlu0 %v726, 64
    %v859 = vpop.permute.xlu0 %858
    %860 = vrot.lane.b32.xlu0 %v729, 64
    %v861 = vpop.permute.xlu0 %860
    %862 = vrot.lane.b32.xlu0 %v731, 64
    %v863 = vpop.permute.xlu0 %862
    %864 = vrot.lane.b32.xlu0 %v734, 64
    %v865 = vpop.permute.xlu0 %864
    %866 = vrot.lane.b32.xlu0 %v736, 64
    %v867 = vpop.permute.xlu0 %866
    %868 = vrot.lane.b32.xlu0 %v739, 64
    %v869 = vpop.permute.xlu0 %868
    %870 = vrot.lane.b32.xlu0 %v741, 64
    %v871 = vpop.permute.xlu0 %870
    %872 = vrot.lane.b32.xlu0 %v744, 64
    %v873 = vpop.permute.xlu0 %872
    %874 = vrot.lane.b32.xlu0 %v746, 64
    %v875 = vpop.permute.xlu0 %874
    %876 = vrot.lane.b32.xlu0 %v749, 64
    %v877 = vpop.permute.xlu0 %876
    %878 = vrot.lane.b32.xlu0 %v751, 64
    %v879 = vpop.permute.xlu0 %878
    %948 = vrot.lane.b32.xlu0 %v37, 96
    %v949 = vpop.permute.xlu0 %948
    %950 = vrot.lane.b32.xlu0 %v38, 96
    %v951 = vpop.permute.xlu0 %950
    %952 = vrot.lane.b32.xlu0 %v40, 96
    %v953 = vpop.permute.xlu0 %952
    %954 = vrot.lane.b32.xlu0 %v41, 96
    %v955 = vpop.permute.xlu0 %954
    %956 = vrot.lane.b32.xlu0 %v43, 96
    %v957 = vpop.permute.xlu0 %956
    %958 = vrot.lane.b32.xlu0 %v44, 96
    %v959 = vpop.permute.xlu0 %958
    %960 = vrot.lane.b32.xlu0 %v46, 96
    %v961 = vpop.permute.xlu0 %960
    %962 = vrot.lane.b32.xlu0 %v47, 96
    %v963 = vpop.permute.xlu0 %962
    %964 = vrot.lane.b32.xlu0 %v49, 96
    %v965 = vpop.permute.xlu0 %964
    %966 = vrot.lane.b32.xlu0 %v50, 96
    %v967 = vpop.permute.xlu0 %966
    %968 = vrot.lane.b32.xlu0 %v52, 96
    %v969 = vpop.permute.xlu0 %968
    %970 = vrot.lane.b32.xlu0 %v53, 96
    %v971 = vpop.permute.xlu0 %970
    %972 = vrot.lane.b32.xlu0 %v55, 96
    %v973 = vpop.permute.xlu0 %972
    %974 = vrot.lane.b32.xlu0 %v56, 96
    %v975 = vpop.permute.xlu0 %974
    %976 = vrot.lane.b32.xlu0 %v58, 96
    %v977 = vpop.permute.xlu0 %976
    %978 = vrot.lane.b32.xlu0 %v59, 96
    %v979 = vpop.permute.xlu0 %978
    %980 = vrot.lane.b32.xlu0 %v61, 96
    %v981 = vpop.permute.xlu0 %980
    %982 = vrot.lane.b32.xlu0 %v62, 96
    %v983 = vpop.permute.xlu0 %982
    %984 = vrot.lane.b32.xlu0 %v64, 96
    %v985 = vpop.permute.xlu0 %984
    %986 = vrot.lane.b32.xlu0 %v65, 96
    %v987 = vpop.permute.xlu0 %986
    %988 = vrot.lane.b32.xlu0 %v67, 96
    %v989 = vpop.permute.xlu0 %988
    %990 = vrot.lane.b32.xlu0 %v68, 96
    %v991 = vpop.permute.xlu0 %990
    %992 = vrot.lane.b32.xlu0 %v70, 96
    %v993 = vpop.permute.xlu0 %992
    %994 = vrot.lane.b32.xlu0 %v71, 96
    %v995 = vpop.permute.xlu0 %994
    %996 = vrot.lane.b32.xlu0 %v73, 96
    %v997 = vpop.permute.xlu0 %996
    %998 = vrot.lane.b32.xlu0 %v74, 96
    %v999 = vpop.permute.xlu0 %998
    %1000 = vrot.lane.b32.xlu0 %v76, 96
    %v1001 = vpop.permute.xlu0 %1000
    %1002 = vrot.lane.b32.xlu0 %v77, 96
    %v1003 = vpop.permute.xlu0 %1002
    %1004 = vrot.lane.b32.xlu0 %v79, 96
    %v1005 = vpop.permute.xlu0 %1004
    %1006 = vrot.lane.b32.xlu0 %v80, 96
    %v1007 = vpop.permute.xlu0 %1006
    %1008 = vrot.lane.b32.xlu0 %v82, 96
    %v1009 = vpop.permute.xlu0 %1008
    %1010 = vrot.lane.b32.xlu0 %v83, 96
    %v1011 = vpop.permute.xlu0 %1010
    %1012 = vrot.lane.b32.xlu0 %v91, 96
    %v1013 = vpop.permute.xlu0 %1012
    %1014 = vrot.lane.b32.xlu0 %v92, 96
    %v1015 = vpop.permute.xlu0 %1014
    %1016 = vrot.lane.b32.xlu0 %v94, 96
    %v1017 = vpop.permute.xlu0 %1016
    %1018 = vrot.lane.b32.xlu0 %v95, 96
    %v1019 = vpop.permute.xlu0 %1018
    %1020 = vrot.lane.b32.xlu0 %v97, 96
    %v1021 = vpop.permute.xlu0 %1020
    %1022 = vrot.lane.b32.xlu0 %v98, 96
    %v1023 = vpop.permute.xlu0 %1022
    %1024 = vrot.lane.b32.xlu0 %v100, 96
    %v1025 = vpop.permute.xlu0 %1024
    %1026 = vrot.lane.b32.xlu0 %v101, 96
    %v1027 = vpop.permute.xlu0 %1026
    %1028 = vrot.lane.b32.xlu0 %v103, 96
    %v1029 = vpop.permute.xlu0 %1028
    %1030 = vrot.lane.b32.xlu0 %v104, 96
    %v1031 = vpop.permute.xlu0 %1030
    %1032 = vrot.lane.b32.xlu0 %v106, 96
    %v1033 = vpop.permute.xlu0 %1032
    %1034 = vrot.lane.b32.xlu0 %v107, 96
    %v1035 = vpop.permute.xlu0 %1034
    %1036 = vrot.lane.b32.xlu0 %v109, 96
    %v1037 = vpop.permute.xlu0 %1036
    %1038 = vrot.lane.b32.xlu0 %v110, 96
    %v1039 = vpop.permute.xlu0 %1038
    %1040 = vrot.lane.b32.xlu0 %v112, 96
    %v1041 = vpop.permute.xlu0 %1040
    %1042 = vrot.lane.b32.xlu0 %v113, 96
    %v1043 = vpop.permute.xlu0 %1042
    %1044 = vrot.lane.b32.xlu0 %v115, 96
    %v1045 = vpop.permute.xlu0 %1044
    %1046 = vrot.lane.b32.xlu0 %v116, 96
    %v1047 = vpop.permute.xlu0 %1046
    %1048 = vrot.lane.b32.xlu0 %v118, 96
    %v1049 = vpop.permute.xlu0 %1048
    %1050 = vrot.lane.b32.xlu0 %v119, 96
    %v1051 = vpop.permute.xlu0 %1050
    %1052 = vrot.lane.b32.xlu0 %v121, 96
    %v1053 = vpop.permute.xlu0 %1052
    %1054 = vrot.lane.b32.xlu0 %v122, 96
    %v1055 = vpop.permute.xlu0 %1054
    %1056 = vrot.lane.b32.xlu0 %v124, 96
    %v1057 = vpop.permute.xlu0 %1056
    %1058 = vrot.lane.b32.xlu0 %v125, 96
    %v1059 = vpop.permute.xlu0 %1058
    %1060 = vrot.lane.b32.xlu0 %v127, 96
    %v1061 = vpop.permute.xlu0 %1060
    %1062 = vrot.lane.b32.xlu0 %v128, 96
    %v1063 = vpop.permute.xlu0 %1062
    %1064 = vrot.lane.b32.xlu0 %v130, 96
    %v1065 = vpop.permute.xlu0 %1064
    %1066 = vrot.lane.b32.xlu0 %v131, 96
    %v1067 = vpop.permute.xlu0 %1066
    %1068 = vrot.lane.b32.xlu0 %v133, 96
    %v1069 = vpop.permute.xlu0 %1068
    %1070 = vrot.lane.b32.xlu0 %v134, 96
    %v1071 = vpop.permute.xlu0 %1070
    %1072 = vrot.lane.b32.xlu0 %v136, 96
    %v1073 = vpop.permute.xlu0 %1072
    %1074 = vrot.lane.b32.xlu0 %v137, 96
    %v1075 = vpop.permute.xlu0 %1074
    %v1142 = vrot.slane %v82, 1
    %v1143 = vrot.slane %v83, 1
    %v1144 = vsel %vm238, %v1142, %v1143
    %v1145 = vrot.slane %v84, 1
    %v1146 = vsel %vm238, %v1143, %v1145
    %v1147 = vrot.slane %v136, 1
    %v1148 = vrot.slane %v137, 1
    %v1149 = vsel %vm238, %v1147, %v1148
    %v1150 = vrot.slane %v138, 1
    %v1151 = vsel %vm238, %v1148, %v1150
    %v1216 = vrot.slane %v82, 2
    %v1217 = vrot.slane %v83, 2
    %v1218 = vsel %vm591, %v1216, %v1217
    %v1219 = vrot.slane %v84, 2
    %v1220 = vsel %vm591, %v1217, %v1219
    %v1221 = vrot.slane %v136, 2
    %v1222 = vrot.slane %v137, 2
    %v1223 = vsel %vm591, %v1221, %v1222
    %v1224 = vrot.slane %v138, 2
    %v1225 = vsel %vm591, %v1222, %v1224
    %1226 = vrot.lane.b32.xlu0 %v599, 32
    %v1227 = vpop.permute.xlu0 %1226
    %1228 = vrot.lane.b32.xlu0 %v601, 32
    %v1229 = vpop.permute.xlu0 %1228
    %1230 = vrot.lane.b32.xlu0 %v604, 32
    %v1231 = vpop.permute.xlu0 %1230
    %1232 = vrot.lane.b32.xlu0 %v606, 32
    %v1233 = vpop.permute.xlu0 %1232
    %1234 = vrot.lane.b32.xlu0 %v609, 32
    %v1235 = vpop.permute.xlu0 %1234
    %1236 = vrot.lane.b32.xlu0 %v611, 32
    %v1237 = vpop.permute.xlu0 %1236
    %1238 = vrot.lane.b32.xlu0 %v614, 32
    %v1239 = vpop.permute.xlu0 %1238
    %1240 = vrot.lane.b32.xlu0 %v616, 32
    %v1241 = vpop.permute.xlu0 %1240
    %1242 = vrot.lane.b32.xlu0 %v619, 32
    %v1243 = vpop.permute.xlu0 %1242
    %1244 = vrot.lane.b32.xlu0 %v621, 32
    %v1245 = vpop.permute.xlu0 %1244
    %1246 = vrot.lane.b32.xlu0 %v624, 32
    %v1247 = vpop.permute.xlu0 %1246
    %1248 = vrot.lane.b32.xlu0 %v626, 32
    %v1249 = vpop.permute.xlu0 %1248
    %1250 = vrot.lane.b32.xlu0 %v629, 32
    %v1251 = vpop.permute.xlu0 %1250
    %1252 = vrot.lane.b32.xlu0 %v631, 32
    %v1253 = vpop.permute.xlu0 %1252
    %1254 = vrot.lane.b32.xlu0 %v634, 32
    %v1255 = vpop.permute.xlu0 %1254
    %1256 = vrot.lane.b32.xlu0 %v636, 32
    %v1257 = vpop.permute.xlu0 %1256
    %1258 = vrot.lane.b32.xlu0 %v639, 32
    %v1259 = vpop.permute.xlu0 %1258
    %1260 = vrot.lane.b32.xlu0 %v641, 32
    %v1261 = vpop.permute.xlu0 %1260
    %1262 = vrot.lane.b32.xlu0 %v644, 32
    %v1263 = vpop.permute.xlu0 %1262
    %1264 = vrot.lane.b32.xlu0 %v646, 32
    %v1265 = vpop.permute.xlu0 %1264
    %1266 = vrot.lane.b32.xlu0 %v649, 32
    %v1267 = vpop.permute.xlu0 %1266
    %1268 = vrot.lane.b32.xlu0 %v651, 32
    %v1269 = vpop.permute.xlu0 %1268
    %1270 = vrot.lane.b32.xlu0 %v654, 32
    %v1271 = vpop.permute.xlu0 %1270
    %1272 = vrot.lane.b32.xlu0 %v656, 32
    %v1273 = vpop.permute.xlu0 %1272
    %1274 = vrot.lane.b32.xlu0 %v659, 32
    %v1275 = vpop.permute.xlu0 %1274
    %1276 = vrot.lane.b32.xlu0 %v661, 32
    %v1277 = vpop.permute.xlu0 %1276
    %1278 = vrot.lane.b32.xlu0 %v664, 32
    %v1279 = vpop.permute.xlu0 %1278
    %1280 = vrot.lane.b32.xlu0 %v666, 32
    %v1281 = vpop.permute.xlu0 %1280
    %1282 = vrot.lane.b32.xlu0 %v669, 32
    %v1283 = vpop.permute.xlu0 %1282
    %1284 = vrot.lane.b32.xlu0 %v671, 32
    %v1285 = vpop.permute.xlu0 %1284
    %1286 = vrot.lane.b32.xlu0 %v1218, 32
    %v1287 = vpop.permute.xlu0 %1286
    %1288 = vrot.lane.b32.xlu0 %v1220, 32
    %v1289 = vpop.permute.xlu0 %1288
    %1290 = vrot.lane.b32.xlu0 %v679, 32
    %v1291 = vpop.permute.xlu0 %1290
    %1292 = vrot.lane.b32.xlu0 %v681, 32
    %v1293 = vpop.permute.xlu0 %1292
    %1294 = vrot.lane.b32.xlu0 %v684, 32
    %v1295 = vpop.permute.xlu0 %1294
    %1296 = vrot.lane.b32.xlu0 %v686, 32
    %v1297 = vpop.permute.xlu0 %1296
    %1298 = vrot.lane.b32.xlu0 %v689, 32
    %v1299 = vpop.permute.xlu0 %1298
    %1300 = vrot.lane.b32.xlu0 %v691, 32
    %v1301 = vpop.permute.xlu0 %1300
    %1302 = vrot.lane.b32.xlu0 %v694, 32
    %v1303 = vpop.permute.xlu0 %1302
    %1304 = vrot.lane.b32.xlu0 %v696, 32
    %v1305 = vpop.permute.xlu0 %1304
    %1306 = vrot.lane.b32.xlu0 %v699, 32
    %v1307 = vpop.permute.xlu0 %1306
    %1308 = vrot.lane.b32.xlu0 %v701, 32
    %v1309 = vpop.permute.xlu0 %1308
    %1310 = vrot.lane.b32.xlu0 %v704, 32
    %v1311 = vpop.permute.xlu0 %1310
    %1312 = vrot.lane.b32.xlu0 %v706, 32
    %v1313 = vpop.permute.xlu0 %1312
    %1314 = vrot.lane.b32.xlu0 %v709, 32
    %v1315 = vpop.permute.xlu0 %1314
    %1316 = vrot.lane.b32.xlu0 %v711, 32
    %v1317 = vpop.permute.xlu0 %1316
    %1318 = vrot.lane.b32.xlu0 %v714, 32
    %v1319 = vpop.permute.xlu0 %1318
    %1320 = vrot.lane.b32.xlu0 %v716, 32
    %v1321 = vpop.permute.xlu0 %1320
    %1322 = vrot.lane.b32.xlu0 %v719, 32
    %v1323 = vpop.permute.xlu0 %1322
    %1324 = vrot.lane.b32.xlu0 %v721, 32
    %v1325 = vpop.permute.xlu0 %1324
    %1326 = vrot.lane.b32.xlu0 %v724, 32
    %v1327 = vpop.permute.xlu0 %1326
    %1328 = vrot.lane.b32.xlu0 %v726, 32
    %v1329 = vpop.permute.xlu0 %1328
    %1330 = vrot.lane.b32.xlu0 %v729, 32
    %v1331 = vpop.permute.xlu0 %1330
    %1332 = vrot.lane.b32.xlu0 %v731, 32
    %v1333 = vpop.permute.xlu0 %1332
    %1334 = vrot.lane.b32.xlu0 %v734, 32
    %v1335 = vpop.permute.xlu0 %1334
    %1336 = vrot.lane.b32.xlu0 %v736, 32
    %v1337 = vpop.permute.xlu0 %1336
    %1338 = vrot.lane.b32.xlu0 %v739, 32
    %v1339 = vpop.permute.xlu0 %1338
    %1340 = vrot.lane.b32.xlu0 %v741, 32
    %v1341 = vpop.permute.xlu0 %1340
    %1342 = vrot.lane.b32.xlu0 %v744, 32
    %v1343 = vpop.permute.xlu0 %1342
    %1344 = vrot.lane.b32.xlu0 %v746, 32
    %v1345 = vpop.permute.xlu0 %1344
    %1346 = vrot.lane.b32.xlu0 %v749, 32
    %v1347 = vpop.permute.xlu0 %1346
    %1348 = vrot.lane.b32.xlu0 %v751, 32
    %v1349 = vpop.permute.xlu0 %1348
    %1350 = vrot.lane.b32.xlu0 %v1223, 32
    %v1351 = vpop.permute.xlu0 %1350
    %1352 = vrot.lane.b32.xlu0 %v1225, 32
    %v1353 = vpop.permute.xlu0 %1352
    %1422 = vrot.lane.b32.xlu0 %v40, 64
    %v1423 = vpop.permute.xlu0 %1422
    %1424 = vrot.lane.b32.xlu0 %v41, 64
    %v1425 = vpop.permute.xlu0 %1424
    %1426 = vrot.lane.b32.xlu0 %v43, 64
    %v1427 = vpop.permute.xlu0 %1426
    %1428 = vrot.lane.b32.xlu0 %v44, 64
    %v1429 = vpop.permute.xlu0 %1428
    %1430 = vrot.lane.b32.xlu0 %v46, 64
    %v1431 = vpop.permute.xlu0 %1430
    %1432 = vrot.lane.b32.xlu0 %v47, 64
    %v1433 = vpop.permute.xlu0 %1432
    %1434 = vrot.lane.b32.xlu0 %v49, 64
    %v1435 = vpop.permute.xlu0 %1434
    %1436 = vrot.lane.b32.xlu0 %v50, 64
    %v1437 = vpop.permute.xlu0 %1436
    %1438 = vrot.lane.b32.xlu0 %v52, 64
    %v1439 = vpop.permute.xlu0 %1438
    %1440 = vrot.lane.b32.xlu0 %v53, 64
    %v1441 = vpop.permute.xlu0 %1440
    %1442 = vrot.lane.b32.xlu0 %v55, 64
    %v1443 = vpop.permute.xlu0 %1442
    %1444 = vrot.lane.b32.xlu0 %v56, 64
    %v1445 = vpop.permute.xlu0 %1444
    %1446 = vrot.lane.b32.xlu0 %v58, 64
    %v1447 = vpop.permute.xlu0 %1446
    %1448 = vrot.lane.b32.xlu0 %v59, 64
    %v1449 = vpop.permute.xlu0 %1448
    %1450 = vrot.lane.b32.xlu0 %v61, 64
    %v1451 = vpop.permute.xlu0 %1450
    %1452 = vrot.lane.b32.xlu0 %v62, 64
    %v1453 = vpop.permute.xlu0 %1452
    %1454 = vrot.lane.b32.xlu0 %v64, 64
    %v1455 = vpop.permute.xlu0 %1454
    %1456 = vrot.lane.b32.xlu0 %v65, 64
    %v1457 = vpop.permute.xlu0 %1456
    %1458 = vrot.lane.b32.xlu0 %v67, 64
    %v1459 = vpop.permute.xlu0 %1458
    %1460 = vrot.lane.b32.xlu0 %v68, 64
    %v1461 = vpop.permute.xlu0 %1460
    %1462 = vrot.lane.b32.xlu0 %v70, 64
    %v1463 = vpop.permute.xlu0 %1462
    %1464 = vrot.lane.b32.xlu0 %v71, 64
    %v1465 = vpop.permute.xlu0 %1464
    %1466 = vrot.lane.b32.xlu0 %v73, 64
    %v1467 = vpop.permute.xlu0 %1466
    %1468 = vrot.lane.b32.xlu0 %v74, 64
    %v1469 = vpop.permute.xlu0 %1468
    %1470 = vrot.lane.b32.xlu0 %v76, 64
    %v1471 = vpop.permute.xlu0 %1470
    %1472 = vrot.lane.b32.xlu0 %v77, 64
    %v1473 = vpop.permute.xlu0 %1472
    %1474 = vrot.lane.b32.xlu0 %v79, 64
    %v1475 = vpop.permute.xlu0 %1474
    %1476 = vrot.lane.b32.xlu0 %v80, 64
    %v1477 = vpop.permute.xlu0 %1476
    %1478 = vrot.lane.b32.xlu0 %v82, 64
    %v1479 = vpop.permute.xlu0 %1478
    %1480 = vrot.lane.b32.xlu0 %v83, 64
    %v1481 = vpop.permute.xlu0 %1480
    %1482 = vrot.lane.b32.xlu0 %v85, 64
    %v1483 = vpop.permute.xlu0 %1482
    %1484 = vrot.lane.b32.xlu0 %v86, 64
    %v1485 = vpop.permute.xlu0 %1484
    %1486 = vrot.lane.b32.xlu0 %v94, 64
    %v1487 = vpop.permute.xlu0 %1486
    %1488 = vrot.lane.b32.xlu0 %v95, 64
    %v1489 = vpop.permute.xlu0 %1488
    %1490 = vrot.lane.b32.xlu0 %v97, 64
    %v1491 = vpop.permute.xlu0 %1490
    %1492 = vrot.lane.b32.xlu0 %v98, 64
    %v1493 = vpop.permute.xlu0 %1492
    %1494 = vrot.lane.b32.xlu0 %v100, 64
    %v1495 = vpop.permute.xlu0 %1494
    %1496 = vrot.lane.b32.xlu0 %v101, 64
    %v1497 = vpop.permute.xlu0 %1496
    %1498 = vrot.lane.b32.xlu0 %v103, 64
    %v1499 = vpop.permute.xlu0 %1498
    %1500 = vrot.lane.b32.xlu0 %v104, 64
    %v1501 = vpop.permute.xlu0 %1500
    %1502 = vrot.lane.b32.xlu0 %v106, 64
    %v1503 = vpop.permute.xlu0 %1502
    %1504 = vrot.lane.b32.xlu0 %v107, 64
    %v1505 = vpop.permute.xlu0 %1504
    %1506 = vrot.lane.b32.xlu0 %v109, 64
    %v1507 = vpop.permute.xlu0 %1506
    %1508 = vrot.lane.b32.xlu0 %v110, 64
    %v1509 = vpop.permute.xlu0 %1508
    %1510 = vrot.lane.b32.xlu0 %v112, 64
    %v1511 = vpop.permute.xlu0 %1510
    %1512 = vrot.lane.b32.xlu0 %v113, 64
    %v1513 = vpop.permute.xlu0 %1512
    %1514 = vrot.lane.b32.xlu0 %v115, 64
    %v1515 = vpop.permute.xlu0 %1514
    %1516 = vrot.lane.b32.xlu0 %v116, 64
    %v1517 = vpop.permute.xlu0 %1516
    %1518 = vrot.lane.b32.xlu0 %v118, 64
    %v1519 = vpop.permute.xlu0 %1518
    %1520 = vrot.lane.b32.xlu0 %v119, 64
    %v1521 = vpop.permute.xlu0 %1520
    %1522 = vrot.lane.b32.xlu0 %v121, 64
    %v1523 = vpop.permute.xlu0 %1522
    %1524 = vrot.lane.b32.xlu0 %v122, 64
    %v1525 = vpop.permute.xlu0 %1524
    %1526 = vrot.lane.b32.xlu0 %v124, 64
    %v1527 = vpop.permute.xlu0 %1526
    %1528 = vrot.lane.b32.xlu0 %v125, 64
    %v1529 = vpop.permute.xlu0 %1528
    %1530 = vrot.lane.b32.xlu0 %v127, 64
    %v1531 = vpop.permute.xlu0 %1530
    %1532 = vrot.lane.b32.xlu0 %v128, 64
    %v1533 = vpop.permute.xlu0 %1532
    %1534 = vrot.lane.b32.xlu0 %v130, 64
    %v1535 = vpop.permute.xlu0 %1534
    %1536 = vrot.lane.b32.xlu0 %v131, 64
    %v1537 = vpop.permute.xlu0 %1536
    %1538 = vrot.lane.b32.xlu0 %v133, 64
    %v1539 = vpop.permute.xlu0 %1538
    %1540 = vrot.lane.b32.xlu0 %v134, 64
    %v1541 = vpop.permute.xlu0 %1540
    %1542 = vrot.lane.b32.xlu0 %v136, 64
    %v1543 = vpop.permute.xlu0 %1542
    %1544 = vrot.lane.b32.xlu0 %v137, 64
    %v1545 = vpop.permute.xlu0 %1544
    %1546 = vrot.lane.b32.xlu0 %v139, 64
    %v1547 = vpop.permute.xlu0 %1546
    %1548 = vrot.lane.b32.xlu0 %v140, 64
    %v1549 = vpop.permute.xlu0 %1548
    %v1616 = vrot.slane %v85, 1
    %v1617 = vrot.slane %v86, 1
    %v1618 = vsel %vm238, %v1616, %v1617
    %v1619 = vrot.slane %v87, 1
    %v1620 = vsel %vm238, %v1617, %v1619
    %v1621 = vrot.slane %v139, 1
    %v1622 = vrot.slane %v140, 1
    %v1623 = vsel %vm238, %v1621, %v1622
    %v1624 = vrot.slane %v141, 1
    %v1625 = vsel %vm238, %v1622, %v1624
    %1626 = vrot.lane.b32.xlu0 %v251, 96
    %v1627 = vpop.permute.xlu0 %1626
    %1628 = vrot.lane.b32.xlu0 %v253, 96
    %v1629 = vpop.permute.xlu0 %1628
    %1630 = vrot.lane.b32.xlu0 %v256, 96
    %v1631 = vpop.permute.xlu0 %1630
    %1632 = vrot.lane.b32.xlu0 %v258, 96
    %v1633 = vpop.permute.xlu0 %1632
    %1634 = vrot.lane.b32.xlu0 %v261, 96
    %v1635 = vpop.permute.xlu0 %1634
    %1636 = vrot.lane.b32.xlu0 %v263, 96
    %v1637 = vpop.permute.xlu0 %1636
    %1638 = vrot.lane.b32.xlu0 %v266, 96
    %v1639 = vpop.permute.xlu0 %1638
    %1640 = vrot.lane.b32.xlu0 %v268, 96
    %v1641 = vpop.permute.xlu0 %1640
    %1642 = vrot.lane.b32.xlu0 %v271, 96
    %v1643 = vpop.permute.xlu0 %1642
    %1644 = vrot.lane.b32.xlu0 %v273, 96
    %v1645 = vpop.permute.xlu0 %1644
    %1646 = vrot.lane.b32.xlu0 %v276, 96
    %v1647 = vpop.permute.xlu0 %1646
    %1648 = vrot.lane.b32.xlu0 %v278, 96
    %v1649 = vpop.permute.xlu0 %1648
    %1650 = vrot.lane.b32.xlu0 %v281, 96
    %v1651 = vpop.permute.xlu0 %1650
    %1652 = vrot.lane.b32.xlu0 %v283, 96
    %v1653 = vpop.permute.xlu0 %1652
    %1654 = vrot.lane.b32.xlu0 %v286, 96
    %v1655 = vpop.permute.xlu0 %1654
    %1656 = vrot.lane.b32.xlu0 %v288, 96
    %v1657 = vpop.permute.xlu0 %1656
    %1658 = vrot.lane.b32.xlu0 %v291, 96
    %v1659 = vpop.permute.xlu0 %1658
    %1660 = vrot.lane.b32.xlu0 %v293, 96
    %v1661 = vpop.permute.xlu0 %1660
    %1662 = vrot.lane.b32.xlu0 %v296, 96
    %v1663 = vpop.permute.xlu0 %1662
    %1664 = vrot.lane.b32.xlu0 %v298, 96
    %v1665 = vpop.permute.xlu0 %1664
    %1666 = vrot.lane.b32.xlu0 %v301, 96
    %v1667 = vpop.permute.xlu0 %1666
    %1668 = vrot.lane.b32.xlu0 %v303, 96
    %v1669 = vpop.permute.xlu0 %1668
    %1670 = vrot.lane.b32.xlu0 %v306, 96
    %v1671 = vpop.permute.xlu0 %1670
    %1672 = vrot.lane.b32.xlu0 %v308, 96
    %v1673 = vpop.permute.xlu0 %1672
    %1674 = vrot.lane.b32.xlu0 %v311, 96
    %v1675 = vpop.permute.xlu0 %1674
    %1676 = vrot.lane.b32.xlu0 %v313, 96
    %v1677 = vpop.permute.xlu0 %1676
    %1678 = vrot.lane.b32.xlu0 %v316, 96
    %v1679 = vpop.permute.xlu0 %1678
    %1680 = vrot.lane.b32.xlu0 %v318, 96
    %v1681 = vpop.permute.xlu0 %1680
    %1682 = vrot.lane.b32.xlu0 %v1144, 96
    %v1683 = vpop.permute.xlu0 %1682
    %1684 = vrot.lane.b32.xlu0 %v1146, 96
    %v1685 = vpop.permute.xlu0 %1684
    %1686 = vrot.lane.b32.xlu0 %v1618, 96
    %v1687 = vpop.permute.xlu0 %1686
    %1688 = vrot.lane.b32.xlu0 %v1620, 96
    %v1689 = vpop.permute.xlu0 %1688
    %1690 = vrot.lane.b32.xlu0 %v331, 96
    %v1691 = vpop.permute.xlu0 %1690
    %1692 = vrot.lane.b32.xlu0 %v333, 96
    %v1693 = vpop.permute.xlu0 %1692
    %1694 = vrot.lane.b32.xlu0 %v336, 96
    %v1695 = vpop.permute.xlu0 %1694
    %1696 = vrot.lane.b32.xlu0 %v338, 96
    %v1697 = vpop.permute.xlu0 %1696
    %1698 = vrot.lane.b32.xlu0 %v341, 96
    %v1699 = vpop.permute.xlu0 %1698
    %1700 = vrot.lane.b32.xlu0 %v343, 96
    %v1701 = vpop.permute.xlu0 %1700
    %1702 = vrot.lane.b32.xlu0 %v346, 96
    %v1703 = vpop.permute.xlu0 %1702
    %1704 = vrot.lane.b32.xlu0 %v348, 96
    %v1705 = vpop.permute.xlu0 %1704
    %1706 = vrot.lane.b32.xlu0 %v351, 96
    %v1707 = vpop.permute.xlu0 %1706
    %1708 = vrot.lane.b32.xlu0 %v353, 96
    %v1709 = vpop.permute.xlu0 %1708
    %1710 = vrot.lane.b32.xlu0 %v356, 96
    %v1711 = vpop.permute.xlu0 %1710
    %1712 = vrot.lane.b32.xlu0 %v358, 96
    %v1713 = vpop.permute.xlu0 %1712
    %1714 = vrot.lane.b32.xlu0 %v361, 96
    %v1715 = vpop.permute.xlu0 %1714
    %1716 = vrot.lane.b32.xlu0 %v363, 96
    %v1717 = vpop.permute.xlu0 %1716
    %1718 = vrot.lane.b32.xlu0 %v366, 96
    %v1719 = vpop.permute.xlu0 %1718
    %1720 = vrot.lane.b32.xlu0 %v368, 96
    %v1721 = vpop.permute.xlu0 %1720
    %1722 = vrot.lane.b32.xlu0 %v371, 96
    %v1723 = vpop.permute.xlu0 %1722
    %1724 = vrot.lane.b32.xlu0 %v373, 96
    %v1725 = vpop.permute.xlu0 %1724
    %1726 = vrot.lane.b32.xlu0 %v376, 96
    %v1727 = vpop.permute.xlu0 %1726
    %1728 = vrot.lane.b32.xlu0 %v378, 96
    %v1729 = vpop.permute.xlu0 %1728
    %1730 = vrot.lane.b32.xlu0 %v381, 96
    %v1731 = vpop.permute.xlu0 %1730
    %1732 = vrot.lane.b32.xlu0 %v383, 96
    %v1733 = vpop.permute.xlu0 %1732
    %1734 = vrot.lane.b32.xlu0 %v386, 96
    %v1735 = vpop.permute.xlu0 %1734
    %1736 = vrot.lane.b32.xlu0 %v388, 96
    %v1737 = vpop.permute.xlu0 %1736
    %1738 = vrot.lane.b32.xlu0 %v391, 96
    %v1739 = vpop.permute.xlu0 %1738
    %1740 = vrot.lane.b32.xlu0 %v393, 96
    %v1741 = vpop.permute.xlu0 %1740
    %1742 = vrot.lane.b32.xlu0 %v396, 96
    %v1743 = vpop.permute.xlu0 %1742
    %1744 = vrot.lane.b32.xlu0 %v398, 96
    %v1745 = vpop.permute.xlu0 %1744
    %1746 = vrot.lane.b32.xlu0 %v1149, 96
    %v1747 = vpop.permute.xlu0 %1746
    %1748 = vrot.lane.b32.xlu0 %v1151, 96
    %v1749 = vpop.permute.xlu0 %1748
    %1750 = vrot.lane.b32.xlu0 %v1623, 96
    %v1751 = vpop.permute.xlu0 %1750
    %1752 = vrot.lane.b32.xlu0 %v1625, 96
    %v1753 = vpop.permute.xlu0 %1752
    %v1818 = vrot.slane %v85, 2
    %v1819 = vrot.slane %v86, 2
    %v1820 = vsel %vm591, %v1818, %v1819
    %v1821 = vrot.slane %v87, 2
    %v1822 = vsel %vm591, %v1819, %v1821
    %v1823 = vrot.slane %v139, 2
    %v1824 = vrot.slane %v140, 2
    %v1825 = vsel %vm591, %v1823, %v1824
    %v1826 = vrot.slane %v141, 2
    %v1827 = vsel %vm591, %v1824, %v1826
    %vm1892 = vcmask 261120
    %v1893 = vsel %vm1892, %v34, %v400
    %v1894 = vsel %vm1892, %v35, %v402
    %v1895 = vsel %vm1892, %v37, %v404
    %v1896 = vsel %vm1892, %v38, %v406
    %v1897 = vsel %vm1892, %v40, %v408
    %v1898 = vsel %vm1892, %v41, %v410
    %v1899 = vsel %vm1892, %v43, %v412
    %v1900 = vsel %vm1892, %v44, %v414
    %v1901 = vsel %vm1892, %v46, %v416
    %v1902 = vsel %vm1892, %v47, %v418
    %v1903 = vsel %vm1892, %v49, %v420
    %v1904 = vsel %vm1892, %v50, %v422
    %v1905 = vsel %vm1892, %v52, %v424
    %v1906 = vsel %vm1892, %v53, %v426
    %v1907 = vsel %vm1892, %v55, %v428
    %v1908 = vsel %vm1892, %v56, %v430
    %v1909 = vsel %vm1892, %v58, %v432
    %v1910 = vsel %vm1892, %v59, %v434
    %v1911 = vsel %vm1892, %v61, %v436
    %v1912 = vsel %vm1892, %v62, %v438
    %v1913 = vsel %vm1892, %v64, %v440
    %v1914 = vsel %vm1892, %v65, %v442
    %v1915 = vsel %vm1892, %v67, %v444
    %v1916 = vsel %vm1892, %v68, %v446
    %v1917 = vsel %vm1892, %v70, %v448
    %v1918 = vsel %vm1892, %v71, %v450
    %v1919 = vsel %vm1892, %v73, %v452
    %v1920 = vsel %vm1892, %v74, %v454
    %v1921 = vsel %vm1892, %v76, %v456
    %v1922 = vsel %vm1892, %v77, %v458
    %v1923 = vsel %vm1892, %v79, %v460
    %v1924 = vsel %vm1892, %v80, %v462
    %v1925 = vsel %vm1892, %v88, %v464
    %v1926 = vsel %vm1892, %v89, %v466
    %v1927 = vsel %vm1892, %v91, %v468
    %v1928 = vsel %vm1892, %v92, %v470
    %v1929 = vsel %vm1892, %v94, %v472
    %v1930 = vsel %vm1892, %v95, %v474
    %v1931 = vsel %vm1892, %v97, %v476
    %v1932 = vsel %vm1892, %v98, %v478
    %v1933 = vsel %vm1892, %v100, %v480
    %v1934 = vsel %vm1892, %v101, %v482
    %v1935 = vsel %vm1892, %v103, %v484
    %v1936 = vsel %vm1892, %v104, %v486
    %v1937 = vsel %vm1892, %v106, %v488
    %v1938 = vsel %vm1892, %v107, %v490
    %v1939 = vsel %vm1892, %v109, %v492
    %v1940 = vsel %vm1892, %v110, %v494
    %v1941 = vsel %vm1892, %v112, %v496
    %v1942 = vsel %vm1892, %v113, %v498
    %v1943 = vsel %vm1892, %v115, %v500
    %v1944 = vsel %vm1892, %v116, %v502
    %v1945 = vsel %vm1892, %v118, %v504
    %v1946 = vsel %vm1892, %v119, %v506
    %v1947 = vsel %vm1892, %v121, %v508
    %v1948 = vsel %vm1892, %v122, %v510
    %v1949 = vsel %vm1892, %v124, %v512
    %v1950 = vsel %vm1892, %v125, %v514
    %v1951 = vsel %vm1892, %v127, %v516
    %v1952 = vsel %vm1892, %v128, %v518
    %v1953 = vsel %vm1892, %v130, %v520
    %v1954 = vsel %vm1892, %v131, %v522
    %v1955 = vsel %vm1892, %v133, %v524
    %v1956 = vsel %vm1892, %v134, %v526
    %vm1957 = vcmask 523264
    %v1958 = vsel %vm1957, %v1893, %v753
    %v1959 = vsel %vm1957, %v1894, %v755
    %v1960 = vsel %vm1957, %v1895, %v757
    %v1961 = vsel %vm1957, %v1896, %v759
    %v1962 = vsel %vm1957, %v1897, %v761
    %v1963 = vsel %vm1957, %v1898, %v763
    %v1964 = vsel %vm1957, %v1899, %v765
    %v1965 = vsel %vm1957, %v1900, %v767
    %v1966 = vsel %vm1957, %v1901, %v769
    %v1967 = vsel %vm1957, %v1902, %v771
    %v1968 = vsel %vm1957, %v1903, %v773
    %v1969 = vsel %vm1957, %v1904, %v775
    %v1970 = vsel %vm1957, %v1905, %v777
    %v1971 = vsel %vm1957, %v1906, %v779
    %v1972 = vsel %vm1957, %v1907, %v781
    %v1973 = vsel %vm1957, %v1908, %v783
    %v1974 = vsel %vm1957, %v1909, %v785
    %v1975 = vsel %vm1957, %v1910, %v787
    %v1976 = vsel %vm1957, %v1911, %v789
    %v1977 = vsel %vm1957, %v1912, %v791
    %v1978 = vsel %vm1957, %v1913, %v793
    %v1979 = vsel %vm1957, %v1914, %v795
    %v1980 = vsel %vm1957, %v1915, %v797
    %v1981 = vsel %vm1957, %v1916, %v799
    %v1982 = vsel %vm1957, %v1917, %v801
    %v1983 = vsel %vm1957, %v1918, %v803
    %v1984 = vsel %vm1957, %v1919, %v805
    %v1985 = vsel %vm1957, %v1920, %v807
    %v1986 = vsel %vm1957, %v1921, %v809
    %v1987 = vsel %vm1957, %v1922, %v811
    %v1988 = vsel %vm1957, %v1923, %v813
    %v1989 = vsel %vm1957, %v1924, %v815
    %v1990 = vsel %vm1957, %v1925, %v817
    %v1991 = vsel %vm1957, %v1926, %v819
    %v1992 = vsel %vm1957, %v1927, %v821
    %v1993 = vsel %vm1957, %v1928, %v823
    %v1994 = vsel %vm1957, %v1929, %v825
    %v1995 = vsel %vm1957, %v1930, %v827
    %v1996 = vsel %vm1957, %v1931, %v829
    %v1997 = vsel %vm1957, %v1932, %v831
    %v1998 = vsel %vm1957, %v1933, %v833
    %v1999 = vsel %vm1957, %v1934, %v835
    %v2000 = vsel %vm1957, %v1935, %v837
    %v2001 = vsel %vm1957, %v1936, %v839
    %v2002 = vsel %vm1957, %v1937, %v841
    %v2003 = vsel %vm1957, %v1938, %v843
    %v2004 = vsel %vm1957, %v1939, %v845
    %v2005 = vsel %vm1957, %v1940, %v847
    %v2006 = vsel %vm1957, %v1941, %v849
    %v2007 = vsel %vm1957, %v1942, %v851
    %v2008 = vsel %vm1957, %v1943, %v853
    %v2009 = vsel %vm1957, %v1944, %v855
    %v2010 = vsel %vm1957, %v1945, %v857
    %v2011 = vsel %vm1957, %v1946, %v859
    %v2012 = vsel %vm1957, %v1947, %v861
    %v2013 = vsel %vm1957, %v1948, %v863
    %v2014 = vsel %vm1957, %v1949, %v865
    %v2015 = vsel %vm1957, %v1950, %v867
    %v2016 = vsel %vm1957, %v1951, %v869
    %v2017 = vsel %vm1957, %v1952, %v871
    %v2018 = vsel %vm1957, %v1953, %v873
    %v2019 = vsel %vm1957, %v1954, %v875
    %v2020 = vsel %vm1957, %v1955, %v877
    %v2021 = vsel %vm1957, %v1956, %v879
    %vm2022 = vcmask 785408
    %v2023 = vsel %vm2022, %v1958, %v949
    %v2024 = vsel %vm2022, %v1959, %v951
    %v2025 = vsel %vm2022, %v1960, %v953
    %v2026 = vsel %vm2022, %v1961, %v955
    %v2027 = vsel %vm2022, %v1962, %v957
    %v2028 = vsel %vm2022, %v1963, %v959
    %v2029 = vsel %vm2022, %v1964, %v961
    %v2030 = vsel %vm2022, %v1965, %v963
    %v2031 = vsel %vm2022, %v1966, %v965
    %v2032 = vsel %vm2022, %v1967, %v967
    %v2033 = vsel %vm2022, %v1968, %v969
    %v2034 = vsel %vm2022, %v1969, %v971
    %v2035 = vsel %vm2022, %v1970, %v973
    %v2036 = vsel %vm2022, %v1971, %v975
    %v2037 = vsel %vm2022, %v1972, %v977
    %v2038 = vsel %vm2022, %v1973, %v979
    %v2039 = vsel %vm2022, %v1974, %v981
    %v2040 = vsel %vm2022, %v1975, %v983
    %v2041 = vsel %vm2022, %v1976, %v985
    %v2042 = vsel %vm2022, %v1977, %v987
    %v2043 = vsel %vm2022, %v1978, %v989
    %v2044 = vsel %vm2022, %v1979, %v991
    %v2045 = vsel %vm2022, %v1980, %v993
    %v2046 = vsel %vm2022, %v1981, %v995
    %v2047 = vsel %vm2022, %v1982, %v997
    %v2048 = vsel %vm2022, %v1983, %v999
    %v2049 = vsel %vm2022, %v1984, %v1001
    %v2050 = vsel %vm2022, %v1985, %v1003
    %v2051 = vsel %vm2022, %v1986, %v1005
    %v2052 = vsel %vm2022, %v1987, %v1007
    %v2053 = vsel %vm2022, %v1988, %v1009
    %v2054 = vsel %vm2022, %v1989, %v1011
    %v2055 = vsel %vm2022, %v1990, %v1013
    %v2056 = vsel %vm2022, %v1991, %v1015
    %v2057 = vsel %vm2022, %v1992, %v1017
    %v2058 = vsel %vm2022, %v1993, %v1019
    %v2059 = vsel %vm2022, %v1994, %v1021
    %v2060 = vsel %vm2022, %v1995, %v1023
    %v2061 = vsel %vm2022, %v1996, %v1025
    %v2062 = vsel %vm2022, %v1997, %v1027
    %v2063 = vsel %vm2022, %v1998, %v1029
    %v2064 = vsel %vm2022, %v1999, %v1031
    %v2065 = vsel %vm2022, %v2000, %v1033
    %v2066 = vsel %vm2022, %v2001, %v1035
    %v2067 = vsel %vm2022, %v2002, %v1037
    %v2068 = vsel %vm2022, %v2003, %v1039
    %v2069 = vsel %vm2022, %v2004, %v1041
    %v2070 = vsel %vm2022, %v2005, %v1043
    %v2071 = vsel %vm2022, %v2006, %v1045
    %v2072 = vsel %vm2022, %v2007, %v1047
    %v2073 = vsel %vm2022, %v2008, %v1049
    %v2074 = vsel %vm2022, %v2009, %v1051
    %v2075 = vsel %vm2022, %v2010, %v1053
    %v2076 = vsel %vm2022, %v2011, %v1055
    %v2077 = vsel %vm2022, %v2012, %v1057
    %v2078 = vsel %vm2022, %v2013, %v1059
    %v2079 = vsel %vm2022, %v2014, %v1061
    %v2080 = vsel %vm2022, %v2015, %v1063
    %v2081 = vsel %vm2022, %v2016, %v1065
    %v2082 = vsel %vm2022, %v2017, %v1067
    %v2083 = vsel %vm2022, %v2018, %v1069
    %v2084 = vsel %vm2022, %v2019, %v1071
    %v2085 = vsel %vm2022, %v2020, %v1073
    %v2086 = vsel %vm2022, %v2021, %v1075
    %v2087 = vsel %vm1892, %v246, %v1227
    %v2088 = vsel %vm1892, %v248, %v1229
    %v2089 = vsel %vm1892, %v251, %v1231
    %v2090 = vsel %vm1892, %v253, %v1233
    %v2091 = vsel %vm1892, %v256, %v1235
    %v2092 = vsel %vm1892, %v258, %v1237
    %v2093 = vsel %vm1892, %v261, %v1239
    %v2094 = vsel %vm1892, %v263, %v1241
    %v2095 = vsel %vm1892, %v266, %v1243
    %v2096 = vsel %vm1892, %v268, %v1245
    %v2097 = vsel %vm1892, %v271, %v1247
    %v2098 = vsel %vm1892, %v273, %v1249
    %v2099 = vsel %vm1892, %v276, %v1251
    %v2100 = vsel %vm1892, %v278, %v1253
    %v2101 = vsel %vm1892, %v281, %v1255
    %v2102 = vsel %vm1892, %v283, %v1257
    %v2103 = vsel %vm1892, %v286, %v1259
    %v2104 = vsel %vm1892, %v288, %v1261
    %v2105 = vsel %vm1892, %v291, %v1263
    %v2106 = vsel %vm1892, %v293, %v1265
    %v2107 = vsel %vm1892, %v296, %v1267
    %v2108 = vsel %vm1892, %v298, %v1269
    %v2109 = vsel %vm1892, %v301, %v1271
    %v2110 = vsel %vm1892, %v303, %v1273
    %v2111 = vsel %vm1892, %v306, %v1275
    %v2112 = vsel %vm1892, %v308, %v1277
    %v2113 = vsel %vm1892, %v311, %v1279
    %v2114 = vsel %vm1892, %v313, %v1281
    %v2115 = vsel %vm1892, %v316, %v1283
    %v2116 = vsel %vm1892, %v318, %v1285
    %v2117 = vsel %vm1892, %v1144, %v1287
    %v2118 = vsel %vm1892, %v1146, %v1289
    %v2119 = vsel %vm1892, %v326, %v1291
    %v2120 = vsel %vm1892, %v328, %v1293
    %v2121 = vsel %vm1892, %v331, %v1295
    %v2122 = vsel %vm1892, %v333, %v1297
    %v2123 = vsel %vm1892, %v336, %v1299
    %v2124 = vsel %vm1892, %v338, %v1301
    %v2125 = vsel %vm1892, %v341, %v1303
    %v2126 = vsel %vm1892, %v343, %v1305
    %v2127 = vsel %vm1892, %v346, %v1307
    %v2128 = vsel %vm1892, %v348, %v1309
    %v2129 = vsel %vm1892, %v351, %v1311
    %v2130 = vsel %vm1892, %v353, %v1313
    %v2131 = vsel %vm1892, %v356, %v1315
    %v2132 = vsel %vm1892, %v358, %v1317
    %v2133 = vsel %vm1892, %v361, %v1319
    %v2134 = vsel %vm1892, %v363, %v1321
    %v2135 = vsel %vm1892, %v366, %v1323
    %v2136 = vsel %vm1892, %v368, %v1325
    %v2137 = vsel %vm1892, %v371, %v1327
    %v2138 = vsel %vm1892, %v373, %v1329
    %v2139 = vsel %vm1892, %v376, %v1331
    %v2140 = vsel %vm1892, %v378, %v1333
    %v2141 = vsel %vm1892, %v381, %v1335
    %v2142 = vsel %vm1892, %v383, %v1337
    %v2143 = vsel %vm1892, %v386, %v1339
    %v2144 = vsel %vm1892, %v388, %v1341
    %v2145 = vsel %vm1892, %v391, %v1343
    %v2146 = vsel %vm1892, %v393, %v1345
    %v2147 = vsel %vm1892, %v396, %v1347
    %v2148 = vsel %vm1892, %v398, %v1349
    %v2149 = vsel %vm1892, %v1149, %v1351
    %v2150 = vsel %vm1892, %v1151, %v1353
    %v2151 = vsel %vm1957, %v2087, %v1423
    %v2152 = vsel %vm1957, %v2088, %v1425
    %v2153 = vsel %vm1957, %v2089, %v1427
    %v2154 = vsel %vm1957, %v2090, %v1429
    %v2155 = vsel %vm1957, %v2091, %v1431
    %v2156 = vsel %vm1957, %v2092, %v1433
    %v2157 = vsel %vm1957, %v2093, %v1435
    %v2158 = vsel %vm1957, %v2094, %v1437
    %v2159 = vsel %vm1957, %v2095, %v1439
    %v2160 = vsel %vm1957, %v2096, %v1441
    %v2161 = vsel %vm1957, %v2097, %v1443
    %v2162 = vsel %vm1957, %v2098, %v1445
    %v2163 = vsel %vm1957, %v2099, %v1447
    %v2164 = vsel %vm1957, %v2100, %v1449
    %v2165 = vsel %vm1957, %v2101, %v1451
    %v2166 = vsel %vm1957, %v2102, %v1453
    %v2167 = vsel %vm1957, %v2103, %v1455
    %v2168 = vsel %vm1957, %v2104, %v1457
    %v2169 = vsel %vm1957, %v2105, %v1459
    %v2170 = vsel %vm1957, %v2106, %v1461
    %v2171 = vsel %vm1957, %v2107, %v1463
    %v2172 = vsel %vm1957, %v2108, %v1465
    %v2173 = vsel %vm1957, %v2109, %v1467
    %v2174 = vsel %vm1957, %v2110, %v1469
    %v2175 = vsel %vm1957, %v2111, %v1471
    %v2176 = vsel %vm1957, %v2112, %v1473
    %v2177 = vsel %vm1957, %v2113, %v1475
    %v2178 = vsel %vm1957, %v2114, %v1477
    %v2179 = vsel %vm1957, %v2115, %v1479
    %v2180 = vsel %vm1957, %v2116, %v1481
    %v2181 = vsel %vm1957, %v2117, %v1483
    %v2182 = vsel %vm1957, %v2118, %v1485
    %v2183 = vsel %vm1957, %v2119, %v1487
    %v2184 = vsel %vm1957, %v2120, %v1489
    %v2185 = vsel %vm1957, %v2121, %v1491
    %v2186 = vsel %vm1957, %v2122, %v1493
    %v2187 = vsel %vm1957, %v2123, %v1495
    %v2188 = vsel %vm1957, %v2124, %v1497
    %v2189 = vsel %vm1957, %v2125, %v1499
    %v2190 = vsel %vm1957, %v2126, %v1501
    %v2191 = vsel %vm1957, %v2127, %v1503
    %v2192 = vsel %vm1957, %v2128, %v1505
    %v2193 = vsel %vm1957, %v2129, %v1507
    %v2194 = vsel %vm1957, %v2130, %v1509
    %v2195 = vsel %vm1957, %v2131, %v1511
    %v2196 = vsel %vm1957, %v2132, %v1513
    %v2197 = vsel %vm1957, %v2133, %v1515
    %v2198 = vsel %vm1957, %v2134, %v1517
    %v2199 = vsel %vm1957, %v2135, %v1519
    %v2200 = vsel %vm1957, %v2136, %v1521
    %v2201 = vsel %vm1957, %v2137, %v1523
    %v2202 = vsel %vm1957, %v2138, %v1525
    %v2203 = vsel %vm1957, %v2139, %v1527
    %v2204 = vsel %vm1957, %v2140, %v1529
    %v2205 = vsel %vm1957, %v2141, %v1531
    %v2206 = vsel %vm1957, %v2142, %v1533
    %v2207 = vsel %vm1957, %v2143, %v1535
    %v2208 = vsel %vm1957, %v2144, %v1537
    %v2209 = vsel %vm1957, %v2145, %v1539
    %v2210 = vsel %vm1957, %v2146, %v1541
    %v2211 = vsel %vm1957, %v2147, %v1543
    %v2212 = vsel %vm1957, %v2148, %v1545
    %v2213 = vsel %vm1957, %v2149, %v1547
    %v2214 = vsel %vm1957, %v2150, %v1549
    %v2215 = vsel %vm2022, %v2151, %v1627
    %v2216 = vsel %vm2022, %v2152, %v1629
    %v2217 = vsel %vm2022, %v2153, %v1631
    %v2218 = vsel %vm2022, %v2154, %v1633
    %v2219 = vsel %vm2022, %v2155, %v1635
    %v2220 = vsel %vm2022, %v2156, %v1637
    %v2221 = vsel %vm2022, %v2157, %v1639
    %v2222 = vsel %vm2022, %v2158, %v1641
    %v2223 = vsel %vm2022, %v2159, %v1643
    %v2224 = vsel %vm2022, %v2160, %v1645
    %v2225 = vsel %vm2022, %v2161, %v1647
    %v2226 = vsel %vm2022, %v2162, %v1649
    %v2227 = vsel %vm2022, %v2163, %v1651
    %v2228 = vsel %vm2022, %v2164, %v1653
    %v2229 = vsel %vm2022, %v2165, %v1655
    %v2230 = vsel %vm2022, %v2166, %v1657
    %v2231 = vsel %vm2022, %v2167, %v1659
    %v2232 = vsel %vm2022, %v2168, %v1661
    %v2233 = vsel %vm2022, %v2169, %v1663
    %v2234 = vsel %vm2022, %v2170, %v1665
    %v2235 = vsel %vm2022, %v2171, %v1667
    %v2236 = vsel %vm2022, %v2172, %v1669
    %v2237 = vsel %vm2022, %v2173, %v1671
    %v2238 = vsel %vm2022, %v2174, %v1673
    %v2239 = vsel %vm2022, %v2175, %v1675
    %v2240 = vsel %vm2022, %v2176, %v1677
    %v2241 = vsel %vm2022, %v2177, %v1679
    %v2242 = vsel %vm2022, %v2178, %v1681
    %v2243 = vsel %vm2022, %v2179, %v1683
    %v2244 = vsel %vm2022, %v2180, %v1685
    %v2245 = vsel %vm2022, %v2181, %v1687
    %v2246 = vsel %vm2022, %v2182, %v1689
    %v2247 = vsel %vm2022, %v2183, %v1691
    %v2248 = vsel %vm2022, %v2184, %v1693
    %v2249 = vsel %vm2022, %v2185, %v1695
    %v2250 = vsel %vm2022, %v2186, %v1697
    %v2251 = vsel %vm2022, %v2187, %v1699
    %v2252 = vsel %vm2022, %v2188, %v1701
    %v2253 = vsel %vm2022, %v2189, %v1703
    %v2254 = vsel %vm2022, %v2190, %v1705
    %v2255 = vsel %vm2022, %v2191, %v1707
    %v2256 = vsel %vm2022, %v2192, %v1709
    %v2257 = vsel %vm2022, %v2193, %v1711
    %v2258 = vsel %vm2022, %v2194, %v1713
    %v2259 = vsel %vm2022, %v2195, %v1715
    %v2260 = vsel %vm2022, %v2196, %v1717
    %v2261 = vsel %vm2022, %v2197, %v1719
    %v2262 = vsel %vm2022, %v2198, %v1721
    %v2263 = vsel %vm2022, %v2199, %v1723
    %v2264 = vsel %vm2022, %v2200, %v1725
    %v2265 = vsel %vm2022, %v2201, %v1727
    %v2266 = vsel %vm2022, %v2202, %v1729
    %v2267 = vsel %vm2022, %v2203, %v1731
    %v2268 = vsel %vm2022, %v2204, %v1733
    %v2269 = vsel %vm2022, %v2205, %v1735
    %v2270 = vsel %vm2022, %v2206, %v1737
    %v2271 = vsel %vm2022, %v2207, %v1739
    %v2272 = vsel %vm2022, %v2208, %v1741
    %v2273 = vsel %vm2022, %v2209, %v1743
    %v2274 = vsel %vm2022, %v2210, %v1745
    %v2275 = vsel %vm2022, %v2211, %v1747
    %v2276 = vsel %vm2022, %v2212, %v1749
    %v2277 = vsel %vm2022, %v2213, %v1751
    %v2278 = vsel %vm2022, %v2214, %v1753
    %v2279 = vpack.c.bf16 %v2024, %v2023
    %v2280 = vpack.c.bf16 %v2216, %v2215
    %v2281 = vpack.c.bf16 %v606, %v604
    %v2282 = vpack.c.bf16 %v2026, %v2025
    %v2283 = vpack.c.bf16 %v2218, %v2217
    %v2284 = vpack.c.bf16 %v611, %v609
    %v2285 = vpack.c.bf16 %v2028, %v2027
    %v2286 = vpack.c.bf16 %v2220, %v2219
    %v2287 = vpack.c.bf16 %v616, %v614
    %v2288 = vpack.c.bf16 %v2030, %v2029
    %v2289 = vpack.c.bf16 %v2222, %v2221
    %v2290 = vpack.c.bf16 %v621, %v619
    %v2291 = vpack.c.bf16 %v2032, %v2031
    %v2292 = vpack.c.bf16 %v2224, %v2223
    %v2293 = vpack.c.bf16 %v626, %v624
    %v2294 = vpack.c.bf16 %v2034, %v2033
    %v2295 = vpack.c.bf16 %v2226, %v2225
    %v2296 = vpack.c.bf16 %v631, %v629
    %v2297 = vpack.c.bf16 %v2036, %v2035
    %v2298 = vpack.c.bf16 %v2228, %v2227
    %v2299 = vpack.c.bf16 %v636, %v634
    %v2300 = vpack.c.bf16 %v2038, %v2037
    %v2301 = vpack.c.bf16 %v2230, %v2229
    %v2302 = vpack.c.bf16 %v641, %v639
    %v2303 = vpack.c.bf16 %v2040, %v2039
    %v2304 = vpack.c.bf16 %v2232, %v2231
    %v2305 = vpack.c.bf16 %v646, %v644
    %v2306 = vpack.c.bf16 %v2042, %v2041
    %v2307 = vpack.c.bf16 %v2234, %v2233
    %v2308 = vpack.c.bf16 %v651, %v649
    %v2309 = vpack.c.bf16 %v2044, %v2043
    %v2310 = vpack.c.bf16 %v2236, %v2235
    %v2311 = vpack.c.bf16 %v656, %v654
    %v2312 = vpack.c.bf16 %v2046, %v2045
    %v2313 = vpack.c.bf16 %v2238, %v2237
    %v2314 = vpack.c.bf16 %v661, %v659
    %v2315 = vpack.c.bf16 %v2048, %v2047
    %v2316 = vpack.c.bf16 %v2240, %v2239
    %v2317 = vpack.c.bf16 %v666, %v664
    %v2318 = vpack.c.bf16 %v2050, %v2049
    %v2319 = vpack.c.bf16 %v2242, %v2241
    %v2320 = vpack.c.bf16 %v671, %v669
    %v2321 = vpack.c.bf16 %v2052, %v2051
    %v2322 = vpack.c.bf16 %v2244, %v2243
    %v2323 = vpack.c.bf16 %v1220, %v1218
    %v2324 = vpack.c.bf16 %v2054, %v2053
    %v2325 = vpack.c.bf16 %v2246, %v2245
    %v2326 = vpack.c.bf16 %v1822, %v1820
    %v2327 = vpack.c.bf16 %v2056, %v2055
    %v2328 = vpack.c.bf16 %v2248, %v2247
    %v2329 = vpack.c.bf16 %v686, %v684
    %v2330 = vpack.c.bf16 %v2058, %v2057
    %v2331 = vpack.c.bf16 %v2250, %v2249
    %v2332 = vpack.c.bf16 %v691, %v689
    %v2333 = vpack.c.bf16 %v2060, %v2059
    %v2334 = vpack.c.bf16 %v2252, %v2251
    %v2335 = vpack.c.bf16 %v696, %v694
    %v2336 = vpack.c.bf16 %v2062, %v2061
    %v2337 = vpack.c.bf16 %v2254, %v2253
    %v2338 = vpack.c.bf16 %v701, %v699
    %v2339 = vpack.c.bf16 %v2064, %v2063
    %v2340 = vpack.c.bf16 %v2256, %v2255
    %v2341 = vpack.c.bf16 %v706, %v704
    %v2342 = vpack.c.bf16 %v2066, %v2065
    %v2343 = vpack.c.bf16 %v2258, %v2257
    %v2344 = vpack.c.bf16 %v711, %v709
    %v2345 = vpack.c.bf16 %v2068, %v2067
    %v2346 = vpack.c.bf16 %v2260, %v2259
    %v2347 = vpack.c.bf16 %v716, %v714
    %v2348 = vpack.c.bf16 %v2070, %v2069
    %v2349 = vpack.c.bf16 %v2262, %v2261
    %v2350 = vpack.c.bf16 %v721, %v719
    %v2351 = vpack.c.bf16 %v2072, %v2071
    %v2352 = vpack.c.bf16 %v2264, %v2263
    %v2353 = vpack.c.bf16 %v726, %v724
    %v2354 = vpack.c.bf16 %v2074, %v2073
    %v2355 = vpack.c.bf16 %v2266, %v2265
    %v2356 = vpack.c.bf16 %v731, %v729
    %v2357 = vpack.c.bf16 %v2076, %v2075
    %v2358 = vpack.c.bf16 %v2268, %v2267
    %v2359 = vpack.c.bf16 %v736, %v734
    %v2360 = vpack.c.bf16 %v2078, %v2077
    %v2361 = vpack.c.bf16 %v2270, %v2269
    %v2362 = vpack.c.bf16 %v741, %v739
    %v2363 = vpack.c.bf16 %v2080, %v2079
    %v2364 = vpack.c.bf16 %v2272, %v2271
    %v2365 = vpack.c.bf16 %v746, %v744
    %v2366 = vpack.c.bf16 %v2082, %v2081
    %v2367 = vpack.c.bf16 %v2274, %v2273
    %v2368 = vpack.c.bf16 %v751, %v749
    %v2369 = vpack.c.bf16 %v2084, %v2083
    %v2370 = vpack.c.bf16 %v2276, %v2275
    %v2371 = vpack.c.bf16 %v1225, %v1223
    %v2372 = vpack.c.bf16 %v2086, %v2085
    %v2373 = vpack.c.bf16 %v2278, %v2277
    %v2374 = vpack.c.bf16 %v1827, %v1825
    %v2375 = vld [vmem:[%s1] sm:$0xf]
    %v2376 = vld [vmem:[%s1 + $0x4] sm:$0xf]
    %v2377 = vld [vmem:[%s1 + $0x8] sm:$0xf]
    %v2378 = vld [vmem:[%s1 + $0xc] sm:$0xf]
    %v2379 = vld [vmem:[%s1 + $0x10] sm:$0xf]
    %v2380 = vld [vmem:[%s1 + $0x14] sm:$0xf]
    %v2381 = vld [vmem:[%s1 + $0x18] sm:$0xf]
    %v2382 = vld [vmem:[%s1 + $0x1c] sm:$0xf]
    %v2383 = vld [vmem:[%s1 + $0x20] sm:$0xf]
    %v2384 = vld [vmem:[%s1 + $0x24] sm:$0xf]
    %v2385 = vld [vmem:[%s1 + $0x28] sm:$0xf]
    %v2386 = vld [vmem:[%s1 + $0x2c] sm:$0xf]
    %v2387 = vld [vmem:[%s1 + $0x30] sm:$0xf]
    %v2388 = vld [vmem:[%s1 + $0x34] sm:$0xf]
    %v2389 = vld [vmem:[%s1 + $0x38] sm:$0xf]
    %v2390 = vld [vmem:[%s1 + $0x3c] sm:$0xf]
    %v2391 = vld [vmem:[%s1 + $0x40] sm:$0xf]
    %v2392 = vld [vmem:[%s1 + $0x44] sm:$0xf]
    %v2393 = vld [vmem:[%s1 + $0x48] sm:$0xf]
    %v2394 = vld [vmem:[%s1 + $0x4c] sm:$0xf]
    %v2395 = vld [vmem:[%s1 + $0x50] sm:$0xf]
    %v2396 = vld [vmem:[%s1 + $0x54] sm:$0xf]
    %v2397 = vld [vmem:[%s1 + $0x58] sm:$0xf]
    %v2398 = vld [vmem:[%s1 + $0x5c] sm:$0xf]
    %v2399 = vld [vmem:[%s1 + $0x60] sm:$0xf]
    %v2400 = vld [vmem:[%s1 + $0x64] sm:$0xf]
    %v2401 = vld [vmem:[%s1 + $0x68] sm:$0xf]
    %v2402 = vld [vmem:[%s1 + $0x6c] sm:$0xf]
    %v2403 = vld [vmem:[%s1 + $0x70] sm:$0xf]
    %v2404 = vld [vmem:[%s1 + $0x74] sm:$0xf]
    %v2405 = vld [vmem:[%s1 + $0x78] sm:$0xf]
    %v2406 = vld [vmem:[%s1 + $0x7c] sm:$0xf]
    %v2407 = vld [vmem:[%s1 + $0x80] sm:$0xf]
    %v2408 = vld [vmem:[%s1 + $0x84] sm:$0xf]
    %v2409 = vld [vmem:[%s1 + $0x88] sm:$0xf]
    %v2410 = vld [vmem:[%s1 + $0x8c] sm:$0xf]
    %v2447 = vunpack.c.l.b16 %v2375
    %v2448 = vunpack.c.l.b16 %v2376
    %v2449 = vunpack.c.l.b16 %v2377
    %v2450 = vunpack.c.l.b16 %v2378
    %v2451 = vunpack.c.l.b16 %v2379
    %v2452 = vunpack.c.l.b16 %v2380
    %v2453 = vunpack.c.l.b16 %v2381
    %v2454 = vunpack.c.l.b16 %v2382
    %v2455 = vunpack.c.l.b16 %v2383
    %v2456 = vunpack.c.l.b16 %v2384
    %v2457 = vunpack.c.l.b16 %v2385
    %v2458 = vunpack.c.l.b16 %v2386
    %v2459 = vunpack.c.l.b16 %v2387
    %v2460 = vunpack.c.l.b16 %v2388
    %v2461 = vunpack.c.l.b16 %v2389
    %v2462 = vunpack.c.l.b16 %v2390
    %v2463 = vunpack.c.l.b16 %v2391
    %v2464 = vunpack.c.l.b16 %v2392
    %v2465 = vunpack.c.l.b16 %v2393
    %v2466 = vunpack.c.l.b16 %v2394
    %v2467 = vunpack.c.l.b16 %v2395
    %v2468 = vunpack.c.l.b16 %v2396
    %v2469 = vunpack.c.l.b16 %v2397
    %v2470 = vunpack.c.l.b16 %v2398
    %v2471 = vunpack.c.l.b16 %v2399
    %v2472 = vunpack.c.l.b16 %v2400
    %v2473 = vunpack.c.l.b16 %v2401
    %v2474 = vunpack.c.l.b16 %v2402
    %v2475 = vunpack.c.l.b16 %v2403
    %v2476 = vunpack.c.l.b16 %v2404
    %v2477 = vunpack.c.l.b16 %v2405
    %v2478 = vunpack.c.l.b16 %v2406
    %v2479 = vunpack.c.l.b16 %v2407
    %v2480 = vunpack.c.l.b16 %v2408
    %v2481 = vunpack.c.l.b16 %v2409
    %v2482 = vunpack.c.l.b16 %v2410
    %v2483 = vpack.c.b16 %v2448, %v2447
    %v2484 = vpack.c.b16 %v2450, %v2449
    %v2485 = vpack.c.b16 %v2452, %v2451
    %v2486 = vpack.c.b16 %v2454, %v2453
    %v2487 = vpack.c.b16 %v2456, %v2455
    %v2488 = vpack.c.b16 %v2458, %v2457
    %v2489 = vpack.c.b16 %v2460, %v2459
    %v2490 = vpack.c.b16 %v2462, %v2461
    %v2491 = vpack.c.b16 %v2464, %v2463
    %v2492 = vpack.c.b16 %v2466, %v2465
    %v2493 = vpack.c.b16 %v2468, %v2467
    %v2494 = vpack.c.b16 %v2470, %v2469
    %v2495 = vpack.c.b16 %v2472, %v2471
    %v2496 = vpack.c.b16 %v2474, %v2473
    %v2497 = vpack.c.b16 %v2476, %v2475
    %v2498 = vpack.c.b16 %v2478, %v2477
    %v2499 = vpack.c.b16 %v2480, %v2479
    %v2500 = vpack.c.b16 %v2482, %v2481
    %v2520 = vsel %vm1892, %v2281, 0
    %v2523 = vsel %vm1892, %v2284, 0
    %v2526 = vsel %vm1892, %v2287, 0
    %v2529 = vsel %vm1892, %v2290, 0
    %v2532 = vsel %vm1892, %v2293, 0
    %v2535 = vsel %vm1892, %v2296, 0
    %v2538 = vsel %vm1892, %v2299, 0
    %v2541 = vsel %vm1892, %v2302, 0
    %v2544 = vsel %vm1892, %v2305, 0
    %v2547 = vsel %vm1892, %v2308, 0
    %v2550 = vsel %vm1892, %v2311, 0
    %v2553 = vsel %vm1892, %v2314, 0
    %v2556 = vsel %vm1892, %v2317, 0
    %v2559 = vsel %vm1892, %v2320, 0
    %v2562 = vsel %vm1892, %v2323, 0
    %v2565 = vsel %vm1892, %v2326, 0
    %v2568 = vsel %vm1892, %v2329, 0
    %v2571 = vsel %vm1892, %v2332, 0
    %v2574 = vsel %vm1892, %v2335, 0
    %v2577 = vsel %vm1892, %v2338, 0
    %v2580 = vsel %vm1892, %v2341, 0
    %v2583 = vsel %vm1892, %v2344, 0
    %v2586 = vsel %vm1892, %v2347, 0
    %v2589 = vsel %vm1892, %v2350, 0
    %v2592 = vsel %vm1892, %v2353, 0
    %v2595 = vsel %vm1892, %v2356, 0
    %v2598 = vsel %vm1892, %v2359, 0
    %v2601 = vsel %vm1892, %v2362, 0
    %v2604 = vsel %vm1892, %v2365, 0
    %v2607 = vsel %vm1892, %v2368, 0
    %v2610 = vsel %vm1892, %v2371, 0
    %v2613 = vsel %vm1892, %v2374, 0
    %2615 = vmatprep.subr.bf16.mxu0 0
    %2616 = vmatpush1.bf16.msra.mxu0 %v2483
    %2617 = vmatprep.subr.bf16.mxu0 0
    %2618 = vmatpush1.bf16.msra.mxu0 %v2484
    %2619 = vmatprep.subr.bf16.mxu0 0
    %2620 = vmatpush1.bf16.msra.mxu0 %v2485
    %2621 = vmatprep.subr.bf16.mxu0 0
    %2622 = vmatpush1.bf16.msra.mxu0 %v2486
    %2623 = vmatprep.subr.bf16.mxu0 0
    %2624 = vmatpush1.bf16.msra.mxu0 %v2487
    %2625 = vmatprep.subr.bf16.mxu0 0
    %2626 = vmatpush1.bf16.msra.mxu0 %v2488
    %2627 = vmatprep.subr.bf16.mxu0 0
    %2628 = vmatpush1.bf16.msra.mxu0 %v2489
    %2629 = vmatprep.subr.bf16.mxu0 0
    %2630 = vmatpush1.bf16.msra.mxu0 %v2490
    %2631 = vmatprep.subr.bf16.mxu0 0
    %2632 = vmatpush1.bf16.msra.mxu0 %v2491
    %2633 = vmatprep.subr.bf16.mxu0 0
    %2634 = vmatpush1.bf16.msra.mxu0 %v2492
    %2635 = vmatprep.subr.bf16.mxu0 0
    %2636 = vmatpush1.bf16.msra.mxu0 %v2493
    %2637 = vmatprep.subr.bf16.mxu0 0
    %2638 = vmatpush1.bf16.msra.mxu0 %v2494
    %2639 = vmatprep.subr.bf16.mxu0 0
    %2640 = vmatpush1.bf16.msra.mxu0 %v2495
    %2641 = vmatprep.subr.bf16.mxu0 0
    %2642 = vmatpush1.bf16.msra.mxu0 %v2496
    %2643 = vmatprep.subr.bf16.mxu0 0
    %2644 = vmatpush1.bf16.msra.mxu0 %v2497
    %2645 = vmatprep.subr.bf16.mxu0 0
    %2646 = vmatpush1.bf16.msra.mxu0 %v2498
    %2647 = vmatprep.mubr.bf16.mxu0 %v2280
    %2648 = vmatmul.mubr.bf16.gmra.mrb[0].mxu0 %v2279
    %v2649 = vpop.f32.mrb[0].mxu0
    %v2650 = vadd.f32 0.0, %v2649
    %v2651 = vpop.f32.mrb[0].mxu0
    %v2652 = vpop.f32.mrb[0].mxu0
    %v2653 = vadd.f32 0.0, %v2652
    %v2654 = vpop.f32.mrb[0].mxu0
    %2655 = vmatprep.mubr.bf16.mxu0 %v2283
    %2656 = vmatmul.mubr.bf16.gmra.mrb[0].mxu0 %v2282
    %v2657 = vpop.f32.mrb[0].mxu0
    %v2658 = vadd.f32 0.0, %v2657
    %v2659 = vpop.f32.mrb[0].mxu0
    %v2660 = vpop.f32.mrb[0].mxu0
    %v2661 = vadd.f32 0.0, %v2660
    %v2662 = vpop.f32.mrb[0].mxu0
    %2663 = vmatprep.mubr.bf16.mxu0 %v2286
    %2664 = vmatmul.mubr.bf16.gmra.mrb[0].mxu0 %v2285
    %v2665 = vpop.f32.mrb[0].mxu0
    %v2666 = vadd.f32 0.0, %v2665
    %v2667 = vpop.f32.mrb[0].mxu0
    %v2668 = vpop.f32.mrb[0].mxu0
    %v2669 = vadd.f32 0.0, %v2668
    %v2670 = vpop.f32.mrb[0].mxu0
    %2671 = vmatprep.mubr.bf16.mxu0 %v2289
    %2672 = vmatmul.mubr.bf16.gmra.mrb[0].mxu0 %v2288
    %v2673 = vpop.f32.mrb[0].mxu0
    %v2674 = vadd.f32 0.0, %v2673
    %v2675 = vpop.f32.mrb[0].mxu0
    %v2676 = vpop.f32.mrb[0].mxu0
    %v2677 = vadd.f32 0.0, %v2676
    %v2678 = vpop.f32.mrb[0].mxu0
    %2679 = vmatprep.mubr.bf16.mxu0 %v2292
    %2680 = vmatmul.mubr.bf16.gmra.mrb[0].mxu0 %v2291
    %v2681 = vpop.f32.mrb[0].mxu0
    %v2682 = vadd.f32 0.0, %v2681
    %v2683 = vpop.f32.mrb[0].mxu0
    %v2684 = vpop.f32.mrb[0].mxu0
    %v2685 = vadd.f32 0.0, %v2684
    %v2686 = vpop.f32.mrb[0].mxu0
    %2687 = vmatprep.mubr.bf16.mxu0 %v2295
    %2688 = vmatmul.mubr.bf16.gmra.mrb[0].mxu0 %v2294
    %v2689 = vpop.f32.mrb[0].mxu0
    %v2690 = vadd.f32 0.0, %v2689
    %v2691 = vpop.f32.mrb[0].mxu0
    %v2692 = vpop.f32.mrb[0].mxu0
    %v2693 = vadd.f32 0.0, %v2692
    %v2694 = vpop.f32.mrb[0].mxu0
    %2695 = vmatprep.mubr.bf16.mxu0 %v2298
    %2696 = vmatmul.mubr.bf16.gmra.mrb[0].mxu0 %v2297
    %v2697 = vpop.f32.mrb[0].mxu0
    %v2698 = vadd.f32 0.0, %v2697
    %v2699 = vpop.f32.mrb[0].mxu0
    %v2700 = vpop.f32.mrb[0].mxu0
    %v2701 = vadd.f32 0.0, %v2700
    %v2702 = vpop.f32.mrb[0].mxu0
    %2703 = vmatprep.mubr.bf16.mxu0 %v2301
    %2704 = vmatmul.mubr.bf16.gmra.mrb[0].mxu0 %v2300
    %v2705 = vpop.f32.mrb[0].mxu0
    %v2706 = vadd.f32 0.0, %v2705
    %v2707 = vpop.f32.mrb[0].mxu0
    %v2708 = vpop.f32.mrb[0].mxu0
    %v2709 = vadd.f32 0.0, %v2708
    %v2710 = vpop.f32.mrb[0].mxu0
    %2711 = vmatprep.mubr.bf16.mxu0 %v2304
    %2712 = vmatmul.mubr.bf16.gmra.mrb[0].mxu0 %v2303
    %v2713 = vpop.f32.mrb[0].mxu0
    %v2714 = vadd.f32 0.0, %v2713
    %v2715 = vpop.f32.mrb[0].mxu0
    %v2716 = vpop.f32.mrb[0].mxu0
    %v2717 = vadd.f32 0.0, %v2716
    %v2718 = vpop.f32.mrb[0].mxu0
    %2719 = vmatprep.mubr.bf16.mxu0 %v2307
    %2720 = vmatmul.mubr.bf16.gmra.mrb[0].mxu0 %v2306
    %v2721 = vpop.f32.mrb[0].mxu0
    %v2722 = vadd.f32 0.0, %v2721
    %v2723 = vpop.f32.mrb[0].mxu0
    %v2724 = vpop.f32.mrb[0].mxu0
    %v2725 = vadd.f32 0.0, %v2724
    %v2726 = vpop.f32.mrb[0].mxu0
    %2727 = vmatprep.mubr.bf16.mxu0 %v2310
    %2728 = vmatmul.mubr.bf16.gmra.mrb[0].mxu0 %v2309
    %v2729 = vpop.f32.mrb[0].mxu0
    %v2730 = vadd.f32 0.0, %v2729
    %v2731 = vpop.f32.mrb[0].mxu0
    %v2732 = vpop.f32.mrb[0].mxu0
    %v2733 = vadd.f32 0.0, %v2732
    %v2734 = vpop.f32.mrb[0].mxu0
    %2735 = vmatprep.mubr.bf16.mxu0 %v2313
    %2736 = vmatmul.mubr.bf16.gmra.mrb[0].mxu0 %v2312
    %v2737 = vpop.f32.mrb[0].mxu0
    %v2738 = vadd.f32 0.0, %v2737
    %v2739 = vpop.f32.mrb[0].mxu0
    %v2740 = vpop.f32.mrb[0].mxu0
    %v2741 = vadd.f32 0.0, %v2740
    %v2742 = vpop.f32.mrb[0].mxu0
    %2743 = vmatprep.mubr.bf16.mxu0 %v2316
    %2744 = vmatmul.mubr.bf16.gmra.mrb[0].mxu0 %v2315
    %v2745 = vpop.f32.mrb[0].mxu0
    %v2746 = vadd.f32 0.0, %v2745
    %v2747 = vpop.f32.mrb[0].mxu0
    %v2748 = vpop.f32.mrb[0].mxu0
    %v2749 = vadd.f32 0.0, %v2748
    %v2750 = vpop.f32.mrb[0].mxu0
    %2751 = vmatprep.mubr.bf16.mxu0 %v2319
    %2752 = vmatmul.mubr.bf16.gmra.mrb[0].mxu0 %v2318
    %v2753 = vpop.f32.mrb[0].mxu0
    %v2754 = vadd.f32 0.0, %v2753
    %v2755 = vpop.f32.mrb[0].mxu0
    %v2756 = vpop.f32.mrb[0].mxu0
    %v2757 = vadd.f32 0.0, %v2756
    %v2758 = vpop.f32.mrb[0].mxu0
    %2759 = vmatprep.mubr.bf16.mxu0 %v2322
    %2760 = vmatmul.mubr.bf16.gmra.mrb[0].mxu0 %v2321
    %v2761 = vpop.f32.mrb[0].mxu0
    %v2762 = vadd.f32 0.0, %v2761
    %v2763 = vpop.f32.mrb[0].mxu0
    %v2764 = vpop.f32.mrb[0].mxu0
    %v2765 = vadd.f32 0.0, %v2764
    %v2766 = vpop.f32.mrb[0].mxu0
    %2767 = vmatprep.mubr.bf16.mxu0 %v2325
    %2768 = vmatmul.mubr.bf16.gmra.mrb[0].mxu0 %v2324
    %v2769 = vpop.f32.mrb[0].mxu0
    %v2770 = vadd.f32 0.0, %v2769
    %v2771 = vpop.f32.mrb[0].mxu0
    %v2772 = vpop.f32.mrb[0].mxu0
    %v2773 = vadd.f32 0.0, %v2772
    %v2774 = vpop.f32.mrb[0].mxu0
    %2775 = vmatprep.mubr.bf16.mxu0 %v2328
    %2776 = vmatmul.mubr.bf16.gmra.mrb[0].mxu0 %v2327
    %v2777 = vpop.f32.mrb[0].mxu0
    %v2778 = vadd.f32 0.0, %v2777
    %v2779 = vpop.f32.mrb[0].mxu0
    %v2780 = vpop.f32.mrb[0].mxu0
    %v2781 = vadd.f32 0.0, %v2780
    %v2782 = vpop.f32.mrb[0].mxu0
    %2783 = vmatprep.mubr.bf16.mxu0 %v2331
    %2784 = vmatmul.mubr.bf16.gmra.mrb[0].mxu0 %v2330
    %v2785 = vpop.f32.mrb[0].mxu0
    %v2786 = vadd.f32 0.0, %v2785
    %v2787 = vpop.f32.mrb[0].mxu0
    %v2788 = vpop.f32.mrb[0].mxu0
    %v2789 = vadd.f32 0.0, %v2788
    %v2790 = vpop.f32.mrb[0].mxu0
    %2791 = vmatprep.mubr.bf16.mxu0 %v2334
    %2792 = vmatmul.mubr.bf16.gmra.mrb[0].mxu0 %v2333
    %v2793 = vpop.f32.mrb[0].mxu0
    %v2794 = vadd.f32 0.0, %v2793
    %v2795 = vpop.f32.mrb[0].mxu0
    %v2796 = vpop.f32.mrb[0].mxu0
    %v2797 = vadd.f32 0.0, %v2796
    %v2798 = vpop.f32.mrb[0].mxu0
    %2799 = vmatprep.mubr.bf16.mxu0 %v2337
    %2800 = vmatmul.mubr.bf16.gmra.mrb[0].mxu0 %v2336
    %v2801 = vpop.f32.mrb[0].mxu0
    %v2802 = vadd.f32 0.0, %v2801
    %v2803 = vpop.f32.mrb[0].mxu0
    %v2804 = vpop.f32.mrb[0].mxu0
    %v2805 = vadd.f32 0.0, %v2804
    %v2806 = vpop.f32.mrb[0].mxu0
    %2807 = vmatprep.mubr.bf16.mxu0 %v2340
    %2808 = vmatmul.mubr.bf16.gmra.mrb[0].mxu0 %v2339
    %v2809 = vpop.f32.mrb[0].mxu0
    %v2810 = vadd.f32 0.0, %v2809
    %v2811 = vpop.f32.mrb[0].mxu0
    %v2812 = vpop.f32.mrb[0].mxu0
    %v2813 = vadd.f32 0.0, %v2812
    %v2814 = vpop.f32.mrb[0].mxu0
    %2815 = vmatprep.mubr.bf16.mxu0 %v2343
    %2816 = vmatmul.mubr.bf16.gmra.mrb[0].mxu0 %v2342
    %v2817 = vpop.f32.mrb[0].mxu0
    %v2818 = vadd.f32 0.0, %v2817
    %v2819 = vpop.f32.mrb[0].mxu0
    %v2820 = vpop.f32.mrb[0].mxu0
    %v2821 = vadd.f32 0.0, %v2820
    %v2822 = vpop.f32.mrb[0].mxu0
    %2823 = vmatprep.mubr.bf16.mxu0 %v2346
    %2824 = vmatmul.mubr.bf16.gmra.mrb[0].mxu0 %v2345
    %v2825 = vpop.f32.mrb[0].mxu0
    %v2826 = vadd.f32 0.0, %v2825
    %v2827 = vpop.f32.mrb[0].mxu0
    %v2828 = vpop.f32.mrb[0].mxu0
    %v2829 = vadd.f32 0.0, %v2828
    %v2830 = vpop.f32.mrb[0].mxu0
    %2831 = vmatprep.mubr.bf16.mxu0 %v2349
    %2832 = vmatmul.mubr.bf16.gmra.mrb[0].mxu0 %v2348
    %v2833 = vpop.f32.mrb[0].mxu0
    %v2834 = vadd.f32 0.0, %v2833
    %v2835 = vpop.f32.mrb[0].mxu0
    %v2836 = vpop.f32.mrb[0].mxu0
    %v2837 = vadd.f32 0.0, %v2836
    %v2838 = vpop.f32.mrb[0].mxu0
    %2839 = vmatprep.mubr.bf16.mxu0 %v2352
    %2840 = vmatmul.mubr.bf16.gmra.mrb[0].mxu0 %v2351
    %v2841 = vpop.f32.mrb[0].mxu0
    %v2842 = vadd.f32 0.0, %v2841
    %v2843 = vpop.f32.mrb[0].mxu0
    %v2844 = vpop.f32.mrb[0].mxu0
    %v2845 = vadd.f32 0.0, %v2844
    %v2846 = vpop.f32.mrb[0].mxu0
    %2847 = vmatprep.mubr.bf16.mxu0 %v2355
    %2848 = vmatmul.mubr.bf16.gmra.mrb[0].mxu0 %v2354
    %v2849 = vpop.f32.mrb[0].mxu0
    %v2850 = vadd.f32 0.0, %v2849
    %v2851 = vpop.f32.mrb[0].mxu0
    %v2852 = vpop.f32.mrb[0].mxu0
    %v2853 = vadd.f32 0.0, %v2852
    %v2854 = vpop.f32.mrb[0].mxu0
    %2855 = vmatprep.mubr.bf16.mxu0 %v2358
    %2856 = vmatmul.mubr.bf16.gmra.mrb[0].mxu0 %v2357
    %v2857 = vpop.f32.mrb[0].mxu0
    %v2858 = vadd.f32 0.0, %v2857
    %v2859 = vpop.f32.mrb[0].mxu0
    %v2860 = vpop.f32.mrb[0].mxu0
    %v2861 = vadd.f32 0.0, %v2860
    %v2862 = vpop.f32.mrb[0].mxu0
    %2863 = vmatprep.mubr.bf16.mxu0 %v2361
    %2864 = vmatmul.mubr.bf16.gmra.mrb[0].mxu0 %v2360
    %v2865 = vpop.f32.mrb[0].mxu0
    %v2866 = vadd.f32 0.0, %v2865
    %v2867 = vpop.f32.mrb[0].mxu0
    %v2868 = vpop.f32.mrb[0].mxu0
    %v2869 = vadd.f32 0.0, %v2868
    %v2870 = vpop.f32.mrb[0].mxu0
    %2871 = vmatprep.mubr.bf16.mxu0 %v2364
    %2872 = vmatmul.mubr.bf16.gmra.mrb[0].mxu0 %v2363
    %v2873 = vpop.f32.mrb[0].mxu0
    %v2874 = vadd.f32 0.0, %v2873
    %v2875 = vpop.f32.mrb[0].mxu0
    %v2876 = vpop.f32.mrb[0].mxu0
    %v2877 = vadd.f32 0.0, %v2876
    %v2878 = vpop.f32.mrb[0].mxu0
    %2879 = vmatprep.mubr.bf16.mxu0 %v2367
    %2880 = vmatmul.mubr.bf16.gmra.mrb[0].mxu0 %v2366
    %v2881 = vpop.f32.mrb[0].mxu0
    %v2882 = vadd.f32 0.0, %v2881
    %v2883 = vpop.f32.mrb[0].mxu0
    %v2884 = vpop.f32.mrb[0].mxu0
    %v2885 = vadd.f32 0.0, %v2884
    %v2886 = vpop.f32.mrb[0].mxu0
    %2887 = vmatprep.mubr.bf16.mxu0 %v2370
    %2888 = vmatmul.mubr.bf16.gmra.mrb[0].mxu0 %v2369
    %v2889 = vpop.f32.mrb[0].mxu0
    %v2890 = vadd.f32 0.0, %v2889
    %v2891 = vpop.f32.mrb[0].mxu0
    %v2892 = vpop.f32.mrb[0].mxu0
    %v2893 = vadd.f32 0.0, %v2892
    %v2894 = vpop.f32.mrb[0].mxu0
    %2895 = vmatprep.mubr.bf16.mxu0 %v2373
    %2896 = vmatmul.mubr.bf16.gmra.mrb[0].mxu0 %v2372
    %v2897 = vpop.f32.mrb[0].mxu0
    %v2898 = vadd.f32 0.0, %v2897
    %v2899 = vpop.f32.mrb[0].mxu0
    %v2900 = vpop.f32.mrb[0].mxu0
    %v2901 = vadd.f32 0.0, %v2900
    %v2902 = vpop.f32.mrb[0].mxu0
    %2903 = vdwg.mxu0
    %2904 = vmatprep.subr.bf16.mxu0 0
    %2905 = vmatpush1.bf16.msra.mxu0 %v2499
    %2906 = vmatprep.subr.bf16.mxu0 0
    %2907 = vmatpush1.bf16.msra.mxu0 %v2500
    %2908 = vmatprep.subr.bf16.mxu0 0
    %2909 = vmatpush1.bf16.msra.mxu0 0
    %2910 = vmatprep.subr.bf16.mxu0 0
    %2911 = vmatpush1.bf16.msra.mxu0 0
    %2912 = vmatprep.subr.bf16.mxu0 0
    %2913 = vmatpush1.bf16.msra.mxu0 0
    %2914 = vmatprep.subr.bf16.mxu0 0
    %2915 = vmatpush1.bf16.msra.mxu0 0
    %2916 = vmatprep.subr.bf16.mxu0 0
    %2917 = vmatpush1.bf16.msra.mxu0 0
    %2918 = vmatprep.subr.bf16.mxu0 0
    %2919 = vmatpush1.bf16.msra.mxu0 0
    %2920 = vmatprep.subr.bf16.mxu0 0
    %2921 = vmatpush1.bf16.msra.mxu0 0
    %2922 = vmatprep.subr.bf16.mxu0 0
    %2923 = vmatpush1.bf16.msra.mxu0 0
    %2924 = vmatprep.subr.bf16.mxu0 0
    %2925 = vmatpush1.bf16.msra.mxu0 0
    %2926 = vmatprep.subr.bf16.mxu0 0
    %2927 = vmatpush1.bf16.msra.mxu0 0
    %2928 = vmatprep.subr.bf16.mxu0 0
    %2929 = vmatpush1.bf16.msra.mxu0 0
    %2930 = vmatprep.subr.bf16.mxu0 0
    %2931 = vmatpush1.bf16.msra.mxu0 0
    %2932 = vmatprep.subr.bf16.mxu0 0
    %2933 = vmatpush1.bf16.msra.mxu0 0
    %2934 = vmatprep.subr.bf16.mxu0 0
    %2935 = vmatpush1.bf16.msra.mxu0 0
    %2936 = vmatprep.mubr.bf16.mxu0 0
    %2937 = vmatmul.mubr.bf16.gmra.mrb[0].mxu0 %v2520
    %v2938 = vpop.f32.mrb[0].mxu0
    %v2939 = vadd.f32 %v2650, %v2938
    %v2940 = vpop.f32.mrb[0].mxu0
    %v2941 = vpop.f32.mrb[0].mxu0
    %v2942 = vadd.f32 %v2653, %v2941
    %v2943 = vpop.f32.mrb[0].mxu0
    %2944 = vmatprep.mubr.bf16.mxu0 0
    %2945 = vmatmul.mubr.bf16.gmra.mrb[0].mxu0 %v2523
    %v2946 = vpop.f32.mrb[0].mxu0
    %v2947 = vadd.f32 %v2658, %v2946
    %v2948 = vpop.f32.mrb[0].mxu0
    %v2949 = vpop.f32.mrb[0].mxu0
    %v2950 = vadd.f32 %v2661, %v2949
    %v2951 = vpop.f32.mrb[0].mxu0
    %2952 = vmatprep.mubr.bf16.mxu0 0
    %2953 = vmatmul.mubr.bf16.gmra.mrb[0].mxu0 %v2526
    %v2954 = vpop.f32.mrb[0].mxu0
    %v2955 = vadd.f32 %v2666, %v2954
    %v2956 = vpop.f32.mrb[0].mxu0
    %v2957 = vpop.f32.mrb[0].mxu0
    %v2958 = vadd.f32 %v2669, %v2957
    %v2959 = vpop.f32.mrb[0].mxu0
    %2960 = vmatprep.mubr.bf16.mxu0 0
    %2961 = vmatmul.mubr.bf16.gmra.mrb[0].mxu0 %v2529
    %v2962 = vpop.f32.mrb[0].mxu0
    %v2963 = vadd.f32 %v2674, %v2962
    %v2964 = vpop.f32.mrb[0].mxu0
    %v2965 = vpop.f32.mrb[0].mxu0
    %v2966 = vadd.f32 %v2677, %v2965
    %v2967 = vpop.f32.mrb[0].mxu0
    %2968 = vmatprep.mubr.bf16.mxu0 0
    %2969 = vmatmul.mubr.bf16.gmra.mrb[0].mxu0 %v2532
    %v2970 = vpop.f32.mrb[0].mxu0
    %v2971 = vadd.f32 %v2682, %v2970
    %v2972 = vpop.f32.mrb[0].mxu0
    %v2973 = vpop.f32.mrb[0].mxu0
    %v2974 = vadd.f32 %v2685, %v2973
    %v2975 = vpop.f32.mrb[0].mxu0
    %2976 = vmatprep.mubr.bf16.mxu0 0
    %2977 = vmatmul.mubr.bf16.gmra.mrb[0].mxu0 %v2535
    %v2978 = vpop.f32.mrb[0].mxu0
    %v2979 = vadd.f32 %v2690, %v2978
    %v2980 = vpop.f32.mrb[0].mxu0
    %v2981 = vpop.f32.mrb[0].mxu0
    %v2982 = vadd.f32 %v2693, %v2981
    %v2983 = vpop.f32.mrb[0].mxu0
    %2984 = vmatprep.mubr.bf16.mxu0 0
    %2985 = vmatmul.mubr.bf16.gmra.mrb[0].mxu0 %v2538
    %v2986 = vpop.f32.mrb[0].mxu0
    %v2987 = vadd.f32 %v2698, %v2986
    %v2988 = vpop.f32.mrb[0].mxu0
    %v2989 = vpop.f32.mrb[0].mxu0
    %v2990 = vadd.f32 %v2701, %v2989
    %v2991 = vpop.f32.mrb[0].mxu0
    %2992 = vmatprep.mubr.bf16.mxu0 0
    %2993 = vmatmul.mubr.bf16.gmra.mrb[0].mxu0 %v2541
    %v2994 = vpop.f32.mrb[0].mxu0
    %v2995 = vadd.f32 %v2706, %v2994
    %v2996 = vpop.f32.mrb[0].mxu0
    %v2997 = vpop.f32.mrb[0].mxu0
    %v2998 = vadd.f32 %v2709, %v2997
    %v2999 = vpop.f32.mrb[0].mxu0
    %3000 = vmatprep.mubr.bf16.mxu0 0
    %3001 = vmatmul.mubr.bf16.gmra.mrb[0].mxu0 %v2544
    %v3002 = vpop.f32.mrb[0].mxu0
    %v3003 = vadd.f32 %v2714, %v3002
    %v3004 = vpop.f32.mrb[0].mxu0
    %v3005 = vpop.f32.mrb[0].mxu0
    %v3006 = vadd.f32 %v2717, %v3005
    %v3007 = vpop.f32.mrb[0].mxu0
    %3008 = vmatprep.mubr.bf16.mxu0 0
    %3009 = vmatmul.mubr.bf16.gmra.mrb[0].mxu0 %v2547
    %v3010 = vpop.f32.mrb[0].mxu0
    %v3011 = vadd.f32 %v2722, %v3010
    %v3012 = vpop.f32.mrb[0].mxu0
    %v3013 = vpop.f32.mrb[0].mxu0
    %v3014 = vadd.f32 %v2725, %v3013
    %v3015 = vpop.f32.mrb[0].mxu0
    %3016 = vmatprep.mubr.bf16.mxu0 0
    %3017 = vmatmul.mubr.bf16.gmra.mrb[0].mxu0 %v2550
    %v3018 = vpop.f32.mrb[0].mxu0
    %v3019 = vadd.f32 %v2730, %v3018
    %v3020 = vpop.f32.mrb[0].mxu0
    %v3021 = vpop.f32.mrb[0].mxu0
    %v3022 = vadd.f32 %v2733, %v3021
    %v3023 = vpop.f32.mrb[0].mxu0
    %3024 = vmatprep.mubr.bf16.mxu0 0
    %3025 = vmatmul.mubr.bf16.gmra.mrb[0].mxu0 %v2553
    %v3026 = vpop.f32.mrb[0].mxu0
    %v3027 = vadd.f32 %v2738, %v3026
    %v3028 = vpop.f32.mrb[0].mxu0
    %v3029 = vpop.f32.mrb[0].mxu0
    %v3030 = vadd.f32 %v2741, %v3029
    %v3031 = vpop.f32.mrb[0].mxu0
    %3032 = vmatprep.mubr.bf16.mxu0 0
    %3033 = vmatmul.mubr.bf16.gmra.mrb[0].mxu0 %v2556
    %v3034 = vpop.f32.mrb[0].mxu0
    %v3035 = vadd.f32 %v2746, %v3034
    %v3036 = vpop.f32.mrb[0].mxu0
    %v3037 = vpop.f32.mrb[0].mxu0
    %v3038 = vadd.f32 %v2749, %v3037
    %v3039 = vpop.f32.mrb[0].mxu0
    %3040 = vmatprep.mubr.bf16.mxu0 0
    %3041 = vmatmul.mubr.bf16.gmra.mrb[0].mxu0 %v2559
    %v3042 = vpop.f32.mrb[0].mxu0
    %v3043 = vadd.f32 %v2754, %v3042
    %v3044 = vpop.f32.mrb[0].mxu0
    %v3045 = vpop.f32.mrb[0].mxu0
    %v3046 = vadd.f32 %v2757, %v3045
    %v3047 = vpop.f32.mrb[0].mxu0
    %3048 = vmatprep.mubr.bf16.mxu0 0
    %3049 = vmatmul.mubr.bf16.gmra.mrb[0].mxu0 %v2562
    %v3050 = vpop.f32.mrb[0].mxu0
    %v3051 = vadd.f32 %v2762, %v3050
    %v3052 = vpop.f32.mrb[0].mxu0
    %v3053 = vpop.f32.mrb[0].mxu0
    %v3054 = vadd.f32 %v2765, %v3053
    %v3055 = vpop.f32.mrb[0].mxu0
    %3056 = vmatprep.mubr.bf16.mxu0 0
    %3057 = vmatmul.mubr.bf16.gmra.mrb[0].mxu0 %v2565
    %v3058 = vpop.f32.mrb[0].mxu0
    %v3059 = vadd.f32 %v2770, %v3058
    %v3060 = vpop.f32.mrb[0].mxu0
    %v3061 = vpop.f32.mrb[0].mxu0
    %v3062 = vadd.f32 %v2773, %v3061
    %v3063 = vpop.f32.mrb[0].mxu0
    %3064 = vmatprep.mubr.bf16.mxu0 0
    %3065 = vmatmul.mubr.bf16.gmra.mrb[0].mxu0 %v2568
    %v3066 = vpop.f32.mrb[0].mxu0
    %v3067 = vadd.f32 %v2778, %v3066
    %v3068 = vpop.f32.mrb[0].mxu0
    %v3069 = vpop.f32.mrb[0].mxu0
    %v3070 = vadd.f32 %v2781, %v3069
    %v3071 = vpop.f32.mrb[0].mxu0
    %3072 = vmatprep.mubr.bf16.mxu0 0
    %3073 = vmatmul.mubr.bf16.gmra.mrb[0].mxu0 %v2571
    %v3074 = vpop.f32.mrb[0].mxu0
    %v3075 = vadd.f32 %v2786, %v3074
    %v3076 = vpop.f32.mrb[0].mxu0
    %v3077 = vpop.f32.mrb[0].mxu0
    %v3078 = vadd.f32 %v2789, %v3077
    %v3079 = vpop.f32.mrb[0].mxu0
    %3080 = vmatprep.mubr.bf16.mxu0 0
    %3081 = vmatmul.mubr.bf16.gmra.mrb[0].mxu0 %v2574
    %v3082 = vpop.f32.mrb[0].mxu0
    %v3083 = vadd.f32 %v2794, %v3082
    %v3084 = vpop.f32.mrb[0].mxu0
    %v3085 = vpop.f32.mrb[0].mxu0
    %v3086 = vadd.f32 %v2797, %v3085
    %v3087 = vpop.f32.mrb[0].mxu0
    %3088 = vmatprep.mubr.bf16.mxu0 0
    %3089 = vmatmul.mubr.bf16.gmra.mrb[0].mxu0 %v2577
    %v3090 = vpop.f32.mrb[0].mxu0
    %v3091 = vadd.f32 %v2802, %v3090
    %v3092 = vpop.f32.mrb[0].mxu0
    %v3093 = vpop.f32.mrb[0].mxu0
    %v3094 = vadd.f32 %v2805, %v3093
    %v3095 = vpop.f32.mrb[0].mxu0
    %3096 = vmatprep.mubr.bf16.mxu0 0
    %3097 = vmatmul.mubr.bf16.gmra.mrb[0].mxu0 %v2580
    %v3098 = vpop.f32.mrb[0].mxu0
    %v3099 = vadd.f32 %v2810, %v3098
    %v3100 = vpop.f32.mrb[0].mxu0
    %v3101 = vpop.f32.mrb[0].mxu0
    %v3102 = vadd.f32 %v2813, %v3101
    %v3103 = vpop.f32.mrb[0].mxu0
    %3104 = vmatprep.mubr.bf16.mxu0 0
    %3105 = vmatmul.mubr.bf16.gmra.mrb[0].mxu0 %v2583
    %v3106 = vpop.f32.mrb[0].mxu0
    %v3107 = vadd.f32 %v2818, %v3106
    %v3108 = vpop.f32.mrb[0].mxu0
    %v3109 = vpop.f32.mrb[0].mxu0
    %v3110 = vadd.f32 %v2821, %v3109
    %v3111 = vpop.f32.mrb[0].mxu0
    %3112 = vmatprep.mubr.bf16.mxu0 0
    %3113 = vmatmul.mubr.bf16.gmra.mrb[0].mxu0 %v2586
    %v3114 = vpop.f32.mrb[0].mxu0
    %v3115 = vadd.f32 %v2826, %v3114
    %v3116 = vpop.f32.mrb[0].mxu0
    %v3117 = vpop.f32.mrb[0].mxu0
    %v3118 = vadd.f32 %v2829, %v3117
    %v3119 = vpop.f32.mrb[0].mxu0
    %3120 = vmatprep.mubr.bf16.mxu0 0
    %3121 = vmatmul.mubr.bf16.gmra.mrb[0].mxu0 %v2589
    %v3122 = vpop.f32.mrb[0].mxu0
    %v3123 = vadd.f32 %v2834, %v3122
    %v3124 = vpop.f32.mrb[0].mxu0
    %v3125 = vpop.f32.mrb[0].mxu0
    %v3126 = vadd.f32 %v2837, %v3125
    %v3127 = vpop.f32.mrb[0].mxu0
    %3128 = vmatprep.mubr.bf16.mxu0 0
    %3129 = vmatmul.mubr.bf16.gmra.mrb[0].mxu0 %v2592
    %v3130 = vpop.f32.mrb[0].mxu0
    %v3131 = vadd.f32 %v2842, %v3130
    %v3132 = vpop.f32.mrb[0].mxu0
    %v3133 = vpop.f32.mrb[0].mxu0
    %v3134 = vadd.f32 %v2845, %v3133
    %v3135 = vpop.f32.mrb[0].mxu0
    %3136 = vmatprep.mubr.bf16.mxu0 0
    %3137 = vmatmul.mubr.bf16.gmra.mrb[0].mxu0 %v2595
    %v3138 = vpop.f32.mrb[0].mxu0
    %v3139 = vadd.f32 %v2850, %v3138
    %v3140 = vpop.f32.mrb[0].mxu0
    %v3141 = vpop.f32.mrb[0].mxu0
    %v3142 = vadd.f32 %v2853, %v3141
    %v3143 = vpop.f32.mrb[0].mxu0
    %3144 = vmatprep.mubr.bf16.mxu0 0
    %3145 = vmatmul.mubr.bf16.gmra.mrb[0].mxu0 %v2598
    %v3146 = vpop.f32.mrb[0].mxu0
    %v3147 = vadd.f32 %v2858, %v3146
    %v3148 = vpop.f32.mrb[0].mxu0
    %v3149 = vpop.f32.mrb[0].mxu0
    %v3150 = vadd.f32 %v2861, %v3149
    %v3151 = vpop.f32.mrb[0].mxu0
    %3152 = vmatprep.mubr.bf16.mxu0 0
    %3153 = vmatmul.mubr.bf16.gmra.mrb[0].mxu0 %v2601
    %v3154 = vpop.f32.mrb[0].mxu0
    %v3155 = vadd.f32 %v2866, %v3154
    %v3156 = vpop.f32.mrb[0].mxu0
    %v3157 = vpop.f32.mrb[0].mxu0
    %v3158 = vadd.f32 %v2869, %v3157
    %v3159 = vpop.f32.mrb[0].mxu0
    %3160 = vmatprep.mubr.bf16.mxu0 0
    %3161 = vmatmul.mubr.bf16.gmra.mrb[0].mxu0 %v2604
    %v3162 = vpop.f32.mrb[0].mxu0
    %v3163 = vadd.f32 %v2874, %v3162
    %v3164 = vpop.f32.mrb[0].mxu0
    %v3165 = vpop.f32.mrb[0].mxu0
    %v3166 = vadd.f32 %v2877, %v3165
    %v3167 = vpop.f32.mrb[0].mxu0
    %3168 = vmatprep.mubr.bf16.mxu0 0
    %3169 = vmatmul.mubr.bf16.gmra.mrb[0].mxu0 %v2607
    %v3170 = vpop.f32.mrb[0].mxu0
    %v3171 = vadd.f32 %v2882, %v3170
    %v3172 = vpop.f32.mrb[0].mxu0
    %v3173 = vpop.f32.mrb[0].mxu0
    %v3174 = vadd.f32 %v2885, %v3173
    %v3175 = vpop.f32.mrb[0].mxu0
    %3176 = vmatprep.mubr.bf16.mxu0 0
    %3177 = vmatmul.mubr.bf16.gmra.mrb[0].mxu0 %v2610
    %v3178 = vpop.f32.mrb[0].mxu0
    %v3179 = vadd.f32 %v2890, %v3178
    %v3180 = vpop.f32.mrb[0].mxu0
    %v3181 = vpop.f32.mrb[0].mxu0
    %v3182 = vadd.f32 %v2893, %v3181
    %v3183 = vpop.f32.mrb[0].mxu0
    %3184 = vmatprep.mubr.bf16.mxu0 0
    %3185 = vmatmul.mubr.bf16.gmra.mrb[0].mxu0 %v2613
    %v3186 = vpop.f32.mrb[0].mxu0
    %v3187 = vadd.f32 %v2898, %v3186
    %v3188 = vpop.f32.mrb[0].mxu0
    %v3189 = vpop.f32.mrb[0].mxu0
    %v3190 = vadd.f32 %v2901, %v3189
    %v3191 = vpop.f32.mrb[0].mxu0
    %3192 = vdwg.mxu0
    %v3193 = vand.u32 2147483647, %v2939
    %v3194 = vand.u32 2147483647, %v2942
    %v3195 = vand.u32 2147483647, %v2947
    %v3196 = vand.u32 2147483647, %v2950
    %v3197 = vand.u32 2147483647, %v2955
    %v3198 = vand.u32 2147483647, %v2958
    %v3199 = vand.u32 2147483647, %v2963
    %v3200 = vand.u32 2147483647, %v2966
    %v3201 = vand.u32 2147483647, %v2971
    %v3202 = vand.u32 2147483647, %v2974
    %v3203 = vand.u32 2147483647, %v2979
    %v3204 = vand.u32 2147483647, %v2982
    %v3205 = vand.u32 2147483647, %v2987
    %v3206 = vand.u32 2147483647, %v2990
    %v3207 = vand.u32 2147483647, %v2995
    %v3208 = vand.u32 2147483647, %v2998
    %v3209 = vand.u32 2147483647, %v3003
    %v3210 = vand.u32 2147483647, %v3006
    %v3211 = vand.u32 2147483647, %v3011
    %v3212 = vand.u32 2147483647, %v3014
    %v3213 = vand.u32 2147483647, %v3019
    %v3214 = vand.u32 2147483647, %v3022
    %v3215 = vand.u32 2147483647, %v3027
    %v3216 = vand.u32 2147483647, %v3030
    %v3217 = vand.u32 2147483647, %v3035
    %v3218 = vand.u32 2147483647, %v3038
    %v3219 = vand.u32 2147483647, %v3043
    %v3220 = vand.u32 2147483647, %v3046
    %v3221 = vand.u32 2147483647, %v3051
    %v3222 = vand.u32 2147483647, %v3054
    %v3223 = vand.u32 2147483647, %v3059
    %v3224 = vand.u32 2147483647, %v3062
    %v3225 = vand.u32 2147483647, %v3067
    %v3226 = vand.u32 2147483647, %v3070
    %v3227 = vand.u32 2147483647, %v3075
    %v3228 = vand.u32 2147483647, %v3078
    %v3229 = vand.u32 2147483647, %v3083
    %v3230 = vand.u32 2147483647, %v3086
    %v3231 = vand.u32 2147483647, %v3091
    %v3232 = vand.u32 2147483647, %v3094
    %v3233 = vand.u32 2147483647, %v3099
    %v3234 = vand.u32 2147483647, %v3102
    %v3235 = vand.u32 2147483647, %v3107
    %v3236 = vand.u32 2147483647, %v3110
    %v3237 = vand.u32 2147483647, %v3115
    %v3238 = vand.u32 2147483647, %v3118
    %v3239 = vand.u32 2147483647, %v3123
    %v3240 = vand.u32 2147483647, %v3126
    %v3241 = vand.u32 2147483647, %v3131
    %v3242 = vand.u32 2147483647, %v3134
    %v3243 = vand.u32 2147483647, %v3139
    %v3244 = vand.u32 2147483647, %v3142
    %v3245 = vand.u32 2147483647, %v3147
    %v3246 = vand.u32 2147483647, %v3150
    %v3247 = vand.u32 2147483647, %v3155
    %v3248 = vand.u32 2147483647, %v3158
    %v3249 = vand.u32 2147483647, %v3163
    %v3250 = vand.u32 2147483647, %v3166
    %v3251 = vand.u32 2147483647, %v3171
    %v3252 = vand.u32 2147483647, %v3174
    %v3253 = vand.u32 2147483647, %v3179
    %v3254 = vand.u32 2147483647, %v3182
    %v3255 = vand.u32 2147483647, %v3187
    %v3256 = vand.u32 2147483647, %v3190
    %3321 = vrot.lane.b32.xlu0 %v3193, 96
    %v3322 = vpop.permute.xlu0 %3321
    %3323 = vrot.lane.b32.xlu0 %v3194, 96
    %v3324 = vpop.permute.xlu0 %3323
    %3325 = vrot.lane.b32.xlu0 %v3195, 96
    %v3326 = vpop.permute.xlu0 %3325
    %3327 = vrot.lane.b32.xlu0 %v3196, 96
    %v3328 = vpop.permute.xlu0 %3327
    %3329 = vrot.lane.b32.xlu0 %v3197, 96
    %v3330 = vpop.permute.xlu0 %3329
    %3331 = vrot.lane.b32.xlu0 %v3198, 96
    %v3332 = vpop.permute.xlu0 %3331
    %3333 = vrot.lane.b32.xlu0 %v3199, 96
    %v3334 = vpop.permute.xlu0 %3333
    %3335 = vrot.lane.b32.xlu0 %v3200, 96
    %v3336 = vpop.permute.xlu0 %3335
    %3337 = vrot.lane.b32.xlu0 %v3201, 96
    %v3338 = vpop.permute.xlu0 %3337
    %3339 = vrot.lane.b32.xlu0 %v3202, 96
    %v3340 = vpop.permute.xlu0 %3339
    %3341 = vrot.lane.b32.xlu0 %v3203, 96
    %v3342 = vpop.permute.xlu0 %3341
    %3343 = vrot.lane.b32.xlu0 %v3204, 96
    %v3344 = vpop.permute.xlu0 %3343
    %3345 = vrot.lane.b32.xlu0 %v3205, 96
    %v3346 = vpop.permute.xlu0 %3345
    %3347 = vrot.lane.b32.xlu0 %v3206, 96
    %v3348 = vpop.permute.xlu0 %3347
    %3349 = vrot.lane.b32.xlu0 %v3207, 96
    %v3350 = vpop.permute.xlu0 %3349
    %3351 = vrot.lane.b32.xlu0 %v3208, 96
    %v3352 = vpop.permute.xlu0 %3351
    %3353 = vrot.lane.b32.xlu0 %v3209, 96
    %v3354 = vpop.permute.xlu0 %3353
    %3355 = vrot.lane.b32.xlu0 %v3210, 96
    %v3356 = vpop.permute.xlu0 %3355
    %3357 = vrot.lane.b32.xlu0 %v3211, 96
    %v3358 = vpop.permute.xlu0 %3357
    %3359 = vrot.lane.b32.xlu0 %v3212, 96
    %v3360 = vpop.permute.xlu0 %3359
    %3361 = vrot.lane.b32.xlu0 %v3213, 96
    %v3362 = vpop.permute.xlu0 %3361
    %3363 = vrot.lane.b32.xlu0 %v3214, 96
    %v3364 = vpop.permute.xlu0 %3363
    %3365 = vrot.lane.b32.xlu0 %v3215, 96
    %v3366 = vpop.permute.xlu0 %3365
    %3367 = vrot.lane.b32.xlu0 %v3216, 96
    %v3368 = vpop.permute.xlu0 %3367
    %3369 = vrot.lane.b32.xlu0 %v3217, 96
    %v3370 = vpop.permute.xlu0 %3369
    %3371 = vrot.lane.b32.xlu0 %v3218, 96
    %v3372 = vpop.permute.xlu0 %3371
    %3373 = vrot.lane.b32.xlu0 %v3219, 96
    %v3374 = vpop.permute.xlu0 %3373
    %3375 = vrot.lane.b32.xlu0 %v3220, 96
    %v3376 = vpop.permute.xlu0 %3375
    %3377 = vrot.lane.b32.xlu0 %v3221, 96
    %v3378 = vpop.permute.xlu0 %3377
    %3379 = vrot.lane.b32.xlu0 %v3222, 96
    %v3380 = vpop.permute.xlu0 %3379
    %3381 = vrot.lane.b32.xlu0 %v3223, 96
    %v3382 = vpop.permute.xlu0 %3381
    %3383 = vrot.lane.b32.xlu0 %v3224, 96
    %v3384 = vpop.permute.xlu0 %3383
    %3385 = vrot.lane.b32.xlu0 %v3225, 96
    %v3386 = vpop.permute.xlu0 %3385
    %3387 = vrot.lane.b32.xlu0 %v3226, 96
    %v3388 = vpop.permute.xlu0 %3387
    %3389 = vrot.lane.b32.xlu0 %v3227, 96
    %v3390 = vpop.permute.xlu0 %3389
    %3391 = vrot.lane.b32.xlu0 %v3228, 96
    %v3392 = vpop.permute.xlu0 %3391
    %3393 = vrot.lane.b32.xlu0 %v3229, 96
    %v3394 = vpop.permute.xlu0 %3393
    %3395 = vrot.lane.b32.xlu0 %v3230, 96
    %v3396 = vpop.permute.xlu0 %3395
    %3397 = vrot.lane.b32.xlu0 %v3231, 96
    %v3398 = vpop.permute.xlu0 %3397
    %3399 = vrot.lane.b32.xlu0 %v3232, 96
    %v3400 = vpop.permute.xlu0 %3399
    %3401 = vrot.lane.b32.xlu0 %v3233, 96
    %v3402 = vpop.permute.xlu0 %3401
    %3403 = vrot.lane.b32.xlu0 %v3234, 96
    %v3404 = vpop.permute.xlu0 %3403
    %3405 = vrot.lane.b32.xlu0 %v3235, 96
    %v3406 = vpop.permute.xlu0 %3405
    %3407 = vrot.lane.b32.xlu0 %v3236, 96
    %v3408 = vpop.permute.xlu0 %3407
    %3409 = vrot.lane.b32.xlu0 %v3237, 96
    %v3410 = vpop.permute.xlu0 %3409
    %3411 = vrot.lane.b32.xlu0 %v3238, 96
    %v3412 = vpop.permute.xlu0 %3411
    %3413 = vrot.lane.b32.xlu0 %v3239, 96
    %v3414 = vpop.permute.xlu0 %3413
    %3415 = vrot.lane.b32.xlu0 %v3240, 96
    %v3416 = vpop.permute.xlu0 %3415
    %3417 = vrot.lane.b32.xlu0 %v3241, 96
    %v3418 = vpop.permute.xlu0 %3417
    %3419 = vrot.lane.b32.xlu0 %v3242, 96
    %v3420 = vpop.permute.xlu0 %3419
    %3421 = vrot.lane.b32.xlu0 %v3243, 96
    %v3422 = vpop.permute.xlu0 %3421
    %3423 = vrot.lane.b32.xlu0 %v3244, 96
    %v3424 = vpop.permute.xlu0 %3423
    %3425 = vrot.lane.b32.xlu0 %v3245, 96
    %v3426 = vpop.permute.xlu0 %3425
    %3427 = vrot.lane.b32.xlu0 %v3246, 96
    %v3428 = vpop.permute.xlu0 %3427
    %3429 = vrot.lane.b32.xlu0 %v3247, 96
    %v3430 = vpop.permute.xlu0 %3429
    %3431 = vrot.lane.b32.xlu0 %v3248, 96
    %v3432 = vpop.permute.xlu0 %3431
    %3433 = vrot.lane.b32.xlu0 %v3249, 96
    %v3434 = vpop.permute.xlu0 %3433
    %3435 = vrot.lane.b32.xlu0 %v3250, 96
    %v3436 = vpop.permute.xlu0 %3435
    %3437 = vrot.lane.b32.xlu0 %v3251, 96
    %v3438 = vpop.permute.xlu0 %3437
    %3439 = vrot.lane.b32.xlu0 %v3252, 96
    %v3440 = vpop.permute.xlu0 %3439
    %3441 = vrot.lane.b32.xlu0 %v3253, 96
    %v3442 = vpop.permute.xlu0 %3441
    %3443 = vrot.lane.b32.xlu0 %v3254, 96
    %v3444 = vpop.permute.xlu0 %3443
    %3445 = vrot.lane.b32.xlu0 %v3255, 96
    %v3446 = vpop.permute.xlu0 %3445
    %3447 = vrot.lane.b32.xlu0 %v3256, 96
    %v3448 = vpop.permute.xlu0 %3447
    %v3513 = vadd.f32 %v3193, %v3322
    %v3514 = vadd.f32 %v3194, %v3324
    %v3515 = vadd.f32 %v3195, %v3326
    %v3516 = vadd.f32 %v3196, %v3328
    %v3517 = vadd.f32 %v3197, %v3330
    %v3518 = vadd.f32 %v3198, %v3332
    %v3519 = vadd.f32 %v3199, %v3334
    %v3520 = vadd.f32 %v3200, %v3336
    %v3521 = vadd.f32 %v3201, %v3338
    %v3522 = vadd.f32 %v3202, %v3340
    %v3523 = vadd.f32 %v3203, %v3342
    %v3524 = vadd.f32 %v3204, %v3344
    %v3525 = vadd.f32 %v3205, %v3346
    %v3526 = vadd.f32 %v3206, %v3348
    %v3527 = vadd.f32 %v3207, %v3350
    %v3528 = vadd.f32 %v3208, %v3352
    %v3529 = vadd.f32 %v3209, %v3354
    %v3530 = vadd.f32 %v3210, %v3356
    %v3531 = vadd.f32 %v3211, %v3358
    %v3532 = vadd.f32 %v3212, %v3360
    %v3533 = vadd.f32 %v3213, %v3362
    %v3534 = vadd.f32 %v3214, %v3364
    %v3535 = vadd.f32 %v3215, %v3366
    %v3536 = vadd.f32 %v3216, %v3368
    %v3537 = vadd.f32 %v3217, %v3370
    %v3538 = vadd.f32 %v3218, %v3372
    %v3539 = vadd.f32 %v3219, %v3374
    %v3540 = vadd.f32 %v3220, %v3376
    %v3541 = vadd.f32 %v3221, %v3378
    %v3542 = vadd.f32 %v3222, %v3380
    %v3543 = vadd.f32 %v3223, %v3382
    %v3544 = vadd.f32 %v3224, %v3384
    %v3545 = vadd.f32 %v3225, %v3386
    %v3546 = vadd.f32 %v3226, %v3388
    %v3547 = vadd.f32 %v3227, %v3390
    %v3548 = vadd.f32 %v3228, %v3392
    %v3549 = vadd.f32 %v3229, %v3394
    %v3550 = vadd.f32 %v3230, %v3396
    %v3551 = vadd.f32 %v3231, %v3398
    %v3552 = vadd.f32 %v3232, %v3400
    %v3553 = vadd.f32 %v3233, %v3402
    %v3554 = vadd.f32 %v3234, %v3404
    %v3555 = vadd.f32 %v3235, %v3406
    %v3556 = vadd.f32 %v3236, %v3408
    %v3557 = vadd.f32 %v3237, %v3410
    %v3558 = vadd.f32 %v3238, %v3412
    %v3559 = vadd.f32 %v3239, %v3414
    %v3560 = vadd.f32 %v3240, %v3416
    %v3561 = vadd.f32 %v3241, %v3418
    %v3562 = vadd.f32 %v3242, %v3420
    %v3563 = vadd.f32 %v3243, %v3422
    %v3564 = vadd.f32 %v3244, %v3424
    %v3565 = vadd.f32 %v3245, %v3426
    %v3566 = vadd.f32 %v3246, %v3428
    %v3567 = vadd.f32 %v3247, %v3430
    %v3568 = vadd.f32 %v3248, %v3432
    %v3569 = vadd.f32 %v3249, %v3434
    %v3570 = vadd.f32 %v3250, %v3436
    %v3571 = vadd.f32 %v3251, %v3438
    %v3572 = vadd.f32 %v3252, %v3440
    %v3573 = vadd.f32 %v3253, %v3442
    %v3574 = vadd.f32 %v3254, %v3444
    %v3575 = vadd.f32 %v3255, %v3446
    %v3576 = vadd.f32 %v3256, %v3448
    %v3577 = vsel %vm1892, %v246, 0.0
    %v3578 = vsel %vm1892, %v248, 0.0
    %v3579 = vadd.f32 %v3577, %v3578
    %v3580 = vsel %vm1892, %v251, 0.0
    %v3581 = vadd.f32 %v3579, %v3580
    %v3582 = vsel %vm1892, %v253, 0.0
    %v3583 = vadd.f32 %v3581, %v3582
    %v3584 = vsel %vm1892, %v256, 0.0
    %v3585 = vadd.f32 %v3583, %v3584
    %v3586 = vsel %vm1892, %v258, 0.0
    %v3587 = vadd.f32 %v3585, %v3586
    %v3588 = vsel %vm1892, %v261, 0.0
    %v3589 = vadd.f32 %v3587, %v3588
    %v3590 = vsel %vm1892, %v263, 0.0
    %v3591 = vadd.f32 %v3589, %v3590
    %v3592 = vsel %vm1892, %v266, 0.0
    %v3593 = vadd.f32 %v3591, %v3592
    %v3594 = vsel %vm1892, %v268, 0.0
    %v3595 = vadd.f32 %v3593, %v3594
    %v3596 = vsel %vm1892, %v271, 0.0
    %v3597 = vadd.f32 %v3595, %v3596
    %v3598 = vsel %vm1892, %v273, 0.0
    %v3599 = vadd.f32 %v3597, %v3598
    %v3600 = vsel %vm1892, %v276, 0.0
    %v3601 = vadd.f32 %v3599, %v3600
    %v3602 = vsel %vm1892, %v278, 0.0
    %v3603 = vadd.f32 %v3601, %v3602
    %v3604 = vsel %vm1892, %v281, 0.0
    %v3605 = vadd.f32 %v3603, %v3604
    %v3606 = vsel %vm1892, %v283, 0.0
    %v3607 = vadd.f32 %v3605, %v3606
    %v3608 = vsel %vm1892, %v286, 0.0
    %v3609 = vadd.f32 %v3607, %v3608
    %v3610 = vsel %vm1892, %v288, 0.0
    %v3611 = vadd.f32 %v3609, %v3610
    %v3612 = vsel %vm1892, %v291, 0.0
    %v3613 = vadd.f32 %v3611, %v3612
    %v3614 = vsel %vm1892, %v293, 0.0
    %v3615 = vadd.f32 %v3613, %v3614
    %v3616 = vsel %vm1892, %v296, 0.0
    %v3617 = vadd.f32 %v3615, %v3616
    %v3618 = vsel %vm1892, %v298, 0.0
    %v3619 = vadd.f32 %v3617, %v3618
    %v3620 = vsel %vm1892, %v301, 0.0
    %v3621 = vadd.f32 %v3619, %v3620
    %v3622 = vsel %vm1892, %v303, 0.0
    %v3623 = vadd.f32 %v3621, %v3622
    %v3624 = vsel %vm1892, %v306, 0.0
    %v3625 = vadd.f32 %v3623, %v3624
    %v3626 = vsel %vm1892, %v308, 0.0
    %v3627 = vadd.f32 %v3625, %v3626
    %v3628 = vsel %vm1892, %v311, 0.0
    %v3629 = vadd.f32 %v3627, %v3628
    %v3630 = vsel %vm1892, %v313, 0.0
    %v3631 = vadd.f32 %v3629, %v3630
    %v3632 = vsel %vm1892, %v316, 0.0
    %v3633 = vadd.f32 %v3631, %v3632
    %v3634 = vsel %vm1892, %v318, 0.0
    %v3635 = vadd.f32 %v3633, %v3634
    %v3636 = vsel %vm1892, %v1144, 0.0
    %v3637 = vadd.f32 %v3635, %v3636
    %v3638 = vsel %vm1892, %v1146, 0.0
    %v3639 = vadd.f32 %v3637, %v3638
    %v3640 = vrot.slane %v3639, 4
    %v3641 = vadd.f32 %v3639, %v3640
    %v3642 = vrot.slane %v3641, 2
    %v3643 = vadd.f32 %v3641, %v3642
    %v3644 = vrot.slane %v3643, 1
    %v3645 = vadd.f32 %v3643, %v3644
    %v3646 = vsel %vm1892, %v326, 0.0
    %v3647 = vsel %vm1892, %v328, 0.0
    %v3648 = vadd.f32 %v3646, %v3647
    %v3649 = vsel %vm1892, %v331, 0.0
    %v3650 = vadd.f32 %v3648, %v3649
    %v3651 = vsel %vm1892, %v333, 0.0
    %v3652 = vadd.f32 %v3650, %v3651
    %v3653 = vsel %vm1892, %v336, 0.0
    %v3654 = vadd.f32 %v3652, %v3653
    %v3655 = vsel %vm1892, %v338, 0.0
    %v3656 = vadd.f32 %v3654, %v3655
    %v3657 = vsel %vm1892, %v341, 0.0
    %v3658 = vadd.f32 %v3656, %v3657
    %v3659 = vsel %vm1892, %v343, 0.0
    %v3660 = vadd.f32 %v3658, %v3659
    %v3661 = vsel %vm1892, %v346, 0.0
    %v3662 = vadd.f32 %v3660, %v3661
    %v3663 = vsel %vm1892, %v348, 0.0
    %v3664 = vadd.f32 %v3662, %v3663
    %v3665 = vsel %vm1892, %v351, 0.0
    %v3666 = vadd.f32 %v3664, %v3665
    %v3667 = vsel %vm1892, %v353, 0.0
    %v3668 = vadd.f32 %v3666, %v3667
    %v3669 = vsel %vm1892, %v356, 0.0
    %v3670 = vadd.f32 %v3668, %v3669
    %v3671 = vsel %vm1892, %v358, 0.0
    %v3672 = vadd.f32 %v3670, %v3671
    %v3673 = vsel %vm1892, %v361, 0.0
    %v3674 = vadd.f32 %v3672, %v3673
    %v3675 = vsel %vm1892, %v363, 0.0
    %v3676 = vadd.f32 %v3674, %v3675
    %v3677 = vsel %vm1892, %v366, 0.0
    %v3678 = vadd.f32 %v3676, %v3677
    %v3679 = vsel %vm1892, %v368, 0.0
    %v3680 = vadd.f32 %v3678, %v3679
    %v3681 = vsel %vm1892, %v371, 0.0
    %v3682 = vadd.f32 %v3680, %v3681
    %v3683 = vsel %vm1892, %v373, 0.0
    %v3684 = vadd.f32 %v3682, %v3683
    %v3685 = vsel %vm1892, %v376, 0.0
    %v3686 = vadd.f32 %v3684, %v3685
    %v3687 = vsel %vm1892, %v378, 0.0
    %v3688 = vadd.f32 %v3686, %v3687
    %v3689 = vsel %vm1892, %v381, 0.0
    %v3690 = vadd.f32 %v3688, %v3689
    %v3691 = vsel %vm1892, %v383, 0.0
    %v3692 = vadd.f32 %v3690, %v3691
    %v3693 = vsel %vm1892, %v386, 0.0
    %v3694 = vadd.f32 %v3692, %v3693
    %v3695 = vsel %vm1892, %v388, 0.0
    %v3696 = vadd.f32 %v3694, %v3695
    %v3697 = vsel %vm1892, %v391, 0.0
    %v3698 = vadd.f32 %v3696, %v3697
    %v3699 = vsel %vm1892, %v393, 0.0
    %v3700 = vadd.f32 %v3698, %v3699
    %v3701 = vsel %vm1892, %v396, 0.0
    %v3702 = vadd.f32 %v3700, %v3701
    %v3703 = vsel %vm1892, %v398, 0.0
    %v3704 = vadd.f32 %v3702, %v3703
    %v3705 = vsel %vm1892, %v1149, 0.0
    %v3706 = vadd.f32 %v3704, %v3705
    %v3707 = vsel %vm1892, %v1151, 0.0
    %v3708 = vadd.f32 %v3706, %v3707
    %v3709 = vrot.slane %v3708, 4
    %v3710 = vadd.f32 %v3708, %v3709
    %v3711 = vrot.slane %v3710, 2
    %v3712 = vadd.f32 %v3710, %v3711
    %v3713 = vrot.slane %v3712, 1
    %v3714 = vadd.f32 %v3712, %v3713
    %v3715 = vrcp.pop 256.0
    %v3716 = vmul.f32 %v3645, %v3715
    %v3717 = vmul.f32 %v3714, %v3715
    %v3718 = vld [vmem:[%s4] sm:$0xff]
    %v3719 = vld [vmem:[%s4 + $0x8] sm:$0xff]
    %v3720 = vld [vmem:[%s4 + $0x10] sm:$0xff]
    %v3721 = vld [vmem:[%s4 + $0x18] sm:$0xff]
    %v3722 = vld [vmem:[%s5] sm:$0x1]
    %v3724 = vlaneseq
    %v3725 = vshrl.u32 %v3724, 7
    %v3726 = vsub.s32 0, %v3725
    %v3727 = vrot.slane %v3722, %v3726
    %vm3731 = vcmask 1041409
    %v3732 = vsel %vm3731, %v3717, %v3716
    %v3733 = vsel %vm1892, %v3732, 0
    %3735 = vmatprep.subr.mxu0 0.0
    %3736 = vmatpush1.msra.mxu0 %v3718
    %3737 = vmatprep.subr.mxu0 0.0
    %3738 = vmatpush1.msra.mxu0 %v3719
    %3739 = vmatprep.subr.mxu0 0.0
    %3740 = vmatpush1.msra.mxu0 %v3720
    %3741 = vmatprep.subr.mxu0 0.0
    %3742 = vmatpush1.msra.mxu0 %v3721
    %3743 = vmatprep.subr.mxu0 0.0
    %3744 = vmatpush1.msra.mxu0 0.0
    %3745 = vmatprep.subr.mxu0 0.0
    %3746 = vmatpush1.msra.mxu0 0.0
    %3747 = vmatprep.subr.mxu0 0.0
    %3748 = vmatpush1.msra.mxu0 0.0
    %3749 = vmatprep.subr.mxu0 0.0
    %3750 = vmatpush1.msra.mxu0 0.0
    %3751 = vmatprep.subr.mxu0 0.0
    %3752 = vmatpush1.msra.mxu0 0.0
    %3753 = vmatprep.subr.mxu0 0.0
    %3754 = vmatpush1.msra.mxu0 0.0
    %3755 = vmatprep.subr.mxu0 0.0
    %3756 = vmatpush1.msra.mxu0 0.0
    %3757 = vmatprep.subr.mxu0 0.0
    %3758 = vmatpush1.msra.mxu0 0.0
    %3759 = vmatprep.subr.mxu0 0.0
    %3760 = vmatpush1.msra.mxu0 0.0
    %3761 = vmatprep.subr.mxu0 0.0
    %3762 = vmatpush1.msra.mxu0 0.0
    %3763 = vmatprep.subr.mxu0 0.0
    %3764 = vmatpush1.msra.mxu0 0.0
    %3765 = vmatprep.subr.mxu0 0.0
    %3766 = vmatpush1.msra.mxu0 0.0
    %3767 = vmatprep.subr.mxu0 0.0
    %3768 = vmatpush1.msra.mxu0 0.0
    %3769 = vmatprep.subr.mxu0 0.0
    %3770 = vmatpush1.msra.mxu0 0.0
    %3771 = vmatprep.subr.mxu0 0.0
    %3772 = vmatpush1.msra.mxu0 0.0
    %3773 = vmatprep.subr.mxu0 0.0
    %3774 = vmatpush1.msra.mxu0 0.0
    %3775 = vmatprep.subr.mxu0 0.0
    %3776 = vmatpush1.msra.mxu0 0.0
    %3777 = vmatprep.subr.mxu0 0.0
    %3778 = vmatpush1.msra.mxu0 0.0
    %3779 = vmatprep.subr.mxu0 0.0
    %3780 = vmatpush1.msra.mxu0 0.0
    %3781 = vmatprep.subr.mxu0 0.0
    %3782 = vmatpush1.msra.mxu0 0.0
    %3783 = vmatprep.subr.mxu0 0.0
    %3784 = vmatpush1.msra.mxu0 0.0
    %3785 = vmatprep.subr.mxu0 0.0
    %3786 = vmatpush1.msra.mxu0 0.0
    %3787 = vmatprep.subr.mxu0 0.0
    %3788 = vmatpush1.msra.mxu0 0.0
    %3789 = vmatprep.subr.mxu0 0.0
    %3790 = vmatpush1.msra.mxu0 0.0
    %3791 = vmatprep.subr.mxu0 0.0
    %3792 = vmatpush1.msra.mxu0 0.0
    %3793 = vmatprep.subr.mxu0 0.0
    %3794 = vmatpush1.msra.mxu0 0.0
    %3795 = vmatprep.subr.mxu0 0.0
    %3796 = vmatpush1.msra.mxu0 0.0
    %3797 = vmatprep.subr.mxu0 0.0
    %3798 = vmatpush1.msra.mxu0 0.0
    %3799 = vmatprep.mubr.f32.mxu0 0.0
    %3800 = vmatmul.mubr.f32.gmra.mrb[0].mxu0 %v3733
    %v3801 = vpop.f32.mrb[0].mxu0
    %v3802 = vadd.f32 %v3727, %v3801
    %v3803 = vpop.f32.mrb[0].mxu0
    %3804 = vdwg.mxu0
    %v3805 = vmax.f32 %v3802, 0.0
    %v3806 = vld [vmem:[%s6] sm:$0x3]
    %v3807 = vld [vmem:[%s7] sm:$0x1]
    %v3809 = vlaneseq
    %v3810 = vshrl.u32 %v3809, 7
    %v3811 = vsub.s32 0, %v3810
    %v3812 = vrot.slane %v3807, %v3811
    %vm3814 = vcmask 15360
    %v3816 = vsel %vm3814, %v3805, 0
    %vm3818 = vcmask 1041408
    %v3820 = vsel %vm3818, %v3806, 0
    %3822 = vmatprep.subr.mxu0 0.0
    %3823 = vmatpush1.msra.mxu0 %v3820
    %3824 = vmatprep.subr.mxu0 0.0
    %3825 = vmatpush1.msra.mxu0 0.0
    %3826 = vmatprep.subr.mxu0 0.0
    %3827 = vmatpush1.msra.mxu0 0.0
    %3828 = vmatprep.subr.mxu0 0.0
    %3829 = vmatpush1.msra.mxu0 0.0
    %3830 = vmatprep.subr.mxu0 0.0
    %3831 = vmatpush1.msra.mxu0 0.0
    %3832 = vmatprep.subr.mxu0 0.0
    %3833 = vmatpush1.msra.mxu0 0.0
    %3834 = vmatprep.subr.mxu0 0.0
    %3835 = vmatpush1.msra.mxu0 0.0
    %3836 = vmatprep.subr.mxu0 0.0
    %3837 = vmatpush1.msra.mxu0 0.0
    %3838 = vmatprep.subr.mxu0 0.0
    %3839 = vmatpush1.msra.mxu0 0.0
    %3840 = vmatprep.subr.mxu0 0.0
    %3841 = vmatpush1.msra.mxu0 0.0
    %3842 = vmatprep.subr.mxu0 0.0
    %3843 = vmatpush1.msra.mxu0 0.0
    %3844 = vmatprep.subr.mxu0 0.0
    %3845 = vmatpush1.msra.mxu0 0.0
    %3846 = vmatprep.subr.mxu0 0.0
    %3847 = vmatpush1.msra.mxu0 0.0
    %3848 = vmatprep.subr.mxu0 0.0
    %3849 = vmatpush1.msra.mxu0 0.0
    %3850 = vmatprep.subr.mxu0 0.0
    %3851 = vmatpush1.msra.mxu0 0.0
    %3852 = vmatprep.subr.mxu0 0.0
    %3853 = vmatpush1.msra.mxu0 0.0
    %3854 = vmatprep.subr.mxu0 0.0
    %3855 = vmatpush1.msra.mxu0 0.0
    %3856 = vmatprep.subr.mxu0 0.0
    %3857 = vmatpush1.msra.mxu0 0.0
    %3858 = vmatprep.subr.mxu0 0.0
    %3859 = vmatpush1.msra.mxu0 0.0
    %3860 = vmatprep.subr.mxu0 0.0
    %3861 = vmatpush1.msra.mxu0 0.0
    %3862 = vmatprep.subr.mxu0 0.0
    %3863 = vmatpush1.msra.mxu0 0.0
    %3864 = vmatprep.subr.mxu0 0.0
    %3865 = vmatpush1.msra.mxu0 0.0
    %3866 = vmatprep.subr.mxu0 0.0
    %3867 = vmatpush1.msra.mxu0 0.0
    %3868 = vmatprep.subr.mxu0 0.0
    %3869 = vmatpush1.msra.mxu0 0.0
    %3870 = vmatprep.subr.mxu0 0.0
    %3871 = vmatpush1.msra.mxu0 0.0
    %3872 = vmatprep.subr.mxu0 0.0
    %3873 = vmatpush1.msra.mxu0 0.0
    %3874 = vmatprep.subr.mxu0 0.0
    %3875 = vmatpush1.msra.mxu0 0.0
    %3876 = vmatprep.subr.mxu0 0.0
    %3877 = vmatpush1.msra.mxu0 0.0
    %3878 = vmatprep.subr.mxu0 0.0
    %3879 = vmatpush1.msra.mxu0 0.0
    %3880 = vmatprep.subr.mxu0 0.0
    %3881 = vmatpush1.msra.mxu0 0.0
    %3882 = vmatprep.subr.mxu0 0.0
    %3883 = vmatpush1.msra.mxu0 0.0
    %3884 = vmatprep.subr.mxu0 0.0
    %3885 = vmatpush1.msra.mxu0 0.0
    %3886 = vmatprep.mubr.f32.mxu0 0.0
    %3887 = vmatmul.mubr.f32.gmra.mrb[0].mxu0 %v3816
    %v3888 = vpop.f32.mrb[0].mxu0
    %v3889 = vadd.f32 %v3812, %v3888
    %v3890 = vpop.f32.mrb[0].mxu0
    %3891 = vdwg.mxu0
    %v3892 = vxor.u32 %v3889, 2147483648
    %v3893 = vmul.f32 %v3892, 1.442695
    %v3894 = vpow.pop %v3893
    %v3895 = vadd.f32 %v3894, 1.0
    %v3896 = vrcp.pop %v3895
    %v3897 = vmul.f32 1.0, %v3896
    %v3898 = vld [vmem:[%s8] sm:$0x1]
    %v3900 = vlaneseq
    %v3901 = vshrl.u32 %v3900, 7
    %v3902 = vsub.s32 0, %v3901
    %v3903 = vrot.slane %v3898, %v3902
    %v3905 = vmul.f32 %v37, %v3903
    %v3906 = vmul.f32 %v38, %v3903
    %v3907 = vmul.f32 %v39, %v3903
    %v3908 = vmul.f32 %v40, %v3903
    %v3909 = vmul.f32 %v41, %v3903
    %v3910 = vmul.f32 %v42, %v3903
    %v3911 = vmul.f32 %v43, %v3903
    %v3912 = vmul.f32 %v44, %v3903
    %v3913 = vmul.f32 %v45, %v3903
    %v3914 = vmul.f32 %v46, %v3903
    %v3915 = vmul.f32 %v47, %v3903
    %v3916 = vmul.f32 %v48, %v3903
    %v3917 = vmul.f32 %v49, %v3903
    %v3918 = vmul.f32 %v50, %v3903
    %v3919 = vmul.f32 %v51, %v3903
    %v3920 = vmul.f32 %v52, %v3903
    %v3921 = vmul.f32 %v53, %v3903
    %v3922 = vmul.f32 %v54, %v3903
    %v3923 = vmul.f32 %v55, %v3903
    %v3924 = vmul.f32 %v56, %v3903
    %v3925 = vmul.f32 %v57, %v3903
    %v3926 = vmul.f32 %v58, %v3903
    %v3927 = vmul.f32 %v59, %v3903
    %v3928 = vmul.f32 %v60, %v3903
    %v3929 = vmul.f32 %v61, %v3903
    %v3930 = vmul.f32 %v62, %v3903
    %v3931 = vmul.f32 %v63, %v3903
    %v3932 = vmul.f32 %v64, %v3903
    %v3933 = vmul.f32 %v65, %v3903
    %v3934 = vmul.f32 %v66, %v3903
    %v3935 = vmul.f32 %v67, %v3903
    %v3936 = vmul.f32 %v68, %v3903
    %v3937 = vmul.f32 %v69, %v3903
    %v3938 = vmul.f32 %v70, %v3903
    %v3939 = vmul.f32 %v71, %v3903
    %v3940 = vmul.f32 %v72, %v3903
    %v3941 = vmul.f32 %v73, %v3903
    %v3942 = vmul.f32 %v74, %v3903
    %v3943 = vmul.f32 %v75, %v3903
    %v3944 = vmul.f32 %v76, %v3903
    %v3945 = vmul.f32 %v77, %v3903
    %v3946 = vmul.f32 %v78, %v3903
    %v3947 = vmul.f32 %v79, %v3903
    %v3948 = vmul.f32 %v80, %v3903
    %v3949 = vmul.f32 %v81, %v3903
    %v3950 = vmul.f32 %v82, %v3903
    %v3951 = vmul.f32 %v83, %v3903
    %v3952 = vmul.f32 %v84, %v3903
    %v3953 = vmul.f32 %v91, %v3903
    %v3954 = vmul.f32 %v92, %v3903
    %v3955 = vmul.f32 %v93, %v3903
    %v3956 = vmul.f32 %v94, %v3903
    %v3957 = vmul.f32 %v95, %v3903
    %v3958 = vmul.f32 %v96, %v3903
    %v3959 = vmul.f32 %v97, %v3903
    %v3960 = vmul.f32 %v98, %v3903
    %v3961 = vmul.f32 %v99, %v3903
    %v3962 = vmul.f32 %v100, %v3903
    %v3963 = vmul.f32 %v101, %v3903
    %v3964 = vmul.f32 %v102, %v3903
    %v3965 = vmul.f32 %v103, %v3903
    %v3966 = vmul.f32 %v104, %v3903
    %v3967 = vmul.f32 %v105, %v3903
    %v3968 = vmul.f32 %v106, %v3903
    %v3969 = vmul.f32 %v107, %v3903
    %v3970 = vmul.f32 %v108, %v3903
    %v3971 = vmul.f32 %v109, %v3903
    %v3972 = vmul.f32 %v110, %v3903
    %v3973 = vmul.f32 %v111, %v3903
    %v3974 = vmul.f32 %v112, %v3903
    %v3975 = vmul.f32 %v113, %v3903
    %v3976 = vmul.f32 %v114, %v3903
    %v3977 = vmul.f32 %v115, %v3903
    %v3978 = vmul.f32 %v116, %v3903
    %v3979 = vmul.f32 %v117, %v3903
    %v3980 = vmul.f32 %v118, %v3903
    %v3981 = vmul.f32 %v119, %v3903
    %v3982 = vmul.f32 %v120, %v3903
    %v3983 = vmul.f32 %v121, %v3903
    %v3984 = vmul.f32 %v122, %v3903
    %v3985 = vmul.f32 %v123, %v3903
    %v3986 = vmul.f32 %v124, %v3903
    %v3987 = vmul.f32 %v125, %v3903
    %v3988 = vmul.f32 %v126, %v3903
    %v3989 = vmul.f32 %v127, %v3903
    %v3990 = vmul.f32 %v128, %v3903
    %v3991 = vmul.f32 %v129, %v3903
    %v3992 = vmul.f32 %v130, %v3903
    %v3993 = vmul.f32 %v131, %v3903
    %v3994 = vmul.f32 %v132, %v3903
    %v3995 = vmul.f32 %v133, %v3903
    %v3996 = vmul.f32 %v134, %v3903
    %v3997 = vmul.f32 %v135, %v3903
    %v3998 = vmul.f32 %v136, %v3903
    %v3999 = vmul.f32 %v137, %v3903
    %v4000 = vmul.f32 %v138, %v3903
    %vm4001 = vcmask 261121
    %v4002 = vsel %vm4001, %v3905, 0.0
    %4003 = vadd.xlane.f32.xlu0 %v4002
    %v4004 = vpop.xlane.xlu0 %4003
    %v4005 = vsel %vm1892, %v3906, 0.0
    %4006 = vadd.xlane.f32.xlu0 %v4005
    %v4007 = vpop.xlane.xlu0 %4006
    %vm4008 = vcmask 253952
    %v4009 = vsel %vm4008, %v3907, 0.0
    %4010 = vadd.xlane.f32.xlu0 %v4009
    %v4011 = vpop.xlane.xlu0 %4010
    %v4012 = vsel %vm4001, %v3908, 0.0
    %4013 = vadd.xlane.f32.xlu0 %v4012
    %v4014 = vpop.xlane.xlu0 %4013
    %v4015 = vsel %vm1892, %v3909, 0.0
    %4016 = vadd.xlane.f32.xlu0 %v4015
    %v4017 = vpop.xlane.xlu0 %4016
    %v4018 = vsel %vm4008, %v3910, 0.0
    %4019 = vadd.xlane.f32.xlu0 %v4018
    %v4020 = vpop.xlane.xlu0 %4019
    %v4021 = vsel %vm4001, %v3911, 0.0
    %4022 = vadd.xlane.f32.xlu0 %v4021
    %v4023 = vpop.xlane.xlu0 %4022
    %v4024 = vsel %vm1892, %v3912, 0.0
    %4025 = vadd.xlane.f32.xlu0 %v4024
    %v4026 = vpop.xlane.xlu0 %4025
    %v4027 = vsel %vm4008, %v3913, 0.0
    %4028 = vadd.xlane.f32.xlu0 %v4027
    %v4029 = vpop.xlane.xlu0 %4028
    %v4030 = vsel %vm4001, %v3914, 0.0
    %4031 = vadd.xlane.f32.xlu0 %v4030
    %v4032 = vpop.xlane.xlu0 %4031
    %v4033 = vsel %vm1892, %v3915, 0.0
    %4034 = vadd.xlane.f32.xlu0 %v4033
    %v4035 = vpop.xlane.xlu0 %4034
    %v4036 = vsel %vm4008, %v3916, 0.0
    %4037 = vadd.xlane.f32.xlu0 %v4036
    %v4038 = vpop.xlane.xlu0 %4037
    %v4039 = vsel %vm4001, %v3917, 0.0
    %4040 = vadd.xlane.f32.xlu0 %v4039
    %v4041 = vpop.xlane.xlu0 %4040
    %v4042 = vsel %vm1892, %v3918, 0.0
    %4043 = vadd.xlane.f32.xlu0 %v4042
    %v4044 = vpop.xlane.xlu0 %4043
    %v4045 = vsel %vm4008, %v3919, 0.0
    %4046 = vadd.xlane.f32.xlu0 %v4045
    %v4047 = vpop.xlane.xlu0 %4046
    %v4048 = vsel %vm4001, %v3920, 0.0
    %4049 = vadd.xlane.f32.xlu0 %v4048
    %v4050 = vpop.xlane.xlu0 %4049
    %v4051 = vsel %vm1892, %v3921, 0.0
    %4052 = vadd.xlane.f32.xlu0 %v4051
    %v4053 = vpop.xlane.xlu0 %4052
    %v4054 = vsel %vm4008, %v3922, 0.0
    %4055 = vadd.xlane.f32.xlu0 %v4054
    %v4056 = vpop.xlane.xlu0 %4055
    %v4057 = vsel %vm4001, %v3923, 0.0
    %4058 = vadd.xlane.f32.xlu0 %v4057
    %v4059 = vpop.xlane.xlu0 %4058
    %v4060 = vsel %vm1892, %v3924, 0.0
    %4061 = vadd.xlane.f32.xlu0 %v4060
    %v4062 = vpop.xlane.xlu0 %4061
    %v4063 = vsel %vm4008, %v3925, 0.0
    %4064 = vadd.xlane.f32.xlu0 %v4063
    %v4065 = vpop.xlane.xlu0 %4064
    %v4066 = vsel %vm4001, %v3926, 0.0
    %4067 = vadd.xlane.f32.xlu0 %v4066
    %v4068 = vpop.xlane.xlu0 %4067
    %v4069 = vsel %vm1892, %v3927, 0.0
    %4070 = vadd.xlane.f32.xlu0 %v4069
    %v4071 = vpop.xlane.xlu0 %4070
    %v4072 = vsel %vm4008, %v3928, 0.0
    %4073 = vadd.xlane.f32.xlu0 %v4072
    %v4074 = vpop.xlane.xlu0 %4073
    %v4075 = vsel %vm4001, %v3929, 0.0
    %4076 = vadd.xlane.f32.xlu0 %v4075
    %v4077 = vpop.xlane.xlu0 %4076
    %v4078 = vsel %vm1892, %v3930, 0.0
    %4079 = vadd.xlane.f32.xlu0 %v4078
    %v4080 = vpop.xlane.xlu0 %4079
    %v4081 = vsel %vm4008, %v3931, 0.0
    %4082 = vadd.xlane.f32.xlu0 %v4081
    %v4083 = vpop.xlane.xlu0 %4082
    %v4084 = vsel %vm4001, %v3932, 0.0
    %4085 = vadd.xlane.f32.xlu0 %v4084
    %v4086 = vpop.xlane.xlu0 %4085
    %v4087 = vsel %vm1892, %v3933, 0.0
    %4088 = vadd.xlane.f32.xlu0 %v4087
    %v4089 = vpop.xlane.xlu0 %4088
    %v4090 = vsel %vm4008, %v3934, 0.0
    %4091 = vadd.xlane.f32.xlu0 %v4090
    %v4092 = vpop.xlane.xlu0 %4091
    %v4093 = vsel %vm4001, %v3935, 0.0
    %4094 = vadd.xlane.f32.xlu0 %v4093
    %v4095 = vpop.xlane.xlu0 %4094
    %v4096 = vsel %vm1892, %v3936, 0.0
    %4097 = vadd.xlane.f32.xlu0 %v4096
    %v4098 = vpop.xlane.xlu0 %4097
    %v4099 = vsel %vm4008, %v3937, 0.0
    %4100 = vadd.xlane.f32.xlu0 %v4099
    %v4101 = vpop.xlane.xlu0 %4100
    %v4102 = vsel %vm4001, %v3938, 0.0
    %4103 = vadd.xlane.f32.xlu0 %v4102
    %v4104 = vpop.xlane.xlu0 %4103
    %v4105 = vsel %vm1892, %v3939, 0.0
    %4106 = vadd.xlane.f32.xlu0 %v4105
    %v4107 = vpop.xlane.xlu0 %4106
    %v4108 = vsel %vm4008, %v3940, 0.0
    %4109 = vadd.xlane.f32.xlu0 %v4108
    %v4110 = vpop.xlane.xlu0 %4109
    %v4111 = vsel %vm4001, %v3941, 0.0
    %4112 = vadd.xlane.f32.xlu0 %v4111
    %v4113 = vpop.xlane.xlu0 %4112
    %v4114 = vsel %vm1892, %v3942, 0.0
    %4115 = vadd.xlane.f32.xlu0 %v4114
    %v4116 = vpop.xlane.xlu0 %4115
    %v4117 = vsel %vm4008, %v3943, 0.0
    %4118 = vadd.xlane.f32.xlu0 %v4117
    %v4119 = vpop.xlane.xlu0 %4118
    %v4120 = vsel %vm4001, %v3944, 0.0
    %4121 = vadd.xlane.f32.xlu0 %v4120
    %v4122 = vpop.xlane.xlu0 %4121
    %v4123 = vsel %vm1892, %v3945, 0.0
    %4124 = vadd.xlane.f32.xlu0 %v4123
    %v4125 = vpop.xlane.xlu0 %4124
    %v4126 = vsel %vm4008, %v3946, 0.0
    %4127 = vadd.xlane.f32.xlu0 %v4126
    %v4128 = vpop.xlane.xlu0 %4127
    %v4129 = vsel %vm4001, %v3947, 0.0
    %4130 = vadd.xlane.f32.xlu0 %v4129
    %v4131 = vpop.xlane.xlu0 %4130
    %v4132 = vsel %vm1892, %v3948, 0.0
    %4133 = vadd.xlane.f32.xlu0 %v4132
    %v4134 = vpop.xlane.xlu0 %4133
    %v4135 = vsel %vm4008, %v3949, 0.0
    %4136 = vadd.xlane.f32.xlu0 %v4135
    %v4137 = vpop.xlane.xlu0 %4136
    %v4138 = vsel %vm4001, %v3950, 0.0
    %4139 = vadd.xlane.f32.xlu0 %v4138
    %v4140 = vpop.xlane.xlu0 %4139
    %v4141 = vsel %vm1892, %v3951, 0.0
    %4142 = vadd.xlane.f32.xlu0 %v4141
    %v4143 = vpop.xlane.xlu0 %4142
    %v4144 = vsel %vm4008, %v3952, 0.0
    %4145 = vadd.xlane.f32.xlu0 %v4144
    %v4146 = vpop.xlane.xlu0 %4145
    %v4147 = vsel %vm4001, %v3953, 0.0
    %4148 = vadd.xlane.f32.xlu0 %v4147
    %v4149 = vpop.xlane.xlu0 %4148
    %v4150 = vsel %vm1892, %v3954, 0.0
    %4151 = vadd.xlane.f32.xlu0 %v4150
    %v4152 = vpop.xlane.xlu0 %4151
    %v4153 = vsel %vm4008, %v3955, 0.0
    %4154 = vadd.xlane.f32.xlu0 %v4153
    %v4155 = vpop.xlane.xlu0 %4154
    %v4156 = vsel %vm4001, %v3956, 0.0
    %4157 = vadd.xlane.f32.xlu0 %v4156
    %v4158 = vpop.xlane.xlu0 %4157
    %v4159 = vsel %vm1892, %v3957, 0.0
    %4160 = vadd.xlane.f32.xlu0 %v4159
    %v4161 = vpop.xlane.xlu0 %4160
    %v4162 = vsel %vm4008, %v3958, 0.0
    %4163 = vadd.xlane.f32.xlu0 %v4162
    %v4164 = vpop.xlane.xlu0 %4163
    %v4165 = vsel %vm4001, %v3959, 0.0
    %4166 = vadd.xlane.f32.xlu0 %v4165
    %v4167 = vpop.xlane.xlu0 %4166
    %v4168 = vsel %vm1892, %v3960, 0.0
    %4169 = vadd.xlane.f32.xlu0 %v4168
    %v4170 = vpop.xlane.xlu0 %4169
    %v4171 = vsel %vm4008, %v3961, 0.0
    %4172 = vadd.xlane.f32.xlu0 %v4171
    %v4173 = vpop.xlane.xlu0 %4172
    %v4174 = vsel %vm4001, %v3962, 0.0
    %4175 = vadd.xlane.f32.xlu0 %v4174
    %v4176 = vpop.xlane.xlu0 %4175
    %v4177 = vsel %vm1892, %v3963, 0.0
    %4178 = vadd.xlane.f32.xlu0 %v4177
    %v4179 = vpop.xlane.xlu0 %4178
    %v4180 = vsel %vm4008, %v3964, 0.0
    %4181 = vadd.xlane.f32.xlu0 %v4180
    %v4182 = vpop.xlane.xlu0 %4181
    %v4183 = vsel %vm4001, %v3965, 0.0
    %4184 = vadd.xlane.f32.xlu0 %v4183
    %v4185 = vpop.xlane.xlu0 %4184
    %v4186 = vsel %vm1892, %v3966, 0.0
    %4187 = vadd.xlane.f32.xlu0 %v4186
    %v4188 = vpop.xlane.xlu0 %4187
    %v4189 = vsel %vm4008, %v3967, 0.0
    %4190 = vadd.xlane.f32.xlu0 %v4189
    %v4191 = vpop.xlane.xlu0 %4190
    %v4192 = vsel %vm4001, %v3968, 0.0
    %4193 = vadd.xlane.f32.xlu0 %v4192
    %v4194 = vpop.xlane.xlu0 %4193
    %v4195 = vsel %vm1892, %v3969, 0.0
    %4196 = vadd.xlane.f32.xlu0 %v4195
    %v4197 = vpop.xlane.xlu0 %4196
    %v4198 = vsel %vm4008, %v3970, 0.0
    %4199 = vadd.xlane.f32.xlu0 %v4198
    %v4200 = vpop.xlane.xlu0 %4199
    %v4201 = vsel %vm4001, %v3971, 0.0
    %4202 = vadd.xlane.f32.xlu0 %v4201
    %v4203 = vpop.xlane.xlu0 %4202
    %v4204 = vsel %vm1892, %v3972, 0.0
    %4205 = vadd.xlane.f32.xlu0 %v4204
    %v4206 = vpop.xlane.xlu0 %4205
    %v4207 = vsel %vm4008, %v3973, 0.0
    %4208 = vadd.xlane.f32.xlu0 %v4207
    %v4209 = vpop.xlane.xlu0 %4208
    %v4210 = vsel %vm4001, %v3974, 0.0
    %4211 = vadd.xlane.f32.xlu0 %v4210
    %v4212 = vpop.xlane.xlu0 %4211
    %v4213 = vsel %vm1892, %v3975, 0.0
    %4214 = vadd.xlane.f32.xlu0 %v4213
    %v4215 = vpop.xlane.xlu0 %4214
    %v4216 = vsel %vm4008, %v3976, 0.0
    %4217 = vadd.xlane.f32.xlu0 %v4216
    %v4218 = vpop.xlane.xlu0 %4217
    %v4219 = vsel %vm4001, %v3977, 0.0
    %4220 = vadd.xlane.f32.xlu0 %v4219
    %v4221 = vpop.xlane.xlu0 %4220
    %v4222 = vsel %vm1892, %v3978, 0.0
    %4223 = vadd.xlane.f32.xlu0 %v4222
    %v4224 = vpop.xlane.xlu0 %4223
    %v4225 = vsel %vm4008, %v3979, 0.0
    %4226 = vadd.xlane.f32.xlu0 %v4225
    %v4227 = vpop.xlane.xlu0 %4226
    %v4228 = vsel %vm4001, %v3980, 0.0
    %4229 = vadd.xlane.f32.xlu0 %v4228
    %v4230 = vpop.xlane.xlu0 %4229
    %v4231 = vsel %vm1892, %v3981, 0.0
    %4232 = vadd.xlane.f32.xlu0 %v4231
    %v4233 = vpop.xlane.xlu0 %4232
    %v4234 = vsel %vm4008, %v3982, 0.0
    %4235 = vadd.xlane.f32.xlu0 %v4234
    %v4236 = vpop.xlane.xlu0 %4235
    %v4237 = vsel %vm4001, %v3983, 0.0
    %4238 = vadd.xlane.f32.xlu0 %v4237
    %v4239 = vpop.xlane.xlu0 %4238
    %v4240 = vsel %vm1892, %v3984, 0.0
    %4241 = vadd.xlane.f32.xlu0 %v4240
    %v4242 = vpop.xlane.xlu0 %4241
    %v4243 = vsel %vm4008, %v3985, 0.0
    %4244 = vadd.xlane.f32.xlu0 %v4243
    %v4245 = vpop.xlane.xlu0 %4244
    %v4246 = vsel %vm4001, %v3986, 0.0
    %4247 = vadd.xlane.f32.xlu0 %v4246
    %v4248 = vpop.xlane.xlu0 %4247
    %v4249 = vsel %vm1892, %v3987, 0.0
    %4250 = vadd.xlane.f32.xlu0 %v4249
    %v4251 = vpop.xlane.xlu0 %4250
    %v4252 = vsel %vm4008, %v3988, 0.0
    %4253 = vadd.xlane.f32.xlu0 %v4252
    %v4254 = vpop.xlane.xlu0 %4253
    %v4255 = vsel %vm4001, %v3989, 0.0
    %4256 = vadd.xlane.f32.xlu0 %v4255
    %v4257 = vpop.xlane.xlu0 %4256
    %v4258 = vsel %vm1892, %v3990, 0.0
    %4259 = vadd.xlane.f32.xlu0 %v4258
    %v4260 = vpop.xlane.xlu0 %4259
    %v4261 = vsel %vm4008, %v3991, 0.0
    %4262 = vadd.xlane.f32.xlu0 %v4261
    %v4263 = vpop.xlane.xlu0 %4262
    %v4264 = vsel %vm4001, %v3992, 0.0
    %4265 = vadd.xlane.f32.xlu0 %v4264
    %v4266 = vpop.xlane.xlu0 %4265
    %v4267 = vsel %vm1892, %v3993, 0.0
    %4268 = vadd.xlane.f32.xlu0 %v4267
    %v4269 = vpop.xlane.xlu0 %4268
    %v4270 = vsel %vm4008, %v3994, 0.0
    %4271 = vadd.xlane.f32.xlu0 %v4270
    %v4272 = vpop.xlane.xlu0 %4271
    %v4273 = vsel %vm4001, %v3995, 0.0
    %4274 = vadd.xlane.f32.xlu0 %v4273
    %v4275 = vpop.xlane.xlu0 %4274
    %v4276 = vsel %vm1892, %v3996, 0.0
    %4277 = vadd.xlane.f32.xlu0 %v4276
    %v4278 = vpop.xlane.xlu0 %4277
    %v4279 = vsel %vm4008, %v3997, 0.0
    %4280 = vadd.xlane.f32.xlu0 %v4279
    %v4281 = vpop.xlane.xlu0 %4280
    %v4282 = vsel %vm4001, %v3998, 0.0
    %4283 = vadd.xlane.f32.xlu0 %v4282
    %v4284 = vpop.xlane.xlu0 %4283
    %v4285 = vsel %vm1892, %v3999, 0.0
    %4286 = vadd.xlane.f32.xlu0 %v4285
    %v4287 = vpop.xlane.xlu0 %4286
    %v4288 = vsel %vm4008, %v4000, 0.0
    %4289 = vadd.xlane.f32.xlu0 %v4288
    %v4290 = vpop.xlane.xlu0 %4289
    %v4291 = vxor.u32 %v4004, 2147483648
    %v4292 = vxor.u32 %v4007, 2147483648
    %v4293 = vxor.u32 %v4011, 2147483648
    %v4294 = vxor.u32 %v4014, 2147483648
    %v4295 = vxor.u32 %v4017, 2147483648
    %v4296 = vxor.u32 %v4020, 2147483648
    %v4297 = vxor.u32 %v4023, 2147483648
    %v4298 = vxor.u32 %v4026, 2147483648
    %v4299 = vxor.u32 %v4029, 2147483648
    %v4300 = vxor.u32 %v4032, 2147483648
    %v4301 = vxor.u32 %v4035, 2147483648
    %v4302 = vxor.u32 %v4038, 2147483648
    %v4303 = vxor.u32 %v4041, 2147483648
    %v4304 = vxor.u32 %v4044, 2147483648
    %v4305 = vxor.u32 %v4047, 2147483648
    %v4306 = vxor.u32 %v4050, 2147483648
    %v4307 = vxor.u32 %v4053, 2147483648
    %v4308 = vxor.u32 %v4056, 2147483648
    %v4309 = vxor.u32 %v4059, 2147483648
    %v4310 = vxor.u32 %v4062, 2147483648
    %v4311 = vxor.u32 %v4065, 2147483648
    %v4312 = vxor.u32 %v4068, 2147483648
    %v4313 = vxor.u32 %v4071, 2147483648
    %v4314 = vxor.u32 %v4074, 2147483648
    %v4315 = vxor.u32 %v4077, 2147483648
    %v4316 = vxor.u32 %v4080, 2147483648
    %v4317 = vxor.u32 %v4083, 2147483648
    %v4318 = vxor.u32 %v4086, 2147483648
    %v4319 = vxor.u32 %v4089, 2147483648
    %v4320 = vxor.u32 %v4092, 2147483648
    %v4321 = vxor.u32 %v4095, 2147483648
    %v4322 = vxor.u32 %v4098, 2147483648
    %v4323 = vxor.u32 %v4101, 2147483648
    %v4324 = vxor.u32 %v4104, 2147483648
    %v4325 = vxor.u32 %v4107, 2147483648
    %v4326 = vxor.u32 %v4110, 2147483648
    %v4327 = vxor.u32 %v4113, 2147483648
    %v4328 = vxor.u32 %v4116, 2147483648
    %v4329 = vxor.u32 %v4119, 2147483648
    %v4330 = vxor.u32 %v4122, 2147483648
    %v4331 = vxor.u32 %v4125, 2147483648
    %v4332 = vxor.u32 %v4128, 2147483648
    %v4333 = vxor.u32 %v4131, 2147483648
    %v4334 = vxor.u32 %v4134, 2147483648
    %v4335 = vxor.u32 %v4137, 2147483648
    %v4336 = vxor.u32 %v4140, 2147483648
    %v4337 = vxor.u32 %v4143, 2147483648
    %v4338 = vxor.u32 %v4146, 2147483648
    %v4339 = vxor.u32 %v4149, 2147483648
    %v4340 = vxor.u32 %v4152, 2147483648
    %v4341 = vxor.u32 %v4155, 2147483648
    %v4342 = vxor.u32 %v4158, 2147483648
    %v4343 = vxor.u32 %v4161, 2147483648
    %v4344 = vxor.u32 %v4164, 2147483648
    %v4345 = vxor.u32 %v4167, 2147483648
    %v4346 = vxor.u32 %v4170, 2147483648
    %v4347 = vxor.u32 %v4173, 2147483648
    %v4348 = vxor.u32 %v4176, 2147483648
    %v4349 = vxor.u32 %v4179, 2147483648
    %v4350 = vxor.u32 %v4182, 2147483648
    %v4351 = vxor.u32 %v4185, 2147483648
    %v4352 = vxor.u32 %v4188, 2147483648
    %v4353 = vxor.u32 %v4191, 2147483648
    %v4354 = vxor.u32 %v4194, 2147483648
    %v4355 = vxor.u32 %v4197, 2147483648
    %v4356 = vxor.u32 %v4200, 2147483648
    %v4357 = vxor.u32 %v4203, 2147483648
    %v4358 = vxor.u32 %v4206, 2147483648
    %v4359 = vxor.u32 %v4209, 2147483648
    %v4360 = vxor.u32 %v4212, 2147483648
    %v4361 = vxor.u32 %v4215, 2147483648
    %v4362 = vxor.u32 %v4218, 2147483648
    %v4363 = vxor.u32 %v4221, 2147483648
    %v4364 = vxor.u32 %v4224, 2147483648
    %v4365 = vxor.u32 %v4227, 2147483648
    %v4366 = vxor.u32 %v4230, 2147483648
    %v4367 = vxor.u32 %v4233, 2147483648
    %v4368 = vxor.u32 %v4236, 2147483648
    %v4369 = vxor.u32 %v4239, 2147483648
    %v4370 = vxor.u32 %v4242, 2147483648
    %v4371 = vxor.u32 %v4245, 2147483648
    %v4372 = vxor.u32 %v4248, 2147483648
    %v4373 = vxor.u32 %v4251, 2147483648
    %v4374 = vxor.u32 %v4254, 2147483648
    %v4375 = vxor.u32 %v4257, 2147483648
    %v4376 = vxor.u32 %v4260, 2147483648
    %v4377 = vxor.u32 %v4263, 2147483648
    %v4378 = vxor.u32 %v4266, 2147483648
    %v4379 = vxor.u32 %v4269, 2147483648
    %v4380 = vxor.u32 %v4272, 2147483648
    %v4381 = vxor.u32 %v4275, 2147483648
    %v4382 = vxor.u32 %v4278, 2147483648
    %v4383 = vxor.u32 %v4281, 2147483648
    %v4384 = vxor.u32 %v4284, 2147483648
    %v4385 = vxor.u32 %v4287, 2147483648
    %v4386 = vxor.u32 %v4290, 2147483648
    %v4387 = vmul.f32 %v4291, 1.442695
    %v4388 = vpow.pop %v4387
    %v4389 = vmul.f32 %v4292, 1.442695
    %v4390 = vpow.pop %v4389
    %v4391 = vmul.f32 %v4293, 1.442695
    %v4392 = vpow.pop %v4391
    %v4393 = vmul.f32 %v4294, 1.442695
    %v4394 = vpow.pop %v4393
    %v4395 = vmul.f32 %v4295, 1.442695
    %v4396 = vpow.pop %v4395
    %v4397 = vmul.f32 %v4296, 1.442695
    %v4398 = vpow.pop %v4397
    %v4399 = vmul.f32 %v4297, 1.442695
    %v4400 = vpow.pop %v4399
    %v4401 = vmul.f32 %v4298, 1.442695
    %v4402 = vpow.pop %v4401
    %v4403 = vmul.f32 %v4299, 1.442695
    %v4404 = vpow.pop %v4403
    %v4405 = vmul.f32 %v4300, 1.442695
    %v4406 = vpow.pop %v4405
    %v4407 = vmul.f32 %v4301, 1.442695
    %v4408 = vpow.pop %v4407
    %v4409 = vmul.f32 %v4302, 1.442695
    %v4410 = vpow.pop %v4409
    %v4411 = vmul.f32 %v4303, 1.442695
    %v4412 = vpow.pop %v4411
    %v4413 = vmul.f32 %v4304, 1.442695
    %v4414 = vpow.pop %v4413
    %v4415 = vmul.f32 %v4305, 1.442695
    %v4416 = vpow.pop %v4415
    %v4417 = vmul.f32 %v4306, 1.442695
    %v4418 = vpow.pop %v4417
    %v4419 = vmul.f32 %v4307, 1.442695
    %v4420 = vpow.pop %v4419
    %v4421 = vmul.f32 %v4308, 1.442695
    %v4422 = vpow.pop %v4421
    %v4423 = vmul.f32 %v4309, 1.442695
    %v4424 = vpow.pop %v4423
    %v4425 = vmul.f32 %v4310, 1.442695
    %v4426 = vpow.pop %v4425
    %v4427 = vmul.f32 %v4311, 1.442695
    %v4428 = vpow.pop %v4427
    %v4429 = vmul.f32 %v4312, 1.442695
    %v4430 = vpow.pop %v4429
    %v4431 = vmul.f32 %v4313, 1.442695
    %v4432 = vpow.pop %v4431
    %v4433 = vmul.f32 %v4314, 1.442695
    %v4434 = vpow.pop %v4433
    %v4435 = vmul.f32 %v4315, 1.442695
    %v4436 = vpow.pop %v4435
    %v4437 = vmul.f32 %v4316, 1.442695
    %v4438 = vpow.pop %v4437
    %v4439 = vmul.f32 %v4317, 1.442695
    %v4440 = vpow.pop %v4439
    %v4441 = vmul.f32 %v4318, 1.442695
    %v4442 = vpow.pop %v4441
    %v4443 = vmul.f32 %v4319, 1.442695
    %v4444 = vpow.pop %v4443
    %v4445 = vmul.f32 %v4320, 1.442695
    %v4446 = vpow.pop %v4445
    %v4447 = vmul.f32 %v4321, 1.442695
    %v4448 = vpow.pop %v4447
    %v4449 = vmul.f32 %v4322, 1.442695
    %v4450 = vpow.pop %v4449
    %v4451 = vmul.f32 %v4323, 1.442695
    %v4452 = vpow.pop %v4451
    %v4453 = vmul.f32 %v4324, 1.442695
    %v4454 = vpow.pop %v4453
    %v4455 = vmul.f32 %v4325, 1.442695
    %v4456 = vpow.pop %v4455
    %v4457 = vmul.f32 %v4326, 1.442695
    %v4458 = vpow.pop %v4457
    %v4459 = vmul.f32 %v4327, 1.442695
    %v4460 = vpow.pop %v4459
    %v4461 = vmul.f32 %v4328, 1.442695
    %v4462 = vpow.pop %v4461
    %v4463 = vmul.f32 %v4329, 1.442695
    %v4464 = vpow.pop %v4463
    %v4465 = vmul.f32 %v4330, 1.442695
    %v4466 = vpow.pop %v4465
    %v4467 = vmul.f32 %v4331, 1.442695
    %v4468 = vpow.pop %v4467
    %v4469 = vmul.f32 %v4332, 1.442695
    %v4470 = vpow.pop %v4469
    %v4471 = vmul.f32 %v4333, 1.442695
    %v4472 = vpow.pop %v4471
    %v4473 = vmul.f32 %v4334, 1.442695
    %v4474 = vpow.pop %v4473
    %v4475 = vmul.f32 %v4335, 1.442695
    %v4476 = vpow.pop %v4475
    %v4477 = vmul.f32 %v4336, 1.442695
    %v4478 = vpow.pop %v4477
    %v4479 = vmul.f32 %v4337, 1.442695
    %v4480 = vpow.pop %v4479
    %v4481 = vmul.f32 %v4338, 1.442695
    %v4482 = vpow.pop %v4481
    %v4483 = vmul.f32 %v4339, 1.442695
    %v4484 = vpow.pop %v4483
    %v4485 = vmul.f32 %v4340, 1.442695
    %v4486 = vpow.pop %v4485
    %v4487 = vmul.f32 %v4341, 1.442695
    %v4488 = vpow.pop %v4487
    %v4489 = vmul.f32 %v4342, 1.442695
    %v4490 = vpow.pop %v4489
    %v4491 = vmul.f32 %v4343, 1.442695
    %v4492 = vpow.pop %v4491
    %v4493 = vmul.f32 %v4344, 1.442695
    %v4494 = vpow.pop %v4493
    %v4495 = vmul.f32 %v4345, 1.442695
    %v4496 = vpow.pop %v4495
    %v4497 = vmul.f32 %v4346, 1.442695
    %v4498 = vpow.pop %v4497
    %v4499 = vmul.f32 %v4347, 1.442695
    %v4500 = vpow.pop %v4499
    %v4501 = vmul.f32 %v4348, 1.442695
    %v4502 = vpow.pop %v4501
    %v4503 = vmul.f32 %v4349, 1.442695
    %v4504 = vpow.pop %v4503
    %v4505 = vmul.f32 %v4350, 1.442695
    %v4506 = vpow.pop %v4505
    %v4507 = vmul.f32 %v4351, 1.442695
    %v4508 = vpow.pop %v4507
    %v4509 = vmul.f32 %v4352, 1.442695
    %v4510 = vpow.pop %v4509
    %v4511 = vmul.f32 %v4353, 1.442695
    %v4512 = vpow.pop %v4511
    %v4513 = vmul.f32 %v4354, 1.442695
    %v4514 = vpow.pop %v4513
    %v4515 = vmul.f32 %v4355, 1.442695
    %v4516 = vpow.pop %v4515
    %v4517 = vmul.f32 %v4356, 1.442695
    %v4518 = vpow.pop %v4517
    %v4519 = vmul.f32 %v4357, 1.442695
    %v4520 = vpow.pop %v4519
    %v4521 = vmul.f32 %v4358, 1.442695
    %v4522 = vpow.pop %v4521
    %v4523 = vmul.f32 %v4359, 1.442695
    %v4524 = vpow.pop %v4523
    %v4525 = vmul.f32 %v4360, 1.442695
    %v4526 = vpow.pop %v4525
    %v4527 = vmul.f32 %v4361, 1.442695
    %v4528 = vpow.pop %v4527
    %v4529 = vmul.f32 %v4362, 1.442695
    %v4530 = vpow.pop %v4529
    %v4531 = vmul.f32 %v4363, 1.442695
    %v4532 = vpow.pop %v4531
    %v4533 = vmul.f32 %v4364, 1.442695
    %v4534 = vpow.pop %v4533
    %v4535 = vmul.f32 %v4365, 1.442695
    %v4536 = vpow.pop %v4535
    %v4537 = vmul.f32 %v4366, 1.442695
    %v4538 = vpow.pop %v4537
    %v4539 = vmul.f32 %v4367, 1.442695
    %v4540 = vpow.pop %v4539
    %v4541 = vmul.f32 %v4368, 1.442695
    %v4542 = vpow.pop %v4541
    %v4543 = vmul.f32 %v4369, 1.442695
    %v4544 = vpow.pop %v4543
    %v4545 = vmul.f32 %v4370, 1.442695
    %v4546 = vpow.pop %v4545
    %v4547 = vmul.f32 %v4371, 1.442695
    %v4548 = vpow.pop %v4547
    %v4549 = vmul.f32 %v4372, 1.442695
    %v4550 = vpow.pop %v4549
    %v4551 = vmul.f32 %v4373, 1.442695
    %v4552 = vpow.pop %v4551
    %v4553 = vmul.f32 %v4374, 1.442695
    %v4554 = vpow.pop %v4553
    %v4555 = vmul.f32 %v4375, 1.442695
    %v4556 = vpow.pop %v4555
    %v4557 = vmul.f32 %v4376, 1.442695
    %v4558 = vpow.pop %v4557
    %v4559 = vmul.f32 %v4377, 1.442695
    %v4560 = vpow.pop %v4559
    %v4561 = vmul.f32 %v4378, 1.442695
    %v4562 = vpow.pop %v4561
    %v4563 = vmul.f32 %v4379, 1.442695
    %v4564 = vpow.pop %v4563
    %v4565 = vmul.f32 %v4380, 1.442695
    %v4566 = vpow.pop %v4565
    %v4567 = vmul.f32 %v4381, 1.442695
    %v4568 = vpow.pop %v4567
    %v4569 = vmul.f32 %v4382, 1.442695
    %v4570 = vpow.pop %v4569
    %v4571 = vmul.f32 %v4383, 1.442695
    %v4572 = vpow.pop %v4571
    %v4573 = vmul.f32 %v4384, 1.442695
    %v4574 = vpow.pop %v4573
    %v4575 = vmul.f32 %v4385, 1.442695
    %v4576 = vpow.pop %v4575
    %v4577 = vmul.f32 %v4386, 1.442695
    %v4578 = vpow.pop %v4577
    %v4579 = vadd.f32 %v4388, 1.0
    %v4580 = vadd.f32 %v4390, 1.0
    %v4581 = vadd.f32 %v4392, 1.0
    %v4582 = vadd.f32 %v4394, 1.0
    %v4583 = vadd.f32 %v4396, 1.0
    %v4584 = vadd.f32 %v4398, 1.0
    %v4585 = vadd.f32 %v4400, 1.0
    %v4586 = vadd.f32 %v4402, 1.0
    %v4587 = vadd.f32 %v4404, 1.0
    %v4588 = vadd.f32 %v4406, 1.0
    %v4589 = vadd.f32 %v4408, 1.0
    %v4590 = vadd.f32 %v4410, 1.0
    %v4591 = vadd.f32 %v4412, 1.0
    %v4592 = vadd.f32 %v4414, 1.0
    %v4593 = vadd.f32 %v4416, 1.0
    %v4594 = vadd.f32 %v4418, 1.0
    %v4595 = vadd.f32 %v4420, 1.0
    %v4596 = vadd.f32 %v4422, 1.0
    %v4597 = vadd.f32 %v4424, 1.0
    %v4598 = vadd.f32 %v4426, 1.0
    %v4599 = vadd.f32 %v4428, 1.0
    %v4600 = vadd.f32 %v4430, 1.0
    %v4601 = vadd.f32 %v4432, 1.0
    %v4602 = vadd.f32 %v4434, 1.0
    %v4603 = vadd.f32 %v4436, 1.0
    %v4604 = vadd.f32 %v4438, 1.0
    %v4605 = vadd.f32 %v4440, 1.0
    %v4606 = vadd.f32 %v4442, 1.0
    %v4607 = vadd.f32 %v4444, 1.0
    %v4608 = vadd.f32 %v4446, 1.0
    %v4609 = vadd.f32 %v4448, 1.0
    %v4610 = vadd.f32 %v4450, 1.0
    %v4611 = vadd.f32 %v4452, 1.0
    %v4612 = vadd.f32 %v4454, 1.0
    %v4613 = vadd.f32 %v4456, 1.0
    %v4614 = vadd.f32 %v4458, 1.0
    %v4615 = vadd.f32 %v4460, 1.0
    %v4616 = vadd.f32 %v4462, 1.0
    %v4617 = vadd.f32 %v4464, 1.0
    %v4618 = vadd.f32 %v4466, 1.0
    %v4619 = vadd.f32 %v4468, 1.0
    %v4620 = vadd.f32 %v4470, 1.0
    %v4621 = vadd.f32 %v4472, 1.0
    %v4622 = vadd.f32 %v4474, 1.0
    %v4623 = vadd.f32 %v4476, 1.0
    %v4624 = vadd.f32 %v4478, 1.0
    %v4625 = vadd.f32 %v4480, 1.0
    %v4626 = vadd.f32 %v4482, 1.0
    %v4627 = vadd.f32 %v4484, 1.0
    %v4628 = vadd.f32 %v4486, 1.0
    %v4629 = vadd.f32 %v4488, 1.0
    %v4630 = vadd.f32 %v4490, 1.0
    %v4631 = vadd.f32 %v4492, 1.0
    %v4632 = vadd.f32 %v4494, 1.0
    %v4633 = vadd.f32 %v4496, 1.0
    %v4634 = vadd.f32 %v4498, 1.0
    %v4635 = vadd.f32 %v4500, 1.0
    %v4636 = vadd.f32 %v4502, 1.0
    %v4637 = vadd.f32 %v4504, 1.0
    %v4638 = vadd.f32 %v4506, 1.0
    %v4639 = vadd.f32 %v4508, 1.0
    %v4640 = vadd.f32 %v4510, 1.0
    %v4641 = vadd.f32 %v4512, 1.0
    %v4642 = vadd.f32 %v4514, 1.0
    %v4643 = vadd.f32 %v4516, 1.0
    %v4644 = vadd.f32 %v4518, 1.0
    %v4645 = vadd.f32 %v4520, 1.0
    %v4646 = vadd.f32 %v4522, 1.0
    %v4647 = vadd.f32 %v4524, 1.0
    %v4648 = vadd.f32 %v4526, 1.0
    %v4649 = vadd.f32 %v4528, 1.0
    %v4650 = vadd.f32 %v4530, 1.0
    %v4651 = vadd.f32 %v4532, 1.0
    %v4652 = vadd.f32 %v4534, 1.0
    %v4653 = vadd.f32 %v4536, 1.0
    %v4654 = vadd.f32 %v4538, 1.0
    %v4655 = vadd.f32 %v4540, 1.0
    %v4656 = vadd.f32 %v4542, 1.0
    %v4657 = vadd.f32 %v4544, 1.0
    %v4658 = vadd.f32 %v4546, 1.0
    %v4659 = vadd.f32 %v4548, 1.0
    %v4660 = vadd.f32 %v4550, 1.0
    %v4661 = vadd.f32 %v4552, 1.0
    %v4662 = vadd.f32 %v4554, 1.0
    %v4663 = vadd.f32 %v4556, 1.0
    %v4664 = vadd.f32 %v4558, 1.0
    %v4665 = vadd.f32 %v4560, 1.0
    %v4666 = vadd.f32 %v4562, 1.0
    %v4667 = vadd.f32 %v4564, 1.0
    %v4668 = vadd.f32 %v4566, 1.0
    %v4669 = vadd.f32 %v4568, 1.0
    %v4670 = vadd.f32 %v4570, 1.0
    %v4671 = vadd.f32 %v4572, 1.0
    %v4672 = vadd.f32 %v4574, 1.0
    %v4673 = vadd.f32 %v4576, 1.0
    %v4674 = vadd.f32 %v4578, 1.0
    %v4675 = vrcp.pop %v4579
    %v4676 = vmul.f32 1.0, %v4675
    %v4677 = vrcp.pop %v4580
    %v4678 = vmul.f32 1.0, %v4677
    %v4679 = vrcp.pop %v4581
    %v4680 = vmul.f32 1.0, %v4679
    %v4681 = vrcp.pop %v4582
    %v4682 = vmul.f32 1.0, %v4681
    %v4683 = vrcp.pop %v4583
    %v4684 = vmul.f32 1.0, %v4683
    %v4685 = vrcp.pop %v4584
    %v4686 = vmul.f32 1.0, %v4685
    %v4687 = vrcp.pop %v4585
    %v4688 = vmul.f32 1.0, %v4687
    %v4689 = vrcp.pop %v4586
    %v4690 = vmul.f32 1.0, %v4689
    %v4691 = vrcp.pop %v4587
    %v4692 = vmul.f32 1.0, %v4691
    %v4693 = vrcp.pop %v4588
    %v4694 = vmul.f32 1.0, %v4693
    %v4695 = vrcp.pop %v4589
    %v4696 = vmul.f32 1.0, %v4695
    %v4697 = vrcp.pop %v4590
    %v4698 = vmul.f32 1.0, %v4697
    %v4699 = vrcp.pop %v4591
    %v4700 = vmul.f32 1.0, %v4699
    %v4701 = vrcp.pop %v4592
    %v4702 = vmul.f32 1.0, %v4701
    %v4703 = vrcp.pop %v4593
    %v4704 = vmul.f32 1.0, %v4703
    %v4705 = vrcp.pop %v4594
    %v4706 = vmul.f32 1.0, %v4705
    %v4707 = vrcp.pop %v4595
    %v4708 = vmul.f32 1.0, %v4707
    %v4709 = vrcp.pop %v4596
    %v4710 = vmul.f32 1.0, %v4709
    %v4711 = vrcp.pop %v4597
    %v4712 = vmul.f32 1.0, %v4711
    %v4713 = vrcp.pop %v4598
    %v4714 = vmul.f32 1.0, %v4713
    %v4715 = vrcp.pop %v4599
    %v4716 = vmul.f32 1.0, %v4715
    %v4717 = vrcp.pop %v4600
    %v4718 = vmul.f32 1.0, %v4717
    %v4719 = vrcp.pop %v4601
    %v4720 = vmul.f32 1.0, %v4719
    %v4721 = vrcp.pop %v4602
    %v4722 = vmul.f32 1.0, %v4721
    %v4723 = vrcp.pop %v4603
    %v4724 = vmul.f32 1.0, %v4723
    %v4725 = vrcp.pop %v4604
    %v4726 = vmul.f32 1.0, %v4725
    %v4727 = vrcp.pop %v4605
    %v4728 = vmul.f32 1.0, %v4727
    %v4729 = vrcp.pop %v4606
    %v4730 = vmul.f32 1.0, %v4729
    %v4731 = vrcp.pop %v4607
    %v4732 = vmul.f32 1.0, %v4731
    %v4733 = vrcp.pop %v4608
    %v4734 = vmul.f32 1.0, %v4733
    %v4735 = vrcp.pop %v4609
    %v4736 = vmul.f32 1.0, %v4735
    %v4737 = vrcp.pop %v4610
    %v4738 = vmul.f32 1.0, %v4737
    %v4739 = vrcp.pop %v4611
    %v4740 = vmul.f32 1.0, %v4739
    %v4741 = vrcp.pop %v4612
    %v4742 = vmul.f32 1.0, %v4741
    %v4743 = vrcp.pop %v4613
    %v4744 = vmul.f32 1.0, %v4743
    %v4745 = vrcp.pop %v4614
    %v4746 = vmul.f32 1.0, %v4745
    %v4747 = vrcp.pop %v4615
    %v4748 = vmul.f32 1.0, %v4747
    %v4749 = vrcp.pop %v4616
    %v4750 = vmul.f32 1.0, %v4749
    %v4751 = vrcp.pop %v4617
    %v4752 = vmul.f32 1.0, %v4751
    %v4753 = vrcp.pop %v4618
    %v4754 = vmul.f32 1.0, %v4753
    %v4755 = vrcp.pop %v4619
    %v4756 = vmul.f32 1.0, %v4755
    %v4757 = vrcp.pop %v4620
    %v4758 = vmul.f32 1.0, %v4757
    %v4759 = vrcp.pop %v4621
    %v4760 = vmul.f32 1.0, %v4759
    %v4761 = vrcp.pop %v4622
    %v4762 = vmul.f32 1.0, %v4761
    %v4763 = vrcp.pop %v4623
    %v4764 = vmul.f32 1.0, %v4763
    %v4765 = vrcp.pop %v4624
    %v4766 = vmul.f32 1.0, %v4765
    %v4767 = vrcp.pop %v4625
    %v4768 = vmul.f32 1.0, %v4767
    %v4769 = vrcp.pop %v4626
    %v4770 = vmul.f32 1.0, %v4769
    %v4771 = vrcp.pop %v4627
    %v4772 = vmul.f32 1.0, %v4771
    %v4773 = vrcp.pop %v4628
    %v4774 = vmul.f32 1.0, %v4773
    %v4775 = vrcp.pop %v4629
    %v4776 = vmul.f32 1.0, %v4775
    %v4777 = vrcp.pop %v4630
    %v4778 = vmul.f32 1.0, %v4777
    %v4779 = vrcp.pop %v4631
    %v4780 = vmul.f32 1.0, %v4779
    %v4781 = vrcp.pop %v4632
    %v4782 = vmul.f32 1.0, %v4781
    %v4783 = vrcp.pop %v4633
    %v4784 = vmul.f32 1.0, %v4783
    %v4785 = vrcp.pop %v4634
    %v4786 = vmul.f32 1.0, %v4785
    %v4787 = vrcp.pop %v4635
    %v4788 = vmul.f32 1.0, %v4787
    %v4789 = vrcp.pop %v4636
    %v4790 = vmul.f32 1.0, %v4789
    %v4791 = vrcp.pop %v4637
    %v4792 = vmul.f32 1.0, %v4791
    %v4793 = vrcp.pop %v4638
    %v4794 = vmul.f32 1.0, %v4793
    %v4795 = vrcp.pop %v4639
    %v4796 = vmul.f32 1.0, %v4795
    %v4797 = vrcp.pop %v4640
    %v4798 = vmul.f32 1.0, %v4797
    %v4799 = vrcp.pop %v4641
    %v4800 = vmul.f32 1.0, %v4799
    %v4801 = vrcp.pop %v4642
    %v4802 = vmul.f32 1.0, %v4801
    %v4803 = vrcp.pop %v4643
    %v4804 = vmul.f32 1.0, %v4803
    %v4805 = vrcp.pop %v4644
    %v4806 = vmul.f32 1.0, %v4805
    %v4807 = vrcp.pop %v4645
    %v4808 = vmul.f32 1.0, %v4807
    %v4809 = vrcp.pop %v4646
    %v4810 = vmul.f32 1.0, %v4809
    %v4811 = vrcp.pop %v4647
    %v4812 = vmul.f32 1.0, %v4811
    %v4813 = vrcp.pop %v4648
    %v4814 = vmul.f32 1.0, %v4813
    %v4815 = vrcp.pop %v4649
    %v4816 = vmul.f32 1.0, %v4815
    %v4817 = vrcp.pop %v4650
    %v4818 = vmul.f32 1.0, %v4817
    %v4819 = vrcp.pop %v4651
    %v4820 = vmul.f32 1.0, %v4819
    %v4821 = vrcp.pop %v4652
    %v4822 = vmul.f32 1.0, %v4821
    %v4823 = vrcp.pop %v4653
    %v4824 = vmul.f32 1.0, %v4823
    %v4825 = vrcp.pop %v4654
    %v4826 = vmul.f32 1.0, %v4825
    %v4827 = vrcp.pop %v4655
    %v4828 = vmul.f32 1.0, %v4827
    %v4829 = vrcp.pop %v4656
    %v4830 = vmul.f32 1.0, %v4829
    %v4831 = vrcp.pop %v4657
    %v4832 = vmul.f32 1.0, %v4831
    %v4833 = vrcp.pop %v4658
    %v4834 = vmul.f32 1.0, %v4833
    %v4835 = vrcp.pop %v4659
    %v4836 = vmul.f32 1.0, %v4835
    %v4837 = vrcp.pop %v4660
    %v4838 = vmul.f32 1.0, %v4837
    %v4839 = vrcp.pop %v4661
    %v4840 = vmul.f32 1.0, %v4839
    %v4841 = vrcp.pop %v4662
    %v4842 = vmul.f32 1.0, %v4841
    %v4843 = vrcp.pop %v4663
    %v4844 = vmul.f32 1.0, %v4843
    %v4845 = vrcp.pop %v4664
    %v4846 = vmul.f32 1.0, %v4845
    %v4847 = vrcp.pop %v4665
    %v4848 = vmul.f32 1.0, %v4847
    %v4849 = vrcp.pop %v4666
    %v4850 = vmul.f32 1.0, %v4849
    %v4851 = vrcp.pop %v4667
    %v4852 = vmul.f32 1.0, %v4851
    %v4853 = vrcp.pop %v4668
    %v4854 = vmul.f32 1.0, %v4853
    %v4855 = vrcp.pop %v4669
    %v4856 = vmul.f32 1.0, %v4855
    %v4857 = vrcp.pop %v4670
    %v4858 = vmul.f32 1.0, %v4857
    %v4859 = vrcp.pop %v4671
    %v4860 = vmul.f32 1.0, %v4859
    %v4861 = vrcp.pop %v4672
    %v4862 = vmul.f32 1.0, %v4861
    %v4863 = vrcp.pop %v4673
    %v4864 = vmul.f32 1.0, %v4863
    %v4865 = vrcp.pop %v4674
    %v4866 = vmul.f32 1.0, %v4865
    %v4869 = vunpack.c.l.s4 1966171168
    %v4870 = vunpack.c.0.s8 %v4869
    %v4871 = vlaneseq
    %v4872 = vshrl.u32 %v4871, 7
    %v4873 = vsub.s32 %v4870, %v4872
    %v4874 = vrot.slane %v3897, %v4873
    %v4875 = vcombine.high %v4874, %v4874
    %v4877 = vunpack.c.l.s4 1966171168
    %v4878 = vunpack.c.0.s8 %v4877
    %v4879 = vlaneseq
    %v4880 = vshrl.u32 %v4879, 7
    %v4881 = vsub.s32 %v4878, %v4880
    %v4882 = vrot.slane %v4874, %v4881
    %v4884 = vunpack.c.l.s4 1966171168
    %v4885 = vunpack.c.0.s8 %v4884
    %v4886 = vlaneseq
    %v4887 = vshrl.u32 %v4886, 7
    %v4888 = vsub.s32 %v4885, %v4887
    %v4889 = vrot.slane %v4875, %v4888
    %v4890 = vlaneseq
    %v4891 = vshrl.u32 %v4890, 7
    %v4892 = vsub.s32 0, %v4891
    %v4893 = vrot.slane %v4882, %v4892
    %v4894 = vlaneseq
    %v4895 = vshrl.u32 %v4894, 7
    %v4896 = vsub.s32 0, %v4895
    %v4897 = vrot.slane %v4889, %v4896
    %v4900 = vmul.f32 %v37, %v4893
    %v4901 = vmul.f32 %v38, %v4893
    %v4902 = vmul.f32 %v39, %v4893
    %v4903 = vmul.f32 %v40, %v4893
    %v4904 = vmul.f32 %v41, %v4893
    %v4905 = vmul.f32 %v42, %v4893
    %v4906 = vmul.f32 %v43, %v4893
    %v4907 = vmul.f32 %v44, %v4893
    %v4908 = vmul.f32 %v45, %v4893
    %v4909 = vmul.f32 %v46, %v4893
    %v4910 = vmul.f32 %v47, %v4893
    %v4911 = vmul.f32 %v48, %v4893
    %v4912 = vmul.f32 %v49, %v4893
    %v4913 = vmul.f32 %v50, %v4893
    %v4914 = vmul.f32 %v51, %v4893
    %v4915 = vmul.f32 %v52, %v4893
    %v4916 = vmul.f32 %v53, %v4893
    %v4917 = vmul.f32 %v54, %v4893
    %v4918 = vmul.f32 %v55, %v4893
    %v4919 = vmul.f32 %v56, %v4893
    %v4920 = vmul.f32 %v57, %v4893
    %v4921 = vmul.f32 %v58, %v4893
    %v4922 = vmul.f32 %v59, %v4893
    %v4923 = vmul.f32 %v60, %v4893
    %v4924 = vmul.f32 %v61, %v4893
    %v4925 = vmul.f32 %v62, %v4893
    %v4926 = vmul.f32 %v63, %v4893
    %v4927 = vmul.f32 %v64, %v4893
    %v4928 = vmul.f32 %v65, %v4893
    %v4929 = vmul.f32 %v66, %v4893
    %v4930 = vmul.f32 %v67, %v4893
    %v4931 = vmul.f32 %v68, %v4893
    %v4932 = vmul.f32 %v69, %v4893
    %v4933 = vmul.f32 %v70, %v4893
    %v4934 = vmul.f32 %v71, %v4893
    %v4935 = vmul.f32 %v72, %v4893
    %v4936 = vmul.f32 %v73, %v4893
    %v4937 = vmul.f32 %v74, %v4893
    %v4938 = vmul.f32 %v75, %v4893
    %v4939 = vmul.f32 %v76, %v4893
    %v4940 = vmul.f32 %v77, %v4893
    %v4941 = vmul.f32 %v78, %v4893
    %v4942 = vmul.f32 %v79, %v4893
    %v4943 = vmul.f32 %v80, %v4893
    %v4944 = vmul.f32 %v81, %v4893
    %v4945 = vmul.f32 %v82, %v4893
    %v4946 = vmul.f32 %v83, %v4893
    %v4947 = vmul.f32 %v84, %v4893
    %v4948 = vmul.f32 %v91, %v4897
    %v4949 = vmul.f32 %v92, %v4897
    %v4950 = vmul.f32 %v93, %v4897
    %v4951 = vmul.f32 %v94, %v4897
    %v4952 = vmul.f32 %v95, %v4897
    %v4953 = vmul.f32 %v96, %v4897
    %v4954 = vmul.f32 %v97, %v4897
    %v4955 = vmul.f32 %v98, %v4897
    %v4956 = vmul.f32 %v99, %v4897
    %v4957 = vmul.f32 %v100, %v4897
    %v4958 = vmul.f32 %v101, %v4897
    %v4959 = vmul.f32 %v102, %v4897
    %v4960 = vmul.f32 %v103, %v4897
    %v4961 = vmul.f32 %v104, %v4897
    %v4962 = vmul.f32 %v105, %v4897
    %v4963 = vmul.f32 %v106, %v4897
    %v4964 = vmul.f32 %v107, %v4897
    %v4965 = vmul.f32 %v108, %v4897
    %v4966 = vmul.f32 %v109, %v4897
    %v4967 = vmul.f32 %v110, %v4897
    %v4968 = vmul.f32 %v111, %v4897
    %v4969 = vmul.f32 %v112, %v4897
    %v4970 = vmul.f32 %v113, %v4897
    %v4971 = vmul.f32 %v114, %v4897
    %v4972 = vmul.f32 %v115, %v4897
    %v4973 = vmul.f32 %v116, %v4897
    %v4974 = vmul.f32 %v117, %v4897
    %v4975 = vmul.f32 %v118, %v4897
    %v4976 = vmul.f32 %v119, %v4897
    %v4977 = vmul.f32 %v120, %v4897
    %v4978 = vmul.f32 %v121, %v4897
    %v4979 = vmul.f32 %v122, %v4897
    %v4980 = vmul.f32 %v123, %v4897
    %v4981 = vmul.f32 %v124, %v4897
    %v4982 = vmul.f32 %v125, %v4897
    %v4983 = vmul.f32 %v126, %v4897
    %v4984 = vmul.f32 %v127, %v4897
    %v4985 = vmul.f32 %v128, %v4897
    %v4986 = vmul.f32 %v129, %v4897
    %v4987 = vmul.f32 %v130, %v4897
    %v4988 = vmul.f32 %v131, %v4897
    %v4989 = vmul.f32 %v132, %v4897
    %v4990 = vmul.f32 %v133, %v4897
    %v4991 = vmul.f32 %v134, %v4897
    %v4992 = vmul.f32 %v135, %v4897
    %v4993 = vmul.f32 %v136, %v4897
    %v4994 = vmul.f32 %v137, %v4897
    %v4995 = vmul.f32 %v138, %v4897
    %v4996 = vmul.f32 %v37, %v4676
    %v4997 = vmul.f32 %v38, %v4678
    %v4998 = vmul.f32 %v39, %v4680
    %v4999 = vmul.f32 %v40, %v4682
    %v5000 = vmul.f32 %v41, %v4684
    %v5001 = vmul.f32 %v42, %v4686
    %v5002 = vmul.f32 %v43, %v4688
    %v5003 = vmul.f32 %v44, %v4690
    %v5004 = vmul.f32 %v45, %v4692
    %v5005 = vmul.f32 %v46, %v4694
    %v5006 = vmul.f32 %v47, %v4696
    %v5007 = vmul.f32 %v48, %v4698
    %v5008 = vmul.f32 %v49, %v4700
    %v5009 = vmul.f32 %v50, %v4702
    %v5010 = vmul.f32 %v51, %v4704
    %v5011 = vmul.f32 %v52, %v4706
    %v5012 = vmul.f32 %v53, %v4708
    %v5013 = vmul.f32 %v54, %v4710
    %v5014 = vmul.f32 %v55, %v4712
    %v5015 = vmul.f32 %v56, %v4714
    %v5016 = vmul.f32 %v57, %v4716
    %v5017 = vmul.f32 %v58, %v4718
    %v5018 = vmul.f32 %v59, %v4720
    %v5019 = vmul.f32 %v60, %v4722
    %v5020 = vmul.f32 %v61, %v4724
    %v5021 = vmul.f32 %v62, %v4726
    %v5022 = vmul.f32 %v63, %v4728
    %v5023 = vmul.f32 %v64, %v4730
    %v5024 = vmul.f32 %v65, %v4732
    %v5025 = vmul.f32 %v66, %v4734
    %v5026 = vmul.f32 %v67, %v4736
    %v5027 = vmul.f32 %v68, %v4738
    %v5028 = vmul.f32 %v69, %v4740
    %v5029 = vmul.f32 %v70, %v4742
    %v5030 = vmul.f32 %v71, %v4744
    %v5031 = vmul.f32 %v72, %v4746
    %v5032 = vmul.f32 %v73, %v4748
    %v5033 = vmul.f32 %v74, %v4750
    %v5034 = vmul.f32 %v75, %v4752
    %v5035 = vmul.f32 %v76, %v4754
    %v5036 = vmul.f32 %v77, %v4756
    %v5037 = vmul.f32 %v78, %v4758
    %v5038 = vmul.f32 %v79, %v4760
    %v5039 = vmul.f32 %v80, %v4762
    %v5040 = vmul.f32 %v81, %v4764
    %v5041 = vmul.f32 %v82, %v4766
    %v5042 = vmul.f32 %v83, %v4768
    %v5043 = vmul.f32 %v84, %v4770
    %v5044 = vmul.f32 %v91, %v4772
    %v5045 = vmul.f32 %v92, %v4774
    %v5046 = vmul.f32 %v93, %v4776
    %v5047 = vmul.f32 %v94, %v4778
    %v5048 = vmul.f32 %v95, %v4780
    %v5049 = vmul.f32 %v96, %v4782
    %v5050 = vmul.f32 %v97, %v4784
    %v5051 = vmul.f32 %v98, %v4786
    %v5052 = vmul.f32 %v99, %v4788
    %v5053 = vmul.f32 %v100, %v4790
    %v5054 = vmul.f32 %v101, %v4792
    %v5055 = vmul.f32 %v102, %v4794
    %v5056 = vmul.f32 %v103, %v4796
    %v5057 = vmul.f32 %v104, %v4798
    %v5058 = vmul.f32 %v105, %v4800
    %v5059 = vmul.f32 %v106, %v4802
    %v5060 = vmul.f32 %v107, %v4804
    %v5061 = vmul.f32 %v108, %v4806
    %v5062 = vmul.f32 %v109, %v4808
    %v5063 = vmul.f32 %v110, %v4810
    %v5064 = vmul.f32 %v111, %v4812
    %v5065 = vmul.f32 %v112, %v4814
    %v5066 = vmul.f32 %v113, %v4816
    %v5067 = vmul.f32 %v114, %v4818
    %v5068 = vmul.f32 %v115, %v4820
    %v5069 = vmul.f32 %v116, %v4822
    %v5070 = vmul.f32 %v117, %v4824
    %v5071 = vmul.f32 %v118, %v4826
    %v5072 = vmul.f32 %v119, %v4828
    %v5073 = vmul.f32 %v120, %v4830
    %v5074 = vmul.f32 %v121, %v4832
    %v5075 = vmul.f32 %v122, %v4834
    %v5076 = vmul.f32 %v123, %v4836
    %v5077 = vmul.f32 %v124, %v4838
    %v5078 = vmul.f32 %v125, %v4840
    %v5079 = vmul.f32 %v126, %v4842
    %v5080 = vmul.f32 %v127, %v4844
    %v5081 = vmul.f32 %v128, %v4846
    %v5082 = vmul.f32 %v129, %v4848
    %v5083 = vmul.f32 %v130, %v4850
    %v5084 = vmul.f32 %v131, %v4852
    %v5085 = vmul.f32 %v132, %v4854
    %v5086 = vmul.f32 %v133, %v4856
    %v5087 = vmul.f32 %v134, %v4858
    %v5088 = vmul.f32 %v135, %v4860
    %v5089 = vmul.f32 %v136, %v4862
    %v5090 = vmul.f32 %v137, %v4864
    %v5091 = vmul.f32 %v138, %v4866
    %v5092 = vadd.f32 %v4900, %v4996
    %v5093 = vadd.f32 %v4901, %v4997
    %v5094 = vadd.f32 %v4902, %v4998
    %v5095 = vadd.f32 %v4903, %v4999
    %v5096 = vadd.f32 %v4904, %v5000
    %v5097 = vadd.f32 %v4905, %v5001
    %v5098 = vadd.f32 %v4906, %v5002
    %v5099 = vadd.f32 %v4907, %v5003
    %v5100 = vadd.f32 %v4908, %v5004
    %v5101 = vadd.f32 %v4909, %v5005
    %v5102 = vadd.f32 %v4910, %v5006
    %v5103 = vadd.f32 %v4911, %v5007
    %v5104 = vadd.f32 %v4912, %v5008
    %v5105 = vadd.f32 %v4913, %v5009
    %v5106 = vadd.f32 %v4914, %v5010
    %v5107 = vadd.f32 %v4915, %v5011
    %v5108 = vadd.f32 %v4916, %v5012
    %v5109 = vadd.f32 %v4917, %v5013
    %v5110 = vadd.f32 %v4918, %v5014
    %v5111 = vadd.f32 %v4919, %v5015
    %v5112 = vadd.f32 %v4920, %v5016
    %v5113 = vadd.f32 %v4921, %v5017
    %v5114 = vadd.f32 %v4922, %v5018
    %v5115 = vadd.f32 %v4923, %v5019
    %v5116 = vadd.f32 %v4924, %v5020
    %v5117 = vadd.f32 %v4925, %v5021
    %v5118 = vadd.f32 %v4926, %v5022
    %v5119 = vadd.f32 %v4927, %v5023
    %v5120 = vadd.f32 %v4928, %v5024
    %v5121 = vadd.f32 %v4929, %v5025
    %v5122 = vadd.f32 %v4930, %v5026
    %v5123 = vadd.f32 %v4931, %v5027
    %v5124 = vadd.f32 %v4932, %v5028
    %v5125 = vadd.f32 %v4933, %v5029
    %v5126 = vadd.f32 %v4934, %v5030
    %v5127 = vadd.f32 %v4935, %v5031
    %v5128 = vadd.f32 %v4936, %v5032
    %v5129 = vadd.f32 %v4937, %v5033
    %v5130 = vadd.f32 %v4938, %v5034
    %v5131 = vadd.f32 %v4939, %v5035
    %v5132 = vadd.f32 %v4940, %v5036
    %v5133 = vadd.f32 %v4941, %v5037
    %v5134 = vadd.f32 %v4942, %v5038
    %v5135 = vadd.f32 %v4943, %v5039
    %v5136 = vadd.f32 %v4944, %v5040
    %v5137 = vadd.f32 %v4945, %v5041
    %v5138 = vadd.f32 %v4946, %v5042
    %v5139 = vadd.f32 %v4947, %v5043
    %v5140 = vadd.f32 %v4948, %v5044
    %v5141 = vadd.f32 %v4949, %v5045
    %v5142 = vadd.f32 %v4950, %v5046
    %v5143 = vadd.f32 %v4951, %v5047
    %v5144 = vadd.f32 %v4952, %v5048
    %v5145 = vadd.f32 %v4953, %v5049
    %v5146 = vadd.f32 %v4954, %v5050
    %v5147 = vadd.f32 %v4955, %v5051
    %v5148 = vadd.f32 %v4956, %v5052
    %v5149 = vadd.f32 %v4957, %v5053
    %v5150 = vadd.f32 %v4958, %v5054
    %v5151 = vadd.f32 %v4959, %v5055
    %v5152 = vadd.f32 %v4960, %v5056
    %v5153 = vadd.f32 %v4961, %v5057
    %v5154 = vadd.f32 %v4962, %v5058
    %v5155 = vadd.f32 %v4963, %v5059
    %v5156 = vadd.f32 %v4964, %v5060
    %v5157 = vadd.f32 %v4965, %v5061
    %v5158 = vadd.f32 %v4966, %v5062
    %v5159 = vadd.f32 %v4967, %v5063
    %v5160 = vadd.f32 %v4968, %v5064
    %v5161 = vadd.f32 %v4969, %v5065
    %v5162 = vadd.f32 %v4970, %v5066
    %v5163 = vadd.f32 %v4971, %v5067
    %v5164 = vadd.f32 %v4972, %v5068
    %v5165 = vadd.f32 %v4973, %v5069
    %v5166 = vadd.f32 %v4974, %v5070
    %v5167 = vadd.f32 %v4975, %v5071
    %v5168 = vadd.f32 %v4976, %v5072
    %v5169 = vadd.f32 %v4977, %v5073
    %v5170 = vadd.f32 %v4978, %v5074
    %v5171 = vadd.f32 %v4979, %v5075
    %v5172 = vadd.f32 %v4980, %v5076
    %v5173 = vadd.f32 %v4981, %v5077
    %v5174 = vadd.f32 %v4982, %v5078
    %v5175 = vadd.f32 %v4983, %v5079
    %v5176 = vadd.f32 %v4984, %v5080
    %v5177 = vadd.f32 %v4985, %v5081
    %v5178 = vadd.f32 %v4986, %v5082
    %v5179 = vadd.f32 %v4987, %v5083
    %v5180 = vadd.f32 %v4988, %v5084
    %v5181 = vadd.f32 %v4989, %v5085
    %v5182 = vadd.f32 %v4990, %v5086
    %v5183 = vadd.f32 %v4991, %v5087
    %v5184 = vadd.f32 %v4992, %v5088
    %v5185 = vadd.f32 %v4993, %v5089
    %v5186 = vadd.f32 %v4994, %v5090
    %v5187 = vadd.f32 %v4995, %v5091
    %vm5252 = vcmask 1040384
    %v5253 = vrot.slane %v3513, 7
    %v5254 = vrot.slane %v3514, 7
    %v5255 = vsel %vm5252, %v5253, %v5254
    %v5256 = vrot.slane %v3515, 7
    %v5257 = vrot.slane %v3516, 7
    %v5258 = vsel %vm5252, %v5256, %v5257
    %v5259 = vrot.slane %v3517, 7
    %v5260 = vrot.slane %v3518, 7
    %v5261 = vsel %vm5252, %v5259, %v5260
    %v5262 = vrot.slane %v3519, 7
    %v5263 = vrot.slane %v3520, 7
    %v5264 = vsel %vm5252, %v5262, %v5263
    %v5265 = vrot.slane %v3521, 7
    %v5266 = vrot.slane %v3522, 7
    %v5267 = vsel %vm5252, %v5265, %v5266
    %v5268 = vrot.slane %v3523, 7
    %v5269 = vrot.slane %v3524, 7
    %v5270 = vsel %vm5252, %v5268, %v5269
    %v5271 = vrot.slane %v3525, 7
    %v5272 = vrot.slane %v3526, 7
    %v5273 = vsel %vm5252, %v5271, %v5272
    %v5274 = vrot.slane %v3527, 7
    %v5275 = vrot.slane %v3528, 7
    %v5276 = vsel %vm5252, %v5274, %v5275
    %v5277 = vrot.slane %v3529, 7
    %v5278 = vrot.slane %v3530, 7
    %v5279 = vsel %vm5252, %v5277, %v5278
    %v5280 = vrot.slane %v3531, 7
    %v5281 = vrot.slane %v3532, 7
    %v5282 = vsel %vm5252, %v5280, %v5281
    %v5283 = vrot.slane %v3533, 7
    %v5284 = vrot.slane %v3534, 7
    %v5285 = vsel %vm5252, %v5283, %v5284
    %v5286 = vrot.slane %v3535, 7
    %v5287 = vrot.slane %v3536, 7
    %v5288 = vsel %vm5252, %v5286, %v5287
    %v5289 = vrot.slane %v3537, 7
    %v5290 = vrot.slane %v3538, 7
    %v5291 = vsel %vm5252, %v5289, %v5290
    %v5292 = vrot.slane %v3539, 7
    %v5293 = vrot.slane %v3540, 7
    %v5294 = vsel %vm5252, %v5292, %v5293
    %v5295 = vrot.slane %v3541, 7
    %v5296 = vrot.slane %v3542, 7
    %v5297 = vsel %vm5252, %v5295, %v5296
    %v5298 = vrot.slane %v3543, 7
    %v5299 = vrot.slane %v3544, 7
    %v5300 = vsel %vm5252, %v5298, %v5299
    %v5301 = vrot.slane %v3545, 7
    %v5302 = vrot.slane %v3546, 7
    %v5303 = vsel %vm5252, %v5301, %v5302
    %v5304 = vrot.slane %v3547, 7
    %v5305 = vrot.slane %v3548, 7
    %v5306 = vsel %vm5252, %v5304, %v5305
    %v5307 = vrot.slane %v3549, 7
    %v5308 = vrot.slane %v3550, 7
    %v5309 = vsel %vm5252, %v5307, %v5308
    %v5310 = vrot.slane %v3551, 7
    %v5311 = vrot.slane %v3552, 7
    %v5312 = vsel %vm5252, %v5310, %v5311
    %v5313 = vrot.slane %v3553, 7
    %v5314 = vrot.slane %v3554, 7
    %v5315 = vsel %vm5252, %v5313, %v5314
    %v5316 = vrot.slane %v3555, 7
    %v5317 = vrot.slane %v3556, 7
    %v5318 = vsel %vm5252, %v5316, %v5317
    %v5319 = vrot.slane %v3557, 7
    %v5320 = vrot.slane %v3558, 7
    %v5321 = vsel %vm5252, %v5319, %v5320
    %v5322 = vrot.slane %v3559, 7
    %v5323 = vrot.slane %v3560, 7
    %v5324 = vsel %vm5252, %v5322, %v5323
    %v5325 = vrot.slane %v3561, 7
    %v5326 = vrot.slane %v3562, 7
    %v5327 = vsel %vm5252, %v5325, %v5326
    %v5328 = vrot.slane %v3563, 7
    %v5329 = vrot.slane %v3564, 7
    %v5330 = vsel %vm5252, %v5328, %v5329
    %v5331 = vrot.slane %v3565, 7
    %v5332 = vrot.slane %v3566, 7
    %v5333 = vsel %vm5252, %v5331, %v5332
    %v5334 = vrot.slane %v3567, 7
    %v5335 = vrot.slane %v3568, 7
    %v5336 = vsel %vm5252, %v5334, %v5335
    %v5337 = vrot.slane %v3569, 7
    %v5338 = vrot.slane %v3570, 7
    %v5339 = vsel %vm5252, %v5337, %v5338
    %v5340 = vrot.slane %v3571, 7
    %v5341 = vrot.slane %v3572, 7
    %v5342 = vsel %vm5252, %v5340, %v5341
    %v5343 = vrot.slane %v3573, 7
    %v5344 = vrot.slane %v3574, 7
    %v5345 = vsel %vm5252, %v5343, %v5344
    %v5346 = vrot.slane %v3575, 7
    %v5347 = vrot.slane %v3576, 7
    %v5348 = vsel %vm5252, %v5346, %v5347
    %v5445 = vadd.f32 %v5092, %v5253
    %v5446 = vadd.f32 %v5093, %v5255
    %v5447 = vadd.f32 %v5094, %v5254
    %v5448 = vadd.f32 %v5095, %v5256
    %v5449 = vadd.f32 %v5096, %v5258
    %v5450 = vadd.f32 %v5097, %v5257
    %v5451 = vadd.f32 %v5098, %v5259
    %v5452 = vadd.f32 %v5099, %v5261
    %v5453 = vadd.f32 %v5100, %v5260
    %v5454 = vadd.f32 %v5101, %v5262
    %v5455 = vadd.f32 %v5102, %v5264
    %v5456 = vadd.f32 %v5103, %v5263
    %v5457 = vadd.f32 %v5104, %v5265
    %v5458 = vadd.f32 %v5105, %v5267
    %v5459 = vadd.f32 %v5106, %v5266
    %v5460 = vadd.f32 %v5107, %v5268
    %v5461 = vadd.f32 %v5108, %v5270
    %v5462 = vadd.f32 %v5109, %v5269
    %v5463 = vadd.f32 %v5110, %v5271
    %v5464 = vadd.f32 %v5111, %v5273
    %v5465 = vadd.f32 %v5112, %v5272
    %v5466 = vadd.f32 %v5113, %v5274
    %v5467 = vadd.f32 %v5114, %v5276
    %v5468 = vadd.f32 %v5115, %v5275
    %v5469 = vadd.f32 %v5116, %v5277
    %v5470 = vadd.f32 %v5117, %v5279
    %v5471 = vadd.f32 %v5118, %v5278
    %v5472 = vadd.f32 %v5119, %v5280
    %v5473 = vadd.f32 %v5120, %v5282
    %v5474 = vadd.f32 %v5121, %v5281
    %v5475 = vadd.f32 %v5122, %v5283
    %v5476 = vadd.f32 %v5123, %v5285
    %v5477 = vadd.f32 %v5124, %v5284
    %v5478 = vadd.f32 %v5125, %v5286
    %v5479 = vadd.f32 %v5126, %v5288
    %v5480 = vadd.f32 %v5127, %v5287
    %v5481 = vadd.f32 %v5128, %v5289
    %v5482 = vadd.f32 %v5129, %v5291
    %v5483 = vadd.f32 %v5130, %v5290
    %v5484 = vadd.f32 %v5131, %v5292
    %v5485 = vadd.f32 %v5132, %v5294
    %v5486 = vadd.f32 %v5133, %v5293
    %v5487 = vadd.f32 %v5134, %v5295
    %v5488 = vadd.f32 %v5135, %v5297
    %v5489 = vadd.f32 %v5136, %v5296
    %v5490 = vadd.f32 %v5137, %v5298
    %v5491 = vadd.f32 %v5138, %v5300
    %v5492 = vadd.f32 %v5139, %v5299
    %v5493 = vadd.f32 %v5140, %v5301
    %v5494 = vadd.f32 %v5141, %v5303
    %v5495 = vadd.f32 %v5142, %v5302
    %v5496 = vadd.f32 %v5143, %v5304
    %v5497 = vadd.f32 %v5144, %v5306
    %v5498 = vadd.f32 %v5145, %v5305
    %v5499 = vadd.f32 %v5146, %v5307
    %v5500 = vadd.f32 %v5147, %v5309
    %v5501 = vadd.f32 %v5148, %v5308
    %v5502 = vadd.f32 %v5149, %v5310
    %v5503 = vadd.f32 %v5150, %v5312
    %v5504 = vadd.f32 %v5151, %v5311
    %v5505 = vadd.f32 %v5152, %v5313
    %v5506 = vadd.f32 %v5153, %v5315
    %v5507 = vadd.f32 %v5154, %v5314
    %v5508 = vadd.f32 %v5155, %v5316
    %v5509 = vadd.f32 %v5156, %v5318
    %v5510 = vadd.f32 %v5157, %v5317
    %v5511 = vadd.f32 %v5158, %v5319
    %v5512 = vadd.f32 %v5159, %v5321
    %v5513 = vadd.f32 %v5160, %v5320
    %v5514 = vadd.f32 %v5161, %v5322
    %v5515 = vadd.f32 %v5162, %v5324
    %v5516 = vadd.f32 %v5163, %v5323
    %v5517 = vadd.f32 %v5164, %v5325
    %v5518 = vadd.f32 %v5165, %v5327
    %v5519 = vadd.f32 %v5166, %v5326
    %v5520 = vadd.f32 %v5167, %v5328
    %v5521 = vadd.f32 %v5168, %v5330
    %v5522 = vadd.f32 %v5169, %v5329
    %v5523 = vadd.f32 %v5170, %v5331
    %v5524 = vadd.f32 %v5171, %v5333
    %v5525 = vadd.f32 %v5172, %v5332
    %v5526 = vadd.f32 %v5173, %v5334
    %v5527 = vadd.f32 %v5174, %v5336
    %v5528 = vadd.f32 %v5175, %v5335
    %v5529 = vadd.f32 %v5176, %v5337
    %v5530 = vadd.f32 %v5177, %v5339
    %v5531 = vadd.f32 %v5178, %v5338
    %v5532 = vadd.f32 %v5179, %v5340
    %v5533 = vadd.f32 %v5180, %v5342
    %v5534 = vadd.f32 %v5181, %v5341
    %v5535 = vadd.f32 %v5182, %v5343
    %v5536 = vadd.f32 %v5183, %v5345
    %v5537 = vadd.f32 %v5184, %v5344
    %v5538 = vadd.f32 %v5185, %v5346
    %v5539 = vadd.f32 %v5186, %v5348
    %v5540 = vadd.f32 %v5187, %v5347
    %5541 = vst.msk [vmem:[#allocation2] sm:$0xff] %vm1892, 0.0
    %5542 = vst.msk [vmem:[#allocation2 + $0x8] sm:$0xff] %vm1892, 0.0
    %vm5543 = vcmask 254976
    %5544 = vst.msk [vmem:[#allocation2 + $0x10] sm:$0x3] %vm5543, 0.0
    %5545 = vst.msk [vmem:[#allocation2 + $0x18] sm:$0xff] %vm1892, 0.0
    %5546 = vst.msk [vmem:[#allocation2 + $0x20] sm:$0xff] %vm1892, 0.0
    %5547 = vst.msk [vmem:[#allocation2 + $0x28] sm:$0x3] %vm5543, 0.0
    %5548 = vst.msk [vmem:[#allocation2 + $0x30] sm:$0xff] %vm1892, 0.0
    %5549 = vst.msk [vmem:[#allocation2 + $0x38] sm:$0xff] %vm1892, 0.0
    %5550 = vst.msk [vmem:[#allocation2 + $0x40] sm:$0x3] %vm5543, 0.0
    %5551 = vst.msk [vmem:[#allocation2 + $0x48] sm:$0xff] %vm1892, 0.0
    %5552 = vst.msk [vmem:[#allocation2 + $0x50] sm:$0xff] %vm1892, 0.0
    %5553 = vst.msk [vmem:[#allocation2 + $0x58] sm:$0x3] %vm5543, 0.0
    %5554 = vst.msk [vmem:[#allocation2 + $0x60] sm:$0xff] %vm1892, 0.0
    %5555 = vst.msk [vmem:[#allocation2 + $0x68] sm:$0xff] %vm1892, 0.0
    %5556 = vst.msk [vmem:[#allocation2 + $0x70] sm:$0x3] %vm5543, 0.0
    %5557 = vst.msk [vmem:[#allocation2 + $0x78] sm:$0xff] %vm1892, 0.0
    %5558 = vst.msk [vmem:[#allocation2 + $0x80] sm:$0xff] %vm1892, 0.0
    %5559 = vst.msk [vmem:[#allocation2 + $0x88] sm:$0x3] %vm5543, 0.0
    %5560 = vst.msk [vmem:[#allocation2 + $0x90] sm:$0xff] %vm1892, 0.0
    %5561 = vst.msk [vmem:[#allocation2 + $0x98] sm:$0xff] %vm1892, 0.0
    %5562 = vst.msk [vmem:[#allocation2 + $0xa0] sm:$0x3] %vm5543, 0.0
    %5563 = vst.msk [vmem:[#allocation2 + $0xa8] sm:$0xff] %vm1892, 0.0
    %5564 = vst.msk [vmem:[#allocation2 + $0xb0] sm:$0xff] %vm1892, 0.0
    %5565 = vst.msk [vmem:[#allocation2 + $0xb8] sm:$0x3] %vm5543, 0.0
    %5566 = vst.msk [vmem:[#allocation2 + $0xc0] sm:$0xff] %vm1892, 0.0
    %5567 = vst.msk [vmem:[#allocation2 + $0xc8] sm:$0xff] %vm1892, 0.0
    %5568 = vst.msk [vmem:[#allocation2 + $0xd0] sm:$0x3] %vm5543, 0.0
    %5569 = vst.msk [vmem:[#allocation2 + $0xd8] sm:$0xff] %vm1892, 0.0
    %5570 = vst.msk [vmem:[#allocation2 + $0xe0] sm:$0xff] %vm1892, 0.0
    %5571 = vst.msk [vmem:[#allocation2 + $0xe8] sm:$0x3] %vm5543, 0.0
    %5572 = vst.msk [vmem:[#allocation2 + $0xf0] sm:$0xff] %vm1892, 0.0
    %5573 = vst.msk [vmem:[#allocation2 + $0xf8] sm:$0xff] %vm1892, 0.0
    %5574 = vst.msk [vmem:[#allocation2 + $0x100] sm:$0x3] %vm5543, 0.0
    %5575 = vst.msk [vmem:[#allocation2 + $0x108] sm:$0xff] %vm1892, 0.0
    %5576 = vst.msk [vmem:[#allocation2 + $0x110] sm:$0xff] %vm1892, 0.0
    %5577 = vst.msk [vmem:[#allocation2 + $0x118] sm:$0x3] %vm5543, 0.0
    %5578 = vst.msk [vmem:[#allocation2 + $0x120] sm:$0xff] %vm1892, 0.0
    %5579 = vst.msk [vmem:[#allocation2 + $0x128] sm:$0xff] %vm1892, 0.0
    %5580 = vst.msk [vmem:[#allocation2 + $0x130] sm:$0x3] %vm5543, 0.0
    %5581 = vst.msk [vmem:[#allocation2 + $0x138] sm:$0xff] %vm1892, 0.0
    %5582 = vst.msk [vmem:[#allocation2 + $0x140] sm:$0xff] %vm1892, 0.0
    %5583 = vst.msk [vmem:[#allocation2 + $0x148] sm:$0x3] %vm5543, 0.0
    %5584 = vst.msk [vmem:[#allocation2 + $0x150] sm:$0xff] %vm1892, 0.0
    %5585 = vst.msk [vmem:[#allocation2 + $0x158] sm:$0xff] %vm1892, 0.0
    %5586 = vst.msk [vmem:[#allocation2 + $0x160] sm:$0x3] %vm5543, 0.0
    %5587 = vst.msk [vmem:[#allocation2 + $0x168] sm:$0xff] %vm1892, 0.0
    %5588 = vst.msk [vmem:[#allocation2 + $0x170] sm:$0xff] %vm1892, 0.0
    %5589 = vst.msk [vmem:[#allocation2 + $0x178] sm:$0x3] %vm5543, 0.0
    %5590 = vst.msk [vmem:[#allocation2 + $0x180] sm:$0xff] %vm1892, 0.0
    %5591 = vst.msk [vmem:[#allocation2 + $0x188] sm:$0xff] %vm1892, 0.0
    %5592 = vst.msk [vmem:[#allocation2 + $0x190] sm:$0x3] %vm5543, 0.0
    %5593 = vst.msk [vmem:[#allocation2 + $0x198] sm:$0xff] %vm1892, 0.0
    %5594 = vst.msk [vmem:[#allocation2 + $0x1a0] sm:$0xff] %vm1892, 0.0
    %5595 = vst.msk [vmem:[#allocation2 + $0x1a8] sm:$0x3] %vm5543, 0.0
    %5596 = vst.msk [vmem:[#allocation2 + $0x1b0] sm:$0xff] %vm1892, 0.0
    %5597 = vst.msk [vmem:[#allocation2 + $0x1b8] sm:$0xff] %vm1892, 0.0
    %5598 = vst.msk [vmem:[#allocation2 + $0x1c0] sm:$0x3] %vm5543, 0.0
    %5599 = vst.msk [vmem:[#allocation2 + $0x1c8] sm:$0xff] %vm1892, 0.0
    %5600 = vst.msk [vmem:[#allocation2 + $0x1d0] sm:$0xff] %vm1892, 0.0
    %5601 = vst.msk [vmem:[#allocation2 + $0x1d8] sm:$0x3] %vm5543, 0.0
    %5602 = vst.msk [vmem:[#allocation2 + $0x1e0] sm:$0xff] %vm1892, 0.0
    %5603 = vst.msk [vmem:[#allocation2 + $0x1e8] sm:$0xff] %vm1892, 0.0
    %5604 = vst.msk [vmem:[#allocation2 + $0x1f0] sm:$0x3] %vm5543, 0.0
    %5605 = vst.msk [vmem:[#allocation2 + $0x1f8] sm:$0xff] %vm1892, 0.0
    %5606 = vst.msk [vmem:[#allocation2 + $0x200] sm:$0xff] %vm1892, 0.0
    %5607 = vst.msk [vmem:[#allocation2 + $0x208] sm:$0x3] %vm5543, 0.0
    %5608 = vst.msk [vmem:[#allocation2 + $0x210] sm:$0xff] %vm1892, 0.0
    %5609 = vst.msk [vmem:[#allocation2 + $0x218] sm:$0xff] %vm1892, 0.0
    %5610 = vst.msk [vmem:[#allocation2 + $0x220] sm:$0x3] %vm5543, 0.0
    %5611 = vst.msk [vmem:[#allocation2 + $0x228] sm:$0xff] %vm1892, 0.0
    %5612 = vst.msk [vmem:[#allocation2 + $0x230] sm:$0xff] %vm1892, 0.0
    %5613 = vst.msk [vmem:[#allocation2 + $0x238] sm:$0x3] %vm5543, 0.0
    %5614 = vst.msk [vmem:[#allocation2 + $0x240] sm:$0xff] %vm1892, 0.0
    %5615 = vst.msk [vmem:[#allocation2 + $0x248] sm:$0xff] %vm1892, 0.0
    %5616 = vst.msk [vmem:[#allocation2 + $0x250] sm:$0x3] %vm5543, 0.0
    %5617 = vst.msk [vmem:[#allocation2 + $0x258] sm:$0xff] %vm1892, 0.0
    %5618 = vst.msk [vmem:[#allocation2 + $0x260] sm:$0xff] %vm1892, 0.0
    %5619 = vst.msk [vmem:[#allocation2 + $0x268] sm:$0x3] %vm5543, 0.0
    %5620 = vst.msk [vmem:[#allocation2 + $0x270] sm:$0xff] %vm1892, 0.0
    %5621 = vst.msk [vmem:[#allocation2 + $0x278] sm:$0xff] %vm1892, 0.0
    %5622 = vst.msk [vmem:[#allocation2 + $0x280] sm:$0x3] %vm5543, 0.0
    %5623 = vst.msk [vmem:[#allocation2 + $0x288] sm:$0xff] %vm1892, 0.0
    %5624 = vst.msk [vmem:[#allocation2 + $0x290] sm:$0xff] %vm1892, 0.0
    %5625 = vst.msk [vmem:[#allocation2 + $0x298] sm:$0x3] %vm5543, 0.0
    %5626 = vst.msk [vmem:[#allocation2 + $0x2a0] sm:$0xff] %vm1892, 0.0
    %5627 = vst.msk [vmem:[#allocation2 + $0x2a8] sm:$0xff] %vm1892, 0.0
    %5628 = vst.msk [vmem:[#allocation2 + $0x2b0] sm:$0x3] %vm5543, 0.0
    %5629 = vst.msk [vmem:[#allocation2 + $0x2b8] sm:$0xff] %vm1892, 0.0
    %5630 = vst.msk [vmem:[#allocation2 + $0x2c0] sm:$0xff] %vm1892, 0.0
    %5631 = vst.msk [vmem:[#allocation2 + $0x2c8] sm:$0x3] %vm5543, 0.0
    %5632 = vst.msk [vmem:[#allocation2 + $0x2d0] sm:$0xff] %vm1892, 0.0
    %5633 = vst.msk [vmem:[#allocation2 + $0x2d8] sm:$0xff] %vm1892, 0.0
    %5634 = vst.msk [vmem:[#allocation2 + $0x2e0] sm:$0x3] %vm5543, 0.0
    %5635 = vst.msk [vmem:[#allocation2 + $0x2e8] sm:$0xff] %vm1892, 0.0
    %5636 = vst.msk [vmem:[#allocation2 + $0x2f0] sm:$0xff] %vm1892, 0.0
    %5637 = vst.msk [vmem:[#allocation2 + $0x2f8] sm:$0x3] %vm5543, 0.0
    %5638 = vst.msk [vmem:[#allocation2 + $0x300] sm:$0xff] %vm1892, 0.0
    %5639 = vst.msk [vmem:[#allocation2 + $0x308] sm:$0xff] %vm1892, 0.0
    %5640 = vst.msk [vmem:[#allocation2 + $0x310] sm:$0x3] %vm5543, 0.0
    %5641 = vst.msk [vmem:[#allocation2 + $0x318] sm:$0xff] %vm1892, 0.0
    %5642 = vst.msk [vmem:[#allocation2 + $0x320] sm:$0xff] %vm1892, 0.0
    %5643 = vst.msk [vmem:[#allocation2 + $0x328] sm:$0x3] %vm5543, 0.0
    %5644 = vst.msk [vmem:[#allocation2 + $0x330] sm:$0xff] %vm1892, 0.0
    %5645 = vst.msk [vmem:[#allocation2 + $0x338] sm:$0xff] %vm1892, 0.0
    %5646 = vst.msk [vmem:[#allocation2 + $0x340] sm:$0x3] %vm5543, 0.0
    %5647 = vst.msk [vmem:[#allocation2 + $0x348] sm:$0xff] %vm1892, 0.0
    %5648 = vst.msk [vmem:[#allocation2 + $0x350] sm:$0xff] %vm1892, 0.0
    %5649 = vst.msk [vmem:[#allocation2 + $0x358] sm:$0x3] %vm5543, 0.0
    %s5650 = scalar_lea.vmem [#allocation2], 24
    %5651 = vst.msk [vmem:[%s5650] sm:$0xfe] %vm4001, %v5445
    %5652 = vst.msk [vmem:[%s5650 + $0x8] sm:$0xff] %vm1892, %v5446
    %5653 = vst.msk [vmem:[%s5650 + $0x10] sm:$0x1] %vm4008, %v5447
    %5654 = vst.msk [vmem:[%s5650 + $0x18] sm:$0xfe] %vm4001, %v5448
    %5655 = vst.msk [vmem:[%s5650 + $0x20] sm:$0xff] %vm1892, %v5449
    %5656 = vst.msk [vmem:[%s5650 + $0x28] sm:$0x1] %vm4008, %v5450
    %5657 = vst.msk [vmem:[%s5650 + $0x30] sm:$0xfe] %vm4001, %v5451
    %5658 = vst.msk [vmem:[%s5650 + $0x38] sm:$0xff] %vm1892, %v5452
    %5659 = vst.msk [vmem:[%s5650 + $0x40] sm:$0x1] %vm4008, %v5453
    %5660 = vst.msk [vmem:[%s5650 + $0x48] sm:$0xfe] %vm4001, %v5454
    %5661 = vst.msk [vmem:[%s5650 + $0x50] sm:$0xff] %vm1892, %v5455
    %5662 = vst.msk [vmem:[%s5650 + $0x58] sm:$0x1] %vm4008, %v5456
    %5663 = vst.msk [vmem:[%s5650 + $0x60] sm:$0xfe] %vm4001, %v5457
    %5664 = vst.msk [vmem:[%s5650 + $0x68] sm:$0xff] %vm1892, %v5458
    %5665 = vst.msk [vmem:[%s5650 + $0x70] sm:$0x1] %vm4008, %v5459
    %5666 = vst.msk [vmem:[%s5650 + $0x78] sm:$0xfe] %vm4001, %v5460
    %5667 = vst.msk [vmem:[%s5650 + $0x80] sm:$0xff] %vm1892, %v5461
    %5668 = vst.msk [vmem:[%s5650 + $0x88] sm:$0x1] %vm4008, %v5462
    %5669 = vst.msk [vmem:[%s5650 + $0x90] sm:$0xfe] %vm4001, %v5463
    %5670 = vst.msk [vmem:[%s5650 + $0x98] sm:$0xff] %vm1892, %v5464
    %5671 = vst.msk [vmem:[%s5650 + $0xa0] sm:$0x1] %vm4008, %v5465
    %5672 = vst.msk [vmem:[%s5650 + $0xa8] sm:$0xfe] %vm4001, %v5466
    %5673 = vst.msk [vmem:[%s5650 + $0xb0] sm:$0xff] %vm1892, %v5467
    %5674 = vst.msk [vmem:[%s5650 + $0xb8] sm:$0x1] %vm4008, %v5468
    %5675 = vst.msk [vmem:[%s5650 + $0xc0] sm:$0xfe] %vm4001, %v5469
    %5676 = vst.msk [vmem:[%s5650 + $0xc8] sm:$0xff] %vm1892, %v5470
    %5677 = vst.msk [vmem:[%s5650 + $0xd0] sm:$0x1] %vm4008, %v5471
    %5678 = vst.msk [vmem:[%s5650 + $0xd8] sm:$0xfe] %vm4001, %v5472
    %5679 = vst.msk [vmem:[%s5650 + $0xe0] sm:$0xff] %vm1892, %v5473
    %5680 = vst.msk [vmem:[%s5650 + $0xe8] sm:$0x1] %vm4008, %v5474
    %5681 = vst.msk [vmem:[%s5650 + $0xf0] sm:$0xfe] %vm4001, %v5475
    %5682 = vst.msk [vmem:[%s5650 + $0xf8] sm:$0xff] %vm1892, %v5476
    %5683 = vst.msk [vmem:[%s5650 + $0x100] sm:$0x1] %vm4008, %v5477
    %5684 = vst.msk [vmem:[%s5650 + $0x108] sm:$0xfe] %vm4001, %v5478
    %5685 = vst.msk [vmem:[%s5650 + $0x110] sm:$0xff] %vm1892, %v5479
    %5686 = vst.msk [vmem:[%s5650 + $0x118] sm:$0x1] %vm4008, %v5480
    %5687 = vst.msk [vmem:[%s5650 + $0x120] sm:$0xfe] %vm4001, %v5481
    %5688 = vst.msk [vmem:[%s5650 + $0x128] sm:$0xff] %vm1892, %v5482
    %5689 = vst.msk [vmem:[%s5650 + $0x130] sm:$0x1] %vm4008, %v5483
    %5690 = vst.msk [vmem:[%s5650 + $0x138] sm:$0xfe] %vm4001, %v5484
    %5691 = vst.msk [vmem:[%s5650 + $0x140] sm:$0xff] %vm1892, %v5485
    %5692 = vst.msk [vmem:[%s5650 + $0x148] sm:$0x1] %vm4008, %v5486
    %5693 = vst.msk [vmem:[%s5650 + $0x150] sm:$0xfe] %vm4001, %v5487
    %5694 = vst.msk [vmem:[%s5650 + $0x158] sm:$0xff] %vm1892, %v5488
    %5695 = vst.msk [vmem:[%s5650 + $0x160] sm:$0x1] %vm4008, %v5489
    %5696 = vst.msk [vmem:[%s5650 + $0x168] sm:$0xfe] %vm4001, %v5490
    %5697 = vst.msk [vmem:[%s5650 + $0x170] sm:$0xff] %vm1892, %v5491
    %5698 = vst.msk [vmem:[%s5650 + $0x178] sm:$0x1] %vm4008, %v5492
    %5699 = vst.msk [vmem:[%s5650 + $0x1b0] sm:$0xfe] %vm4001, %v5493
    %5700 = vst.msk [vmem:[%s5650 + $0x1b8] sm:$0xff] %vm1892, %v5494
    %5701 = vst.msk [vmem:[%s5650 + $0x1c0] sm:$0x1] %vm4008, %v5495
    %5702 = vst.msk [vmem:[%s5650 + $0x1c8] sm:$0xfe] %vm4001, %v5496
    %5703 = vst.msk [vmem:[%s5650 + $0x1d0] sm:$0xff] %vm1892, %v5497
    %5704 = vst.msk [vmem:[%s5650 + $0x1d8] sm:$0x1] %vm4008, %v5498
    %5705 = vst.msk [vmem:[%s5650 + $0x1e0] sm:$0xfe] %vm4001, %v5499
    %5706 = vst.msk [vmem:[%s5650 + $0x1e8] sm:$0xff] %vm1892, %v5500
    %5707 = vst.msk [vmem:[%s5650 + $0x1f0] sm:$0x1] %vm4008, %v5501
    %5708 = vst.msk [vmem:[%s5650 + $0x1f8] sm:$0xfe] %vm4001, %v5502
    %5709 = vst.msk [vmem:[%s5650 + $0x200] sm:$0xff] %vm1892, %v5503
    %5710 = vst.msk [vmem:[%s5650 + $0x208] sm:$0x1] %vm4008, %v5504
    %5711 = vst.msk [vmem:[%s5650 + $0x210] sm:$0xfe] %vm4001, %v5505
    %5712 = vst.msk [vmem:[%s5650 + $0x218] sm:$0xff] %vm1892, %v5506
    %5713 = vst.msk [vmem:[%s5650 + $0x220] sm:$0x1] %vm4008, %v5507
    %5714 = vst.msk [vmem:[%s5650 + $0x228] sm:$0xfe] %vm4001, %v5508
    %5715 = vst.msk [vmem:[%s5650 + $0x230] sm:$0xff] %vm1892, %v5509
    %5716 = vst.msk [vmem:[%s5650 + $0x238] sm:$0x1] %vm4008, %v5510
    %5717 = vst.msk [vmem:[%s5650 + $0x240] sm:$0xfe] %vm4001, %v5511
    %5718 = vst.msk [vmem:[%s5650 + $0x248] sm:$0xff] %vm1892, %v5512
    %5719 = vst.msk [vmem:[%s5650 + $0x250] sm:$0x1] %vm4008, %v5513
    %5720 = vst.msk [vmem:[%s5650 + $0x258] sm:$0xfe] %vm4001, %v5514
    %5721 = vst.msk [vmem:[%s5650 + $0x260] sm:$0xff] %vm1892, %v5515
    %5722 = vst.msk [vmem:[%s5650 + $0x268] sm:$0x1] %vm4008, %v5516
    %5723 = vst.msk [vmem:[%s5650 + $0x270] sm:$0xfe] %vm4001, %v5517
    %5724 = vst.msk [vmem:[%s5650 + $0x278] sm:$0xff] %vm1892, %v5518
    %5725 = vst.msk [vmem:[%s5650 + $0x280] sm:$0x1] %vm4008, %v5519
    %5726 = vst.msk [vmem:[%s5650 + $0x288] sm:$0xfe] %vm4001, %v5520
    %5727 = vst.msk [vmem:[%s5650 + $0x290] sm:$0xff] %vm1892, %v5521
    %5728 = vst.msk [vmem:[%s5650 + $0x298] sm:$0x1] %vm4008, %v5522
    %5729 = vst.msk [vmem:[%s5650 + $0x2a0] sm:$0xfe] %vm4001, %v5523
    %5730 = vst.msk [vmem:[%s5650 + $0x2a8] sm:$0xff] %vm1892, %v5524
    %5731 = vst.msk [vmem:[%s5650 + $0x2b0] sm:$0x1] %vm4008, %v5525
    %5732 = vst.msk [vmem:[%s5650 + $0x2b8] sm:$0xfe] %vm4001, %v5526
    %5733 = vst.msk [vmem:[%s5650 + $0x2c0] sm:$0xff] %vm1892, %v5527
    %5734 = vst.msk [vmem:[%s5650 + $0x2c8] sm:$0x1] %vm4008, %v5528
    %5735 = vst.msk [vmem:[%s5650 + $0x2d0] sm:$0xfe] %vm4001, %v5529
    %5736 = vst.msk [vmem:[%s5650 + $0x2d8] sm:$0xff] %vm1892, %v5530
    %5737 = vst.msk [vmem:[%s5650 + $0x2e0] sm:$0x1] %vm4008, %v5531
    %5738 = vst.msk [vmem:[%s5650 + $0x2e8] sm:$0xfe] %vm4001, %v5532
    %5739 = vst.msk [vmem:[%s5650 + $0x2f0] sm:$0xff] %vm1892, %v5533
    %5740 = vst.msk [vmem:[%s5650 + $0x2f8] sm:$0x1] %vm4008, %v5534
    %5741 = vst.msk [vmem:[%s5650 + $0x300] sm:$0xfe] %vm4001, %v5535
    %5742 = vst.msk [vmem:[%s5650 + $0x308] sm:$0xff] %vm1892, %v5536
    %5743 = vst.msk [vmem:[%s5650 + $0x310] sm:$0x1] %vm4008, %v5537
    %5744 = vst.msk [vmem:[%s5650 + $0x318] sm:$0xfe] %vm4001, %v5538
    %5745 = vst.msk [vmem:[%s5650 + $0x320] sm:$0xff] %vm1892, %v5539
    %5746 = vst.msk [vmem:[%s5650 + $0x328] sm:$0x1] %vm4008, %v5540
    %v5747 = vld [vmem:[#allocation2] sm:$0xff]
    %v5748 = vld [vmem:[#allocation2 + $0x8] sm:$0xff]
    %v5749 = vld [vmem:[#allocation2 + $0x10] sm:$0x3]
    %v5750 = vld [vmem:[#allocation2 + $0x18] sm:$0xff]
    %v5751 = vld [vmem:[#allocation2 + $0x20] sm:$0xff]
    %v5752 = vld [vmem:[#allocation2 + $0x28] sm:$0x3]
    %v5753 = vld [vmem:[#allocation2 + $0x30] sm:$0xff]
    %v5754 = vld [vmem:[#allocation2 + $0x38] sm:$0xff]
    %v5755 = vld [vmem:[#allocation2 + $0x40] sm:$0x3]
    %v5756 = vld [vmem:[#allocation2 + $0x48] sm:$0xff]
    %v5757 = vld [vmem:[#allocation2 + $0x50] sm:$0xff]
    %v5758 = vld [vmem:[#allocation2 + $0x58] sm:$0x3]
    %v5759 = vld [vmem:[#allocation2 + $0x60] sm:$0xff]
    %v5760 = vld [vmem:[#allocation2 + $0x68] sm:$0xff]
    %v5761 = vld [vmem:[#allocation2 + $0x70] sm:$0x3]
    %v5762 = vld [vmem:[#allocation2 + $0x78] sm:$0xff]
    %v5763 = vld [vmem:[#allocation2 + $0x80] sm:$0xff]
    %v5764 = vld [vmem:[#allocation2 + $0x88] sm:$0x3]
    %v5765 = vld [vmem:[#allocation2 + $0x90] sm:$0xff]
    %v5766 = vld [vmem:[#allocation2 + $0x98] sm:$0xff]
    %v5767 = vld [vmem:[#allocation2 + $0xa0] sm:$0x3]
    %v5768 = vld [vmem:[#allocation2 + $0xa8] sm:$0xff]
    %v5769 = vld [vmem:[#allocation2 + $0xb0] sm:$0xff]
    %v5770 = vld [vmem:[#allocation2 + $0xb8] sm:$0x3]
    %v5771 = vld [vmem:[#allocation2 + $0xc0] sm:$0xff]
    %v5772 = vld [vmem:[#allocation2 + $0xc8] sm:$0xff]
    %v5773 = vld [vmem:[#allocation2 + $0xd0] sm:$0x3]
    %v5774 = vld [vmem:[#allocation2 + $0xd8] sm:$0xff]
    %v5775 = vld [vmem:[#allocation2 + $0xe0] sm:$0xff]
    %v5776 = vld [vmem:[#allocation2 + $0xe8] sm:$0x3]
    %v5777 = vld [vmem:[#allocation2 + $0xf0] sm:$0xff]
    %v5778 = vld [vmem:[#allocation2 + $0xf8] sm:$0xff]
    %v5779 = vld [vmem:[#allocation2 + $0x100] sm:$0x3]
    %v5780 = vld [vmem:[#allocation2 + $0x108] sm:$0xff]
    %v5781 = vld [vmem:[#allocation2 + $0x110] sm:$0xff]
    %v5782 = vld [vmem:[#allocation2 + $0x118] sm:$0x3]
    %v5783 = vld [vmem:[#allocation2 + $0x120] sm:$0xff]
    %v5784 = vld [vmem:[#allocation2 + $0x128] sm:$0xff]
    %v5785 = vld [vmem:[#allocation2 + $0x130] sm:$0x3]
    %v5786 = vld [vmem:[#allocation2 + $0x138] sm:$0xff]
    %v5787 = vld [vmem:[#allocation2 + $0x140] sm:$0xff]
    %v5788 = vld [vmem:[#allocation2 + $0x148] sm:$0x3]
    %v5789 = vld [vmem:[#allocation2 + $0x150] sm:$0xff]
    %v5790 = vld [vmem:[#allocation2 + $0x158] sm:$0xff]
    %v5791 = vld [vmem:[#allocation2 + $0x160] sm:$0x3]
    %v5792 = vld [vmem:[#allocation2 + $0x168] sm:$0xff]
    %v5793 = vld [vmem:[#allocation2 + $0x170] sm:$0xff]
    %v5794 = vld [vmem:[#allocation2 + $0x178] sm:$0x3]
    %v5795 = vld [vmem:[#allocation2 + $0x180] sm:$0xff]
    %v5796 = vld [vmem:[#allocation2 + $0x188] sm:$0xff]
    %v5797 = vld [vmem:[#allocation2 + $0x190] sm:$0x3]
    %v5798 = vld [vmem:[#allocation2 + $0x198] sm:$0xff]
    %v5799 = vld [vmem:[#allocation2 + $0x1a0] sm:$0xff]
    %v5800 = vld [vmem:[#allocation2 + $0x1a8] sm:$0x3]
    %v5801 = vld [vmem:[#allocation2 + $0x1b0] sm:$0xff]
    %v5802 = vld [vmem:[#allocation2 + $0x1b8] sm:$0xff]
    %v5803 = vld [vmem:[#allocation2 + $0x1c0] sm:$0x3]
    %v5804 = vld [vmem:[#allocation2 + $0x1c8] sm:$0xff]
    %v5805 = vld [vmem:[#allocation2 + $0x1d0] sm:$0xff]
    %v5806 = vld [vmem:[#allocation2 + $0x1d8] sm:$0x3]
    %v5807 = vld [vmem:[#allocation2 + $0x1e0] sm:$0xff]
    %v5808 = vld [vmem:[#allocation2 + $0x1e8] sm:$0xff]
    %v5809 = vld [vmem:[#allocation2 + $0x1f0] sm:$0x3]
    %v5810 = vld [vmem:[#allocation2 + $0x1f8] sm:$0xff]
    %v5811 = vld [vmem:[#allocation2 + $0x200] sm:$0xff]
    %v5812 = vld [vmem:[#allocation2 + $0x208] sm:$0x3]
    %v5813 = vld [vmem:[#allocation2 + $0x210] sm:$0xff]
    %v5814 = vld [vmem:[#allocation2 + $0x218] sm:$0xff]
    %v5815 = vld [vmem:[#allocation2 + $0x220] sm:$0x3]
    %v5816 = vld [vmem:[#allocation2 + $0x228] sm:$0xff]
    %v5817 = vld [vmem:[#allocation2 + $0x230] sm:$0xff]
    %v5818 = vld [vmem:[#allocation2 + $0x238] sm:$0x3]
    %v5819 = vld [vmem:[#allocation2 + $0x240] sm:$0xff]
    %v5820 = vld [vmem:[#allocation2 + $0x248] sm:$0xff]
    %v5821 = vld [vmem:[#allocation2 + $0x250] sm:$0x3]
    %v5822 = vld [vmem:[#allocation2 + $0x258] sm:$0xff]
    %v5823 = vld [vmem:[#allocation2 + $0x260] sm:$0xff]
    %v5824 = vld [vmem:[#allocation2 + $0x268] sm:$0x3]
    %v5825 = vld [vmem:[#allocation2 + $0x270] sm:$0xff]
    %v5826 = vld [vmem:[#allocation2 + $0x278] sm:$0xff]
    %v5827 = vld [vmem:[#allocation2 + $0x280] sm:$0x3]
    %v5828 = vld [vmem:[#allocation2 + $0x288] sm:$0xff]
    %v5829 = vld [vmem:[#allocation2 + $0x290] sm:$0xff]
    %v5830 = vld [vmem:[#allocation2 + $0x298] sm:$0x3]
    %v5831 = vld [vmem:[#allocation2 + $0x2a0] sm:$0xff]
    %v5832 = vld [vmem:[#allocation2 + $0x2a8] sm:$0xff]
    %v5833 = vld [vmem:[#allocation2 + $0x2b0] sm:$0x3]
    %v5834 = vld [vmem:[#allocation2 + $0x2b8] sm:$0xff]
    %v5835 = vld [vmem:[#allocation2 + $0x2c0] sm:$0xff]
    %v5836 = vld [vmem:[#allocation2 + $0x2c8] sm:$0x3]
    %v5837 = vld [vmem:[#allocation2 + $0x2d0] sm:$0xff]
    %v5838 = vld [vmem:[#allocation2 + $0x2d8] sm:$0xff]
    %v5839 = vld [vmem:[#allocation2 + $0x2e0] sm:$0x3]
    %v5840 = vld [vmem:[#allocation2 + $0x2e8] sm:$0xff]
    %v5841 = vld [vmem:[#allocation2 + $0x2f0] sm:$0xff]
    %v5842 = vld [vmem:[#allocation2 + $0x2f8] sm:$0x3]
    %v5843 = vld [vmem:[#allocation2 + $0x300] sm:$0xff]
    %v5844 = vld [vmem:[#allocation2 + $0x308] sm:$0xff]
    %v5845 = vld [vmem:[#allocation2 + $0x310] sm:$0x3]
    %v5846 = vld [vmem:[#allocation2 + $0x318] sm:$0xff]
    %v5847 = vld [vmem:[#allocation2 + $0x320] sm:$0xff]
    %v5848 = vld [vmem:[#allocation2 + $0x328] sm:$0x3]
    %v5849 = vld [vmem:[#allocation2 + $0x330] sm:$0xff]
    %v5850 = vld [vmem:[#allocation2 + $0x338] sm:$0xff]
    %v5851 = vld [vmem:[#allocation2 + $0x340] sm:$0x3]
    %v5852 = vld [vmem:[#allocation2 + $0x348] sm:$0xff]
    %v5853 = vld [vmem:[#allocation2 + $0x350] sm:$0xff]
    %v5854 = vld [vmem:[#allocation2 + $0x358] sm:$0x3]
    %v5951 = vrot.slane %v5747, 1
    %v5952 = vrot.slane %v5748, 1
    %v5953 = vsel %vm238, %v5951, %v5952
    %v5954 = vrot.slane %v5749, 1
    %v5955 = vsel %vm238, %v5952, %v5954
    %v5956 = vrot.slane %v5750, 1
    %v5957 = vrot.slane %v5751, 1
    %v5958 = vsel %vm238, %v5956, %v5957
    %v5959 = vrot.slane %v5752, 1
    %v5960 = vsel %vm238, %v5957, %v5959
    %v5961 = vrot.slane %v5753, 1
    %v5962 = vrot.slane %v5754, 1
    %v5963 = vsel %vm238, %v5961, %v5962
    %v5964 = vrot.slane %v5755, 1
    %v5965 = vsel %vm238, %v5962, %v5964
    %v5966 = vrot.slane %v5756, 1
    %v5967 = vrot.slane %v5757, 1
    %v5968 = vsel %vm238, %v5966, %v5967
    %v5969 = vrot.slane %v5758, 1
    %v5970 = vsel %vm238, %v5967, %v5969
    %v5971 = vrot.slane %v5759, 1
    %v5972 = vrot.slane %v5760, 1
    %v5973 = vsel %vm238, %v5971, %v5972
    %v5974 = vrot.slane %v5761, 1
    %v5975 = vsel %vm238, %v5972, %v5974
    %v5976 = vrot.slane %v5762, 1
    %v5977 = vrot.slane %v5763, 1
    %v5978 = vsel %vm238, %v5976, %v5977
    %v5979 = vrot.slane %v5764, 1
    %v5980 = vsel %vm238, %v5977, %v5979
    %v5981 = vrot.slane %v5765, 1
    %v5982 = vrot.slane %v5766, 1
    %v5983 = vsel %vm238, %v5981, %v5982
    %v5984 = vrot.slane %v5767, 1
    %v5985 = vsel %vm238, %v5982, %v5984
    %v5986 = vrot.slane %v5768, 1
    %v5987 = vrot.slane %v5769, 1
    %v5988 = vsel %vm238, %v5986, %v5987
    %v5989 = vrot.slane %v5770, 1
    %v5990 = vsel %vm238, %v5987, %v5989
    %v5991 = vrot.slane %v5771, 1
    %v5992 = vrot.slane %v5772, 1
    %v5993 = vsel %vm238, %v5991, %v5992
    %v5994 = vrot.slane %v5773, 1
    %v5995 = vsel %vm238, %v5992, %v5994
    %v5996 = vrot.slane %v5774, 1
    %v5997 = vrot.slane %v5775, 1
    %v5998 = vsel %vm238, %v5996, %v5997
    %v5999 = vrot.slane %v5776, 1
    %v6000 = vsel %vm238, %v5997, %v5999
    %v6001 = vrot.slane %v5777, 1
    %v6002 = vrot.slane %v5778, 1
    %v6003 = vsel %vm238, %v6001, %v6002
    %v6004 = vrot.slane %v5779, 1
    %v6005 = vsel %vm238, %v6002, %v6004
    %v6006 = vrot.slane %v5780, 1
    %v6007 = vrot.slane %v5781, 1
    %v6008 = vsel %vm238, %v6006, %v6007
    %v6009 = vrot.slane %v5782, 1
    %v6010 = vsel %vm238, %v6007, %v6009
    %v6011 = vrot.slane %v5783, 1
    %v6012 = vrot.slane %v5784, 1
    %v6013 = vsel %vm238, %v6011, %v6012
    %v6014 = vrot.slane %v5785, 1
    %v6015 = vsel %vm238, %v6012, %v6014
    %v6016 = vrot.slane %v5786, 1
    %v6017 = vrot.slane %v5787, 1
    %v6018 = vsel %vm238, %v6016, %v6017
    %v6019 = vrot.slane %v5788, 1
    %v6020 = vsel %vm238, %v6017, %v6019
    %v6021 = vrot.slane %v5789, 1
    %v6022 = vrot.slane %v5790, 1
    %v6023 = vsel %vm238, %v6021, %v6022
    %v6024 = vrot.slane %v5791, 1
    %v6025 = vsel %vm238, %v6022, %v6024
    %v6026 = vrot.slane %v5792, 1
    %v6027 = vrot.slane %v5793, 1
    %v6028 = vsel %vm238, %v6026, %v6027
    %v6029 = vrot.slane %v5794, 1
    %v6030 = vsel %vm238, %v6027, %v6029
    %v6031 = vrot.slane %v5801, 1
    %v6032 = vrot.slane %v5802, 1
    %v6033 = vsel %vm238, %v6031, %v6032
    %v6034 = vrot.slane %v5803, 1
    %v6035 = vsel %vm238, %v6032, %v6034
    %v6036 = vrot.slane %v5804, 1
    %v6037 = vrot.slane %v5805, 1
    %v6038 = vsel %vm238, %v6036, %v6037
    %v6039 = vrot.slane %v5806, 1
    %v6040 = vsel %vm238, %v6037, %v6039
    %v6041 = vrot.slane %v5807, 1
    %v6042 = vrot.slane %v5808, 1
    %v6043 = vsel %vm238, %v6041, %v6042
    %v6044 = vrot.slane %v5809, 1
    %v6045 = vsel %vm238, %v6042, %v6044
    %v6046 = vrot.slane %v5810, 1
    %v6047 = vrot.slane %v5811, 1
    %v6048 = vsel %vm238, %v6046, %v6047
    %v6049 = vrot.slane %v5812, 1
    %v6050 = vsel %vm238, %v6047, %v6049
    %v6051 = vrot.slane %v5813, 1
    %v6052 = vrot.slane %v5814, 1
    %v6053 = vsel %vm238, %v6051, %v6052
    %v6054 = vrot.slane %v5815, 1
    %v6055 = vsel %vm238, %v6052, %v6054
    %v6056 = vrot.slane %v5816, 1
    %v6057 = vrot.slane %v5817, 1
    %v6058 = vsel %vm238, %v6056, %v6057
    %v6059 = vrot.slane %v5818, 1
    %v6060 = vsel %vm238, %v6057, %v6059
    %v6061 = vrot.slane %v5819, 1
    %v6062 = vrot.slane %v5820, 1
    %v6063 = vsel %vm238, %v6061, %v6062
    %v6064 = vrot.slane %v5821, 1
    %v6065 = vsel %vm238, %v6062, %v6064
    %v6066 = vrot.slane %v5822, 1
    %v6067 = vrot.slane %v5823, 1
    %v6068 = vsel %vm238, %v6066, %v6067
    %v6069 = vrot.slane %v5824, 1
    %v6070 = vsel %vm238, %v6067, %v6069
    %v6071 = vrot.slane %v5825, 1
    %v6072 = vrot.slane %v5826, 1
    %v6073 = vsel %vm238, %v6071, %v6072
    %v6074 = vrot.slane %v5827, 1
    %v6075 = vsel %vm238, %v6072, %v6074
    %v6076 = vrot.slane %v5828, 1
    %v6077 = vrot.slane %v5829, 1
    %v6078 = vsel %vm238, %v6076, %v6077
    %v6079 = vrot.slane %v5830, 1
    %v6080 = vsel %vm238, %v6077, %v6079
    %v6081 = vrot.slane %v5831, 1
    %v6082 = vrot.slane %v5832, 1
    %v6083 = vsel %vm238, %v6081, %v6082
    %v6084 = vrot.slane %v5833, 1
    %v6085 = vsel %vm238, %v6082, %v6084
    %v6086 = vrot.slane %v5834, 1
    %v6087 = vrot.slane %v5835, 1
    %v6088 = vsel %vm238, %v6086, %v6087
    %v6089 = vrot.slane %v5836, 1
    %v6090 = vsel %vm238, %v6087, %v6089
    %v6091 = vrot.slane %v5837, 1
    %v6092 = vrot.slane %v5838, 1
    %v6093 = vsel %vm238, %v6091, %v6092
    %v6094 = vrot.slane %v5839, 1
    %v6095 = vsel %vm238, %v6092, %v6094
    %v6096 = vrot.slane %v5840, 1
    %v6097 = vrot.slane %v5841, 1
    %v6098 = vsel %vm238, %v6096, %v6097
    %v6099 = vrot.slane %v5842, 1
    %v6100 = vsel %vm238, %v6097, %v6099
    %v6101 = vrot.slane %v5843, 1
    %v6102 = vrot.slane %v5844, 1
    %v6103 = vsel %vm238, %v6101, %v6102
    %v6104 = vrot.slane %v5845, 1
    %v6105 = vsel %vm238, %v6102, %v6104
    %v6106 = vrot.slane %v5846, 1
    %v6107 = vrot.slane %v5847, 1
    %v6108 = vsel %vm238, %v6106, %v6107
    %v6109 = vrot.slane %v5848, 1
    %v6110 = vsel %vm238, %v6107, %v6109
    %6111 = vrot.lane.b32.xlu0 %v5953, 32
    %v6112 = vpop.permute.xlu0 %6111
    %6113 = vrot.lane.b32.xlu0 %v5955, 32
    %v6114 = vpop.permute.xlu0 %6113
    %6115 = vrot.lane.b32.xlu0 %v5958, 32
    %v6116 = vpop.permute.xlu0 %6115
    %6117 = vrot.lane.b32.xlu0 %v5960, 32
    %v6118 = vpop.permute.xlu0 %6117
    %6119 = vrot.lane.b32.xlu0 %v5963, 32
    %v6120 = vpop.permute.xlu0 %6119
    %6121 = vrot.lane.b32.xlu0 %v5965, 32
    %v6122 = vpop.permute.xlu0 %6121
    %6123 = vrot.lane.b32.xlu0 %v5968, 32
    %v6124 = vpop.permute.xlu0 %6123
    %6125 = vrot.lane.b32.xlu0 %v5970, 32
    %v6126 = vpop.permute.xlu0 %6125
    %6127 = vrot.lane.b32.xlu0 %v5973, 32
    %v6128 = vpop.permute.xlu0 %6127
    %6129 = vrot.lane.b32.xlu0 %v5975, 32
    %v6130 = vpop.permute.xlu0 %6129
    %6131 = vrot.lane.b32.xlu0 %v5978, 32
    %v6132 = vpop.permute.xlu0 %6131
    %6133 = vrot.lane.b32.xlu0 %v5980, 32
    %v6134 = vpop.permute.xlu0 %6133
    %6135 = vrot.lane.b32.xlu0 %v5983, 32
    %v6136 = vpop.permute.xlu0 %6135
    %6137 = vrot.lane.b32.xlu0 %v5985, 32
    %v6138 = vpop.permute.xlu0 %6137
    %6139 = vrot.lane.b32.xlu0 %v5988, 32
    %v6140 = vpop.permute.xlu0 %6139
    %6141 = vrot.lane.b32.xlu0 %v5990, 32
    %v6142 = vpop.permute.xlu0 %6141
    %6143 = vrot.lane.b32.xlu0 %v5993, 32
    %v6144 = vpop.permute.xlu0 %6143
    %6145 = vrot.lane.b32.xlu0 %v5995, 32
    %v6146 = vpop.permute.xlu0 %6145
    %6147 = vrot.lane.b32.xlu0 %v5998, 32
    %v6148 = vpop.permute.xlu0 %6147
    %6149 = vrot.lane.b32.xlu0 %v6000, 32
    %v6150 = vpop.permute.xlu0 %6149
    %6151 = vrot.lane.b32.xlu0 %v6003, 32
    %v6152 = vpop.permute.xlu0 %6151
    %6153 = vrot.lane.b32.xlu0 %v6005, 32
    %v6154 = vpop.permute.xlu0 %6153
    %6155 = vrot.lane.b32.xlu0 %v6008, 32
    %v6156 = vpop.permute.xlu0 %6155
    %6157 = vrot.lane.b32.xlu0 %v6010, 32
    %v6158 = vpop.permute.xlu0 %6157
    %6159 = vrot.lane.b32.xlu0 %v6013, 32
    %v6160 = vpop.permute.xlu0 %6159
    %6161 = vrot.lane.b32.xlu0 %v6015, 32
    %v6162 = vpop.permute.xlu0 %6161
    %6163 = vrot.lane.b32.xlu0 %v6018, 32
    %v6164 = vpop.permute.xlu0 %6163
    %6165 = vrot.lane.b32.xlu0 %v6020, 32
    %v6166 = vpop.permute.xlu0 %6165
    %6167 = vrot.lane.b32.xlu0 %v6023, 32
    %v6168 = vpop.permute.xlu0 %6167
    %6169 = vrot.lane.b32.xlu0 %v6025, 32
    %v6170 = vpop.permute.xlu0 %6169
    %6171 = vrot.lane.b32.xlu0 %v6028, 32
    %v6172 = vpop.permute.xlu0 %6171
    %6173 = vrot.lane.b32.xlu0 %v6030, 32
    %v6174 = vpop.permute.xlu0 %6173
    %6175 = vrot.lane.b32.xlu0 %v6033, 32
    %v6176 = vpop.permute.xlu0 %6175
    %6177 = vrot.lane.b32.xlu0 %v6035, 32
    %v6178 = vpop.permute.xlu0 %6177
    %6179 = vrot.lane.b32.xlu0 %v6038, 32
    %v6180 = vpop.permute.xlu0 %6179
    %6181 = vrot.lane.b32.xlu0 %v6040, 32
    %v6182 = vpop.permute.xlu0 %6181
    %6183 = vrot.lane.b32.xlu0 %v6043, 32
    %v6184 = vpop.permute.xlu0 %6183
    %6185 = vrot.lane.b32.xlu0 %v6045, 32
    %v6186 = vpop.permute.xlu0 %6185
    %6187 = vrot.lane.b32.xlu0 %v6048, 32
    %v6188 = vpop.permute.xlu0 %6187
    %6189 = vrot.lane.b32.xlu0 %v6050, 32
    %v6190 = vpop.permute.xlu0 %6189
    %6191 = vrot.lane.b32.xlu0 %v6053, 32
    %v6192 = vpop.permute.xlu0 %6191
    %6193 = vrot.lane.b32.xlu0 %v6055, 32
    %v6194 = vpop.permute.xlu0 %6193
    %6195 = vrot.lane.b32.xlu0 %v6058, 32
    %v6196 = vpop.permute.xlu0 %6195
    %6197 = vrot.lane.b32.xlu0 %v6060, 32
    %v6198 = vpop.permute.xlu0 %6197
    %6199 = vrot.lane.b32.xlu0 %v6063, 32
    %v6200 = vpop.permute.xlu0 %6199
    %6201 = vrot.lane.b32.xlu0 %v6065, 32
    %v6202 = vpop.permute.xlu0 %6201
    %6203 = vrot.lane.b32.xlu0 %v6068, 32
    %v6204 = vpop.permute.xlu0 %6203
    %6205 = vrot.lane.b32.xlu0 %v6070, 32
    %v6206 = vpop.permute.xlu0 %6205
    %6207 = vrot.lane.b32.xlu0 %v6073, 32
    %v6208 = vpop.permute.xlu0 %6207
    %6209 = vrot.lane.b32.xlu0 %v6075, 32
    %v6210 = vpop.permute.xlu0 %6209
    %6211 = vrot.lane.b32.xlu0 %v6078, 32
    %v6212 = vpop.permute.xlu0 %6211
    %6213 = vrot.lane.b32.xlu0 %v6080, 32
    %v6214 = vpop.permute.xlu0 %6213
    %6215 = vrot.lane.b32.xlu0 %v6083, 32
    %v6216 = vpop.permute.xlu0 %6215
    %6217 = vrot.lane.b32.xlu0 %v6085, 32
    %v6218 = vpop.permute.xlu0 %6217
    %6219 = vrot.lane.b32.xlu0 %v6088, 32
    %v6220 = vpop.permute.xlu0 %6219
    %6221 = vrot.lane.b32.xlu0 %v6090, 32
    %v6222 = vpop.permute.xlu0 %6221
    %6223 = vrot.lane.b32.xlu0 %v6093, 32
    %v6224 = vpop.permute.xlu0 %6223
    %6225 = vrot.lane.b32.xlu0 %v6095, 32
    %v6226 = vpop.permute.xlu0 %6225
    %6227 = vrot.lane.b32.xlu0 %v6098, 32
    %v6228 = vpop.permute.xlu0 %6227
    %6229 = vrot.lane.b32.xlu0 %v6100, 32
    %v6230 = vpop.permute.xlu0 %6229
    %6231 = vrot.lane.b32.xlu0 %v6103, 32
    %v6232 = vpop.permute.xlu0 %6231
    %6233 = vrot.lane.b32.xlu0 %v6105, 32
    %v6234 = vpop.permute.xlu0 %6233
    %6235 = vrot.lane.b32.xlu0 %v6108, 32
    %v6236 = vpop.permute.xlu0 %6235
    %6237 = vrot.lane.b32.xlu0 %v6110, 32
    %v6238 = vpop.permute.xlu0 %6237
    %v6303 = vrot.slane %v5747, 2
    %v6304 = vrot.slane %v5748, 2
    %v6305 = vsel %vm591, %v6303, %v6304
    %v6306 = vrot.slane %v5749, 2
    %v6307 = vsel %vm591, %v6304, %v6306
    %v6308 = vrot.slane %v5750, 2
    %v6309 = vrot.slane %v5751, 2
    %v6310 = vsel %vm591, %v6308, %v6309
    %v6311 = vrot.slane %v5752, 2
    %v6312 = vsel %vm591, %v6309, %v6311
    %v6313 = vrot.slane %v5753, 2
    %v6314 = vrot.slane %v5754, 2
    %v6315 = vsel %vm591, %v6313, %v6314
    %v6316 = vrot.slane %v5755, 2
    %v6317 = vsel %vm591, %v6314, %v6316
    %v6318 = vrot.slane %v5756, 2
    %v6319 = vrot.slane %v5757, 2
    %v6320 = vsel %vm591, %v6318, %v6319
    %v6321 = vrot.slane %v5758, 2
    %v6322 = vsel %vm591, %v6319, %v6321
    %v6323 = vrot.slane %v5759, 2
    %v6324 = vrot.slane %v5760, 2
    %v6325 = vsel %vm591, %v6323, %v6324
    %v6326 = vrot.slane %v5761, 2
    %v6327 = vsel %vm591, %v6324, %v6326
    %v6328 = vrot.slane %v5762, 2
    %v6329 = vrot.slane %v5763, 2
    %v6330 = vsel %vm591, %v6328, %v6329
    %v6331 = vrot.slane %v5764, 2
    %v6332 = vsel %vm591, %v6329, %v6331
    %v6333 = vrot.slane %v5765, 2
    %v6334 = vrot.slane %v5766, 2
    %v6335 = vsel %vm591, %v6333, %v6334
    %v6336 = vrot.slane %v5767, 2
    %v6337 = vsel %vm591, %v6334, %v6336
    %v6338 = vrot.slane %v5768, 2
    %v6339 = vrot.slane %v5769, 2
    %v6340 = vsel %vm591, %v6338, %v6339
    %v6341 = vrot.slane %v5770, 2
    %v6342 = vsel %vm591, %v6339, %v6341
    %v6343 = vrot.slane %v5771, 2
    %v6344 = vrot.slane %v5772, 2
    %v6345 = vsel %vm591, %v6343, %v6344
    %v6346 = vrot.slane %v5773, 2
    %v6347 = vsel %vm591, %v6344, %v6346
    %v6348 = vrot.slane %v5774, 2
    %v6349 = vrot.slane %v5775, 2
    %v6350 = vsel %vm591, %v6348, %v6349
    %v6351 = vrot.slane %v5776, 2
    %v6352 = vsel %vm591, %v6349, %v6351
    %v6353 = vrot.slane %v5777, 2
    %v6354 = vrot.slane %v5778, 2
    %v6355 = vsel %vm591, %v6353, %v6354
    %v6356 = vrot.slane %v5779, 2
    %v6357 = vsel %vm591, %v6354, %v6356
    %v6358 = vrot.slane %v5780, 2
    %v6359 = vrot.slane %v5781, 2
    %v6360 = vsel %vm591, %v6358, %v6359
    %v6361 = vrot.slane %v5782, 2
    %v6362 = vsel %vm591, %v6359, %v6361
    %v6363 = vrot.slane %v5783, 2
    %v6364 = vrot.slane %v5784, 2
    %v6365 = vsel %vm591, %v6363, %v6364
    %v6366 = vrot.slane %v5785, 2
    %v6367 = vsel %vm591, %v6364, %v6366
    %v6368 = vrot.slane %v5786, 2
    %v6369 = vrot.slane %v5787, 2
    %v6370 = vsel %vm591, %v6368, %v6369
    %v6371 = vrot.slane %v5788, 2
    %v6372 = vsel %vm591, %v6369, %v6371
    %v6373 = vrot.slane %v5789, 2
    %v6374 = vrot.slane %v5790, 2
    %v6375 = vsel %vm591, %v6373, %v6374
    %v6376 = vrot.slane %v5791, 2
    %v6377 = vsel %vm591, %v6374, %v6376
    %v6378 = vrot.slane %v5792, 2
    %v6379 = vrot.slane %v5793, 2
    %v6380 = vsel %vm591, %v6378, %v6379
    %v6381 = vrot.slane %v5794, 2
    %v6382 = vsel %vm591, %v6379, %v6381
    %v6383 = vrot.slane %v5801, 2
    %v6384 = vrot.slane %v5802, 2
    %v6385 = vsel %vm591, %v6383, %v6384
    %v6386 = vrot.slane %v5803, 2
    %v6387 = vsel %vm591, %v6384, %v6386
    %v6388 = vrot.slane %v5804, 2
    %v6389 = vrot.slane %v5805, 2
    %v6390 = vsel %vm591, %v6388, %v6389
    %v6391 = vrot.slane %v5806, 2
    %v6392 = vsel %vm591, %v6389, %v6391
    %v6393 = vrot.slane %v5807, 2
    %v6394 = vrot.slane %v5808, 2
    %v6395 = vsel %vm591, %v6393, %v6394
    %v6396 = vrot.slane %v5809, 2
    %v6397 = vsel %vm591, %v6394, %v6396
    %v6398 = vrot.slane %v5810, 2
    %v6399 = vrot.slane %v5811, 2
    %v6400 = vsel %vm591, %v6398, %v6399
    %v6401 = vrot.slane %v5812, 2
    %v6402 = vsel %vm591, %v6399, %v6401
    %v6403 = vrot.slane %v5813, 2
    %v6404 = vrot.slane %v5814, 2
    %v6405 = vsel %vm591, %v6403, %v6404
    %v6406 = vrot.slane %v5815, 2
    %v6407 = vsel %vm591, %v6404, %v6406
    %v6408 = vrot.slane %v5816, 2
    %v6409 = vrot.slane %v5817, 2
    %v6410 = vsel %vm591, %v6408, %v6409
    %v6411 = vrot.slane %v5818, 2
    %v6412 = vsel %vm591, %v6409, %v6411
    %v6413 = vrot.slane %v5819, 2
    %v6414 = vrot.slane %v5820, 2
    %v6415 = vsel %vm591, %v6413, %v6414
    %v6416 = vrot.slane %v5821, 2
    %v6417 = vsel %vm591, %v6414, %v6416
    %v6418 = vrot.slane %v5822, 2
    %v6419 = vrot.slane %v5823, 2
    %v6420 = vsel %vm591, %v6418, %v6419
    %v6421 = vrot.slane %v5824, 2
    %v6422 = vsel %vm591, %v6419, %v6421
    %v6423 = vrot.slane %v5825, 2
    %v6424 = vrot.slane %v5826, 2
    %v6425 = vsel %vm591, %v6423, %v6424
    %v6426 = vrot.slane %v5827, 2
    %v6427 = vsel %vm591, %v6424, %v6426
    %v6428 = vrot.slane %v5828, 2
    %v6429 = vrot.slane %v5829, 2
    %v6430 = vsel %vm591, %v6428, %v6429
    %v6431 = vrot.slane %v5830, 2
    %v6432 = vsel %vm591, %v6429, %v6431
    %v6433 = vrot.slane %v5831, 2
    %v6434 = vrot.slane %v5832, 2
    %v6435 = vsel %vm591, %v6433, %v6434
    %v6436 = vrot.slane %v5833, 2
    %v6437 = vsel %vm591, %v6434, %v6436
    %v6438 = vrot.slane %v5834, 2
    %v6439 = vrot.slane %v5835, 2
    %v6440 = vsel %vm591, %v6438, %v6439
    %v6441 = vrot.slane %v5836, 2
    %v6442 = vsel %vm591, %v6439, %v6441
    %v6443 = vrot.slane %v5837, 2
    %v6444 = vrot.slane %v5838, 2
    %v6445 = vsel %vm591, %v6443, %v6444
    %v6446 = vrot.slane %v5839, 2
    %v6447 = vsel %vm591, %v6444, %v6446
    %v6448 = vrot.slane %v5840, 2
    %v6449 = vrot.slane %v5841, 2
    %v6450 = vsel %vm591, %v6448, %v6449
    %v6451 = vrot.slane %v5842, 2
    %v6452 = vsel %vm591, %v6449, %v6451
    %v6453 = vrot.slane %v5843, 2
    %v6454 = vrot.slane %v5844, 2
    %v6455 = vsel %vm591, %v6453, %v6454
    %v6456 = vrot.slane %v5845, 2
    %v6457 = vsel %vm591, %v6454, %v6456
    %v6458 = vrot.slane %v5846, 2
    %v6459 = vrot.slane %v5847, 2
    %v6460 = vsel %vm591, %v6458, %v6459
    %v6461 = vrot.slane %v5848, 2
    %v6462 = vsel %vm591, %v6459, %v6461
    %6463 = vrot.lane.b32.xlu0 %v6305, 64
    %v6464 = vpop.permute.xlu0 %6463
    %6465 = vrot.lane.b32.xlu0 %v6307, 64
    %v6466 = vpop.permute.xlu0 %6465
    %6467 = vrot.lane.b32.xlu0 %v6310, 64
    %v6468 = vpop.permute.xlu0 %6467
    %6469 = vrot.lane.b32.xlu0 %v6312, 64
    %v6470 = vpop.permute.xlu0 %6469
    %6471 = vrot.lane.b32.xlu0 %v6315, 64
    %v6472 = vpop.permute.xlu0 %6471
    %6473 = vrot.lane.b32.xlu0 %v6317, 64
    %v6474 = vpop.permute.xlu0 %6473
    %6475 = vrot.lane.b32.xlu0 %v6320, 64
    %v6476 = vpop.permute.xlu0 %6475
    %6477 = vrot.lane.b32.xlu0 %v6322, 64
    %v6478 = vpop.permute.xlu0 %6477
    %6479 = vrot.lane.b32.xlu0 %v6325, 64
    %v6480 = vpop.permute.xlu0 %6479
    %6481 = vrot.lane.b32.xlu0 %v6327, 64
    %v6482 = vpop.permute.xlu0 %6481
    %6483 = vrot.lane.b32.xlu0 %v6330, 64
    %v6484 = vpop.permute.xlu0 %6483
    %6485 = vrot.lane.b32.xlu0 %v6332, 64
    %v6486 = vpop.permute.xlu0 %6485
    %6487 = vrot.lane.b32.xlu0 %v6335, 64
    %v6488 = vpop.permute.xlu0 %6487
    %6489 = vrot.lane.b32.xlu0 %v6337, 64
    %v6490 = vpop.permute.xlu0 %6489
    %6491 = vrot.lane.b32.xlu0 %v6340, 64
    %v6492 = vpop.permute.xlu0 %6491
    %6493 = vrot.lane.b32.xlu0 %v6342, 64
    %v6494 = vpop.permute.xlu0 %6493
    %6495 = vrot.lane.b32.xlu0 %v6345, 64
    %v6496 = vpop.permute.xlu0 %6495
    %6497 = vrot.lane.b32.xlu0 %v6347, 64
    %v6498 = vpop.permute.xlu0 %6497
    %6499 = vrot.lane.b32.xlu0 %v6350, 64
    %v6500 = vpop.permute.xlu0 %6499
    %6501 = vrot.lane.b32.xlu0 %v6352, 64
    %v6502 = vpop.permute.xlu0 %6501
    %6503 = vrot.lane.b32.xlu0 %v6355, 64
    %v6504 = vpop.permute.xlu0 %6503
    %6505 = vrot.lane.b32.xlu0 %v6357, 64
    %v6506 = vpop.permute.xlu0 %6505
    %6507 = vrot.lane.b32.xlu0 %v6360, 64
    %v6508 = vpop.permute.xlu0 %6507
    %6509 = vrot.lane.b32.xlu0 %v6362, 64
    %v6510 = vpop.permute.xlu0 %6509
    %6511 = vrot.lane.b32.xlu0 %v6365, 64
    %v6512 = vpop.permute.xlu0 %6511
    %6513 = vrot.lane.b32.xlu0 %v6367, 64
    %v6514 = vpop.permute.xlu0 %6513
    %6515 = vrot.lane.b32.xlu0 %v6370, 64
    %v6516 = vpop.permute.xlu0 %6515
    %6517 = vrot.lane.b32.xlu0 %v6372, 64
    %v6518 = vpop.permute.xlu0 %6517
    %6519 = vrot.lane.b32.xlu0 %v6375, 64
    %v6520 = vpop.permute.xlu0 %6519
    %6521 = vrot.lane.b32.xlu0 %v6377, 64
    %v6522 = vpop.permute.xlu0 %6521
    %6523 = vrot.lane.b32.xlu0 %v6380, 64
    %v6524 = vpop.permute.xlu0 %6523
    %6525 = vrot.lane.b32.xlu0 %v6382, 64
    %v6526 = vpop.permute.xlu0 %6525
    %6527 = vrot.lane.b32.xlu0 %v6385, 64
    %v6528 = vpop.permute.xlu0 %6527
    %6529 = vrot.lane.b32.xlu0 %v6387, 64
    %v6530 = vpop.permute.xlu0 %6529
    %6531 = vrot.lane.b32.xlu0 %v6390, 64
    %v6532 = vpop.permute.xlu0 %6531
    %6533 = vrot.lane.b32.xlu0 %v6392, 64
    %v6534 = vpop.permute.xlu0 %6533
    %6535 = vrot.lane.b32.xlu0 %v6395, 64
    %v6536 = vpop.permute.xlu0 %6535
    %6537 = vrot.lane.b32.xlu0 %v6397, 64
    %v6538 = vpop.permute.xlu0 %6537
    %6539 = vrot.lane.b32.xlu0 %v6400, 64
    %v6540 = vpop.permute.xlu0 %6539
    %6541 = vrot.lane.b32.xlu0 %v6402, 64
    %v6542 = vpop.permute.xlu0 %6541
    %6543 = vrot.lane.b32.xlu0 %v6405, 64
    %v6544 = vpop.permute.xlu0 %6543
    %6545 = vrot.lane.b32.xlu0 %v6407, 64
    %v6546 = vpop.permute.xlu0 %6545
    %6547 = vrot.lane.b32.xlu0 %v6410, 64
    %v6548 = vpop.permute.xlu0 %6547
    %6549 = vrot.lane.b32.xlu0 %v6412, 64
    %v6550 = vpop.permute.xlu0 %6549
    %6551 = vrot.lane.b32.xlu0 %v6415, 64
    %v6552 = vpop.permute.xlu0 %6551
    %6553 = vrot.lane.b32.xlu0 %v6417, 64
    %v6554 = vpop.permute.xlu0 %6553
    %6555 = vrot.lane.b32.xlu0 %v6420, 64
    %v6556 = vpop.permute.xlu0 %6555
    %6557 = vrot.lane.b32.xlu0 %v6422, 64
    %v6558 = vpop.permute.xlu0 %6557
    %6559 = vrot.lane.b32.xlu0 %v6425, 64
    %v6560 = vpop.permute.xlu0 %6559
    %6561 = vrot.lane.b32.xlu0 %v6427, 64
    %v6562 = vpop.permute.xlu0 %6561
    %6563 = vrot.lane.b32.xlu0 %v6430, 64
    %v6564 = vpop.permute.xlu0 %6563
    %6565 = vrot.lane.b32.xlu0 %v6432, 64
    %v6566 = vpop.permute.xlu0 %6565
    %6567 = vrot.lane.b32.xlu0 %v6435, 64
    %v6568 = vpop.permute.xlu0 %6567
    %6569 = vrot.lane.b32.xlu0 %v6437, 64
    %v6570 = vpop.permute.xlu0 %6569
    %6571 = vrot.lane.b32.xlu0 %v6440, 64
    %v6572 = vpop.permute.xlu0 %6571
    %6573 = vrot.lane.b32.xlu0 %v6442, 64
    %v6574 = vpop.permute.xlu0 %6573
    %6575 = vrot.lane.b32.xlu0 %v6445, 64
    %v6576 = vpop.permute.xlu0 %6575
    %6577 = vrot.lane.b32.xlu0 %v6447, 64
    %v6578 = vpop.permute.xlu0 %6577
    %6579 = vrot.lane.b32.xlu0 %v6450, 64
    %v6580 = vpop.permute.xlu0 %6579
    %6581 = vrot.lane.b32.xlu0 %v6452, 64
    %v6582 = vpop.permute.xlu0 %6581
    %6583 = vrot.lane.b32.xlu0 %v6455, 64
    %v6584 = vpop.permute.xlu0 %6583
    %6585 = vrot.lane.b32.xlu0 %v6457, 64
    %v6586 = vpop.permute.xlu0 %6585
    %6587 = vrot.lane.b32.xlu0 %v6460, 64
    %v6588 = vpop.permute.xlu0 %6587
    %6589 = vrot.lane.b32.xlu0 %v6462, 64
    %v6590 = vpop.permute.xlu0 %6589
    %6659 = vrot.lane.b32.xlu0 %v5750, 96
    %v6660 = vpop.permute.xlu0 %6659
    %6661 = vrot.lane.b32.xlu0 %v5751, 96
    %v6662 = vpop.permute.xlu0 %6661
    %6663 = vrot.lane.b32.xlu0 %v5753, 96
    %v6664 = vpop.permute.xlu0 %6663
    %6665 = vrot.lane.b32.xlu0 %v5754, 96
    %v6666 = vpop.permute.xlu0 %6665
    %6667 = vrot.lane.b32.xlu0 %v5756, 96
    %v6668 = vpop.permute.xlu0 %6667
    %6669 = vrot.lane.b32.xlu0 %v5757, 96
    %v6670 = vpop.permute.xlu0 %6669
    %6671 = vrot.lane.b32.xlu0 %v5759, 96
    %v6672 = vpop.permute.xlu0 %6671
    %6673 = vrot.lane.b32.xlu0 %v5760, 96
    %v6674 = vpop.permute.xlu0 %6673
    %6675 = vrot.lane.b32.xlu0 %v5762, 96
    %v6676 = vpop.permute.xlu0 %6675
    %6677 = vrot.lane.b32.xlu0 %v5763, 96
    %v6678 = vpop.permute.xlu0 %6677
    %6679 = vrot.lane.b32.xlu0 %v5765, 96
    %v6680 = vpop.permute.xlu0 %6679
    %6681 = vrot.lane.b32.xlu0 %v5766, 96
    %v6682 = vpop.permute.xlu0 %6681
    %6683 = vrot.lane.b32.xlu0 %v5768, 96
    %v6684 = vpop.permute.xlu0 %6683
    %6685 = vrot.lane.b32.xlu0 %v5769, 96
    %v6686 = vpop.permute.xlu0 %6685
    %6687 = vrot.lane.b32.xlu0 %v5771, 96
    %v6688 = vpop.permute.xlu0 %6687
    %6689 = vrot.lane.b32.xlu0 %v5772, 96
    %v6690 = vpop.permute.xlu0 %6689
    %6691 = vrot.lane.b32.xlu0 %v5774, 96
    %v6692 = vpop.permute.xlu0 %6691
    %6693 = vrot.lane.b32.xlu0 %v5775, 96
    %v6694 = vpop.permute.xlu0 %6693
    %6695 = vrot.lane.b32.xlu0 %v5777, 96
    %v6696 = vpop.permute.xlu0 %6695
    %6697 = vrot.lane.b32.xlu0 %v5778, 96
    %v6698 = vpop.permute.xlu0 %6697
    %6699 = vrot.lane.b32.xlu0 %v5780, 96
    %v6700 = vpop.permute.xlu0 %6699
    %6701 = vrot.lane.b32.xlu0 %v5781, 96
    %v6702 = vpop.permute.xlu0 %6701
    %6703 = vrot.lane.b32.xlu0 %v5783, 96
    %v6704 = vpop.permute.xlu0 %6703
    %6705 = vrot.lane.b32.xlu0 %v5784, 96
    %v6706 = vpop.permute.xlu0 %6705
    %6707 = vrot.lane.b32.xlu0 %v5786, 96
    %v6708 = vpop.permute.xlu0 %6707
    %6709 = vrot.lane.b32.xlu0 %v5787, 96
    %v6710 = vpop.permute.xlu0 %6709
    %6711 = vrot.lane.b32.xlu0 %v5789, 96
    %v6712 = vpop.permute.xlu0 %6711
    %6713 = vrot.lane.b32.xlu0 %v5790, 96
    %v6714 = vpop.permute.xlu0 %6713
    %6715 = vrot.lane.b32.xlu0 %v5792, 96
    %v6716 = vpop.permute.xlu0 %6715
    %6717 = vrot.lane.b32.xlu0 %v5793, 96
    %v6718 = vpop.permute.xlu0 %6717
    %6719 = vrot.lane.b32.xlu0 %v5795, 96
    %v6720 = vpop.permute.xlu0 %6719
    %6721 = vrot.lane.b32.xlu0 %v5796, 96
    %v6722 = vpop.permute.xlu0 %6721
    %6723 = vrot.lane.b32.xlu0 %v5804, 96
    %v6724 = vpop.permute.xlu0 %6723
    %6725 = vrot.lane.b32.xlu0 %v5805, 96
    %v6726 = vpop.permute.xlu0 %6725
    %6727 = vrot.lane.b32.xlu0 %v5807, 96
    %v6728 = vpop.permute.xlu0 %6727
    %6729 = vrot.lane.b32.xlu0 %v5808, 96
    %v6730 = vpop.permute.xlu0 %6729
    %6731 = vrot.lane.b32.xlu0 %v5810, 96
    %v6732 = vpop.permute.xlu0 %6731
    %6733 = vrot.lane.b32.xlu0 %v5811, 96
    %v6734 = vpop.permute.xlu0 %6733
    %6735 = vrot.lane.b32.xlu0 %v5813, 96
    %v6736 = vpop.permute.xlu0 %6735
    %6737 = vrot.lane.b32.xlu0 %v5814, 96
    %v6738 = vpop.permute.xlu0 %6737
    %6739 = vrot.lane.b32.xlu0 %v5816, 96
    %v6740 = vpop.permute.xlu0 %6739
    %6741 = vrot.lane.b32.xlu0 %v5817, 96
    %v6742 = vpop.permute.xlu0 %6741
    %6743 = vrot.lane.b32.xlu0 %v5819, 96
    %v6744 = vpop.permute.xlu0 %6743
    %6745 = vrot.lane.b32.xlu0 %v5820, 96
    %v6746 = vpop.permute.xlu0 %6745
    %6747 = vrot.lane.b32.xlu0 %v5822, 96
    %v6748 = vpop.permute.xlu0 %6747
    %6749 = vrot.lane.b32.xlu0 %v5823, 96
    %v6750 = vpop.permute.xlu0 %6749
    %6751 = vrot.lane.b32.xlu0 %v5825, 96
    %v6752 = vpop.permute.xlu0 %6751
    %6753 = vrot.lane.b32.xlu0 %v5826, 96
    %v6754 = vpop.permute.xlu0 %6753
    %6755 = vrot.lane.b32.xlu0 %v5828, 96
    %v6756 = vpop.permute.xlu0 %6755
    %6757 = vrot.lane.b32.xlu0 %v5829, 96
    %v6758 = vpop.permute.xlu0 %6757
    %6759 = vrot.lane.b32.xlu0 %v5831, 96
    %v6760 = vpop.permute.xlu0 %6759
    %6761 = vrot.lane.b32.xlu0 %v5832, 96
    %v6762 = vpop.permute.xlu0 %6761
    %6763 = vrot.lane.b32.xlu0 %v5834, 96
    %v6764 = vpop.permute.xlu0 %6763
    %6765 = vrot.lane.b32.xlu0 %v5835, 96
    %v6766 = vpop.permute.xlu0 %6765
    %6767 = vrot.lane.b32.xlu0 %v5837, 96
    %v6768 = vpop.permute.xlu0 %6767
    %6769 = vrot.lane.b32.xlu0 %v5838, 96
    %v6770 = vpop.permute.xlu0 %6769
    %6771 = vrot.lane.b32.xlu0 %v5840, 96
    %v6772 = vpop.permute.xlu0 %6771
    %6773 = vrot.lane.b32.xlu0 %v5841, 96
    %v6774 = vpop.permute.xlu0 %6773
    %6775 = vrot.lane.b32.xlu0 %v5843, 96
    %v6776 = vpop.permute.xlu0 %6775
    %6777 = vrot.lane.b32.xlu0 %v5844, 96
    %v6778 = vpop.permute.xlu0 %6777
    %6779 = vrot.lane.b32.xlu0 %v5846, 96
    %v6780 = vpop.permute.xlu0 %6779
    %6781 = vrot.lane.b32.xlu0 %v5847, 96
    %v6782 = vpop.permute.xlu0 %6781
    %6783 = vrot.lane.b32.xlu0 %v5849, 96
    %v6784 = vpop.permute.xlu0 %6783
    %6785 = vrot.lane.b32.xlu0 %v5850, 96
    %v6786 = vpop.permute.xlu0 %6785
    %v6853 = vrot.slane %v5795, 1
    %v6854 = vrot.slane %v5796, 1
    %v6855 = vsel %vm238, %v6853, %v6854
    %v6856 = vrot.slane %v5797, 1
    %v6857 = vsel %vm238, %v6854, %v6856
    %v6858 = vrot.slane %v5849, 1
    %v6859 = vrot.slane %v5850, 1
    %v6860 = vsel %vm238, %v6858, %v6859
    %v6861 = vrot.slane %v5851, 1
    %v6862 = vsel %vm238, %v6859, %v6861
    %v6927 = vrot.slane %v5795, 2
    %v6928 = vrot.slane %v5796, 2
    %v6929 = vsel %vm591, %v6927, %v6928
    %v6930 = vrot.slane %v5797, 2
    %v6931 = vsel %vm591, %v6928, %v6930
    %v6932 = vrot.slane %v5849, 2
    %v6933 = vrot.slane %v5850, 2
    %v6934 = vsel %vm591, %v6932, %v6933
    %v6935 = vrot.slane %v5851, 2
    %v6936 = vsel %vm591, %v6933, %v6935
    %6937 = vrot.lane.b32.xlu0 %v6310, 32
    %v6938 = vpop.permute.xlu0 %6937
    %6939 = vrot.lane.b32.xlu0 %v6312, 32
    %v6940 = vpop.permute.xlu0 %6939
    %6941 = vrot.lane.b32.xlu0 %v6315, 32
    %v6942 = vpop.permute.xlu0 %6941
    %6943 = vrot.lane.b32.xlu0 %v6317, 32
    %v6944 = vpop.permute.xlu0 %6943
    %6945 = vrot.lane.b32.xlu0 %v6320, 32
    %v6946 = vpop.permute.xlu0 %6945
    %6947 = vrot.lane.b32.xlu0 %v6322, 32
    %v6948 = vpop.permute.xlu0 %6947
    %6949 = vrot.lane.b32.xlu0 %v6325, 32
    %v6950 = vpop.permute.xlu0 %6949
    %6951 = vrot.lane.b32.xlu0 %v6327, 32
    %v6952 = vpop.permute.xlu0 %6951
    %6953 = vrot.lane.b32.xlu0 %v6330, 32
    %v6954 = vpop.permute.xlu0 %6953
    %6955 = vrot.lane.b32.xlu0 %v6332, 32
    %v6956 = vpop.permute.xlu0 %6955
    %6957 = vrot.lane.b32.xlu0 %v6335, 32
    %v6958 = vpop.permute.xlu0 %6957
    %6959 = vrot.lane.b32.xlu0 %v6337, 32
    %v6960 = vpop.permute.xlu0 %6959
    %6961 = vrot.lane.b32.xlu0 %v6340, 32
    %v6962 = vpop.permute.xlu0 %6961
    %6963 = vrot.lane.b32.xlu0 %v6342, 32
    %v6964 = vpop.permute.xlu0 %6963
    %6965 = vrot.lane.b32.xlu0 %v6345, 32
    %v6966 = vpop.permute.xlu0 %6965
    %6967 = vrot.lane.b32.xlu0 %v6347, 32
    %v6968 = vpop.permute.xlu0 %6967
    %6969 = vrot.lane.b32.xlu0 %v6350, 32
    %v6970 = vpop.permute.xlu0 %6969
    %6971 = vrot.lane.b32.xlu0 %v6352, 32
    %v6972 = vpop.permute.xlu0 %6971
    %6973 = vrot.lane.b32.xlu0 %v6355, 32
    %v6974 = vpop.permute.xlu0 %6973
    %6975 = vrot.lane.b32.xlu0 %v6357, 32
    %v6976 = vpop.permute.xlu0 %6975
    %6977 = vrot.lane.b32.xlu0 %v6360, 32
    %v6978 = vpop.permute.xlu0 %6977
    %6979 = vrot.lane.b32.xlu0 %v6362, 32
    %v6980 = vpop.permute.xlu0 %6979
    %6981 = vrot.lane.b32.xlu0 %v6365, 32
    %v6982 = vpop.permute.xlu0 %6981
    %6983 = vrot.lane.b32.xlu0 %v6367, 32
    %v6984 = vpop.permute.xlu0 %6983
    %6985 = vrot.lane.b32.xlu0 %v6370, 32
    %v6986 = vpop.permute.xlu0 %6985
    %6987 = vrot.lane.b32.xlu0 %v6372, 32
    %v6988 = vpop.permute.xlu0 %6987
    %6989 = vrot.lane.b32.xlu0 %v6375, 32
    %v6990 = vpop.permute.xlu0 %6989
    %6991 = vrot.lane.b32.xlu0 %v6377, 32
    %v6992 = vpop.permute.xlu0 %6991
    %6993 = vrot.lane.b32.xlu0 %v6380, 32
    %v6994 = vpop.permute.xlu0 %6993
    %6995 = vrot.lane.b32.xlu0 %v6382, 32
    %v6996 = vpop.permute.xlu0 %6995
    %6997 = vrot.lane.b32.xlu0 %v6929, 32
    %v6998 = vpop.permute.xlu0 %6997
    %6999 = vrot.lane.b32.xlu0 %v6931, 32
    %v7000 = vpop.permute.xlu0 %6999
    %7001 = vrot.lane.b32.xlu0 %v6390, 32
    %v7002 = vpop.permute.xlu0 %7001
    %7003 = vrot.lane.b32.xlu0 %v6392, 32
    %v7004 = vpop.permute.xlu0 %7003
    %7005 = vrot.lane.b32.xlu0 %v6395, 32
    %v7006 = vpop.permute.xlu0 %7005
    %7007 = vrot.lane.b32.xlu0 %v6397, 32
    %v7008 = vpop.permute.xlu0 %7007
    %7009 = vrot.lane.b32.xlu0 %v6400, 32
    %v7010 = vpop.permute.xlu0 %7009
    %7011 = vrot.lane.b32.xlu0 %v6402, 32
    %v7012 = vpop.permute.xlu0 %7011
    %7013 = vrot.lane.b32.xlu0 %v6405, 32
    %v7014 = vpop.permute.xlu0 %7013
    %7015 = vrot.lane.b32.xlu0 %v6407, 32
    %v7016 = vpop.permute.xlu0 %7015
    %7017 = vrot.lane.b32.xlu0 %v6410, 32
    %v7018 = vpop.permute.xlu0 %7017
    %7019 = vrot.lane.b32.xlu0 %v6412, 32
    %v7020 = vpop.permute.xlu0 %7019
    %7021 = vrot.lane.b32.xlu0 %v6415, 32
    %v7022 = vpop.permute.xlu0 %7021
    %7023 = vrot.lane.b32.xlu0 %v6417, 32
    %v7024 = vpop.permute.xlu0 %7023
    %7025 = vrot.lane.b32.xlu0 %v6420, 32
    %v7026 = vpop.permute.xlu0 %7025
    %7027 = vrot.lane.b32.xlu0 %v6422, 32
    %v7028 = vpop.permute.xlu0 %7027
    %7029 = vrot.lane.b32.xlu0 %v6425, 32
    %v7030 = vpop.permute.xlu0 %7029
    %7031 = vrot.lane.b32.xlu0 %v6427, 32
    %v7032 = vpop.permute.xlu0 %7031
    %7033 = vrot.lane.b32.xlu0 %v6430, 32
    %v7034 = vpop.permute.xlu0 %7033
    %7035 = vrot.lane.b32.xlu0 %v6432, 32
    %v7036 = vpop.permute.xlu0 %7035
    %7037 = vrot.lane.b32.xlu0 %v6435, 32
    %v7038 = vpop.permute.xlu0 %7037
    %7039 = vrot.lane.b32.xlu0 %v6437, 32
    %v7040 = vpop.permute.xlu0 %7039
    %7041 = vrot.lane.b32.xlu0 %v6440, 32
    %v7042 = vpop.permute.xlu0 %7041
    %7043 = vrot.lane.b32.xlu0 %v6442, 32
    %v7044 = vpop.permute.xlu0 %7043
    %7045 = vrot.lane.b32.xlu0 %v6445, 32
    %v7046 = vpop.permute.xlu0 %7045
    %7047 = vrot.lane.b32.xlu0 %v6447, 32
    %v7048 = vpop.permute.xlu0 %7047
    %7049 = vrot.lane.b32.xlu0 %v6450, 32
    %v7050 = vpop.permute.xlu0 %7049
    %7051 = vrot.lane.b32.xlu0 %v6452, 32
    %v7052 = vpop.permute.xlu0 %7051
    %7053 = vrot.lane.b32.xlu0 %v6455, 32
    %v7054 = vpop.permute.xlu0 %7053
    %7055 = vrot.lane.b32.xlu0 %v6457, 32
    %v7056 = vpop.permute.xlu0 %7055
    %7057 = vrot.lane.b32.xlu0 %v6460, 32
    %v7058 = vpop.permute.xlu0 %7057
    %7059 = vrot.lane.b32.xlu0 %v6462, 32
    %v7060 = vpop.permute.xlu0 %7059
    %7061 = vrot.lane.b32.xlu0 %v6934, 32
    %v7062 = vpop.permute.xlu0 %7061
    %7063 = vrot.lane.b32.xlu0 %v6936, 32
    %v7064 = vpop.permute.xlu0 %7063
    %7133 = vrot.lane.b32.xlu0 %v5753, 64
    %v7134 = vpop.permute.xlu0 %7133
    %7135 = vrot.lane.b32.xlu0 %v5754, 64
    %v7136 = vpop.permute.xlu0 %7135
    %7137 = vrot.lane.b32.xlu0 %v5756, 64
    %v7138 = vpop.permute.xlu0 %7137
    %7139 = vrot.lane.b32.xlu0 %v5757, 64
    %v7140 = vpop.permute.xlu0 %7139
    %7141 = vrot.lane.b32.xlu0 %v5759, 64
    %v7142 = vpop.permute.xlu0 %7141
    %7143 = vrot.lane.b32.xlu0 %v5760, 64
    %v7144 = vpop.permute.xlu0 %7143
    %7145 = vrot.lane.b32.xlu0 %v5762, 64
    %v7146 = vpop.permute.xlu0 %7145
    %7147 = vrot.lane.b32.xlu0 %v5763, 64
    %v7148 = vpop.permute.xlu0 %7147
    %7149 = vrot.lane.b32.xlu0 %v5765, 64
    %v7150 = vpop.permute.xlu0 %7149
    %7151 = vrot.lane.b32.xlu0 %v5766, 64
    %v7152 = vpop.permute.xlu0 %7151
    %7153 = vrot.lane.b32.xlu0 %v5768, 64
    %v7154 = vpop.permute.xlu0 %7153
    %7155 = vrot.lane.b32.xlu0 %v5769, 64
    %v7156 = vpop.permute.xlu0 %7155
    %7157 = vrot.lane.b32.xlu0 %v5771, 64
    %v7158 = vpop.permute.xlu0 %7157
    %7159 = vrot.lane.b32.xlu0 %v5772, 64
    %v7160 = vpop.permute.xlu0 %7159
    %7161 = vrot.lane.b32.xlu0 %v5774, 64
    %v7162 = vpop.permute.xlu0 %7161
    %7163 = vrot.lane.b32.xlu0 %v5775, 64
    %v7164 = vpop.permute.xlu0 %7163
    %7165 = vrot.lane.b32.xlu0 %v5777, 64
    %v7166 = vpop.permute.xlu0 %7165
    %7167 = vrot.lane.b32.xlu0 %v5778, 64
    %v7168 = vpop.permute.xlu0 %7167
    %7169 = vrot.lane.b32.xlu0 %v5780, 64
    %v7170 = vpop.permute.xlu0 %7169
    %7171 = vrot.lane.b32.xlu0 %v5781, 64
    %v7172 = vpop.permute.xlu0 %7171
    %7173 = vrot.lane.b32.xlu0 %v5783, 64
    %v7174 = vpop.permute.xlu0 %7173
    %7175 = vrot.lane.b32.xlu0 %v5784, 64
    %v7176 = vpop.permute.xlu0 %7175
    %7177 = vrot.lane.b32.xlu0 %v5786, 64
    %v7178 = vpop.permute.xlu0 %7177
    %7179 = vrot.lane.b32.xlu0 %v5787, 64
    %v7180 = vpop.permute.xlu0 %7179
    %7181 = vrot.lane.b32.xlu0 %v5789, 64
    %v7182 = vpop.permute.xlu0 %7181
    %7183 = vrot.lane.b32.xlu0 %v5790, 64
    %v7184 = vpop.permute.xlu0 %7183
    %7185 = vrot.lane.b32.xlu0 %v5792, 64
    %v7186 = vpop.permute.xlu0 %7185
    %7187 = vrot.lane.b32.xlu0 %v5793, 64
    %v7188 = vpop.permute.xlu0 %7187
    %7189 = vrot.lane.b32.xlu0 %v5795, 64
    %v7190 = vpop.permute.xlu0 %7189
    %7191 = vrot.lane.b32.xlu0 %v5796, 64
    %v7192 = vpop.permute.xlu0 %7191
    %7193 = vrot.lane.b32.xlu0 %v5798, 64
    %v7194 = vpop.permute.xlu0 %7193
    %7195 = vrot.lane.b32.xlu0 %v5799, 64
    %v7196 = vpop.permute.xlu0 %7195
    %7197 = vrot.lane.b32.xlu0 %v5807, 64
    %v7198 = vpop.permute.xlu0 %7197
    %7199 = vrot.lane.b32.xlu0 %v5808, 64
    %v7200 = vpop.permute.xlu0 %7199
    %7201 = vrot.lane.b32.xlu0 %v5810, 64
    %v7202 = vpop.permute.xlu0 %7201
    %7203 = vrot.lane.b32.xlu0 %v5811, 64
    %v7204 = vpop.permute.xlu0 %7203
    %7205 = vrot.lane.b32.xlu0 %v5813, 64
    %v7206 = vpop.permute.xlu0 %7205
    %7207 = vrot.lane.b32.xlu0 %v5814, 64
    %v7208 = vpop.permute.xlu0 %7207
    %7209 = vrot.lane.b32.xlu0 %v5816, 64
    %v7210 = vpop.permute.xlu0 %7209
    %7211 = vrot.lane.b32.xlu0 %v5817, 64
    %v7212 = vpop.permute.xlu0 %7211
    %7213 = vrot.lane.b32.xlu0 %v5819, 64
    %v7214 = vpop.permute.xlu0 %7213
    %7215 = vrot.lane.b32.xlu0 %v5820, 64
    %v7216 = vpop.permute.xlu0 %7215
    %7217 = vrot.lane.b32.xlu0 %v5822, 64
    %v7218 = vpop.permute.xlu0 %7217
    %7219 = vrot.lane.b32.xlu0 %v5823, 64
    %v7220 = vpop.permute.xlu0 %7219
    %7221 = vrot.lane.b32.xlu0 %v5825, 64
    %v7222 = vpop.permute.xlu0 %7221
    %7223 = vrot.lane.b32.xlu0 %v5826, 64
    %v7224 = vpop.permute.xlu0 %7223
    %7225 = vrot.lane.b32.xlu0 %v5828, 64
    %v7226 = vpop.permute.xlu0 %7225
    %7227 = vrot.lane.b32.xlu0 %v5829, 64
    %v7228 = vpop.permute.xlu0 %7227
    %7229 = vrot.lane.b32.xlu0 %v5831, 64
    %v7230 = vpop.permute.xlu0 %7229
    %7231 = vrot.lane.b32.xlu0 %v5832, 64
    %v7232 = vpop.permute.xlu0 %7231
    %7233 = vrot.lane.b32.xlu0 %v5834, 64
    %v7234 = vpop.permute.xlu0 %7233
    %7235 = vrot.lane.b32.xlu0 %v5835, 64
    %v7236 = vpop.permute.xlu0 %7235
    %7237 = vrot.lane.b32.xlu0 %v5837, 64
    %v7238 = vpop.permute.xlu0 %7237
    %7239 = vrot.lane.b32.xlu0 %v5838, 64
    %v7240 = vpop.permute.xlu0 %7239
    %7241 = vrot.lane.b32.xlu0 %v5840, 64
    %v7242 = vpop.permute.xlu0 %7241
    %7243 = vrot.lane.b32.xlu0 %v5841, 64
    %v7244 = vpop.permute.xlu0 %7243
    %7245 = vrot.lane.b32.xlu0 %v5843, 64
    %v7246 = vpop.permute.xlu0 %7245
    %7247 = vrot.lane.b32.xlu0 %v5844, 64
    %v7248 = vpop.permute.xlu0 %7247
    %7249 = vrot.lane.b32.xlu0 %v5846, 64
    %v7250 = vpop.permute.xlu0 %7249
    %7251 = vrot.lane.b32.xlu0 %v5847, 64
    %v7252 = vpop.permute.xlu0 %7251
    %7253 = vrot.lane.b32.xlu0 %v5849, 64
    %v7254 = vpop.permute.xlu0 %7253
    %7255 = vrot.lane.b32.xlu0 %v5850, 64
    %v7256 = vpop.permute.xlu0 %7255
    %7257 = vrot.lane.b32.xlu0 %v5852, 64
    %v7258 = vpop.permute.xlu0 %7257
    %7259 = vrot.lane.b32.xlu0 %v5853, 64
    %v7260 = vpop.permute.xlu0 %7259
    %v7327 = vrot.slane %v5798, 1
    %v7328 = vrot.slane %v5799, 1
    %v7329 = vsel %vm238, %v7327, %v7328
    %v7330 = vrot.slane %v5800, 1
    %v7331 = vsel %vm238, %v7328, %v7330
    %v7332 = vrot.slane %v5852, 1
    %v7333 = vrot.slane %v5853, 1
    %v7334 = vsel %vm238, %v7332, %v7333
    %v7335 = vrot.slane %v5854, 1
    %v7336 = vsel %vm238, %v7333, %v7335
    %7337 = vrot.lane.b32.xlu0 %v5963, 96
    %v7338 = vpop.permute.xlu0 %7337
    %7339 = vrot.lane.b32.xlu0 %v5965, 96
    %v7340 = vpop.permute.xlu0 %7339
    %7341 = vrot.lane.b32.xlu0 %v5968, 96
    %v7342 = vpop.permute.xlu0 %7341
    %7343 = vrot.lane.b32.xlu0 %v5970, 96
    %v7344 = vpop.permute.xlu0 %7343
    %7345 = vrot.lane.b32.xlu0 %v5973, 96
    %v7346 = vpop.permute.xlu0 %7345
    %7347 = vrot.lane.b32.xlu0 %v5975, 96
    %v7348 = vpop.permute.xlu0 %7347
    %7349 = vrot.lane.b32.xlu0 %v5978, 96
    %v7350 = vpop.permute.xlu0 %7349
    %7351 = vrot.lane.b32.xlu0 %v5980, 96
    %v7352 = vpop.permute.xlu0 %7351
    %7353 = vrot.lane.b32.xlu0 %v5983, 96
    %v7354 = vpop.permute.xlu0 %7353
    %7355 = vrot.lane.b32.xlu0 %v5985, 96
    %v7356 = vpop.permute.xlu0 %7355
    %7357 = vrot.lane.b32.xlu0 %v5988, 96
    %v7358 = vpop.permute.xlu0 %7357
    %7359 = vrot.lane.b32.xlu0 %v5990, 96
    %v7360 = vpop.permute.xlu0 %7359
    %7361 = vrot.lane.b32.xlu0 %v5993, 96
    %v7362 = vpop.permute.xlu0 %7361
    %7363 = vrot.lane.b32.xlu0 %v5995, 96
    %v7364 = vpop.permute.xlu0 %7363
    %7365 = vrot.lane.b32.xlu0 %v5998, 96
    %v7366 = vpop.permute.xlu0 %7365
    %7367 = vrot.lane.b32.xlu0 %v6000, 96
    %v7368 = vpop.permute.xlu0 %7367
    %7369 = vrot.lane.b32.xlu0 %v6003, 96
    %v7370 = vpop.permute.xlu0 %7369
    %7371 = vrot.lane.b32.xlu0 %v6005, 96
    %v7372 = vpop.permute.xlu0 %7371
    %7373 = vrot.lane.b32.xlu0 %v6008, 96
    %v7374 = vpop.permute.xlu0 %7373
    %7375 = vrot.lane.b32.xlu0 %v6010, 96
    %v7376 = vpop.permute.xlu0 %7375
    %7377 = vrot.lane.b32.xlu0 %v6013, 96
    %v7378 = vpop.permute.xlu0 %7377
    %7379 = vrot.lane.b32.xlu0 %v6015, 96
    %v7380 = vpop.permute.xlu0 %7379
    %7381 = vrot.lane.b32.xlu0 %v6018, 96
    %v7382 = vpop.permute.xlu0 %7381
    %7383 = vrot.lane.b32.xlu0 %v6020, 96
    %v7384 = vpop.permute.xlu0 %7383
    %7385 = vrot.lane.b32.xlu0 %v6023, 96
    %v7386 = vpop.permute.xlu0 %7385
    %7387 = vrot.lane.b32.xlu0 %v6025, 96
    %v7388 = vpop.permute.xlu0 %7387
    %7389 = vrot.lane.b32.xlu0 %v6028, 96
    %v7390 = vpop.permute.xlu0 %7389
    %7391 = vrot.lane.b32.xlu0 %v6030, 96
    %v7392 = vpop.permute.xlu0 %7391
    %7393 = vrot.lane.b32.xlu0 %v6855, 96
    %v7394 = vpop.permute.xlu0 %7393
    %7395 = vrot.lane.b32.xlu0 %v6857, 96
    %v7396 = vpop.permute.xlu0 %7395
    %7397 = vrot.lane.b32.xlu0 %v7329, 96
    %v7398 = vpop.permute.xlu0 %7397
    %7399 = vrot.lane.b32.xlu0 %v7331, 96
    %v7400 = vpop.permute.xlu0 %7399
    %7401 = vrot.lane.b32.xlu0 %v6043, 96
    %v7402 = vpop.permute.xlu0 %7401
    %7403 = vrot.lane.b32.xlu0 %v6045, 96
    %v7404 = vpop.permute.xlu0 %7403
    %7405 = vrot.lane.b32.xlu0 %v6048, 96
    %v7406 = vpop.permute.xlu0 %7405
    %7407 = vrot.lane.b32.xlu0 %v6050, 96
    %v7408 = vpop.permute.xlu0 %7407
    %7409 = vrot.lane.b32.xlu0 %v6053, 96
    %v7410 = vpop.permute.xlu0 %7409
    %7411 = vrot.lane.b32.xlu0 %v6055, 96
    %v7412 = vpop.permute.xlu0 %7411
    %7413 = vrot.lane.b32.xlu0 %v6058, 96
    %v7414 = vpop.permute.xlu0 %7413
    %7415 = vrot.lane.b32.xlu0 %v6060, 96
    %v7416 = vpop.permute.xlu0 %7415
    %7417 = vrot.lane.b32.xlu0 %v6063, 96
    %v7418 = vpop.permute.xlu0 %7417
    %7419 = vrot.lane.b32.xlu0 %v6065, 96
    %v7420 = vpop.permute.xlu0 %7419
    %7421 = vrot.lane.b32.xlu0 %v6068, 96
    %v7422 = vpop.permute.xlu0 %7421
    %7423 = vrot.lane.b32.xlu0 %v6070, 96
    %v7424 = vpop.permute.xlu0 %7423
    %7425 = vrot.lane.b32.xlu0 %v6073, 96
    %v7426 = vpop.permute.xlu0 %7425
    %7427 = vrot.lane.b32.xlu0 %v6075, 96
    %v7428 = vpop.permute.xlu0 %7427
    %7429 = vrot.lane.b32.xlu0 %v6078, 96
    %v7430 = vpop.permute.xlu0 %7429
    %7431 = vrot.lane.b32.xlu0 %v6080, 96
    %v7432 = vpop.permute.xlu0 %7431
    %7433 = vrot.lane.b32.xlu0 %v6083, 96
    %v7434 = vpop.permute.xlu0 %7433
    %7435 = vrot.lane.b32.xlu0 %v6085, 96
    %v7436 = vpop.permute.xlu0 %7435
    %7437 = vrot.lane.b32.xlu0 %v6088, 96
    %v7438 = vpop.permute.xlu0 %7437
    %7439 = vrot.lane.b32.xlu0 %v6090, 96
    %v7440 = vpop.permute.xlu0 %7439
    %7441 = vrot.lane.b32.xlu0 %v6093, 96
    %v7442 = vpop.permute.xlu0 %7441
    %7443 = vrot.lane.b32.xlu0 %v6095, 96
    %v7444 = vpop.permute.xlu0 %7443
    %7445 = vrot.lane.b32.xlu0 %v6098, 96
    %v7446 = vpop.permute.xlu0 %7445
    %7447 = vrot.lane.b32.xlu0 %v6100, 96
    %v7448 = vpop.permute.xlu0 %7447
    %7449 = vrot.lane.b32.xlu0 %v6103, 96
    %v7450 = vpop.permute.xlu0 %7449
    %7451 = vrot.lane.b32.xlu0 %v6105, 96
    %v7452 = vpop.permute.xlu0 %7451
    %7453 = vrot.lane.b32.xlu0 %v6108, 96
    %v7454 = vpop.permute.xlu0 %7453
    %7455 = vrot.lane.b32.xlu0 %v6110, 96
    %v7456 = vpop.permute.xlu0 %7455
    %7457 = vrot.lane.b32.xlu0 %v6860, 96
    %v7458 = vpop.permute.xlu0 %7457
    %7459 = vrot.lane.b32.xlu0 %v6862, 96
    %v7460 = vpop.permute.xlu0 %7459
    %7461 = vrot.lane.b32.xlu0 %v7334, 96
    %v7462 = vpop.permute.xlu0 %7461
    %7463 = vrot.lane.b32.xlu0 %v7336, 96
    %v7464 = vpop.permute.xlu0 %7463
    %v7529 = vrot.slane %v5798, 2
    %v7530 = vrot.slane %v5799, 2
    %v7531 = vsel %vm591, %v7529, %v7530
    %v7532 = vrot.slane %v5800, 2
    %v7533 = vsel %vm591, %v7530, %v7532
    %v7534 = vrot.slane %v5852, 2
    %v7535 = vrot.slane %v5853, 2
    %v7536 = vsel %vm591, %v7534, %v7535
    %v7537 = vrot.slane %v5854, 2
    %v7538 = vsel %vm591, %v7535, %v7537
    %v7603 = vsel %vm1892, %v5747, %v6112
    %v7604 = vsel %vm1892, %v5748, %v6114
    %v7605 = vsel %vm1892, %v5750, %v6116
    %v7606 = vsel %vm1892, %v5751, %v6118
    %v7607 = vsel %vm1892, %v5753, %v6120
    %v7608 = vsel %vm1892, %v5754, %v6122
    %v7609 = vsel %vm1892, %v5756, %v6124
    %v7610 = vsel %vm1892, %v5757, %v6126
    %v7611 = vsel %vm1892, %v5759, %v6128
    %v7612 = vsel %vm1892, %v5760, %v6130
    %v7613 = vsel %vm1892, %v5762, %v6132
    %v7614 = vsel %vm1892, %v5763, %v6134
    %v7615 = vsel %vm1892, %v5765, %v6136
    %v7616 = vsel %vm1892, %v5766, %v6138
    %v7617 = vsel %vm1892, %v5768, %v6140
    %v7618 = vsel %vm1892, %v5769, %v6142
    %v7619 = vsel %vm1892, %v5771, %v6144
    %v7620 = vsel %vm1892, %v5772, %v6146
    %v7621 = vsel %vm1892, %v5774, %v6148
    %v7622 = vsel %vm1892, %v5775, %v6150
    %v7623 = vsel %vm1892, %v5777, %v6152
    %v7624 = vsel %vm1892, %v5778, %v6154
    %v7625 = vsel %vm1892, %v5780, %v6156
    %v7626 = vsel %vm1892, %v5781, %v6158
    %v7627 = vsel %vm1892, %v5783, %v6160
    %v7628 = vsel %vm1892, %v5784, %v6162
    %v7629 = vsel %vm1892, %v5786, %v6164
    %v7630 = vsel %vm1892, %v5787, %v6166
    %v7631 = vsel %vm1892, %v5789, %v6168
    %v7632 = vsel %vm1892, %v5790, %v6170
    %v7633 = vsel %vm1892, %v5792, %v6172
    %v7634 = vsel %vm1892, %v5793, %v6174
    %v7635 = vsel %vm1892, %v5801, %v6176
    %v7636 = vsel %vm1892, %v5802, %v6178
    %v7637 = vsel %vm1892, %v5804, %v6180
    %v7638 = vsel %vm1892, %v5805, %v6182
    %v7639 = vsel %vm1892, %v5807, %v6184
    %v7640 = vsel %vm1892, %v5808, %v6186
    %v7641 = vsel %vm1892, %v5810, %v6188
    %v7642 = vsel %vm1892, %v5811, %v6190
    %v7643 = vsel %vm1892, %v5813, %v6192
    %v7644 = vsel %vm1892, %v5814, %v6194
    %v7645 = vsel %vm1892, %v5816, %v6196
    %v7646 = vsel %vm1892, %v5817, %v6198
    %v7647 = vsel %vm1892, %v5819, %v6200
    %v7648 = vsel %vm1892, %v5820, %v6202
    %v7649 = vsel %vm1892, %v5822, %v6204
    %v7650 = vsel %vm1892, %v5823, %v6206
    %v7651 = vsel %vm1892, %v5825, %v6208
    %v7652 = vsel %vm1892, %v5826, %v6210
    %v7653 = vsel %vm1892, %v5828, %v6212
    %v7654 = vsel %vm1892, %v5829, %v6214
    %v7655 = vsel %vm1892, %v5831, %v6216
    %v7656 = vsel %vm1892, %v5832, %v6218
    %v7657 = vsel %vm1892, %v5834, %v6220
    %v7658 = vsel %vm1892, %v5835, %v6222
    %v7659 = vsel %vm1892, %v5837, %v6224
    %v7660 = vsel %vm1892, %v5838, %v6226
    %v7661 = vsel %vm1892, %v5840, %v6228
    %v7662 = vsel %vm1892, %v5841, %v6230
    %v7663 = vsel %vm1892, %v5843, %v6232
    %v7664 = vsel %vm1892, %v5844, %v6234
    %v7665 = vsel %vm1892, %v5846, %v6236
    %v7666 = vsel %vm1892, %v5847, %v6238
    %v7667 = vsel %vm1957, %v7603, %v6464
    %v7668 = vsel %vm1957, %v7604, %v6466
    %v7669 = vsel %vm1957, %v7605, %v6468
    %v7670 = vsel %vm1957, %v7606, %v6470
    %v7671 = vsel %vm1957, %v7607, %v6472
    %v7672 = vsel %vm1957, %v7608, %v6474
    %v7673 = vsel %vm1957, %v7609, %v6476
    %v7674 = vsel %vm1957, %v7610, %v6478
    %v7675 = vsel %vm1957, %v7611, %v6480
    %v7676 = vsel %vm1957, %v7612, %v6482
    %v7677 = vsel %vm1957, %v7613, %v6484
    %v7678 = vsel %vm1957, %v7614, %v6486
    %v7679 = vsel %vm1957, %v7615, %v6488
    %v7680 = vsel %vm1957, %v7616, %v6490
    %v7681 = vsel %vm1957, %v7617, %v6492
    %v7682 = vsel %vm1957, %v7618, %v6494
    %v7683 = vsel %vm1957, %v7619, %v6496
    %v7684 = vsel %vm1957, %v7620, %v6498
    %v7685 = vsel %vm1957, %v7621, %v6500
    %v7686 = vsel %vm1957, %v7622, %v6502
    %v7687 = vsel %vm1957, %v7623, %v6504
    %v7688 = vsel %vm1957, %v7624, %v6506
    %v7689 = vsel %vm1957, %v7625, %v6508
    %v7690 = vsel %vm1957, %v7626, %v6510
    %v7691 = vsel %vm1957, %v7627, %v6512
    %v7692 = vsel %vm1957, %v7628, %v6514
    %v7693 = vsel %vm1957, %v7629, %v6516
    %v7694 = vsel %vm1957, %v7630, %v6518
    %v7695 = vsel %vm1957, %v7631, %v6520
    %v7696 = vsel %vm1957, %v7632, %v6522
    %v7697 = vsel %vm1957, %v7633, %v6524
    %v7698 = vsel %vm1957, %v7634, %v6526
    %v7699 = vsel %vm1957, %v7635, %v6528
    %v7700 = vsel %vm1957, %v7636, %v6530
    %v7701 = vsel %vm1957, %v7637, %v6532
    %v7702 = vsel %vm1957, %v7638, %v6534
    %v7703 = vsel %vm1957, %v7639, %v6536
    %v7704 = vsel %vm1957, %v7640, %v6538
    %v7705 = vsel %vm1957, %v7641, %v6540
    %v7706 = vsel %vm1957, %v7642, %v6542
    %v7707 = vsel %vm1957, %v7643, %v6544
    %v7708 = vsel %vm1957, %v7644, %v6546
    %v7709 = vsel %vm1957, %v7645, %v6548
    %v7710 = vsel %vm1957, %v7646, %v6550
    %v7711 = vsel %vm1957, %v7647, %v6552
    %v7712 = vsel %vm1957, %v7648, %v6554
    %v7713 = vsel %vm1957, %v7649, %v6556
    %v7714 = vsel %vm1957, %v7650, %v6558
    %v7715 = vsel %vm1957, %v7651, %v6560
    %v7716 = vsel %vm1957, %v7652, %v6562
    %v7717 = vsel %vm1957, %v7653, %v6564
    %v7718 = vsel %vm1957, %v7654, %v6566
    %v7719 = vsel %vm1957, %v7655, %v6568
    %v7720 = vsel %vm1957, %v7656, %v6570
    %v7721 = vsel %vm1957, %v7657, %v6572
    %v7722 = vsel %vm1957, %v7658, %v6574
    %v7723 = vsel %vm1957, %v7659, %v6576
    %v7724 = vsel %vm1957, %v7660, %v6578
    %v7725 = vsel %vm1957, %v7661, %v6580
    %v7726 = vsel %vm1957, %v7662, %v6582
    %v7727 = vsel %vm1957, %v7663, %v6584
    %v7728 = vsel %vm1957, %v7664, %v6586
    %v7729 = vsel %vm1957, %v7665, %v6588
    %v7730 = vsel %vm1957, %v7666, %v6590
    %v7731 = vsel %vm2022, %v7667, %v6660
    %v7732 = vsel %vm2022, %v7668, %v6662
    %v7733 = vsel %vm2022, %v7669, %v6664
    %v7734 = vsel %vm2022, %v7670, %v6666
    %v7735 = vsel %vm2022, %v7671, %v6668
    %v7736 = vsel %vm2022, %v7672, %v6670
    %v7737 = vsel %vm2022, %v7673, %v6672
    %v7738 = vsel %vm2022, %v7674, %v6674
    %v7739 = vsel %vm2022, %v7675, %v6676
    %v7740 = vsel %vm2022, %v7676, %v6678
    %v7741 = vsel %vm2022, %v7677, %v6680
    %v7742 = vsel %vm2022, %v7678, %v6682
    %v7743 = vsel %vm2022, %v7679, %v6684
    %v7744 = vsel %vm2022, %v7680, %v6686
    %v7745 = vsel %vm2022, %v7681, %v6688
    %v7746 = vsel %vm2022, %v7682, %v6690
    %v7747 = vsel %vm2022, %v7683, %v6692
    %v7748 = vsel %vm2022, %v7684, %v6694
    %v7749 = vsel %vm2022, %v7685, %v6696
    %v7750 = vsel %vm2022, %v7686, %v6698
    %v7751 = vsel %vm2022, %v7687, %v6700
    %v7752 = vsel %vm2022, %v7688, %v6702
    %v7753 = vsel %vm2022, %v7689, %v6704
    %v7754 = vsel %vm2022, %v7690, %v6706
    %v7755 = vsel %vm2022, %v7691, %v6708
    %v7756 = vsel %vm2022, %v7692, %v6710
    %v7757 = vsel %vm2022, %v7693, %v6712
    %v7758 = vsel %vm2022, %v7694, %v6714
    %v7759 = vsel %vm2022, %v7695, %v6716
    %v7760 = vsel %vm2022, %v7696, %v6718
    %v7761 = vsel %vm2022, %v7697, %v6720
    %v7762 = vsel %vm2022, %v7698, %v6722
    %v7763 = vsel %vm2022, %v7699, %v6724
    %v7764 = vsel %vm2022, %v7700, %v6726
    %v7765 = vsel %vm2022, %v7701, %v6728
    %v7766 = vsel %vm2022, %v7702, %v6730
    %v7767 = vsel %vm2022, %v7703, %v6732
    %v7768 = vsel %vm2022, %v7704, %v6734
    %v7769 = vsel %vm2022, %v7705, %v6736
    %v7770 = vsel %vm2022, %v7706, %v6738
    %v7771 = vsel %vm2022, %v7707, %v6740
    %v7772 = vsel %vm2022, %v7708, %v6742
    %v7773 = vsel %vm2022, %v7709, %v6744
    %v7774 = vsel %vm2022, %v7710, %v6746
    %v7775 = vsel %vm2022, %v7711, %v6748
    %v7776 = vsel %vm2022, %v7712, %v6750
    %v7777 = vsel %vm2022, %v7713, %v6752
    %v7778 = vsel %vm2022, %v7714, %v6754
    %v7779 = vsel %vm2022, %v7715, %v6756
    %v7780 = vsel %vm2022, %v7716, %v6758
    %v7781 = vsel %vm2022, %v7717, %v6760
    %v7782 = vsel %vm2022, %v7718, %v6762
    %v7783 = vsel %vm2022, %v7719, %v6764
    %v7784 = vsel %vm2022, %v7720, %v6766
    %v7785 = vsel %vm2022, %v7721, %v6768
    %v7786 = vsel %vm2022, %v7722, %v6770
    %v7787 = vsel %vm2022, %v7723, %v6772
    %v7788 = vsel %vm2022, %v7724, %v6774
    %v7789 = vsel %vm2022, %v7725, %v6776
    %v7790 = vsel %vm2022, %v7726, %v6778
    %v7791 = vsel %vm2022, %v7727, %v6780
    %v7792 = vsel %vm2022, %v7728, %v6782
    %v7793 = vsel %vm2022, %v7729, %v6784
    %v7794 = vsel %vm2022, %v7730, %v6786
    %v7795 = vsel %vm1892, %v5958, %v6938
    %v7796 = vsel %vm1892, %v5960, %v6940
    %v7797 = vsel %vm1892, %v5963, %v6942
    %v7798 = vsel %vm1892, %v5965, %v6944
    %v7799 = vsel %vm1892, %v5968, %v6946
    %v7800 = vsel %vm1892, %v5970, %v6948
    %v7801 = vsel %vm1892, %v5973, %v6950
    %v7802 = vsel %vm1892, %v5975, %v6952
    %v7803 = vsel %vm1892, %v5978, %v6954
    %v7804 = vsel %vm1892, %v5980, %v6956
    %v7805 = vsel %vm1892, %v5983, %v6958
    %v7806 = vsel %vm1892, %v5985, %v6960
    %v7807 = vsel %vm1892, %v5988, %v6962
    %v7808 = vsel %vm1892, %v5990, %v6964
    %v7809 = vsel %vm1892, %v5993, %v6966
    %v7810 = vsel %vm1892, %v5995, %v6968
    %v7811 = vsel %vm1892, %v5998, %v6970
    %v7812 = vsel %vm1892, %v6000, %v6972
    %v7813 = vsel %vm1892, %v6003, %v6974
    %v7814 = vsel %vm1892, %v6005, %v6976
    %v7815 = vsel %vm1892, %v6008, %v6978
    %v7816 = vsel %vm1892, %v6010, %v6980
    %v7817 = vsel %vm1892, %v6013, %v6982
    %v7818 = vsel %vm1892, %v6015, %v6984
    %v7819 = vsel %vm1892, %v6018, %v6986
    %v7820 = vsel %vm1892, %v6020, %v6988
    %v7821 = vsel %vm1892, %v6023, %v6990
    %v7822 = vsel %vm1892, %v6025, %v6992
    %v7823 = vsel %vm1892, %v6028, %v6994
    %v7824 = vsel %vm1892, %v6030, %v6996
    %v7825 = vsel %vm1892, %v6855, %v6998
    %v7826 = vsel %vm1892, %v6857, %v7000
    %v7827 = vsel %vm1892, %v6038, %v7002
    %v7828 = vsel %vm1892, %v6040, %v7004
    %v7829 = vsel %vm1892, %v6043, %v7006
    %v7830 = vsel %vm1892, %v6045, %v7008
    %v7831 = vsel %vm1892, %v6048, %v7010
    %v7832 = vsel %vm1892, %v6050, %v7012
    %v7833 = vsel %vm1892, %v6053, %v7014
    %v7834 = vsel %vm1892, %v6055, %v7016
    %v7835 = vsel %vm1892, %v6058, %v7018
    %v7836 = vsel %vm1892, %v6060, %v7020
    %v7837 = vsel %vm1892, %v6063, %v7022
    %v7838 = vsel %vm1892, %v6065, %v7024
    %v7839 = vsel %vm1892, %v6068, %v7026
    %v7840 = vsel %vm1892, %v6070, %v7028
    %v7841 = vsel %vm1892, %v6073, %v7030
    %v7842 = vsel %vm1892, %v6075, %v7032
    %v7843 = vsel %vm1892, %v6078, %v7034
    %v7844 = vsel %vm1892, %v6080, %v7036
    %v7845 = vsel %vm1892, %v6083, %v7038
    %v7846 = vsel %vm1892, %v6085, %v7040
    %v7847 = vsel %vm1892, %v6088, %v7042
    %v7848 = vsel %vm1892, %v6090, %v7044
    %v7849 = vsel %vm1892, %v6093, %v7046
    %v7850 = vsel %vm1892, %v6095, %v7048
    %v7851 = vsel %vm1892, %v6098, %v7050
    %v7852 = vsel %vm1892, %v6100, %v7052
    %v7853 = vsel %vm1892, %v6103, %v7054
    %v7854 = vsel %vm1892, %v6105, %v7056
    %v7855 = vsel %vm1892, %v6108, %v7058
    %v7856 = vsel %vm1892, %v6110, %v7060
    %v7857 = vsel %vm1892, %v6860, %v7062
    %v7858 = vsel %vm1892, %v6862, %v7064
    %v7859 = vsel %vm1957, %v7795, %v7134
    %v7860 = vsel %vm1957, %v7796, %v7136
    %v7861 = vsel %vm1957, %v7797, %v7138
    %v7862 = vsel %vm1957, %v7798, %v7140
    %v7863 = vsel %vm1957, %v7799, %v7142
    %v7864 = vsel %vm1957, %v7800, %v7144
    %v7865 = vsel %vm1957, %v7801, %v7146
    %v7866 = vsel %vm1957, %v7802, %v7148
    %v7867 = vsel %vm1957, %v7803, %v7150
    %v7868 = vsel %vm1957, %v7804, %v7152
    %v7869 = vsel %vm1957, %v7805, %v7154
    %v7870 = vsel %vm1957, %v7806, %v7156
    %v7871 = vsel %vm1957, %v7807, %v7158
    %v7872 = vsel %vm1957, %v7808, %v7160
    %v7873 = vsel %vm1957, %v7809, %v7162
    %v7874 = vsel %vm1957, %v7810, %v7164
    %v7875 = vsel %vm1957, %v7811, %v7166
    %v7876 = vsel %vm1957, %v7812, %v7168
    %v7877 = vsel %vm1957, %v7813, %v7170
    %v7878 = vsel %vm1957, %v7814, %v7172
    %v7879 = vsel %vm1957, %v7815, %v7174
    %v7880 = vsel %vm1957, %v7816, %v7176
    %v7881 = vsel %vm1957, %v7817, %v7178
    %v7882 = vsel %vm1957, %v7818, %v7180
    %v7883 = vsel %vm1957, %v7819, %v7182
    %v7884 = vsel %vm1957, %v7820, %v7184
    %v7885 = vsel %vm1957, %v7821, %v7186
    %v7886 = vsel %vm1957, %v7822, %v7188
    %v7887 = vsel %vm1957, %v7823, %v7190
    %v7888 = vsel %vm1957, %v7824, %v7192
    %v7889 = vsel %vm1957, %v7825, %v7194
    %v7890 = vsel %vm1957, %v7826, %v7196
    %v7891 = vsel %vm1957, %v7827, %v7198
    %v7892 = vsel %vm1957, %v7828, %v7200
    %v7893 = vsel %vm1957, %v7829, %v7202
    %v7894 = vsel %vm1957, %v7830, %v7204
    %v7895 = vsel %vm1957, %v7831, %v7206
    %v7896 = vsel %vm1957, %v7832, %v7208
    %v7897 = vsel %vm1957, %v7833, %v7210
    %v7898 = vsel %vm1957, %v7834, %v7212
    %v7899 = vsel %vm1957, %v7835, %v7214
    %v7900 = vsel %vm1957, %v7836, %v7216
    %v7901 = vsel %vm1957, %v7837, %v7218
    %v7902 = vsel %vm1957, %v7838, %v7220
    %v7903 = vsel %vm1957, %v7839, %v7222
    %v7904 = vsel %vm1957, %v7840, %v7224
    %v7905 = vsel %vm1957, %v7841, %v7226
    %v7906 = vsel %vm1957, %v7842, %v7228
    %v7907 = vsel %vm1957, %v7843, %v7230
    %v7908 = vsel %vm1957, %v7844, %v7232
    %v7909 = vsel %vm1957, %v7845, %v7234
    %v7910 = vsel %vm1957, %v7846, %v7236
    %v7911 = vsel %vm1957, %v7847, %v7238
    %v7912 = vsel %vm1957, %v7848, %v7240
    %v7913 = vsel %vm1957, %v7849, %v7242
    %v7914 = vsel %vm1957, %v7850, %v7244
    %v7915 = vsel %vm1957, %v7851, %v7246
    %v7916 = vsel %vm1957, %v7852, %v7248
    %v7917 = vsel %vm1957, %v7853, %v7250
    %v7918 = vsel %vm1957, %v7854, %v7252
    %v7919 = vsel %vm1957, %v7855, %v7254
    %v7920 = vsel %vm1957, %v7856, %v7256
    %v7921 = vsel %vm1957, %v7857, %v7258
    %v7922 = vsel %vm1957, %v7858, %v7260
    %v7923 = vsel %vm2022, %v7859, %v7338
    %v7924 = vsel %vm2022, %v7860, %v7340
    %v7925 = vsel %vm2022, %v7861, %v7342
    %v7926 = vsel %vm2022, %v7862, %v7344
    %v7927 = vsel %vm2022, %v7863, %v7346
    %v7928 = vsel %vm2022, %v7864, %v7348
    %v7929 = vsel %vm2022, %v7865, %v7350
    %v7930 = vsel %vm2022, %v7866, %v7352
    %v7931 = vsel %vm2022, %v7867, %v7354
    %v7932 = vsel %vm2022, %v7868, %v7356
    %v7933 = vsel %vm2022, %v7869, %v7358
    %v7934 = vsel %vm2022, %v7870, %v7360
    %v7935 = vsel %vm2022, %v7871, %v7362
    %v7936 = vsel %vm2022, %v7872, %v7364
    %v7937 = vsel %vm2022, %v7873, %v7366
    %v7938 = vsel %vm2022, %v7874, %v7368
    %v7939 = vsel %vm2022, %v7875, %v7370
    %v7940 = vsel %vm2022, %v7876, %v7372
    %v7941 = vsel %vm2022, %v7877, %v7374
    %v7942 = vsel %vm2022, %v7878, %v7376
    %v7943 = vsel %vm2022, %v7879, %v7378
    %v7944 = vsel %vm2022, %v7880, %v7380
    %v7945 = vsel %vm2022, %v7881, %v7382
    %v7946 = vsel %vm2022, %v7882, %v7384
    %v7947 = vsel %vm2022, %v7883, %v7386
    %v7948 = vsel %vm2022, %v7884, %v7388
    %v7949 = vsel %vm2022, %v7885, %v7390
    %v7950 = vsel %vm2022, %v7886, %v7392
    %v7951 = vsel %vm2022, %v7887, %v7394
    %v7952 = vsel %vm2022, %v7888, %v7396
    %v7953 = vsel %vm2022, %v7889, %v7398
    %v7954 = vsel %vm2022, %v7890, %v7400
    %v7955 = vsel %vm2022, %v7891, %v7402
    %v7956 = vsel %vm2022, %v7892, %v7404
    %v7957 = vsel %vm2022, %v7893, %v7406
    %v7958 = vsel %vm2022, %v7894, %v7408
    %v7959 = vsel %vm2022, %v7895, %v7410
    %v7960 = vsel %vm2022, %v7896, %v7412
    %v7961 = vsel %vm2022, %v7897, %v7414
    %v7962 = vsel %vm2022, %v7898, %v7416
    %v7963 = vsel %vm2022, %v7899, %v7418
    %v7964 = vsel %vm2022, %v7900, %v7420
    %v7965 = vsel %vm2022, %v7901, %v7422
    %v7966 = vsel %vm2022, %v7902, %v7424
    %v7967 = vsel %vm2022, %v7903, %v7426
    %v7968 = vsel %vm2022, %v7904, %v7428
    %v7969 = vsel %vm2022, %v7905, %v7430
    %v7970 = vsel %vm2022, %v7906, %v7432
    %v7971 = vsel %vm2022, %v7907, %v7434
    %v7972 = vsel %vm2022, %v7908, %v7436
    %v7973 = vsel %vm2022, %v7909, %v7438
    %v7974 = vsel %vm2022, %v7910, %v7440
    %v7975 = vsel %vm2022, %v7911, %v7442
    %v7976 = vsel %vm2022, %v7912, %v7444
    %v7977 = vsel %vm2022, %v7913, %v7446
    %v7978 = vsel %vm2022, %v7914, %v7448
    %v7979 = vsel %vm2022, %v7915, %v7450
    %v7980 = vsel %vm2022, %v7916, %v7452
    %v7981 = vsel %vm2022, %v7917, %v7454
    %v7982 = vsel %vm2022, %v7918, %v7456
    %v7983 = vsel %vm2022, %v7919, %v7458
    %v7984 = vsel %vm2022, %v7920, %v7460
    %v7985 = vsel %vm2022, %v7921, %v7462
    %v7986 = vsel %vm2022, %v7922, %v7464
    %v7987 = vpack.c.bf16 %v7732, %v7731
    %v7988 = vpack.c.bf16 %v7924, %v7923
    %v7989 = vpack.c.bf16 %v6317, %v6315
    %v7990 = vpack.c.bf16 %v7734, %v7733
    %v7991 = vpack.c.bf16 %v7926, %v7925
    %v7992 = vpack.c.bf16 %v6322, %v6320
    %v7993 = vpack.c.bf16 %v7736, %v7735
    %v7994 = vpack.c.bf16 %v7928, %v7927
    %v7995 = vpack.c.bf16 %v6327, %v6325
    %v7996 = vpack.c.bf16 %v7738, %v7737
    %v7997 = vpack.c.bf16 %v7930, %v7929
    %v7998 = vpack.c.bf16 %v6332, %v6330
    %v7999 = vpack.c.bf16 %v7740, %v7739
    %v8000 = vpack.c.bf16 %v7932, %v7931
    %v8001 = vpack.c.bf16 %v6337, %v6335
    %v8002 = vpack.c.bf16 %v7742, %v7741
    %v8003 = vpack.c.bf16 %v7934, %v7933
    %v8004 = vpack.c.bf16 %v6342, %v6340
    %v8005 = vpack.c.bf16 %v7744, %v7743
    %v8006 = vpack.c.bf16 %v7936, %v7935
    %v8007 = vpack.c.bf16 %v6347, %v6345
    %v8008 = vpack.c.bf16 %v7746, %v7745
    %v8009 = vpack.c.bf16 %v7938, %v7937
    %v8010 = vpack.c.bf16 %v6352, %v6350
    %v8011 = vpack.c.bf16 %v7748, %v7747
    %v8012 = vpack.c.bf16 %v7940, %v7939
    %v8013 = vpack.c.bf16 %v6357, %v6355
    %v8014 = vpack.c.bf16 %v7750, %v7749
    %v8015 = vpack.c.bf16 %v7942, %v7941
    %v8016 = vpack.c.bf16 %v6362, %v6360
    %v8017 = vpack.c.bf16 %v7752, %v7751
    %v8018 = vpack.c.bf16 %v7944, %v7943
    %v8019 = vpack.c.bf16 %v6367, %v6365
    %v8020 = vpack.c.bf16 %v7754, %v7753
    %v8021 = vpack.c.bf16 %v7946, %v7945
    %v8022 = vpack.c.bf16 %v6372, %v6370
    %v8023 = vpack.c.bf16 %v7756, %v7755
    %v8024 = vpack.c.bf16 %v7948, %v7947
    %v8025 = vpack.c.bf16 %v6377, %v6375
    %v8026 = vpack.c.bf16 %v7758, %v7757
    %v8027 = vpack.c.bf16 %v7950, %v7949
    %v8028 = vpack.c.bf16 %v6382, %v6380
    %v8029 = vpack.c.bf16 %v7760, %v7759
    %v8030 = vpack.c.bf16 %v7952, %v7951
    %v8031 = vpack.c.bf16 %v6931, %v6929
    %v8032 = vpack.c.bf16 %v7762, %v7761
    %v8033 = vpack.c.bf16 %v7954, %v7953
    %v8034 = vpack.c.bf16 %v7533, %v7531
    %v8035 = vpack.c.bf16 %v7764, %v7763
    %v8036 = vpack.c.bf16 %v7956, %v7955
    %v8037 = vpack.c.bf16 %v6397, %v6395
    %v8038 = vpack.c.bf16 %v7766, %v7765
    %v8039 = vpack.c.bf16 %v7958, %v7957
    %v8040 = vpack.c.bf16 %v6402, %v6400
    %v8041 = vpack.c.bf16 %v7768, %v7767
    %v8042 = vpack.c.bf16 %v7960, %v7959
    %v8043 = vpack.c.bf16 %v6407, %v6405
    %v8044 = vpack.c.bf16 %v7770, %v7769
    %v8045 = vpack.c.bf16 %v7962, %v7961
    %v8046 = vpack.c.bf16 %v6412, %v6410
    %v8047 = vpack.c.bf16 %v7772, %v7771
    %v8048 = vpack.c.bf16 %v7964, %v7963
    %v8049 = vpack.c.bf16 %v6417, %v6415
    %v8050 = vpack.c.bf16 %v7774, %v7773
    %v8051 = vpack.c.bf16 %v7966, %v7965
    %v8052 = vpack.c.bf16 %v6422, %v6420
    %v8053 = vpack.c.bf16 %v7776, %v7775
    %v8054 = vpack.c.bf16 %v7968, %v7967
    %v8055 = vpack.c.bf16 %v6427, %v6425
    %v8056 = vpack.c.bf16 %v7778, %v7777
    %v8057 = vpack.c.bf16 %v7970, %v7969
    %v8058 = vpack.c.bf16 %v6432, %v6430
    %v8059 = vpack.c.bf16 %v7780, %v7779
    %v8060 = vpack.c.bf16 %v7972, %v7971
    %v8061 = vpack.c.bf16 %v6437, %v6435
    %v8062 = vpack.c.bf16 %v7782, %v7781
    %v8063 = vpack.c.bf16 %v7974, %v7973
    %v8064 = vpack.c.bf16 %v6442, %v6440
    %v8065 = vpack.c.bf16 %v7784, %v7783
    %v8066 = vpack.c.bf16 %v7976, %v7975
    %v8067 = vpack.c.bf16 %v6447, %v6445
    %v8068 = vpack.c.bf16 %v7786, %v7785
    %v8069 = vpack.c.bf16 %v7978, %v7977
    %v8070 = vpack.c.bf16 %v6452, %v6450
    %v8071 = vpack.c.bf16 %v7788, %v7787
    %v8072 = vpack.c.bf16 %v7980, %v7979
    %v8073 = vpack.c.bf16 %v6457, %v6455
    %v8074 = vpack.c.bf16 %v7790, %v7789
    %v8075 = vpack.c.bf16 %v7982, %v7981
    %v8076 = vpack.c.bf16 %v6462, %v6460
    %v8077 = vpack.c.bf16 %v7792, %v7791
    %v8078 = vpack.c.bf16 %v7984, %v7983
    %v8079 = vpack.c.bf16 %v6936, %v6934
    %v8080 = vpack.c.bf16 %v7794, %v7793
    %v8081 = vpack.c.bf16 %v7986, %v7985
    %v8082 = vpack.c.bf16 %v7538, %v7536
    %v8083 = vld [vmem:[%s2] sm:$0xf]
    %v8084 = vld [vmem:[%s2 + $0x4] sm:$0xf]
    %v8085 = vld [vmem:[%s2 + $0x8] sm:$0xf]
    %v8086 = vld [vmem:[%s2 + $0xc] sm:$0xf]
    %v8087 = vld [vmem:[%s2 + $0x10] sm:$0xf]
    %v8088 = vld [vmem:[%s2 + $0x14] sm:$0xf]
    %v8089 = vld [vmem:[%s2 + $0x18] sm:$0xf]
    %v8090 = vld [vmem:[%s2 + $0x1c] sm:$0xf]
    %v8091 = vld [vmem:[%s2 + $0x20] sm:$0xf]
    %v8092 = vld [vmem:[%s2 + $0x24] sm:$0xf]
    %v8093 = vld [vmem:[%s2 + $0x28] sm:$0xf]
    %v8094 = vld [vmem:[%s2 + $0x2c] sm:$0xf]
    %v8095 = vld [vmem:[%s2 + $0x30] sm:$0xf]
    %v8096 = vld [vmem:[%s2 + $0x34] sm:$0xf]
    %v8097 = vld [vmem:[%s2 + $0x38] sm:$0xf]
    %v8098 = vld [vmem:[%s2 + $0x3c] sm:$0xf]
    %v8099 = vld [vmem:[%s2 + $0x40] sm:$0xf]
    %v8100 = vld [vmem:[%s2 + $0x44] sm:$0xf]
    %v8101 = vld [vmem:[%s2 + $0x48] sm:$0xf]
    %v8102 = vld [vmem:[%s2 + $0x4c] sm:$0xf]
    %v8103 = vld [vmem:[%s2 + $0x50] sm:$0xf]
    %v8104 = vld [vmem:[%s2 + $0x54] sm:$0xf]
    %v8105 = vld [vmem:[%s2 + $0x58] sm:$0xf]
    %v8106 = vld [vmem:[%s2 + $0x5c] sm:$0xf]
    %v8107 = vld [vmem:[%s2 + $0x60] sm:$0xf]
    %v8108 = vld [vmem:[%s2 + $0x64] sm:$0xf]
    %v8109 = vld [vmem:[%s2 + $0x68] sm:$0xf]
    %v8110 = vld [vmem:[%s2 + $0x6c] sm:$0xf]
    %v8111 = vld [vmem:[%s2 + $0x70] sm:$0xf]
    %v8112 = vld [vmem:[%s2 + $0x74] sm:$0xf]
    %v8113 = vld [vmem:[%s2 + $0x78] sm:$0xf]
    %v8114 = vld [vmem:[%s2 + $0x7c] sm:$0xf]
    %v8115 = vld [vmem:[%s2 + $0x80] sm:$0xf]
    %v8116 = vld [vmem:[%s2 + $0x84] sm:$0xf]
    %v8117 = vld [vmem:[%s2 + $0x88] sm:$0xf]
    %v8118 = vld [vmem:[%s2 + $0x8c] sm:$0xf]
    %v8155 = vunpack.c.l.b16 %v8083
    %v8156 = vunpack.c.l.b16 %v8084
    %v8157 = vunpack.c.l.b16 %v8085
    %v8158 = vunpack.c.l.b16 %v8086
    %v8159 = vunpack.c.l.b16 %v8087
    %v8160 = vunpack.c.l.b16 %v8088
    %v8161 = vunpack.c.l.b16 %v8089
    %v8162 = vunpack.c.l.b16 %v8090
    %v8163 = vunpack.c.l.b16 %v8091
    %v8164 = vunpack.c.l.b16 %v8092
    %v8165 = vunpack.c.l.b16 %v8093
    %v8166 = vunpack.c.l.b16 %v8094
    %v8167 = vunpack.c.l.b16 %v8095
    %v8168 = vunpack.c.l.b16 %v8096
    %v8169 = vunpack.c.l.b16 %v8097
    %v8170 = vunpack.c.l.b16 %v8098
    %v8171 = vunpack.c.l.b16 %v8099
    %v8172 = vunpack.c.l.b16 %v8100
    %v8173 = vunpack.c.l.b16 %v8101
    %v8174 = vunpack.c.l.b16 %v8102
    %v8175 = vunpack.c.l.b16 %v8103
    %v8176 = vunpack.c.l.b16 %v8104
    %v8177 = vunpack.c.l.b16 %v8105
    %v8178 = vunpack.c.l.b16 %v8106
    %v8179 = vunpack.c.l.b16 %v8107
    %v8180 = vunpack.c.l.b16 %v8108
    %v8181 = vunpack.c.l.b16 %v8109
    %v8182 = vunpack.c.l.b16 %v8110
    %v8183 = vunpack.c.l.b16 %v8111
    %v8184 = vunpack.c.l.b16 %v8112
    %v8185 = vunpack.c.l.b16 %v8113
    %v8186 = vunpack.c.l.b16 %v8114
    %v8187 = vunpack.c.l.b16 %v8115
    %v8188 = vunpack.c.l.b16 %v8116
    %v8189 = vunpack.c.l.b16 %v8117
    %v8190 = vunpack.c.l.b16 %v8118
    %v8191 = vpack.c.b16 %v8156, %v8155
    %v8192 = vpack.c.b16 %v8158, %v8157
    %v8193 = vpack.c.b16 %v8160, %v8159
    %v8194 = vpack.c.b16 %v8162, %v8161
    %v8195 = vpack.c.b16 %v8164, %v8163
    %v8196 = vpack.c.b16 %v8166, %v8165
    %v8197 = vpack.c.b16 %v8168, %v8167
    %v8198 = vpack.c.b16 %v8170, %v8169
    %v8199 = vpack.c.b16 %v8172, %v8171
    %v8200 = vpack.c.b16 %v8174, %v8173
    %v8201 = vpack.c.b16 %v8176, %v8175
    %v8202 = vpack.c.b16 %v8178, %v8177
    %v8203 = vpack.c.b16 %v8180, %v8179
    %v8204 = vpack.c.b16 %v8182, %v8181
    %v8205 = vpack.c.b16 %v8184, %v8183
    %v8206 = vpack.c.b16 %v8186, %v8185
    %v8207 = vpack.c.b16 %v8188, %v8187
    %v8208 = vpack.c.b16 %v8190, %v8189
    %v8228 = vsel %vm1892, %v7989, 0
    %v8231 = vsel %vm1892, %v7992, 0
    %v8234 = vsel %vm1892, %v7995, 0
    %v8237 = vsel %vm1892, %v7998, 0
    %v8240 = vsel %vm1892, %v8001, 0
    %v8243 = vsel %vm1892, %v8004, 0
    %v8246 = vsel %vm1892, %v8007, 0
    %v8249 = vsel %vm1892, %v8010, 0
    %v8252 = vsel %vm1892, %v8013, 0
    %v8255 = vsel %vm1892, %v8016, 0
    %v8258 = vsel %vm1892, %v8019, 0
    %v8261 = vsel %vm1892, %v8022, 0
    %v8264 = vsel %vm1892, %v8025, 0
    %v8267 = vsel %vm1892, %v8028, 0
    %v8270 = vsel %vm1892, %v8031, 0
    %v8273 = vsel %vm1892, %v8034, 0
    %v8276 = vsel %vm1892, %v8037, 0
    %v8279 = vsel %vm1892, %v8040, 0
    %v8282 = vsel %vm1892, %v8043, 0
    %v8285 = vsel %vm1892, %v8046, 0
    %v8288 = vsel %vm1892, %v8049, 0
    %v8291 = vsel %vm1892, %v8052, 0
    %v8294 = vsel %vm1892, %v8055, 0
    %v8297 = vsel %vm1892, %v8058, 0
    %v8300 = vsel %vm1892, %v8061, 0
    %v8303 = vsel %vm1892, %v8064, 0
    %v8306 = vsel %vm1892, %v8067, 0
    %v8309 = vsel %vm1892, %v8070, 0
    %v8312 = vsel %vm1892, %v8073, 0
    %v8315 = vsel %vm1892, %v8076, 0
    %v8318 = vsel %vm1892, %v8079, 0
    %v8321 = vsel %vm1892, %v8082, 0
    %8323 = vmatprep.subr.bf16.mxu0 0
    %8324 = vmatpush1.bf16.msra.mxu0 %v8191
    %8325 = vmatprep.subr.bf16.mxu0 0
    %8326 = vmatpush1.bf16.msra.mxu0 %v8192
    %8327 = vmatprep.subr.bf16.mxu0 0
    %8328 = vmatpush1.bf16.msra.mxu0 %v8193
    %8329 = vmatprep.subr.bf16.mxu0 0
    %8330 = vmatpush1.bf16.msra.mxu0 %v8194
    %8331 = vmatprep.subr.bf16.mxu0 0
    %8332 = vmatpush1.bf16.msra.mxu0 %v8195
    %8333 = vmatprep.subr.bf16.mxu0 0
    %8334 = vmatpush1.bf16.msra.mxu0 %v8196
    %8335 = vmatprep.subr.bf16.mxu0 0
    %8336 = vmatpush1.bf16.msra.mxu0 %v8197
    %8337 = vmatprep.subr.bf16.mxu0 0
    %8338 = vmatpush1.bf16.msra.mxu0 %v8198
    %8339 = vmatprep.subr.bf16.mxu0 0
    %8340 = vmatpush1.bf16.msra.mxu0 %v8199
    %8341 = vmatprep.subr.bf16.mxu0 0
    %8342 = vmatpush1.bf16.msra.mxu0 %v8200
    %8343 = vmatprep.subr.bf16.mxu0 0
    %8344 = vmatpush1.bf16.msra.mxu0 %v8201
    %8345 = vmatprep.subr.bf16.mxu0 0
    %8346 = vmatpush1.bf16.msra.mxu0 %v8202
    %8347 = vmatprep.subr.bf16.mxu0 0
    %8348 = vmatpush1.bf16.msra.mxu0 %v8203
    %8349 = vmatprep.subr.bf16.mxu0 0
    %8350 = vmatpush1.bf16.msra.mxu0 %v8204
    %8351 = vmatprep.subr.bf16.mxu0 0
    %8352 = vmatpush1.bf16.msra.mxu0 %v8205
    %8353 = vmatprep.subr.bf16.mxu0 0
    %8354 = vmatpush1.bf16.msra.mxu0 %v8206
    %8355 = vmatprep.mubr.bf16.mxu0 %v7988
    %8356 = vmatmul.mubr.bf16.gmra.mrb[0].mxu0 %v7987
    %v8357 = vpop.f32.mrb[0].mxu0
    %v8358 = vadd.f32 0.0, %v8357
    %v8359 = vpop.f32.mrb[0].mxu0
    %v8360 = vpop.f32.mrb[0].mxu0
    %v8361 = vadd.f32 0.0, %v8360
    %v8362 = vpop.f32.mrb[0].mxu0
    %8363 = vmatprep.mubr.bf16.mxu0 %v7991
    %8364 = vmatmul.mubr.bf16.gmra.mrb[0].mxu0 %v7990
    %v8365 = vpop.f32.mrb[0].mxu0
    %v8366 = vadd.f32 0.0, %v8365
    %v8367 = vpop.f32.mrb[0].mxu0
    %v8368 = vpop.f32.mrb[0].mxu0
    %v8369 = vadd.f32 0.0, %v8368
    %v8370 = vpop.f32.mrb[0].mxu0
    %8371 = vmatprep.mubr.bf16.mxu0 %v7994
    %8372 = vmatmul.mubr.bf16.gmra.mrb[0].mxu0 %v7993
    %v8373 = vpop.f32.mrb[0].mxu0
    %v8374 = vadd.f32 0.0, %v8373
    %v8375 = vpop.f32.mrb[0].mxu0
    %v8376 = vpop.f32.mrb[0].mxu0
    %v8377 = vadd.f32 0.0, %v8376
    %v8378 = vpop.f32.mrb[0].mxu0
    %8379 = vmatprep.mubr.bf16.mxu0 %v7997
    %8380 = vmatmul.mubr.bf16.gmra.mrb[0].mxu0 %v7996
    %v8381 = vpop.f32.mrb[0].mxu0
    %v8382 = vadd.f32 0.0, %v8381
    %v8383 = vpop.f32.mrb[0].mxu0
    %v8384 = vpop.f32.mrb[0].mxu0
    %v8385 = vadd.f32 0.0, %v8384
    %v8386 = vpop.f32.mrb[0].mxu0
    %8387 = vmatprep.mubr.bf16.mxu0 %v8000
    %8388 = vmatmul.mubr.bf16.gmra.mrb[0].mxu0 %v7999
    %v8389 = vpop.f32.mrb[0].mxu0
    %v8390 = vadd.f32 0.0, %v8389
    %v8391 = vpop.f32.mrb[0].mxu0
    %v8392 = vpop.f32.mrb[0].mxu0
    %v8393 = vadd.f32 0.0, %v8392
    %v8394 = vpop.f32.mrb[0].mxu0
    %8395 = vmatprep.mubr.bf16.mxu0 %v8003
    %8396 = vmatmul.mubr.bf16.gmra.mrb[0].mxu0 %v8002
    %v8397 = vpop.f32.mrb[0].mxu0
    %v8398 = vadd.f32 0.0, %v8397
    %v8399 = vpop.f32.mrb[0].mxu0
    %v8400 = vpop.f32.mrb[0].mxu0
    %v8401 = vadd.f32 0.0, %v8400
    %v8402 = vpop.f32.mrb[0].mxu0
    %8403 = vmatprep.mubr.bf16.mxu0 %v8006
    %8404 = vmatmul.mubr.bf16.gmra.mrb[0].mxu0 %v8005
    %v8405 = vpop.f32.mrb[0].mxu0
    %v8406 = vadd.f32 0.0, %v8405
    %v8407 = vpop.f32.mrb[0].mxu0
    %v8408 = vpop.f32.mrb[0].mxu0
    %v8409 = vadd.f32 0.0, %v8408
    %v8410 = vpop.f32.mrb[0].mxu0
    %8411 = vmatprep.mubr.bf16.mxu0 %v8009
    %8412 = vmatmul.mubr.bf16.gmra.mrb[0].mxu0 %v8008
    %v8413 = vpop.f32.mrb[0].mxu0
    %v8414 = vadd.f32 0.0, %v8413
    %v8415 = vpop.f32.mrb[0].mxu0
    %v8416 = vpop.f32.mrb[0].mxu0
    %v8417 = vadd.f32 0.0, %v8416
    %v8418 = vpop.f32.mrb[0].mxu0
    %8419 = vmatprep.mubr.bf16.mxu0 %v8012
    %8420 = vmatmul.mubr.bf16.gmra.mrb[0].mxu0 %v8011
    %v8421 = vpop.f32.mrb[0].mxu0
    %v8422 = vadd.f32 0.0, %v8421
    %v8423 = vpop.f32.mrb[0].mxu0
    %v8424 = vpop.f32.mrb[0].mxu0
    %v8425 = vadd.f32 0.0, %v8424
    %v8426 = vpop.f32.mrb[0].mxu0
    %8427 = vmatprep.mubr.bf16.mxu0 %v8015
    %8428 = vmatmul.mubr.bf16.gmra.mrb[0].mxu0 %v8014
    %v8429 = vpop.f32.mrb[0].mxu0
    %v8430 = vadd.f32 0.0, %v8429
    %v8431 = vpop.f32.mrb[0].mxu0
    %v8432 = vpop.f32.mrb[0].mxu0
    %v8433 = vadd.f32 0.0, %v8432
    %v8434 = vpop.f32.mrb[0].mxu0
    %8435 = vmatprep.mubr.bf16.mxu0 %v8018
    %8436 = vmatmul.mubr.bf16.gmra.mrb[0].mxu0 %v8017
    %v8437 = vpop.f32.mrb[0].mxu0
    %v8438 = vadd.f32 0.0, %v8437
    %v8439 = vpop.f32.mrb[0].mxu0
    %v8440 = vpop.f32.mrb[0].mxu0
    %v8441 = vadd.f32 0.0, %v8440
    %v8442 = vpop.f32.mrb[0].mxu0
    %8443 = vmatprep.mubr.bf16.mxu0 %v8021
    %8444 = vmatmul.mubr.bf16.gmra.mrb[0].mxu0 %v8020
    %v8445 = vpop.f32.mrb[0].mxu0
    %v8446 = vadd.f32 0.0, %v8445
    %v8447 = vpop.f32.mrb[0].mxu0
    %v8448 = vpop.f32.mrb[0].mxu0
    %v8449 = vadd.f32 0.0, %v8448
    %v8450 = vpop.f32.mrb[0].mxu0
    %8451 = vmatprep.mubr.bf16.mxu0 %v8024
    %8452 = vmatmul.mubr.bf16.gmra.mrb[0].mxu0 %v8023
    %v8453 = vpop.f32.mrb[0].mxu0
    %v8454 = vadd.f32 0.0, %v8453
    %v8455 = vpop.f32.mrb[0].mxu0
    %v8456 = vpop.f32.mrb[0].mxu0
    %v8457 = vadd.f32 0.0, %v8456
    %v8458 = vpop.f32.mrb[0].mxu0
    %8459 = vmatprep.mubr.bf16.mxu0 %v8027
    %8460 = vmatmul.mubr.bf16.gmra.mrb[0].mxu0 %v8026
    %v8461 = vpop.f32.mrb[0].mxu0
    %v8462 = vadd.f32 0.0, %v8461
    %v8463 = vpop.f32.mrb[0].mxu0
    %v8464 = vpop.f32.mrb[0].mxu0
    %v8465 = vadd.f32 0.0, %v8464
    %v8466 = vpop.f32.mrb[0].mxu0
    %8467 = vmatprep.mubr.bf16.mxu0 %v8030
    %8468 = vmatmul.mubr.bf16.gmra.mrb[0].mxu0 %v8029
    %v8469 = vpop.f32.mrb[0].mxu0
    %v8470 = vadd.f32 0.0, %v8469
    %v8471 = vpop.f32.mrb[0].mxu0
    %v8472 = vpop.f32.mrb[0].mxu0
    %v8473 = vadd.f32 0.0, %v8472
    %v8474 = vpop.f32.mrb[0].mxu0
    %8475 = vmatprep.mubr.bf16.mxu0 %v8033
    %8476 = vmatmul.mubr.bf16.gmra.mrb[0].mxu0 %v8032
    %v8477 = vpop.f32.mrb[0].mxu0
    %v8478 = vadd.f32 0.0, %v8477
    %v8479 = vpop.f32.mrb[0].mxu0
    %v8480 = vpop.f32.mrb[0].mxu0
    %v8481 = vadd.f32 0.0, %v8480
    %v8482 = vpop.f32.mrb[0].mxu0
    %8483 = vmatprep.mubr.bf16.mxu0 %v8036
    %8484 = vmatmul.mubr.bf16.gmra.mrb[0].mxu0 %v8035
    %v8485 = vpop.f32.mrb[0].mxu0
    %v8486 = vadd.f32 0.0, %v8485
    %v8487 = vpop.f32.mrb[0].mxu0
    %v8488 = vpop.f32.mrb[0].mxu0
    %v8489 = vadd.f32 0.0, %v8488
    %v8490 = vpop.f32.mrb[0].mxu0
    %8491 = vmatprep.mubr.bf16.mxu0 %v8039
    %8492 = vmatmul.mubr.bf16.gmra.mrb[0].mxu0 %v8038
    %v8493 = vpop.f32.mrb[0].mxu0
    %v8494 = vadd.f32 0.0, %v8493
    %v8495 = vpop.f32.mrb[0].mxu0
    %v8496 = vpop.f32.mrb[0].mxu0
    %v8497 = vadd.f32 0.0, %v8496
    %v8498 = vpop.f32.mrb[0].mxu0
    %8499 = vmatprep.mubr.bf16.mxu0 %v8042
    %8500 = vmatmul.mubr.bf16.gmra.mrb[0].mxu0 %v8041
    %v8501 = vpop.f32.mrb[0].mxu0
    %v8502 = vadd.f32 0.0, %v8501
    %v8503 = vpop.f32.mrb[0].mxu0
    %v8504 = vpop.f32.mrb[0].mxu0
    %v8505 = vadd.f32 0.0, %v8504
    %v8506 = vpop.f32.mrb[0].mxu0
    %8507 = vmatprep.mubr.bf16.mxu0 %v8045
    %8508 = vmatmul.mubr.bf16.gmra.mrb[0].mxu0 %v8044
    %v8509 = vpop.f32.mrb[0].mxu0
    %v8510 = vadd.f32 0.0, %v8509
    %v8511 = vpop.f32.mrb[0].mxu0
    %v8512 = vpop.f32.mrb[0].mxu0
    %v8513 = vadd.f32 0.0, %v8512
    %v8514 = vpop.f32.mrb[0].mxu0
    %8515 = vmatprep.mubr.bf16.mxu0 %v8048
    %8516 = vmatmul.mubr.bf16.gmra.mrb[0].mxu0 %v8047
    %v8517 = vpop.f32.mrb[0].mxu0
    %v8518 = vadd.f32 0.0, %v8517
    %v8519 = vpop.f32.mrb[0].mxu0
    %v8520 = vpop.f32.mrb[0].mxu0
    %v8521 = vadd.f32 0.0, %v8520
    %v8522 = vpop.f32.mrb[0].mxu0
    %8523 = vmatprep.mubr.bf16.mxu0 %v8051
    %8524 = vmatmul.mubr.bf16.gmra.mrb[0].mxu0 %v8050
    %v8525 = vpop.f32.mrb[0].mxu0
    %v8526 = vadd.f32 0.0, %v8525
    %v8527 = vpop.f32.mrb[0].mxu0
    %v8528 = vpop.f32.mrb[0].mxu0
    %v8529 = vadd.f32 0.0, %v8528
    %v8530 = vpop.f32.mrb[0].mxu0
    %8531 = vmatprep.mubr.bf16.mxu0 %v8054
    %8532 = vmatmul.mubr.bf16.gmra.mrb[0].mxu0 %v8053
    %v8533 = vpop.f32.mrb[0].mxu0
    %v8534 = vadd.f32 0.0, %v8533
    %v8535 = vpop.f32.mrb[0].mxu0
    %v8536 = vpop.f32.mrb[0].mxu0
    %v8537 = vadd.f32 0.0, %v8536
    %v8538 = vpop.f32.mrb[0].mxu0
    %8539 = vmatprep.mubr.bf16.mxu0 %v8057
    %8540 = vmatmul.mubr.bf16.gmra.mrb[0].mxu0 %v8056
    %v8541 = vpop.f32.mrb[0].mxu0
    %v8542 = vadd.f32 0.0, %v8541
    %v8543 = vpop.f32.mrb[0].mxu0
    %v8544 = vpop.f32.mrb[0].mxu0
    %v8545 = vadd.f32 0.0, %v8544
    %v8546 = vpop.f32.mrb[0].mxu0
    %8547 = vmatprep.mubr.bf16.mxu0 %v8060
    %8548 = vmatmul.mubr.bf16.gmra.mrb[0].mxu0 %v8059
    %v8549 = vpop.f32.mrb[0].mxu0
    %v8550 = vadd.f32 0.0, %v8549
    %v8551 = vpop.f32.mrb[0].mxu0
    %v8552 = vpop.f32.mrb[0].mxu0
    %v8553 = vadd.f32 0.0, %v8552
    %v8554 = vpop.f32.mrb[0].mxu0
    %8555 = vmatprep.mubr.bf16.mxu0 %v8063
    %8556 = vmatmul.mubr.bf16.gmra.mrb[0].mxu0 %v8062
    %v8557 = vpop.f32.mrb[0].mxu0
    %v8558 = vadd.f32 0.0, %v8557
    %v8559 = vpop.f32.mrb[0].mxu0
    %v8560 = vpop.f32.mrb[0].mxu0
    %v8561 = vadd.f32 0.0, %v8560
    %v8562 = vpop.f32.mrb[0].mxu0
    %8563 = vmatprep.mubr.bf16.mxu0 %v8066
    %8564 = vmatmul.mubr.bf16.gmra.mrb[0].mxu0 %v8065
    %v8565 = vpop.f32.mrb[0].mxu0
    %v8566 = vadd.f32 0.0, %v8565
    %v8567 = vpop.f32.mrb[0].mxu0
    %v8568 = vpop.f32.mrb[0].mxu0
    %v8569 = vadd.f32 0.0, %v8568
    %v8570 = vpop.f32.mrb[0].mxu0
    %8571 = vmatprep.mubr.bf16.mxu0 %v8069
    %8572 = vmatmul.mubr.bf16.gmra.mrb[0].mxu0 %v8068
    %v8573 = vpop.f32.mrb[0].mxu0
    %v8574 = vadd.f32 0.0, %v8573
    %v8575 = vpop.f32.mrb[0].mxu0
    %v8576 = vpop.f32.mrb[0].mxu0
    %v8577 = vadd.f32 0.0, %v8576
    %v8578 = vpop.f32.mrb[0].mxu0
    %8579 = vmatprep.mubr.bf16.mxu0 %v8072
    %8580 = vmatmul.mubr.bf16.gmra.mrb[0].mxu0 %v8071
    %v8581 = vpop.f32.mrb[0].mxu0
    %v8582 = vadd.f32 0.0, %v8581
    %v8583 = vpop.f32.mrb[0].mxu0
    %v8584 = vpop.f32.mrb[0].mxu0
    %v8585 = vadd.f32 0.0, %v8584
    %v8586 = vpop.f32.mrb[0].mxu0
    %8587 = vmatprep.mubr.bf16.mxu0 %v8075
    %8588 = vmatmul.mubr.bf16.gmra.mrb[0].mxu0 %v8074
    %v8589 = vpop.f32.mrb[0].mxu0
    %v8590 = vadd.f32 0.0, %v8589
    %v8591 = vpop.f32.mrb[0].mxu0
    %v8592 = vpop.f32.mrb[0].mxu0
    %v8593 = vadd.f32 0.0, %v8592
    %v8594 = vpop.f32.mrb[0].mxu0
    %8595 = vmatprep.mubr.bf16.mxu0 %v8078
    %8596 = vmatmul.mubr.bf16.gmra.mrb[0].mxu0 %v8077
    %v8597 = vpop.f32.mrb[0].mxu0
    %v8598 = vadd.f32 0.0, %v8597
    %v8599 = vpop.f32.mrb[0].mxu0
    %v8600 = vpop.f32.mrb[0].mxu0
    %v8601 = vadd.f32 0.0, %v8600
    %v8602 = vpop.f32.mrb[0].mxu0
    %8603 = vmatprep.mubr.bf16.mxu0 %v8081
    %8604 = vmatmul.mubr.bf16.gmra.mrb[0].mxu0 %v8080
    %v8605 = vpop.f32.mrb[0].mxu0
    %v8606 = vadd.f32 0.0, %v8605
    %v8607 = vpop.f32.mrb[0].mxu0
    %v8608 = vpop.f32.mrb[0].mxu0
    %v8609 = vadd.f32 0.0, %v8608
    %v8610 = vpop.f32.mrb[0].mxu0
    %8611 = vdwg.mxu0
    %8612 = vmatprep.subr.bf16.mxu0 0
    %8613 = vmatpush1.bf16.msra.mxu0 %v8207
    %8614 = vmatprep.subr.bf16.mxu0 0
    %8615 = vmatpush1.bf16.msra.mxu0 %v8208
    %8616 = vmatprep.subr.bf16.mxu0 0
    %8617 = vmatpush1.bf16.msra.mxu0 0
    %8618 = vmatprep.subr.bf16.mxu0 0
    %8619 = vmatpush1.bf16.msra.mxu0 0
    %8620 = vmatprep.subr.bf16.mxu0 0
    %8621 = vmatpush1.bf16.msra.mxu0 0
    %8622 = vmatprep.subr.bf16.mxu0 0
    %8623 = vmatpush1.bf16.msra.mxu0 0
    %8624 = vmatprep.subr.bf16.mxu0 0
    %8625 = vmatpush1.bf16.msra.mxu0 0
    %8626 = vmatprep.subr.bf16.mxu0 0
    %8627 = vmatpush1.bf16.msra.mxu0 0
    %8628 = vmatprep.subr.bf16.mxu0 0
    %8629 = vmatpush1.bf16.msra.mxu0 0
    %8630 = vmatprep.subr.bf16.mxu0 0
    %8631 = vmatpush1.bf16.msra.mxu0 0
    %8632 = vmatprep.subr.bf16.mxu0 0
    %8633 = vmatpush1.bf16.msra.mxu0 0
    %8634 = vmatprep.subr.bf16.mxu0 0
    %8635 = vmatpush1.bf16.msra.mxu0 0
    %8636 = vmatprep.subr.bf16.mxu0 0
    %8637 = vmatpush1.bf16.msra.mxu0 0
    %8638 = vmatprep.subr.bf16.mxu0 0
    %8639 = vmatpush1.bf16.msra.mxu0 0
    %8640 = vmatprep.subr.bf16.mxu0 0
    %8641 = vmatpush1.bf16.msra.mxu0 0
    %8642 = vmatprep.subr.bf16.mxu0 0
    %8643 = vmatpush1.bf16.msra.mxu0 0
    %8644 = vmatprep.mubr.bf16.mxu0 0
    %8645 = vmatmul.mubr.bf16.gmra.mrb[0].mxu0 %v8228
    %v8646 = vpop.f32.mrb[0].mxu0
    %v8647 = vadd.f32 %v8358, %v8646
    %v8648 = vpop.f32.mrb[0].mxu0
    %v8649 = vpop.f32.mrb[0].mxu0
    %v8650 = vadd.f32 %v8361, %v8649
    %v8651 = vpop.f32.mrb[0].mxu0
    %8652 = vmatprep.mubr.bf16.mxu0 0
    %8653 = vmatmul.mubr.bf16.gmra.mrb[0].mxu0 %v8231
    %v8654 = vpop.f32.mrb[0].mxu0
    %v8655 = vadd.f32 %v8366, %v8654
    %v8656 = vpop.f32.mrb[0].mxu0
    %v8657 = vpop.f32.mrb[0].mxu0
    %v8658 = vadd.f32 %v8369, %v8657
    %v8659 = vpop.f32.mrb[0].mxu0
    %8660 = vmatprep.mubr.bf16.mxu0 0
    %8661 = vmatmul.mubr.bf16.gmra.mrb[0].mxu0 %v8234
    %v8662 = vpop.f32.mrb[0].mxu0
    %v8663 = vadd.f32 %v8374, %v8662
    %v8664 = vpop.f32.mrb[0].mxu0
    %v8665 = vpop.f32.mrb[0].mxu0
    %v8666 = vadd.f32 %v8377, %v8665
    %v8667 = vpop.f32.mrb[0].mxu0
    %8668 = vmatprep.mubr.bf16.mxu0 0
    %8669 = vmatmul.mubr.bf16.gmra.mrb[0].mxu0 %v8237
    %v8670 = vpop.f32.mrb[0].mxu0
    %v8671 = vadd.f32 %v8382, %v8670
    %v8672 = vpop.f32.mrb[0].mxu0
    %v8673 = vpop.f32.mrb[0].mxu0
    %v8674 = vadd.f32 %v8385, %v8673
    %v8675 = vpop.f32.mrb[0].mxu0
    %8676 = vmatprep.mubr.bf16.mxu0 0
    %8677 = vmatmul.mubr.bf16.gmra.mrb[0].mxu0 %v8240
    %v8678 = vpop.f32.mrb[0].mxu0
    %v8679 = vadd.f32 %v8390, %v8678
    %v8680 = vpop.f32.mrb[0].mxu0
    %v8681 = vpop.f32.mrb[0].mxu0
    %v8682 = vadd.f32 %v8393, %v8681
    %v8683 = vpop.f32.mrb[0].mxu0
    %8684 = vmatprep.mubr.bf16.mxu0 0
    %8685 = vmatmul.mubr.bf16.gmra.mrb[0].mxu0 %v8243
    %v8686 = vpop.f32.mrb[0].mxu0
    %v8687 = vadd.f32 %v8398, %v8686
    %v8688 = vpop.f32.mrb[0].mxu0
    %v8689 = vpop.f32.mrb[0].mxu0
    %v8690 = vadd.f32 %v8401, %v8689
    %v8691 = vpop.f32.mrb[0].mxu0
    %8692 = vmatprep.mubr.bf16.mxu0 0
    %8693 = vmatmul.mubr.bf16.gmra.mrb[0].mxu0 %v8246
    %v8694 = vpop.f32.mrb[0].mxu0
    %v8695 = vadd.f32 %v8406, %v8694
    %v8696 = vpop.f32.mrb[0].mxu0
    %v8697 = vpop.f32.mrb[0].mxu0
    %v8698 = vadd.f32 %v8409, %v8697
    %v8699 = vpop.f32.mrb[0].mxu0
    %8700 = vmatprep.mubr.bf16.mxu0 0
    %8701 = vmatmul.mubr.bf16.gmra.mrb[0].mxu0 %v8249
    %v8702 = vpop.f32.mrb[0].mxu0
    %v8703 = vadd.f32 %v8414, %v8702
    %v8704 = vpop.f32.mrb[0].mxu0
    %v8705 = vpop.f32.mrb[0].mxu0
    %v8706 = vadd.f32 %v8417, %v8705
    %v8707 = vpop.f32.mrb[0].mxu0
    %8708 = vmatprep.mubr.bf16.mxu0 0
    %8709 = vmatmul.mubr.bf16.gmra.mrb[0].mxu0 %v8252
    %v8710 = vpop.f32.mrb[0].mxu0
    %v8711 = vadd.f32 %v8422, %v8710
    %v8712 = vpop.f32.mrb[0].mxu0
    %v8713 = vpop.f32.mrb[0].mxu0
    %v8714 = vadd.f32 %v8425, %v8713
    %v8715 = vpop.f32.mrb[0].mxu0
    %8716 = vmatprep.mubr.bf16.mxu0 0
    %8717 = vmatmul.mubr.bf16.gmra.mrb[0].mxu0 %v8255
    %v8718 = vpop.f32.mrb[0].mxu0
    %v8719 = vadd.f32 %v8430, %v8718
    %v8720 = vpop.f32.mrb[0].mxu0
    %v8721 = vpop.f32.mrb[0].mxu0
    %v8722 = vadd.f32 %v8433, %v8721
    %v8723 = vpop.f32.mrb[0].mxu0
    %8724 = vmatprep.mubr.bf16.mxu0 0
    %8725 = vmatmul.mubr.bf16.gmra.mrb[0].mxu0 %v8258
    %v8726 = vpop.f32.mrb[0].mxu0
    %v8727 = vadd.f32 %v8438, %v8726
    %v8728 = vpop.f32.mrb[0].mxu0
    %v8729 = vpop.f32.mrb[0].mxu0
    %v8730 = vadd.f32 %v8441, %v8729
    %v8731 = vpop.f32.mrb[0].mxu0
    %8732 = vmatprep.mubr.bf16.mxu0 0
    %8733 = vmatmul.mubr.bf16.gmra.mrb[0].mxu0 %v8261
    %v8734 = vpop.f32.mrb[0].mxu0
    %v8735 = vadd.f32 %v8446, %v8734
    %v8736 = vpop.f32.mrb[0].mxu0
    %v8737 = vpop.f32.mrb[0].mxu0
    %v8738 = vadd.f32 %v8449, %v8737
    %v8739 = vpop.f32.mrb[0].mxu0
    %8740 = vmatprep.mubr.bf16.mxu0 0
    %8741 = vmatmul.mubr.bf16.gmra.mrb[0].mxu0 %v8264
    %v8742 = vpop.f32.mrb[0].mxu0
    %v8743 = vadd.f32 %v8454, %v8742
    %v8744 = vpop.f32.mrb[0].mxu0
    %v8745 = vpop.f32.mrb[0].mxu0
    %v8746 = vadd.f32 %v8457, %v8745
    %v8747 = vpop.f32.mrb[0].mxu0
    %8748 = vmatprep.mubr.bf16.mxu0 0
    %8749 = vmatmul.mubr.bf16.gmra.mrb[0].mxu0 %v8267
    %v8750 = vpop.f32.mrb[0].mxu0
    %v8751 = vadd.f32 %v8462, %v8750
    %v8752 = vpop.f32.mrb[0].mxu0
    %v8753 = vpop.f32.mrb[0].mxu0
    %v8754 = vadd.f32 %v8465, %v8753
    %v8755 = vpop.f32.mrb[0].mxu0
    %8756 = vmatprep.mubr.bf16.mxu0 0
    %8757 = vmatmul.mubr.bf16.gmra.mrb[0].mxu0 %v8270
    %v8758 = vpop.f32.mrb[0].mxu0
    %v8759 = vadd.f32 %v8470, %v8758
    %v8760 = vpop.f32.mrb[0].mxu0
    %v8761 = vpop.f32.mrb[0].mxu0
    %v8762 = vadd.f32 %v8473, %v8761
    %v8763 = vpop.f32.mrb[0].mxu0
    %8764 = vmatprep.mubr.bf16.mxu0 0
    %8765 = vmatmul.mubr.bf16.gmra.mrb[0].mxu0 %v8273
    %v8766 = vpop.f32.mrb[0].mxu0
    %v8767 = vadd.f32 %v8478, %v8766
    %v8768 = vpop.f32.mrb[0].mxu0
    %v8769 = vpop.f32.mrb[0].mxu0
    %v8770 = vadd.f32 %v8481, %v8769
    %v8771 = vpop.f32.mrb[0].mxu0
    %8772 = vmatprep.mubr.bf16.mxu0 0
    %8773 = vmatmul.mubr.bf16.gmra.mrb[0].mxu0 %v8276
    %v8774 = vpop.f32.mrb[0].mxu0
    %v8775 = vadd.f32 %v8486, %v8774
    %v8776 = vpop.f32.mrb[0].mxu0
    %v8777 = vpop.f32.mrb[0].mxu0
    %v8778 = vadd.f32 %v8489, %v8777
    %v8779 = vpop.f32.mrb[0].mxu0
    %8780 = vmatprep.mubr.bf16.mxu0 0
    %8781 = vmatmul.mubr.bf16.gmra.mrb[0].mxu0 %v8279
    %v8782 = vpop.f32.mrb[0].mxu0
    %v8783 = vadd.f32 %v8494, %v8782
    %v8784 = vpop.f32.mrb[0].mxu0
    %v8785 = vpop.f32.mrb[0].mxu0
    %v8786 = vadd.f32 %v8497, %v8785
    %v8787 = vpop.f32.mrb[0].mxu0
    %8788 = vmatprep.mubr.bf16.mxu0 0
    %8789 = vmatmul.mubr.bf16.gmra.mrb[0].mxu0 %v8282
    %v8790 = vpop.f32.mrb[0].mxu0
    %v8791 = vadd.f32 %v8502, %v8790
    %v8792 = vpop.f32.mrb[0].mxu0
    %v8793 = vpop.f32.mrb[0].mxu0
    %v8794 = vadd.f32 %v8505, %v8793
    %v8795 = vpop.f32.mrb[0].mxu0
    %8796 = vmatprep.mubr.bf16.mxu0 0
    %8797 = vmatmul.mubr.bf16.gmra.mrb[0].mxu0 %v8285
    %v8798 = vpop.f32.mrb[0].mxu0
    %v8799 = vadd.f32 %v8510, %v8798
    %v8800 = vpop.f32.mrb[0].mxu0
    %v8801 = vpop.f32.mrb[0].mxu0
    %v8802 = vadd.f32 %v8513, %v8801
    %v8803 = vpop.f32.mrb[0].mxu0
    %8804 = vmatprep.mubr.bf16.mxu0 0
    %8805 = vmatmul.mubr.bf16.gmra.mrb[0].mxu0 %v8288
    %v8806 = vpop.f32.mrb[0].mxu0
    %v8807 = vadd.f32 %v8518, %v8806
    %v8808 = vpop.f32.mrb[0].mxu0
    %v8809 = vpop.f32.mrb[0].mxu0
    %v8810 = vadd.f32 %v8521, %v8809
    %v8811 = vpop.f32.mrb[0].mxu0
    %8812 = vmatprep.mubr.bf16.mxu0 0
    %8813 = vmatmul.mubr.bf16.gmra.mrb[0].mxu0 %v8291
    %v8814 = vpop.f32.mrb[0].mxu0
    %v8815 = vadd.f32 %v8526, %v8814
    %v8816 = vpop.f32.mrb[0].mxu0
    %v8817 = vpop.f32.mrb[0].mxu0
    %v8818 = vadd.f32 %v8529, %v8817
    %v8819 = vpop.f32.mrb[0].mxu0
    %8820 = vmatprep.mubr.bf16.mxu0 0
    %8821 = vmatmul.mubr.bf16.gmra.mrb[0].mxu0 %v8294
    %v8822 = vpop.f32.mrb[0].mxu0
    %v8823 = vadd.f32 %v8534, %v8822
    %v8824 = vpop.f32.mrb[0].mxu0
    %v8825 = vpop.f32.mrb[0].mxu0
    %v8826 = vadd.f32 %v8537, %v8825
    %v8827 = vpop.f32.mrb[0].mxu0
    %8828 = vmatprep.mubr.bf16.mxu0 0
    %8829 = vmatmul.mubr.bf16.gmra.mrb[0].mxu0 %v8297
    %v8830 = vpop.f32.mrb[0].mxu0
    %v8831 = vadd.f32 %v8542, %v8830
    %v8832 = vpop.f32.mrb[0].mxu0
    %v8833 = vpop.f32.mrb[0].mxu0
    %v8834 = vadd.f32 %v8545, %v8833
    %v8835 = vpop.f32.mrb[0].mxu0
    %8836 = vmatprep.mubr.bf16.mxu0 0
    %8837 = vmatmul.mubr.bf16.gmra.mrb[0].mxu0 %v8300
    %v8838 = vpop.f32.mrb[0].mxu0
    %v8839 = vadd.f32 %v8550, %v8838
    %v8840 = vpop.f32.mrb[0].mxu0
    %v8841 = vpop.f32.mrb[0].mxu0
    %v8842 = vadd.f32 %v8553, %v8841
    %v8843 = vpop.f32.mrb[0].mxu0
    %8844 = vmatprep.mubr.bf16.mxu0 0
    %8845 = vmatmul.mubr.bf16.gmra.mrb[0].mxu0 %v8303
    %v8846 = vpop.f32.mrb[0].mxu0
    %v8847 = vadd.f32 %v8558, %v8846
    %v8848 = vpop.f32.mrb[0].mxu0
    %v8849 = vpop.f32.mrb[0].mxu0
    %v8850 = vadd.f32 %v8561, %v8849
    %v8851 = vpop.f32.mrb[0].mxu0
    %8852 = vmatprep.mubr.bf16.mxu0 0
    %8853 = vmatmul.mubr.bf16.gmra.mrb[0].mxu0 %v8306
    %v8854 = vpop.f32.mrb[0].mxu0
    %v8855 = vadd.f32 %v8566, %v8854
    %v8856 = vpop.f32.mrb[0].mxu0
    %v8857 = vpop.f32.mrb[0].mxu0
    %v8858 = vadd.f32 %v8569, %v8857
    %v8859 = vpop.f32.mrb[0].mxu0
    %8860 = vmatprep.mubr.bf16.mxu0 0
    %8861 = vmatmul.mubr.bf16.gmra.mrb[0].mxu0 %v8309
    %v8862 = vpop.f32.mrb[0].mxu0
    %v8863 = vadd.f32 %v8574, %v8862
    %v8864 = vpop.f32.mrb[0].mxu0
    %v8865 = vpop.f32.mrb[0].mxu0
    %v8866 = vadd.f32 %v8577, %v8865
    %v8867 = vpop.f32.mrb[0].mxu0
    %8868 = vmatprep.mubr.bf16.mxu0 0
    %8869 = vmatmul.mubr.bf16.gmra.mrb[0].mxu0 %v8312
    %v8870 = vpop.f32.mrb[0].mxu0
    %v8871 = vadd.f32 %v8582, %v8870
    %v8872 = vpop.f32.mrb[0].mxu0
    %v8873 = vpop.f32.mrb[0].mxu0
    %v8874 = vadd.f32 %v8585, %v8873
    %v8875 = vpop.f32.mrb[0].mxu0
    %8876 = vmatprep.mubr.bf16.mxu0 0
    %8877 = vmatmul.mubr.bf16.gmra.mrb[0].mxu0 %v8315
    %v8878 = vpop.f32.mrb[0].mxu0
    %v8879 = vadd.f32 %v8590, %v8878
    %v8880 = vpop.f32.mrb[0].mxu0
    %v8881 = vpop.f32.mrb[0].mxu0
    %v8882 = vadd.f32 %v8593, %v8881
    %v8883 = vpop.f32.mrb[0].mxu0
    %8884 = vmatprep.mubr.bf16.mxu0 0
    %8885 = vmatmul.mubr.bf16.gmra.mrb[0].mxu0 %v8318
    %v8886 = vpop.f32.mrb[0].mxu0
    %v8887 = vadd.f32 %v8598, %v8886
    %v8888 = vpop.f32.mrb[0].mxu0
    %v8889 = vpop.f32.mrb[0].mxu0
    %v8890 = vadd.f32 %v8601, %v8889
    %v8891 = vpop.f32.mrb[0].mxu0
    %8892 = vmatprep.mubr.bf16.mxu0 0
    %8893 = vmatmul.mubr.bf16.gmra.mrb[0].mxu0 %v8321
    %v8894 = vpop.f32.mrb[0].mxu0
    %v8895 = vadd.f32 %v8606, %v8894
    %v8896 = vpop.f32.mrb[0].mxu0
    %v8897 = vpop.f32.mrb[0].mxu0
    %v8898 = vadd.f32 %v8609, %v8897
    %v8899 = vpop.f32.mrb[0].mxu0
    %8900 = vdwg.mxu0
    %v8901 = vld [vmem:[%s3] sm:$0x1]
    %v8903 = vlaneseq
    %v8904 = vshrl.u32 %v8903, 7
    %v8905 = vsub.s32 0, %v8904
    %v8906 = vrot.slane %v8901, %v8905
    %v8908 = vadd.f32 %v8647, %v8906
    %v8909 = vadd.f32 %v8650, %v8906
    %v8910 = vadd.f32 %v8655, %v8906
    %v8911 = vadd.f32 %v8658, %v8906
    %v8912 = vadd.f32 %v8663, %v8906
    %v8913 = vadd.f32 %v8666, %v8906
    %v8914 = vadd.f32 %v8671, %v8906
    %v8915 = vadd.f32 %v8674, %v8906
    %v8916 = vadd.f32 %v8679, %v8906
    %v8917 = vadd.f32 %v8682, %v8906
    %v8918 = vadd.f32 %v8687, %v8906
    %v8919 = vadd.f32 %v8690, %v8906
    %v8920 = vadd.f32 %v8695, %v8906
    %v8921 = vadd.f32 %v8698, %v8906
    %v8922 = vadd.f32 %v8703, %v8906
    %v8923 = vadd.f32 %v8706, %v8906
    %v8924 = vadd.f32 %v8711, %v8906
    %v8925 = vadd.f32 %v8714, %v8906
    %v8926 = vadd.f32 %v8719, %v8906
    %v8927 = vadd.f32 %v8722, %v8906
    %v8928 = vadd.f32 %v8727, %v8906
    %v8929 = vadd.f32 %v8730, %v8906
    %v8930 = vadd.f32 %v8735, %v8906
    %v8931 = vadd.f32 %v8738, %v8906
    %v8932 = vadd.f32 %v8743, %v8906
    %v8933 = vadd.f32 %v8746, %v8906
    %v8934 = vadd.f32 %v8751, %v8906
    %v8935 = vadd.f32 %v8754, %v8906
    %v8936 = vadd.f32 %v8759, %v8906
    %v8937 = vadd.f32 %v8762, %v8906
    %v8938 = vadd.f32 %v8767, %v8906
    %v8939 = vadd.f32 %v8770, %v8906
    %v8940 = vadd.f32 %v8775, %v8906
    %v8941 = vadd.f32 %v8778, %v8906
    %v8942 = vadd.f32 %v8783, %v8906
    %v8943 = vadd.f32 %v8786, %v8906
    %v8944 = vadd.f32 %v8791, %v8906
    %v8945 = vadd.f32 %v8794, %v8906
    %v8946 = vadd.f32 %v8799, %v8906
    %v8947 = vadd.f32 %v8802, %v8906
    %v8948 = vadd.f32 %v8807, %v8906
    %v8949 = vadd.f32 %v8810, %v8906
    %v8950 = vadd.f32 %v8815, %v8906
    %v8951 = vadd.f32 %v8818, %v8906
    %v8952 = vadd.f32 %v8823, %v8906
    %v8953 = vadd.f32 %v8826, %v8906
    %v8954 = vadd.f32 %v8831, %v8906
    %v8955 = vadd.f32 %v8834, %v8906
    %v8956 = vadd.f32 %v8839, %v8906
    %v8957 = vadd.f32 %v8842, %v8906
    %v8958 = vadd.f32 %v8847, %v8906
    %v8959 = vadd.f32 %v8850, %v8906
    %v8960 = vadd.f32 %v8855, %v8906
    %v8961 = vadd.f32 %v8858, %v8906
    %v8962 = vadd.f32 %v8863, %v8906
    %v8963 = vadd.f32 %v8866, %v8906
    %v8964 = vadd.f32 %v8871, %v8906
    %v8965 = vadd.f32 %v8874, %v8906
    %v8966 = vadd.f32 %v8879, %v8906
    %v8967 = vadd.f32 %v8882, %v8906
    %v8968 = vadd.f32 %v8887, %v8906
    %v8969 = vadd.f32 %v8890, %v8906
    %v8970 = vadd.f32 %v8895, %v8906
    %v8971 = vadd.f32 %v8898, %v8906
    %v8972 = vcombine.low %v8908, %v8912
    %v8973 = vcombine.high %v8908, %v8912
    %v8975 = vunpack.c.l.s4 1983009808
    %v8976 = vunpack.c.0.s8 %v8975
    %v8977 = vlaneseq
    %v8978 = vshrl.u32 %v8977, 7
    %v8979 = vsub.s32 %v8976, %v8978
    %v8980 = vrot.slane %v8972, %v8979
    %v8982 = vunpack.c.l.s4 1983009808
    %v8983 = vunpack.c.0.s8 %v8982
    %v8984 = vlaneseq
    %v8985 = vshrl.u32 %v8984, 7
    %v8986 = vsub.s32 %v8983, %v8985
    %v8987 = vrot.slane %v8973, %v8986
    %v8988 = vcombine.low %v8910, %v8914
    %v8989 = vcombine.high %v8910, %v8914
    %v8991 = vunpack.c.l.s4 1983009808
    %v8992 = vunpack.c.0.s8 %v8991
    %v8993 = vlaneseq
    %v8994 = vshrl.u32 %v8993, 7
    %v8995 = vsub.s32 %v8992, %v8994
    %v8996 = vrot.slane %v8988, %v8995
    %v8998 = vunpack.c.l.s4 1983009808
    %v8999 = vunpack.c.0.s8 %v8998
    %v9000 = vlaneseq
    %v9001 = vshrl.u32 %v9000, 7
    %v9002 = vsub.s32 %v8999, %v9001
    %v9003 = vrot.slane %v8989, %v9002
    %v9004 = vcombine.low %v8916, %v8920
    %v9005 = vcombine.high %v8916, %v8920
    %v9007 = vunpack.c.l.s4 1983009808
    %v9008 = vunpack.c.0.s8 %v9007
    %v9009 = vlaneseq
    %v9010 = vshrl.u32 %v9009, 7
    %v9011 = vsub.s32 %v9008, %v9010
    %v9012 = vrot.slane %v9004, %v9011
    %v9014 = vunpack.c.l.s4 1983009808
    %v9015 = vunpack.c.0.s8 %v9014
    %v9016 = vlaneseq
    %v9017 = vshrl.u32 %v9016, 7
    %v9018 = vsub.s32 %v9015, %v9017
    %v9019 = vrot.slane %v9005, %v9018
    %v9020 = vcombine.low %v8918, %v8922
    %v9021 = vcombine.high %v8918, %v8922
    %v9023 = vunpack.c.l.s4 1983009808
    %v9024 = vunpack.c.0.s8 %v9023
    %v9025 = vlaneseq
    %v9026 = vshrl.u32 %v9025, 7
    %v9027 = vsub.s32 %v9024, %v9026
    %v9028 = vrot.slane %v9020, %v9027
    %v9030 = vunpack.c.l.s4 1983009808
    %v9031 = vunpack.c.0.s8 %v9030
    %v9032 = vlaneseq
    %v9033 = vshrl.u32 %v9032, 7
    %v9034 = vsub.s32 %v9031, %v9033
    %v9035 = vrot.slane %v9021, %v9034
    %v9036 = vcombine.low %v8980, %v8996
    %v9037 = vcombine.high %v8980, %v8996
    %v9039 = vunpack.c.l.s4 1934713408
    %v9040 = vunpack.c.0.s8 %v9039
    %v9041 = vlaneseq
    %v9042 = vshrl.u32 %v9041, 7
    %v9043 = vsub.s32 %v9040, %v9042
    %v9044 = vrot.slane %v9036, %v9043
    %v9046 = vunpack.c.l.s4 1934713408
    %v9047 = vunpack.c.0.s8 %v9046
    %v9048 = vlaneseq
    %v9049 = vshrl.u32 %v9048, 7
    %v9050 = vsub.s32 %v9047, %v9049
    %v9051 = vrot.slane %v9037, %v9050
    %v9052 = vcombine.low %v8987, %v9003
    %v9053 = vcombine.high %v8987, %v9003
    %v9055 = vunpack.c.l.s4 1934713408
    %v9056 = vunpack.c.0.s8 %v9055
    %v9057 = vlaneseq
    %v9058 = vshrl.u32 %v9057, 7
    %v9059 = vsub.s32 %v9056, %v9058
    %v9060 = vrot.slane %v9052, %v9059
    %v9062 = vunpack.c.l.s4 1934713408
    %v9063 = vunpack.c.0.s8 %v9062
    %v9064 = vlaneseq
    %v9065 = vshrl.u32 %v9064, 7
    %v9066 = vsub.s32 %v9063, %v9065
    %v9067 = vrot.slane %v9053, %v9066
    %v9068 = vcombine.low %v9012, %v9028
    %v9069 = vcombine.high %v9012, %v9028
    %v9071 = vunpack.c.l.s4 1934713408
    %v9072 = vunpack.c.0.s8 %v9071
    %v9073 = vlaneseq
    %v9074 = vshrl.u32 %v9073, 7
    %v9075 = vsub.s32 %v9072, %v9074
    %v9076 = vrot.slane %v9068, %v9075
    %v9078 = vunpack.c.l.s4 1934713408
    %v9079 = vunpack.c.0.s8 %v9078
    %v9080 = vlaneseq
    %v9081 = vshrl.u32 %v9080, 7
    %v9082 = vsub.s32 %v9079, %v9081
    %v9083 = vrot.slane %v9069, %v9082
    %v9084 = vcombine.low %v9019, %v9035
    %v9085 = vcombine.high %v9019, %v9035
    %v9087 = vunpack.c.l.s4 1934713408
    %v9088 = vunpack.c.0.s8 %v9087
    %v9089 = vlaneseq
    %v9090 = vshrl.u32 %v9089, 7
    %v9091 = vsub.s32 %v9088, %v9090
    %v9092 = vrot.slane %v9084, %v9091
    %v9094 = vunpack.c.l.s4 1934713408
    %v9095 = vunpack.c.0.s8 %v9094
    %v9096 = vlaneseq
    %v9097 = vshrl.u32 %v9096, 7
    %v9098 = vsub.s32 %v9095, %v9097
    %v9099 = vrot.slane %v9085, %v9098
    %v9100 = vcombine.low %v9044, %v9076
    %v9101 = vcombine.high %v9044, %v9076
    %v9102 = vcombine.low %v9051, %v9083
    %v9103 = vcombine.high %v9051, %v9083
    %v9104 = vcombine.low %v9060, %v9092
    %v9105 = vcombine.high %v9060, %v9092
    %v9106 = vcombine.low %v9067, %v9099
    %v9107 = vcombine.high %v9067, %v9099
    %v9108 = vcombine.low %v8924, %v8928
    %v9109 = vcombine.high %v8924, %v8928
    %v9111 = vunpack.c.l.s4 1983009808
    %v9112 = vunpack.c.0.s8 %v9111
    %v9113 = vlaneseq
    %v9114 = vshrl.u32 %v9113, 7
    %v9115 = vsub.s32 %v9112, %v9114
    %v9116 = vrot.slane %v9108, %v9115
    %v9118 = vunpack.c.l.s4 1983009808
    %v9119 = vunpack.c.0.s8 %v9118
    %v9120 = vlaneseq
    %v9121 = vshrl.u32 %v9120, 7
    %v9122 = vsub.s32 %v9119, %v9121
    %v9123 = vrot.slane %v9109, %v9122
    %v9124 = vcombine.low %v8926, %v8930
    %v9125 = vcombine.high %v8926, %v8930
    %v9127 = vunpack.c.l.s4 1983009808
    %v9128 = vunpack.c.0.s8 %v9127
    %v9129 = vlaneseq
    %v9130 = vshrl.u32 %v9129, 7
    %v9131 = vsub.s32 %v9128, %v9130
    %v9132 = vrot.slane %v9124, %v9131
    %v9134 = vunpack.c.l.s4 1983009808
    %v9135 = vunpack.c.0.s8 %v9134
    %v9136 = vlaneseq
    %v9137 = vshrl.u32 %v9136, 7
    %v9138 = vsub.s32 %v9135, %v9137
    %v9139 = vrot.slane %v9125, %v9138
    %v9140 = vcombine.low %v8932, %v8936
    %v9141 = vcombine.high %v8932, %v8936
    %v9143 = vunpack.c.l.s4 1983009808
    %v9144 = vunpack.c.0.s8 %v9143
    %v9145 = vlaneseq
    %v9146 = vshrl.u32 %v9145, 7
    %v9147 = vsub.s32 %v9144, %v9146
    %v9148 = vrot.slane %v9140, %v9147
    %v9150 = vunpack.c.l.s4 1983009808
    %v9151 = vunpack.c.0.s8 %v9150
    %v9152 = vlaneseq
    %v9153 = vshrl.u32 %v9152, 7
    %v9154 = vsub.s32 %v9151, %v9153
    %v9155 = vrot.slane %v9141, %v9154
    %v9156 = vcombine.low %v8934, %v8938
    %v9157 = vcombine.high %v8934, %v8938
    %v9159 = vunpack.c.l.s4 1983009808
    %v9160 = vunpack.c.0.s8 %v9159
    %v9161 = vlaneseq
    %v9162 = vshrl.u32 %v9161, 7
    %v9163 = vsub.s32 %v9160, %v9162
    %v9164 = vrot.slane %v9156, %v9163
    %v9166 = vunpack.c.l.s4 1983009808
    %v9167 = vunpack.c.0.s8 %v9166
    %v9168 = vlaneseq
    %v9169 = vshrl.u32 %v9168, 7
    %v9170 = vsub.s32 %v9167, %v9169
    %v9171 = vrot.slane %v9157, %v9170
    %v9172 = vcombine.low %v9116, %v9132
    %v9173 = vcombine.high %v9116, %v9132
    %v9175 = vunpack.c.l.s4 1934713408
    %v9176 = vunpack.c.0.s8 %v9175
    %v9177 = vlaneseq
    %v9178 = vshrl.u32 %v9177, 7
    %v9179 = vsub.s32 %v9176, %v9178
    %v9180 = vrot.slane %v9172, %v9179
    %v9182 = vunpack.c.l.s4 1934713408
    %v9183 = vunpack.c.0.s8 %v9182
    %v9184 = vlaneseq
    %v9185 = vshrl.u32 %v9184, 7
    %v9186 = vsub.s32 %v9183, %v9185
    %v9187 = vrot.slane %v9173, %v9186
    %v9188 = vcombine.low %v9123, %v9139
    %v9189 = vcombine.high %v9123, %v9139
    %v9191 = vunpack.c.l.s4 1934713408
    %v9192 = vunpack.c.0.s8 %v9191
    %v9193 = vlaneseq
    %v9194 = vshrl.u32 %v9193, 7
    %v9195 = vsub.s32 %v9192, %v9194
    %v9196 = vrot.slane %v9188, %v9195
    %v9198 = vunpack.c.l.s4 1934713408
    %v9199 = vunpack.c.0.s8 %v9198
    %v9200 = vlaneseq
    %v9201 = vshrl.u32 %v9200, 7
    %v9202 = vsub.s32 %v9199, %v9201
    %v9203 = vrot.slane %v9189, %v9202
    %v9204 = vcombine.low %v9148, %v9164
    %v9205 = vcombine.high %v9148, %v9164
    %v9207 = vunpack.c.l.s4 1934713408
    %v9208 = vunpack.c.0.s8 %v9207
    %v9209 = vlaneseq
    %v9210 = vshrl.u32 %v9209, 7
    %v9211 = vsub.s32 %v9208, %v9210
    %v9212 = vrot.slane %v9204, %v9211
    %v9214 = vunpack.c.l.s4 1934713408
    %v9215 = vunpack.c.0.s8 %v9214
    %v9216 = vlaneseq
    %v9217 = vshrl.u32 %v9216, 7
    %v9218 = vsub.s32 %v9215, %v9217
    %v9219 = vrot.slane %v9205, %v9218
    %v9220 = vcombine.low %v9155, %v9171
    %v9221 = vcombine.high %v9155, %v9171
    %v9223 = vunpack.c.l.s4 1934713408
    %v9224 = vunpack.c.0.s8 %v9223
    %v9225 = vlaneseq
    %v9226 = vshrl.u32 %v9225, 7
    %v9227 = vsub.s32 %v9224, %v9226
    %v9228 = vrot.slane %v9220, %v9227
    %v9230 = vunpack.c.l.s4 1934713408
    %v9231 = vunpack.c.0.s8 %v9230
    %v9232 = vlaneseq
    %v9233 = vshrl.u32 %v9232, 7
    %v9234 = vsub.s32 %v9231, %v9233
    %v9235 = vrot.slane %v9221, %v9234
    %v9236 = vcombine.low %v9180, %v9212
    %v9237 = vcombine.high %v9180, %v9212
    %v9238 = vcombine.low %v9187, %v9219
    %v9239 = vcombine.high %v9187, %v9219
    %v9240 = vcombine.low %v9196, %v9228
    %v9241 = vcombine.high %v9196, %v9228
    %v9242 = vcombine.low %v9203, %v9235
    %v9243 = vcombine.high %v9203, %v9235
    %v9244 = vcombine.low %v8940, %v8944
    %v9245 = vcombine.high %v8940, %v8944
    %v9247 = vunpack.c.l.s4 1983009808
    %v9248 = vunpack.c.0.s8 %v9247
    %v9249 = vlaneseq
    %v9250 = vshrl.u32 %v9249, 7
    %v9251 = vsub.s32 %v9248, %v9250
    %v9252 = vrot.slane %v9244, %v9251
    %v9254 = vunpack.c.l.s4 1983009808
    %v9255 = vunpack.c.0.s8 %v9254
    %v9256 = vlaneseq
    %v9257 = vshrl.u32 %v9256, 7
    %v9258 = vsub.s32 %v9255, %v9257
    %v9259 = vrot.slane %v9245, %v9258
    %v9260 = vcombine.low %v8942, %v8946
    %v9261 = vcombine.high %v8942, %v8946
    %v9263 = vunpack.c.l.s4 1983009808
    %v9264 = vunpack.c.0.s8 %v9263
    %v9265 = vlaneseq
    %v9266 = vshrl.u32 %v9265, 7
    %v9267 = vsub.s32 %v9264, %v9266
    %v9268 = vrot.slane %v9260, %v9267
    %v9270 = vunpack.c.l.s4 1983009808
    %v9271 = vunpack.c.0.s8 %v9270
    %v9272 = vlaneseq
    %v9273 = vshrl.u32 %v9272, 7
    %v9274 = vsub.s32 %v9271, %v9273
    %v9275 = vrot.slane %v9261, %v9274
    %v9276 = vcombine.low %v8948, %v8952
    %v9277 = vcombine.high %v8948, %v8952
    %v9279 = vunpack.c.l.s4 1983009808
    %v9280 = vunpack.c.0.s8 %v9279
    %v9281 = vlaneseq
    %v9282 = vshrl.u32 %v9281, 7
    %v9283 = vsub.s32 %v9280, %v9282
    %v9284 = vrot.slane %v9276, %v9283
    %v9286 = vunpack.c.l.s4 1983009808
    %v9287 = vunpack.c.0.s8 %v9286
    %v9288 = vlaneseq
    %v9289 = vshrl.u32 %v9288, 7
    %v9290 = vsub.s32 %v9287, %v9289
    %v9291 = vrot.slane %v9277, %v9290
    %v9292 = vcombine.low %v8950, %v8954
    %v9293 = vcombine.high %v8950, %v8954
    %v9295 = vunpack.c.l.s4 1983009808
    %v9296 = vunpack.c.0.s8 %v9295
    %v9297 = vlaneseq
    %v9298 = vshrl.u32 %v9297, 7
    %v9299 = vsub.s32 %v9296, %v9298
    %v9300 = vrot.slane %v9292, %v9299
    %v9302 = vunpack.c.l.s4 1983009808
    %v9303 = vunpack.c.0.s8 %v9302
    %v9304 = vlaneseq
    %v9305 = vshrl.u32 %v9304, 7
    %v9306 = vsub.s32 %v9303, %v9305
    %v9307 = vrot.slane %v9293, %v9306
    %v9308 = vcombine.low %v9252, %v9268
    %v9309 = vcombine.high %v9252, %v9268
    %v9311 = vunpack.c.l.s4 1934713408
    %v9312 = vunpack.c.0.s8 %v9311
    %v9313 = vlaneseq
    %v9314 = vshrl.u32 %v9313, 7
    %v9315 = vsub.s32 %v9312, %v9314
    %v9316 = vrot.slane %v9308, %v9315
    %v9318 = vunpack.c.l.s4 1934713408
    %v9319 = vunpack.c.0.s8 %v9318
    %v9320 = vlaneseq
    %v9321 = vshrl.u32 %v9320, 7
    %v9322 = vsub.s32 %v9319, %v9321
    %v9323 = vrot.slane %v9309, %v9322
    %v9324 = vcombine.low %v9259, %v9275
    %v9325 = vcombine.high %v9259, %v9275
    %v9327 = vunpack.c.l.s4 1934713408
    %v9328 = vunpack.c.0.s8 %v9327
    %v9329 = vlaneseq
    %v9330 = vshrl.u32 %v9329, 7
    %v9331 = vsub.s32 %v9328, %v9330
    %v9332 = vrot.slane %v9324, %v9331
    %v9334 = vunpack.c.l.s4 1934713408
    %v9335 = vunpack.c.0.s8 %v9334
    %v9336 = vlaneseq
    %v9337 = vshrl.u32 %v9336, 7
    %v9338 = vsub.s32 %v9335, %v9337
    %v9339 = vrot.slane %v9325, %v9338
    %v9340 = vcombine.low %v9284, %v9300
    %v9341 = vcombine.high %v9284, %v9300
    %v9343 = vunpack.c.l.s4 1934713408
    %v9344 = vunpack.c.0.s8 %v9343
    %v9345 = vlaneseq
    %v9346 = vshrl.u32 %v9345, 7
    %v9347 = vsub.s32 %v9344, %v9346
    %v9348 = vrot.slane %v9340, %v9347
    %v9350 = vunpack.c.l.s4 1934713408
    %v9351 = vunpack.c.0.s8 %v9350
    %v9352 = vlaneseq
    %v9353 = vshrl.u32 %v9352, 7
    %v9354 = vsub.s32 %v9351, %v9353
    %v9355 = vrot.slane %v9341, %v9354
    %v9356 = vcombine.low %v9291, %v9307
    %v9357 = vcombine.high %v9291, %v9307
    %v9359 = vunpack.c.l.s4 1934713408
    %v9360 = vunpack.c.0.s8 %v9359
    %v9361 = vlaneseq
    %v9362 = vshrl.u32 %v9361, 7
    %v9363 = vsub.s32 %v9360, %v9362
    %v9364 = vrot.slane %v9356, %v9363
    %v9366 = vunpack.c.l.s4 1934713408
    %v9367 = vunpack.c.0.s8 %v9366
    %v9368 = vlaneseq
    %v9369 = vshrl.u32 %v9368, 7
    %v9370 = vsub.s32 %v9367, %v9369
    %v9371 = vrot.slane %v9357, %v9370
    %v9372 = vcombine.low %v9316, %v9348
    %v9373 = vcombine.high %v9316, %v9348
    %v9374 = vcombine.low %v9323, %v9355
    %v9375 = vcombine.high %v9323, %v9355
    %v9376 = vcombine.low %v9332, %v9364
    %v9377 = vcombine.high %v9332, %v9364
    %v9378 = vcombine.low %v9339, %v9371
    %v9379 = vcombine.high %v9339, %v9371
    %v9380 = vcombine.low %v8956, %v8960
    %v9381 = vcombine.high %v8956, %v8960
    %v9383 = vunpack.c.l.s4 1983009808
    %v9384 = vunpack.c.0.s8 %v9383
    %v9385 = vlaneseq
    %v9386 = vshrl.u32 %v9385, 7
    %v9387 = vsub.s32 %v9384, %v9386
    %v9388 = vrot.slane %v9380, %v9387
    %v9390 = vunpack.c.l.s4 1983009808
    %v9391 = vunpack.c.0.s8 %v9390
    %v9392 = vlaneseq
    %v9393 = vshrl.u32 %v9392, 7
    %v9394 = vsub.s32 %v9391, %v9393
    %v9395 = vrot.slane %v9381, %v9394
    %v9396 = vcombine.low %v8958, %v8962
    %v9397 = vcombine.high %v8958, %v8962
    %v9399 = vunpack.c.l.s4 1983009808
    %v9400 = vunpack.c.0.s8 %v9399
    %v9401 = vlaneseq
    %v9402 = vshrl.u32 %v9401, 7
    %v9403 = vsub.s32 %v9400, %v9402
    %v9404 = vrot.slane %v9396, %v9403
    %v9406 = vunpack.c.l.s4 1983009808
    %v9407 = vunpack.c.0.s8 %v9406
    %v9408 = vlaneseq
    %v9409 = vshrl.u32 %v9408, 7
    %v9410 = vsub.s32 %v9407, %v9409
    %v9411 = vrot.slane %v9397, %v9410
    %v9412 = vcombine.low %v8964, %v8968
    %v9413 = vcombine.high %v8964, %v8968
    %v9415 = vunpack.c.l.s4 1983009808
    %v9416 = vunpack.c.0.s8 %v9415
    %v9417 = vlaneseq
    %v9418 = vshrl.u32 %v9417, 7
    %v9419 = vsub.s32 %v9416, %v9418
    %v9420 = vrot.slane %v9412, %v9419
    %v9422 = vunpack.c.l.s4 1983009808
    %v9423 = vunpack.c.0.s8 %v9422
    %v9424 = vlaneseq
    %v9425 = vshrl.u32 %v9424, 7
    %v9426 = vsub.s32 %v9423, %v9425
    %v9427 = vrot.slane %v9413, %v9426
    %v9428 = vcombine.low %v8966, %v8970
    %v9429 = vcombine.high %v8966, %v8970
    %v9431 = vunpack.c.l.s4 1983009808
    %v9432 = vunpack.c.0.s8 %v9431
    %v9433 = vlaneseq
    %v9434 = vshrl.u32 %v9433, 7
    %v9435 = vsub.s32 %v9432, %v9434
    %v9436 = vrot.slane %v9428, %v9435
    %v9438 = vunpack.c.l.s4 1983009808
    %v9439 = vunpack.c.0.s8 %v9438
    %v9440 = vlaneseq
    %v9441 = vshrl.u32 %v9440, 7
    %v9442 = vsub.s32 %v9439, %v9441
    %v9443 = vrot.slane %v9429, %v9442
    %v9444 = vcombine.low %v9388, %v9404
    %v9445 = vcombine.high %v9388, %v9404
    %v9447 = vunpack.c.l.s4 1934713408
    %v9448 = vunpack.c.0.s8 %v9447
    %v9449 = vlaneseq
    %v9450 = vshrl.u32 %v9449, 7
    %v9451 = vsub.s32 %v9448, %v9450
    %v9452 = vrot.slane %v9444, %v9451
    %v9454 = vunpack.c.l.s4 1934713408
    %v9455 = vunpack.c.0.s8 %v9454
    %v9456 = vlaneseq
    %v9457 = vshrl.u32 %v9456, 7
    %v9458 = vsub.s32 %v9455, %v9457
    %v9459 = vrot.slane %v9445, %v9458
    %v9460 = vcombine.low %v9395, %v9411
    %v9461 = vcombine.high %v9395, %v9411
    %v9463 = vunpack.c.l.s4 1934713408
    %v9464 = vunpack.c.0.s8 %v9463
    %v9465 = vlaneseq
    %v9466 = vshrl.u32 %v9465, 7
    %v9467 = vsub.s32 %v9464, %v9466
    %v9468 = vrot.slane %v9460, %v9467
    %v9470 = vunpack.c.l.s4 1934713408
    %v9471 = vunpack.c.0.s8 %v9470
    %v9472 = vlaneseq
    %v9473 = vshrl.u32 %v9472, 7
    %v9474 = vsub.s32 %v9471, %v9473
    %v9475 = vrot.slane %v9461, %v9474
    %v9476 = vcombine.low %v9420, %v9436
    %v9477 = vcombine.high %v9420, %v9436
    %v9479 = vunpack.c.l.s4 1934713408
    %v9480 = vunpack.c.0.s8 %v9479
    %v9481 = vlaneseq
    %v9482 = vshrl.u32 %v9481, 7
    %v9483 = vsub.s32 %v9480, %v9482
    %v9484 = vrot.slane %v9476, %v9483
    %v9486 = vunpack.c.l.s4 1934713408
    %v9487 = vunpack.c.0.s8 %v9486
    %v9488 = vlaneseq
    %v9489 = vshrl.u32 %v9488, 7
    %v9490 = vsub.s32 %v9487, %v9489
    %v9491 = vrot.slane %v9477, %v9490
    %v9492 = vcombine.low %v9427, %v9443
    %v9493 = vcombine.high %v9427, %v9443
    %v9495 = vunpack.c.l.s4 1934713408
    %v9496 = vunpack.c.0.s8 %v9495
    %v9497 = vlaneseq
    %v9498 = vshrl.u32 %v9497, 7
    %v9499 = vsub.s32 %v9496, %v9498
    %v9500 = vrot.slane %v9492, %v9499
    %v9502 = vunpack.c.l.s4 1934713408
    %v9503 = vunpack.c.0.s8 %v9502
    %v9504 = vlaneseq
    %v9505 = vshrl.u32 %v9504, 7
    %v9506 = vsub.s32 %v9503, %v9505
    %v9507 = vrot.slane %v9493, %v9506
    %v9508 = vcombine.low %v9452, %v9484
    %v9509 = vcombine.high %v9452, %v9484
    %v9510 = vcombine.low %v9459, %v9491
    %v9511 = vcombine.high %v9459, %v9491
    %v9512 = vcombine.low %v9468, %v9500
    %v9513 = vcombine.high %v9468, %v9500
    %v9514 = vcombine.low %v9475, %v9507
    %v9515 = vcombine.high %v9475, %v9507
    %v9516 = vcombine.low %v8909, %v8913
    %v9517 = vcombine.high %v8909, %v8913
    %v9519 = vunpack.c.l.s4 1983009808
    %v9520 = vunpack.c.0.s8 %v9519
    %v9521 = vlaneseq
    %v9522 = vshrl.u32 %v9521, 7
    %v9523 = vsub.s32 %v9520, %v9522
    %v9524 = vrot.slane %v9516, %v9523
    %v9526 = vunpack.c.l.s4 1983009808
    %v9527 = vunpack.c.0.s8 %v9526
    %v9528 = vlaneseq
    %v9529 = vshrl.u32 %v9528, 7
    %v9530 = vsub.s32 %v9527, %v9529
    %v9531 = vrot.slane %v9517, %v9530
    %v9532 = vcombine.low %v8911, %v8915
    %v9533 = vcombine.high %v8911, %v8915
    %v9535 = vunpack.c.l.s4 1983009808
    %v9536 = vunpack.c.0.s8 %v9535
    %v9537 = vlaneseq
    %v9538 = vshrl.u32 %v9537, 7
    %v9539 = vsub.s32 %v9536, %v9538
    %v9540 = vrot.slane %v9532, %v9539
    %v9542 = vunpack.c.l.s4 1983009808
    %v9543 = vunpack.c.0.s8 %v9542
    %v9544 = vlaneseq
    %v9545 = vshrl.u32 %v9544, 7
    %v9546 = vsub.s32 %v9543, %v9545
    %v9547 = vrot.slane %v9533, %v9546
    %v9548 = vcombine.low %v8917, %v8921
    %v9549 = vcombine.high %v8917, %v8921
    %v9551 = vunpack.c.l.s4 1983009808
    %v9552 = vunpack.c.0.s8 %v9551
    %v9553 = vlaneseq
    %v9554 = vshrl.u32 %v9553, 7
    %v9555 = vsub.s32 %v9552, %v9554
    %v9556 = vrot.slane %v9548, %v9555
    %v9558 = vunpack.c.l.s4 1983009808
    %v9559 = vunpack.c.0.s8 %v9558
    %v9560 = vlaneseq
    %v9561 = vshrl.u32 %v9560, 7
    %v9562 = vsub.s32 %v9559, %v9561
    %v9563 = vrot.slane %v9549, %v9562
    %v9564 = vcombine.low %v8919, %v8923
    %v9565 = vcombine.high %v8919, %v8923
    %v9567 = vunpack.c.l.s4 1983009808
    %v9568 = vunpack.c.0.s8 %v9567
    %v9569 = vlaneseq
    %v9570 = vshrl.u32 %v9569, 7
    %v9571 = vsub.s32 %v9568, %v9570
    %v9572 = vrot.slane %v9564, %v9571
    %v9574 = vunpack.c.l.s4 1983009808
    %v9575 = vunpack.c.0.s8 %v9574
    %v9576 = vlaneseq
    %v9577 = vshrl.u32 %v9576, 7
    %v9578 = vsub.s32 %v9575, %v9577
    %v9579 = vrot.slane %v9565, %v9578
    %v9580 = vcombine.low %v9524, %v9540
    %v9581 = vcombine.high %v9524, %v9540
    %v9583 = vunpack.c.l.s4 1934713408
    %v9584 = vunpack.c.0.s8 %v9583
    %v9585 = vlaneseq
    %v9586 = vshrl.u32 %v9585, 7
    %v9587 = vsub.s32 %v9584, %v9586
    %v9588 = vrot.slane %v9580, %v9587
    %v9590 = vunpack.c.l.s4 1934713408
    %v9591 = vunpack.c.0.s8 %v9590
    %v9592 = vlaneseq
    %v9593 = vshrl.u32 %v9592, 7
    %v9594 = vsub.s32 %v9591, %v9593
    %v9595 = vrot.slane %v9581, %v9594
    %v9596 = vcombine.low %v9531, %v9547
    %v9597 = vcombine.high %v9531, %v9547
    %v9599 = vunpack.c.l.s4 1934713408
    %v9600 = vunpack.c.0.s8 %v9599
    %v9601 = vlaneseq
    %v9602 = vshrl.u32 %v9601, 7
    %v9603 = vsub.s32 %v9600, %v9602
    %v9604 = vrot.slane %v9596, %v9603
    %v9606 = vunpack.c.l.s4 1934713408
    %v9607 = vunpack.c.0.s8 %v9606
    %v9608 = vlaneseq
    %v9609 = vshrl.u32 %v9608, 7
    %v9610 = vsub.s32 %v9607, %v9609
    %v9611 = vrot.slane %v9597, %v9610
    %v9612 = vcombine.low %v9556, %v9572
    %v9613 = vcombine.high %v9556, %v9572
    %v9615 = vunpack.c.l.s4 1934713408
    %v9616 = vunpack.c.0.s8 %v9615
    %v9617 = vlaneseq
    %v9618 = vshrl.u32 %v9617, 7
    %v9619 = vsub.s32 %v9616, %v9618
    %v9620 = vrot.slane %v9612, %v9619
    %v9622 = vunpack.c.l.s4 1934713408
    %v9623 = vunpack.c.0.s8 %v9622
    %v9624 = vlaneseq
    %v9625 = vshrl.u32 %v9624, 7
    %v9626 = vsub.s32 %v9623, %v9625
    %v9627 = vrot.slane %v9613, %v9626
    %v9628 = vcombine.low %v9563, %v9579
    %v9629 = vcombine.high %v9563, %v9579
    %v9631 = vunpack.c.l.s4 1934713408
    %v9632 = vunpack.c.0.s8 %v9631
    %v9633 = vlaneseq
    %v9634 = vshrl.u32 %v9633, 7
    %v9635 = vsub.s32 %v9632, %v9634
    %v9636 = vrot.slane %v9628, %v9635
    %v9638 = vunpack.c.l.s4 1934713408
    %v9639 = vunpack.c.0.s8 %v9638
    %v9640 = vlaneseq
    %v9641 = vshrl.u32 %v9640, 7
    %v9642 = vsub.s32 %v9639, %v9641
    %v9643 = vrot.slane %v9629, %v9642
    %v9644 = vcombine.low %v9588, %v9620
    %v9645 = vcombine.high %v9588, %v9620
    %v9646 = vcombine.low %v9595, %v9627
    %v9647 = vcombine.high %v9595, %v9627
    %v9648 = vcombine.low %v9604, %v9636
    %v9649 = vcombine.high %v9604, %v9636
    %v9650 = vcombine.low %v9611, %v9643
    %v9651 = vcombine.high %v9611, %v9643
    %v9652 = vcombine.low %v8925, %v8929
    %v9653 = vcombine.high %v8925, %v8929
    %v9655 = vunpack.c.l.s4 1983009808
    %v9656 = vunpack.c.0.s8 %v9655
    %v9657 = vlaneseq
    %v9658 = vshrl.u32 %v9657, 7
    %v9659 = vsub.s32 %v9656, %v9658
    %v9660 = vrot.slane %v9652, %v9659
    %v9662 = vunpack.c.l.s4 1983009808
    %v9663 = vunpack.c.0.s8 %v9662
    %v9664 = vlaneseq
    %v9665 = vshrl.u32 %v9664, 7
    %v9666 = vsub.s32 %v9663, %v9665
    %v9667 = vrot.slane %v9653, %v9666
    %v9668 = vcombine.low %v8927, %v8931
    %v9669 = vcombine.high %v8927, %v8931
    %v9671 = vunpack.c.l.s4 1983009808
    %v9672 = vunpack.c.0.s8 %v9671
    %v9673 = vlaneseq
    %v9674 = vshrl.u32 %v9673, 7
    %v9675 = vsub.s32 %v9672, %v9674
    %v9676 = vrot.slane %v9668, %v9675
    %v9678 = vunpack.c.l.s4 1983009808
    %v9679 = vunpack.c.0.s8 %v9678
    %v9680 = vlaneseq
    %v9681 = vshrl.u32 %v9680, 7
    %v9682 = vsub.s32 %v9679, %v9681
    %v9683 = vrot.slane %v9669, %v9682
    %v9684 = vcombine.low %v8933, %v8937
    %v9685 = vcombine.high %v8933, %v8937
    %v9687 = vunpack.c.l.s4 1983009808
    %v9688 = vunpack.c.0.s8 %v9687
    %v9689 = vlaneseq
    %v9690 = vshrl.u32 %v9689, 7
    %v9691 = vsub.s32 %v9688, %v9690
    %v9692 = vrot.slane %v9684, %v9691
    %v9694 = vunpack.c.l.s4 1983009808
    %v9695 = vunpack.c.0.s8 %v9694
    %v9696 = vlaneseq
    %v9697 = vshrl.u32 %v9696, 7
    %v9698 = vsub.s32 %v9695, %v9697
    %v9699 = vrot.slane %v9685, %v9698
    %v9700 = vcombine.low %v8935, %v8939
    %v9701 = vcombine.high %v8935, %v8939
    %v9703 = vunpack.c.l.s4 1983009808
    %v9704 = vunpack.c.0.s8 %v9703
    %v9705 = vlaneseq
    %v9706 = vshrl.u32 %v9705, 7
    %v9707 = vsub.s32 %v9704, %v9706
    %v9708 = vrot.slane %v9700, %v9707
    %v9710 = vunpack.c.l.s4 1983009808
    %v9711 = vunpack.c.0.s8 %v9710
    %v9712 = vlaneseq
    %v9713 = vshrl.u32 %v9712, 7
    %v9714 = vsub.s32 %v9711, %v9713
    %v9715 = vrot.slane %v9701, %v9714
    %v9716 = vcombine.low %v9660, %v9676
    %v9717 = vcombine.high %v9660, %v9676
    %v9719 = vunpack.c.l.s4 1934713408
    %v9720 = vunpack.c.0.s8 %v9719
    %v9721 = vlaneseq
    %v9722 = vshrl.u32 %v9721, 7
    %v9723 = vsub.s32 %v9720, %v9722
    %v9724 = vrot.slane %v9716, %v9723
    %v9726 = vunpack.c.l.s4 1934713408
    %v9727 = vunpack.c.0.s8 %v9726
    %v9728 = vlaneseq
    %v9729 = vshrl.u32 %v9728, 7
    %v9730 = vsub.s32 %v9727, %v9729
    %v9731 = vrot.slane %v9717, %v9730
    %v9732 = vcombine.low %v9667, %v9683
    %v9733 = vcombine.high %v9667, %v9683
    %v9735 = vunpack.c.l.s4 1934713408
    %v9736 = vunpack.c.0.s8 %v9735
    %v9737 = vlaneseq
    %v9738 = vshrl.u32 %v9737, 7
    %v9739 = vsub.s32 %v9736, %v9738
    %v9740 = vrot.slane %v9732, %v9739
    %v9742 = vunpack.c.l.s4 1934713408
    %v9743 = vunpack.c.0.s8 %v9742
    %v9744 = vlaneseq
    %v9745 = vshrl.u32 %v9744, 7
    %v9746 = vsub.s32 %v9743, %v9745
    %v9747 = vrot.slane %v9733, %v9746
    %v9748 = vcombine.low %v9692, %v9708
    %v9749 = vcombine.high %v9692, %v9708
    %v9751 = vunpack.c.l.s4 1934713408
    %v9752 = vunpack.c.0.s8 %v9751
    %v9753 = vlaneseq
    %v9754 = vshrl.u32 %v9753, 7
    %v9755 = vsub.s32 %v9752, %v9754
    %v9756 = vrot.slane %v9748, %v9755
    %v9758 = vunpack.c.l.s4 1934713408
    %v9759 = vunpack.c.0.s8 %v9758
    %v9760 = vlaneseq
    %v9761 = vshrl.u32 %v9760, 7
    %v9762 = vsub.s32 %v9759, %v9761
    %v9763 = vrot.slane %v9749, %v9762
    %v9764 = vcombine.low %v9699, %v9715
    %v9765 = vcombine.high %v9699, %v9715
    %v9767 = vunpack.c.l.s4 1934713408
    %v9768 = vunpack.c.0.s8 %v9767
    %v9769 = vlaneseq
    %v9770 = vshrl.u32 %v9769, 7
    %v9771 = vsub.s32 %v9768, %v9770
    %v9772 = vrot.slane %v9764, %v9771
    %v9774 = vunpack.c.l.s4 1934713408
    %v9775 = vunpack.c.0.s8 %v9774
    %v9776 = vlaneseq
    %v9777 = vshrl.u32 %v9776, 7
    %v9778 = vsub.s32 %v9775, %v9777
    %v9779 = vrot.slane %v9765, %v9778
    %v9780 = vcombine.low %v9724, %v9756
    %v9781 = vcombine.high %v9724, %v9756
    %v9782 = vcombine.low %v9731, %v9763
    %v9783 = vcombine.high %v9731, %v9763
    %v9784 = vcombine.low %v9740, %v9772
    %v9785 = vcombine.high %v9740, %v9772
    %v9786 = vcombine.low %v9747, %v9779
    %v9787 = vcombine.high %v9747, %v9779
    %v9788 = vcombine.low %v8941, %v8945
    %v9789 = vcombine.high %v8941, %v8945
    %v9791 = vunpack.c.l.s4 1983009808
    %v9792 = vunpack.c.0.s8 %v9791
    %v9793 = vlaneseq
    %v9794 = vshrl.u32 %v9793, 7
    %v9795 = vsub.s32 %v9792, %v9794
    %v9796 = vrot.slane %v9788, %v9795
    %v9798 = vunpack.c.l.s4 1983009808
    %v9799 = vunpack.c.0.s8 %v9798
    %v9800 = vlaneseq
    %v9801 = vshrl.u32 %v9800, 7
    %v9802 = vsub.s32 %v9799, %v9801
    %v9803 = vrot.slane %v9789, %v9802
    %v9804 = vcombine.low %v8943, %v8947
    %v9805 = vcombine.high %v8943, %v8947
    %v9807 = vunpack.c.l.s4 1983009808
    %v9808 = vunpack.c.0.s8 %v9807
    %v9809 = vlaneseq
    %v9810 = vshrl.u32 %v9809, 7
    %v9811 = vsub.s32 %v9808, %v9810
    %v9812 = vrot.slane %v9804, %v9811
    %v9814 = vunpack.c.l.s4 1983009808
    %v9815 = vunpack.c.0.s8 %v9814
    %v9816 = vlaneseq
    %v9817 = vshrl.u32 %v9816, 7
    %v9818 = vsub.s32 %v9815, %v9817
    %v9819 = vrot.slane %v9805, %v9818
    %v9820 = vcombine.low %v8949, %v8953
    %v9821 = vcombine.high %v8949, %v8953
    %v9823 = vunpack.c.l.s4 1983009808
    %v9824 = vunpack.c.0.s8 %v9823
    %v9825 = vlaneseq
    %v9826 = vshrl.u32 %v9825, 7
    %v9827 = vsub.s32 %v9824, %v9826
    %v9828 = vrot.slane %v9820, %v9827
    %v9830 = vunpack.c.l.s4 1983009808
    %v9831 = vunpack.c.0.s8 %v9830
    %v9832 = vlaneseq
    %v9833 = vshrl.u32 %v9832, 7
    %v9834 = vsub.s32 %v9831, %v9833
    %v9835 = vrot.slane %v9821, %v9834
    %v9836 = vcombine.low %v8951, %v8955
    %v9837 = vcombine.high %v8951, %v8955
    %v9839 = vunpack.c.l.s4 1983009808
    %v9840 = vunpack.c.0.s8 %v9839
    %v9841 = vlaneseq
    %v9842 = vshrl.u32 %v9841, 7
    %v9843 = vsub.s32 %v9840, %v9842
    %v9844 = vrot.slane %v9836, %v9843
    %v9846 = vunpack.c.l.s4 1983009808
    %v9847 = vunpack.c.0.s8 %v9846
    %v9848 = vlaneseq
    %v9849 = vshrl.u32 %v9848, 7
    %v9850 = vsub.s32 %v9847, %v9849
    %v9851 = vrot.slane %v9837, %v9850
    %v9852 = vcombine.low %v9796, %v9812
    %v9853 = vcombine.high %v9796, %v9812
    %v9855 = vunpack.c.l.s4 1934713408
    %v9856 = vunpack.c.0.s8 %v9855
    %v9857 = vlaneseq
    %v9858 = vshrl.u32 %v9857, 7
    %v9859 = vsub.s32 %v9856, %v9858
    %v9860 = vrot.slane %v9852, %v9859
    %v9862 = vunpack.c.l.s4 1934713408
    %v9863 = vunpack.c.0.s8 %v9862
    %v9864 = vlaneseq
    %v9865 = vshrl.u32 %v9864, 7
    %v9866 = vsub.s32 %v9863, %v9865
    %v9867 = vrot.slane %v9853, %v9866
    %v9868 = vcombine.low %v9803, %v9819
    %v9869 = vcombine.high %v9803, %v9819
    %v9871 = vunpack.c.l.s4 1934713408
    %v9872 = vunpack.c.0.s8 %v9871
    %v9873 = vlaneseq
    %v9874 = vshrl.u32 %v9873, 7
    %v9875 = vsub.s32 %v9872, %v9874
    %v9876 = vrot.slane %v9868, %v9875
    %v9878 = vunpack.c.l.s4 1934713408
    %v9879 = vunpack.c.0.s8 %v9878
    %v9880 = vlaneseq
    %v9881 = vshrl.u32 %v9880, 7
    %v9882 = vsub.s32 %v9879, %v9881
    %v9883 = vrot.slane %v9869, %v9882
    %v9884 = vcombine.low %v9828, %v9844
    %v9885 = vcombine.high %v9828, %v9844
    %v9887 = vunpack.c.l.s4 1934713408
    %v9888 = vunpack.c.0.s8 %v9887
    %v9889 = vlaneseq
    %v9890 = vshrl.u32 %v9889, 7
    %v9891 = vsub.s32 %v9888, %v9890
    %v9892 = vrot.slane %v9884, %v9891
    %v9894 = vunpack.c.l.s4 1934713408
    %v9895 = vunpack.c.0.s8 %v9894
    %v9896 = vlaneseq
    %v9897 = vshrl.u32 %v9896, 7
    %v9898 = vsub.s32 %v9895, %v9897
    %v9899 = vrot.slane %v9885, %v9898
    %v9900 = vcombine.low %v9835, %v9851
    %v9901 = vcombine.high %v9835, %v9851
    %v9903 = vunpack.c.l.s4 1934713408
    %v9904 = vunpack.c.0.s8 %v9903
    %v9905 = vlaneseq
    %v9906 = vshrl.u32 %v9905, 7
    %v9907 = vsub.s32 %v9904, %v9906
    %v9908 = vrot.slane %v9900, %v9907
    %v9910 = vunpack.c.l.s4 1934713408
    %v9911 = vunpack.c.0.s8 %v9910
    %v9912 = vlaneseq
    %v9913 = vshrl.u32 %v9912, 7
    %v9914 = vsub.s32 %v9911, %v9913
    %v9915 = vrot.slane %v9901, %v9914
    %v9916 = vcombine.low %v9860, %v9892
    %v9917 = vcombine.high %v9860, %v9892
    %v9918 = vcombine.low %v9867, %v9899
    %v9919 = vcombine.high %v9867, %v9899
    %v9920 = vcombine.low %v9876, %v9908
    %v9921 = vcombine.high %v9876, %v9908
    %v9922 = vcombine.low %v9883, %v9915
    %v9923 = vcombine.high %v9883, %v9915
    %v9924 = vcombine.low %v8957, %v8961
    %v9925 = vcombine.high %v8957, %v8961
    %v9927 = vunpack.c.l.s4 1983009808
    %v9928 = vunpack.c.0.s8 %v9927
    %v9929 = vlaneseq
    %v9930 = vshrl.u32 %v9929, 7
    %v9931 = vsub.s32 %v9928, %v9930
    %v9932 = vrot.slane %v9924, %v9931
    %v9934 = vunpack.c.l.s4 1983009808
    %v9935 = vunpack.c.0.s8 %v9934
    %v9936 = vlaneseq
    %v9937 = vshrl.u32 %v9936, 7
    %v9938 = vsub.s32 %v9935, %v9937
    %v9939 = vrot.slane %v9925, %v9938
    %v9940 = vcombine.low %v8959, %v8963
    %v9941 = vcombine.high %v8959, %v8963
    %v9943 = vunpack.c.l.s4 1983009808
    %v9944 = vunpack.c.0.s8 %v9943
    %v9945 = vlaneseq
    %v9946 = vshrl.u32 %v9945, 7
    %v9947 = vsub.s32 %v9944, %v9946
    %v9948 = vrot.slane %v9940, %v9947
    %v9950 = vunpack.c.l.s4 1983009808
    %v9951 = vunpack.c.0.s8 %v9950
    %v9952 = vlaneseq
    %v9953 = vshrl.u32 %v9952, 7
    %v9954 = vsub.s32 %v9951, %v9953
    %v9955 = vrot.slane %v9941, %v9954
    %v9956 = vcombine.low %v8965, %v8969
    %v9957 = vcombine.high %v8965, %v8969
    %v9959 = vunpack.c.l.s4 1983009808
    %v9960 = vunpack.c.0.s8 %v9959
    %v9961 = vlaneseq
    %v9962 = vshrl.u32 %v9961, 7
    %v9963 = vsub.s32 %v9960, %v9962
    %v9964 = vrot.slane %v9956, %v9963
    %v9966 = vunpack.c.l.s4 1983009808
    %v9967 = vunpack.c.0.s8 %v9966
    %v9968 = vlaneseq
    %v9969 = vshrl.u32 %v9968, 7
    %v9970 = vsub.s32 %v9967, %v9969
    %v9971 = vrot.slane %v9957, %v9970
    %v9972 = vcombine.low %v8967, %v8971
    %v9973 = vcombine.high %v8967, %v8971
    %v9975 = vunpack.c.l.s4 1983009808
    %v9976 = vunpack.c.0.s8 %v9975
    %v9977 = vlaneseq
    %v9978 = vshrl.u32 %v9977, 7
    %v9979 = vsub.s32 %v9976, %v9978
    %v9980 = vrot.slane %v9972, %v9979
    %v9982 = vunpack.c.l.s4 1983009808
    %v9983 = vunpack.c.0.s8 %v9982
    %v9984 = vlaneseq
    %v9985 = vshrl.u32 %v9984, 7
    %v9986 = vsub.s32 %v9983, %v9985
    %v9987 = vrot.slane %v9973, %v9986
    %v9988 = vcombine.low %v9932, %v9948
    %v9989 = vcombine.high %v9932, %v9948
    %v9991 = vunpack.c.l.s4 1934713408
    %v9992 = vunpack.c.0.s8 %v9991
    %v9993 = vlaneseq
    %v9994 = vshrl.u32 %v9993, 7
    %v9995 = vsub.s32 %v9992, %v9994
    %v9996 = vrot.slane %v9988, %v9995
    %v9998 = vunpack.c.l.s4 1934713408
    %v9999 = vunpack.c.0.s8 %v9998
    %v10000 = vlaneseq
    %v10001 = vshrl.u32 %v10000, 7
    %v10002 = vsub.s32 %v9999, %v10001
    %v10003 = vrot.slane %v9989, %v10002
    %v10004 = vcombine.low %v9939, %v9955
    %v10005 = vcombine.high %v9939, %v9955
    %v10007 = vunpack.c.l.s4 1934713408
    %v10008 = vunpack.c.0.s8 %v10007
    %v10009 = vlaneseq
    %v10010 = vshrl.u32 %v10009, 7
    %v10011 = vsub.s32 %v10008, %v10010
    %v10012 = vrot.slane %v10004, %v10011
    %v10014 = vunpack.c.l.s4 1934713408
    %v10015 = vunpack.c.0.s8 %v10014
    %v10016 = vlaneseq
    %v10017 = vshrl.u32 %v10016, 7
    %v10018 = vsub.s32 %v10015, %v10017
    %v10019 = vrot.slane %v10005, %v10018
    %v10020 = vcombine.low %v9964, %v9980
    %v10021 = vcombine.high %v9964, %v9980
    %v10023 = vunpack.c.l.s4 1934713408
    %v10024 = vunpack.c.0.s8 %v10023
    %v10025 = vlaneseq
    %v10026 = vshrl.u32 %v10025, 7
    %v10027 = vsub.s32 %v10024, %v10026
    %v10028 = vrot.slane %v10020, %v10027
    %v10030 = vunpack.c.l.s4 1934713408
    %v10031 = vunpack.c.0.s8 %v10030
    %v10032 = vlaneseq
    %v10033 = vshrl.u32 %v10032, 7
    %v10034 = vsub.s32 %v10031, %v10033
    %v10035 = vrot.slane %v10021, %v10034
    %v10036 = vcombine.low %v9971, %v9987
    %v10037 = vcombine.high %v9971, %v9987
    %v10039 = vunpack.c.l.s4 1934713408
    %v10040 = vunpack.c.0.s8 %v10039
    %v10041 = vlaneseq
    %v10042 = vshrl.u32 %v10041, 7
    %v10043 = vsub.s32 %v10040, %v10042
    %v10044 = vrot.slane %v10036, %v10043
    %v10046 = vunpack.c.l.s4 1934713408
    %v10047 = vunpack.c.0.s8 %v10046
    %v10048 = vlaneseq
    %v10049 = vshrl.u32 %v10048, 7
    %v10050 = vsub.s32 %v10047, %v10049
    %v10051 = vrot.slane %v10037, %v10050
    %v10052 = vcombine.low %v9996, %v10028
    %v10053 = vcombine.high %v9996, %v10028
    %v10054 = vcombine.low %v10003, %v10035
    %v10055 = vcombine.high %v10003, %v10035
    %v10056 = vcombine.low %v10012, %v10044
    %v10057 = vcombine.high %v10012, %v10044
    %v10058 = vcombine.low %v10019, %v10051
    %v10059 = vcombine.high %v10019, %v10051
    %10064 = vrot.lane.b32.xlu0 %v9101, 32
    %v10065 = vpop.permute.xlu0 %10064
    %10066 = vrot.lane.b32.xlu0 %v9237, 32
    %v10067 = vpop.permute.xlu0 %10066
    %10068 = vrot.lane.b32.xlu0 %v9373, 32
    %v10069 = vpop.permute.xlu0 %10068
    %10070 = vrot.lane.b32.xlu0 %v9509, 32
    %v10071 = vpop.permute.xlu0 %10070
    %10080 = vrot.lane.b32.xlu0 %v9102, 64
    %v10081 = vpop.permute.xlu0 %10080
    %10082 = vrot.lane.b32.xlu0 %v9238, 64
    %v10083 = vpop.permute.xlu0 %10082
    %10084 = vrot.lane.b32.xlu0 %v9374, 64
    %v10085 = vpop.permute.xlu0 %10084
    %10086 = vrot.lane.b32.xlu0 %v9510, 64
    %v10087 = vpop.permute.xlu0 %10086
    %10096 = vrot.lane.b32.xlu0 %v9103, 96
    %v10097 = vpop.permute.xlu0 %10096
    %10098 = vrot.lane.b32.xlu0 %v9239, 96
    %v10099 = vpop.permute.xlu0 %10098
    %10100 = vrot.lane.b32.xlu0 %v9375, 96
    %v10101 = vpop.permute.xlu0 %10100
    %10102 = vrot.lane.b32.xlu0 %v9511, 96
    %v10103 = vpop.permute.xlu0 %10102
    %10112 = vrot.lane.b32.xlu0 %v9105, 32
    %v10113 = vpop.permute.xlu0 %10112
    %10114 = vrot.lane.b32.xlu0 %v9241, 32
    %v10115 = vpop.permute.xlu0 %10114
    %10116 = vrot.lane.b32.xlu0 %v9377, 32
    %v10117 = vpop.permute.xlu0 %10116
    %10118 = vrot.lane.b32.xlu0 %v9513, 32
    %v10119 = vpop.permute.xlu0 %10118
    %10128 = vrot.lane.b32.xlu0 %v9106, 64
    %v10129 = vpop.permute.xlu0 %10128
    %10130 = vrot.lane.b32.xlu0 %v9242, 64
    %v10131 = vpop.permute.xlu0 %10130
    %10132 = vrot.lane.b32.xlu0 %v9378, 64
    %v10133 = vpop.permute.xlu0 %10132
    %10134 = vrot.lane.b32.xlu0 %v9514, 64
    %v10135 = vpop.permute.xlu0 %10134
    %10144 = vrot.lane.b32.xlu0 %v9107, 96
    %v10145 = vpop.permute.xlu0 %10144
    %10146 = vrot.lane.b32.xlu0 %v9243, 96
    %v10147 = vpop.permute.xlu0 %10146
    %10148 = vrot.lane.b32.xlu0 %v9379, 96
    %v10149 = vpop.permute.xlu0 %10148
    %10150 = vrot.lane.b32.xlu0 %v9515, 96
    %v10151 = vpop.permute.xlu0 %10150
    %10160 = vrot.lane.b32.xlu0 %v9645, 32
    %v10161 = vpop.permute.xlu0 %10160
    %10162 = vrot.lane.b32.xlu0 %v9781, 32
    %v10163 = vpop.permute.xlu0 %10162
    %10164 = vrot.lane.b32.xlu0 %v9917, 32
    %v10165 = vpop.permute.xlu0 %10164
    %10166 = vrot.lane.b32.xlu0 %v10053, 32
    %v10167 = vpop.permute.xlu0 %10166
    %10176 = vrot.lane.b32.xlu0 %v9646, 64
    %v10177 = vpop.permute.xlu0 %10176
    %10178 = vrot.lane.b32.xlu0 %v9782, 64
    %v10179 = vpop.permute.xlu0 %10178
    %10180 = vrot.lane.b32.xlu0 %v9918, 64
    %v10181 = vpop.permute.xlu0 %10180
    %10182 = vrot.lane.b32.xlu0 %v10054, 64
    %v10183 = vpop.permute.xlu0 %10182
    %10192 = vrot.lane.b32.xlu0 %v9647, 96
    %v10193 = vpop.permute.xlu0 %10192
    %10194 = vrot.lane.b32.xlu0 %v9783, 96
    %v10195 = vpop.permute.xlu0 %10194
    %10196 = vrot.lane.b32.xlu0 %v9919, 96
    %v10197 = vpop.permute.xlu0 %10196
    %10198 = vrot.lane.b32.xlu0 %v10055, 96
    %v10199 = vpop.permute.xlu0 %10198
    %10208 = vrot.lane.b32.xlu0 %v9649, 32
    %v10209 = vpop.permute.xlu0 %10208
    %10210 = vrot.lane.b32.xlu0 %v9785, 32
    %v10211 = vpop.permute.xlu0 %10210
    %10212 = vrot.lane.b32.xlu0 %v9921, 32
    %v10213 = vpop.permute.xlu0 %10212
    %10214 = vrot.lane.b32.xlu0 %v10057, 32
    %v10215 = vpop.permute.xlu0 %10214
    %10224 = vrot.lane.b32.xlu0 %v9650, 64
    %v10225 = vpop.permute.xlu0 %10224
    %10226 = vrot.lane.b32.xlu0 %v9786, 64
    %v10227 = vpop.permute.xlu0 %10226
    %10228 = vrot.lane.b32.xlu0 %v9922, 64
    %v10229 = vpop.permute.xlu0 %10228
    %10230 = vrot.lane.b32.xlu0 %v10058, 64
    %v10231 = vpop.permute.xlu0 %10230
    %10240 = vrot.lane.b32.xlu0 %v9651, 96
    %v10241 = vpop.permute.xlu0 %10240
    %10242 = vrot.lane.b32.xlu0 %v9787, 96
    %v10243 = vpop.permute.xlu0 %10242
    %10244 = vrot.lane.b32.xlu0 %v9923, 96
    %v10245 = vpop.permute.xlu0 %10244
    %10246 = vrot.lane.b32.xlu0 %v10059, 96
    %v10247 = vpop.permute.xlu0 %10246
    %v10252 = vsel %vm1892, %v9100, %v10065
    %v10253 = vsel %vm1892, %v9236, %v10067
    %v10254 = vsel %vm1892, %v9372, %v10069
    %v10255 = vsel %vm1892, %v9508, %v10071
    %v10256 = vsel %vm1957, %v10252, %v10081
    %v10257 = vsel %vm1957, %v10253, %v10083
    %v10258 = vsel %vm1957, %v10254, %v10085
    %v10259 = vsel %vm1957, %v10255, %v10087
    %v10260 = vsel %vm2022, %v10256, %v10097
    %v10261 = vsel %vm2022, %v10257, %v10099
    %v10262 = vsel %vm2022, %v10258, %v10101
    %v10263 = vsel %vm2022, %v10259, %v10103
    %v10264 = vsel %vm1892, %v9104, %v10113
    %v10265 = vsel %vm1892, %v9240, %v10115
    %v10266 = vsel %vm1892, %v9376, %v10117
    %v10267 = vsel %vm1892, %v9512, %v10119
    %v10268 = vsel %vm1957, %v10264, %v10129
    %v10269 = vsel %vm1957, %v10265, %v10131
    %v10270 = vsel %vm1957, %v10266, %v10133
    %v10271 = vsel %vm1957, %v10267, %v10135
    %v10272 = vsel %vm2022, %v10268, %v10145
    %v10273 = vsel %vm2022, %v10269, %v10147
    %v10274 = vsel %vm2022, %v10270, %v10149
    %v10275 = vsel %vm2022, %v10271, %v10151
    %v10276 = vsel %vm1892, %v9644, %v10161
    %v10277 = vsel %vm1892, %v9780, %v10163
    %v10278 = vsel %vm1892, %v9916, %v10165
    %v10279 = vsel %vm1892, %v10052, %v10167
    %v10280 = vsel %vm1957, %v10276, %v10177
    %v10281 = vsel %vm1957, %v10277, %v10179
    %v10282 = vsel %vm1957, %v10278, %v10181
    %v10283 = vsel %vm1957, %v10279, %v10183
    %v10284 = vsel %vm2022, %v10280, %v10193
    %v10285 = vsel %vm2022, %v10281, %v10195
    %v10286 = vsel %vm2022, %v10282, %v10197
    %v10287 = vsel %vm2022, %v10283, %v10199
    %v10288 = vsel %vm1892, %v9648, %v10209
    %v10289 = vsel %vm1892, %v9784, %v10211
    %v10290 = vsel %vm1892, %v9920, %v10213
    %v10291 = vsel %vm1892, %v10056, %v10215
    %v10292 = vsel %vm1957, %v10288, %v10225
    %v10293 = vsel %vm1957, %v10289, %v10227
    %v10294 = vsel %vm1957, %v10290, %v10229
    %v10295 = vsel %vm1957, %v10291, %v10231
    %v10296 = vsel %vm2022, %v10292, %v10241
    %v10297 = vsel %vm2022, %v10293, %v10243
    %v10298 = vsel %vm2022, %v10294, %v10245
    %v10299 = vsel %vm2022, %v10295, %v10247
    %10300 = vst [vmem:[#allocation3] sm:$0xff] %v10260
    %10301 = vst [vmem:[#allocation3 + $0x8] sm:$0xff] %v10272
    %10302 = vst [vmem:[#allocation3 + $0x10] sm:$0xff] %v10284
    %10303 = vst [vmem:[#allocation3 + $0x18] sm:$0xff] %v10296
    %10304 = vst [vmem:[#allocation3 + $0x20] sm:$0xff] %v10261
    %10305 = vst [vmem:[#allocation3 + $0x28] sm:$0xff] %v10273
    %10306 = vst [vmem:[#allocation3 + $0x30] sm:$0xff] %v10285
    %10307 = vst [vmem:[#allocation3 + $0x38] sm:$0xff] %v10297
    %10308 = vst [vmem:[#allocation3 + $0x40] sm:$0xff] %v10262
    %10309 = vst [vmem:[#allocation3 + $0x48] sm:$0xff] %v10274
    %10310 = vst [vmem:[#allocation3 + $0x50] sm:$0xff] %v10286
    %10311 = vst [vmem:[#allocation3 + $0x58] sm:$0xff] %v10298
    %10312 = vst [vmem:[#allocation3 + $0x60] sm:$0xff] %v10263
    %10313 = vst [vmem:[#allocation3 + $0x68] sm:$0xff] %v10275
    %10314 = vst [vmem:[#allocation3 + $0x70] sm:$0xff] %v10287
    %10315 = vst [vmem:[#allocation3 + $0x78] sm:$0xff] %v10299
    // Predicated region
    $region38: #{tpu_custom_call.1} parent=1 // pred_check
      _
    $region39: #{tpu_custom_call.1} parent=1 // pred_check_branch
      %10317 = sbr.rel (0) target = $region41
    $region40: #{tpu_custom_call.1} parent=1 // pred_region
      %s10319 = ssub.s32 2048, 2048
      %10320 = vsyncadd [#allocation4], %s10319
      %s10321 = sshll.u32 [#allocation3], 4
      %s10322 = int_to_ptr.vmem [resolvable:$true] %s10321
      %10327 = dma.vmem_to_hbm [thread:$0]  %s10322, 2048, %s9, [#allocation4], 512, 512, 32
    $region41: #{tpu_custom_call.1} parent=1 // pred_fallthru
      _
    // Predicated region
    $region42: #{tpu_custom_call.1} parent=1 // pred_check
      _
    $region43: #{tpu_custom_call.1} parent=1 // pred_check_branch
      %10329 = sbr.rel (0) target = $region45
    $region44: #{tpu_custom_call.1} parent=1 // pred_region
      %10330 = dma.done [#allocation4], 2048
    $region45: #{tpu_custom_call.1} parent=1 // pred_fallthru
      _
    %10331 = vsyncpa [#allocation4], 1

</llo_original>
